<compile_context>
chip_gen: v5e
topology: v5e:2x2
jax: 0.10.0
libtpu: 0.0.40
codegen_flags: <defaults>
</compile_context>

<pallas_src>
import functools

import jax
import jax.numpy as jnp
from jax import lax
from jax.experimental import pallas as pl
from jax.experimental.pallas import tpu as pltpu

_HEAD_TM = 512                       # row tile of the lane-dense head matmul

_VMEM_LIMIT_CACHE = [None]


def _vmem_limit_bytes():
    """Scoped-VMEM budget derived from the chip (64 MiB on v7x, 128 on v5e/v6e)."""
    if _VMEM_LIMIT_CACHE[0] is None:
        cap = 128 * 1024 * 1024
        try:
            cap = int(getattr(pltpu.get_tpu_info(), "vmem_capacity_bytes", cap))
        except Exception:
            pass
        _VMEM_LIMIT_CACHE[0] = min(48 * 1024 * 1024, (cap * 3) // 5)
    return _VMEM_LIMIT_CACHE[0]


def _cparams(n_grid_dims):
    return pltpu.CompilerParams(
        dimension_semantics=("parallel",) * n_grid_dims,
        vmem_limit_bytes=_vmem_limit_bytes(),
    )


# ---------------------------------------------------------------------------
# Direct 3x3 conv kernel (padding=1, stride 1 or 2).  The padded image is
# flattened so every tap is a contiguous 2-D slice (stride 2 uses a 2x2 parity
# decomposition).  All taps are concatenated along the contraction dim and fed
# to a single MXU matmul.  BN shift, ReLU and the residual / downsample
# projection are fused into the epilogue.  Output rows have row-stride = Wo+2
# (junk columns are cropped on the JAX side).
# ---------------------------------------------------------------------------
def _conv3x3_kernel(*refs, taps, lout, relu, res_mode):
    if res_mode == 2:                                 # projected residual
        x_ref, w_ref, t_ref, xd_ref, wd_ref, td_ref, o_ref = refs
    elif res_mode == 1:                               # identity residual
        x_ref, w_ref, t_ref, xd_ref, o_ref = refs
    else:
        x_ref, w_ref, t_ref, o_ref = refs

    pieces = [x_ref[0, p, off:off + lout, :] for (p, off) in taps]
    a = pieces[0] if len(pieces) == 1 else jnp.concatenate(pieces, axis=-1)
    y = jnp.dot(a, w_ref[...], preferred_element_type=jnp.float32) + t_ref[...]
    if relu:
        y = jnp.maximum(y, 0.0)
    if res_mode == 2:
        y = y + jnp.dot(xd_ref[0], wd_ref[...],
                        preferred_element_type=jnp.float32) + td_ref[...]
    elif res_mode == 1:
        y = y + xd_ref[0].astype(jnp.float32)
    o_ref[0] = y.astype(o_ref.dtype)


def _conv3x3(x, wmat, shift, *, stride, relu=True, res=None):
    """x: (B,H,W,Cin) bf16; wmat: (9*Cin, Cout) bf16 (BN scale folded);
    shift: (Cout,) f32.  res: None, ("add", xd_flat) or ("proj", xd_flat, wd, td)
    where xd_flat is (B, Ho*(Wo+2), Cin0) in the kernel's flat output layout.
    Returns compact (B, Ho, Wo, Cout) bf16."""
    B, H, W, Cin = x.shape
    Cout = wmat.shape[-1]
    if stride == 1:
        Ho, Wo = H, W
        Wrow = W + 2
        xp = jnp.pad(x, ((0, 0), (1, 2), (1, 1), (0, 0)))      # (B, H+3, W+2, C)
        xin = xp.reshape(B, 1, (H + 3) * Wrow, Cin)
        taps = tuple((0, kh * Wrow + kw) for kh in range(3) for kw in range(3))
    else:
        assert stride == 2 and H % 2 == 0 and W % 2 == 0
        Ho, Wo = H // 2, W // 2
        Wrow = Wo + 1
        xp = jnp.pad(x, ((0, 0), (1, 3), (1, 1), (0, 0)))      # (B, H+4, W+2, C)
        xs = jnp.stack([xp[:, a::2, b::2, :] for a in (0, 1) for b in (0, 1)],
                       axis=1)                                  # (B,4,Ho+2,Wrow,C)
        xin = xs.reshape(B, 4, (Ho + 2) * Wrow, Cin)
        taps = tuple((2 * (kh % 2) + (kw % 2), (kh // 2) * Wrow + (kw // 2))
                     for kh in range(3) for kw in range(3))
    Lout = Ho * Wrow

    in_specs = [
        pl.BlockSpec((1,) + xin.shape[1:], lambda b: (b, 0, 0, 0)),
        pl.BlockSpec(wmat.shape, lambda b: (0, 0)),
        pl.BlockSpec((1, Cout), lambda b: (0, 0)),
    ]
    args = [xin, wmat, shift.reshape(1, Cout).astype(jnp.float32)]
    res_mode = 0
    if res is not None:
        if res[0] == "proj":
            _, xd_flat, wd, td = res
            res_mode = 2
            in_specs += [
                pl.BlockSpec((1, Lout, xd_flat.shape[-1]), lambda b: (b, 0, 0)),
                pl.BlockSpec(wd.shape, lambda b: (0, 0)),
                pl.BlockSpec((1, Cout), lambda b: (0, 0)),
            ]
            args += [xd_flat, wd, td.reshape(1, Cout).astype(jnp.float32)]
        else:
            _, xd_flat = res
            res_mode = 1
            in_specs.append(pl.BlockSpec((1, Lout, Cout), lambda b: (b, 0, 0)))
            args.append(xd_flat)

    kern = functools.partial(_conv3x3_kernel, taps=taps, lout=Lout,
                             relu=relu, res_mode=res_mode)
    out = pl.pallas_call(
        kern,
        grid=(B,),
        in_specs=in_specs,
        out_specs=pl.BlockSpec((1, Lout, Cout), lambda b: (b, 0, 0)),
        out_shape=jax.ShapeDtypeStruct((B, Lout, Cout), jnp.bfloat16),
        compiler_params=_cparams(1),
    )(*args)
    return out.reshape(B, Ho, Wrow, Cout)[:, :, :Wo, :]


# ---------------------------------------------------------------------------
# ConvTranspose2d(k=3, stride=2, padding=1, output_padding=1) via sub-pixel
# decomposition: 4 output parities, ONE matmul per parity (taps and K-split
# inputs concatenated along the contraction dim inside the kernel).
# ---------------------------------------------------------------------------
_UPCONV_PARITY_TAPS = (
    ((0, 0, 4),),                                    # out[2p  , 2q  ]
    ((0, 0, 5), (0, 1, 3)),                          # out[2p  , 2q+1]
    ((0, 0, 7), (1, 0, 1)),                          # out[2p+1, 2q  ]
    ((0, 0, 8), (0, 1, 6), (1, 0, 2), (1, 1, 0)),    # out[2p+1, 2q+1]
)


def _upconv_kernel(*refs, n_in, lout, wrow):
    xs = refs[:n_in]
    ws = refs[n_in:n_in + 4]
    t_ref = refs[n_in + 4]
    outs = refs[n_in + 5:]
    for oi, taps in enumerate(_UPCONV_PARITY_TAPS):
        pieces = [xs[j][0, (dh * wrow + dw):(dh * wrow + dw) + lout, :]
                  for (dh, dw, _ti) in taps for j in range(n_in)]
        a = pieces[0] if len(pieces) == 1 else jnp.concatenate(pieces, axis=-1)
        acc = jnp.dot(a, ws[oi][...], preferred_element_type=jnp.float32)
        outs[oi][0] = (acc + t_ref[...]).astype(outs[oi].dtype)


def _conv_transpose3x3_s2(pairs, bias):
    """pairs: list of (x (B,Hi,Wi,Cin_i) bf16, wstack (9,Cin_i,Cout) bf16);
    the list is the K-split of a channel concat.  Returns (B,2Hi,2Wi,Cout)."""
    B, Hi, Wi, _ = pairs[0][0].shape
    Cout = pairs[0][1].shape[-1]
    n_in = len(pairs)
    Wrow = Wi + 1
    Lout = Hi * Wrow
    Lpad = (Hi + 2) * Wrow

    in_specs, args = [], []
    for x, _ in pairs:
        cin = x.shape[-1]
        xe = jnp.pad(x, ((0, 0), (0, 2), (0, 1), (0, 0)))       # (B, Hi+2, Wi+1, C)
        in_specs.append(pl.BlockSpec((1, Lpad, cin), lambda b: (b, 0, 0)))
        args.append(xe.reshape(B, Lpad, cin))
    wstacks = [w for _, w in pairs]
    for taps in _UPCONV_PARITY_TAPS:
        rows = [wstacks[j][ti] for (_dh, _dw, ti) in taps for j in range(n_in)]
        wp = rows[0] if len(rows) == 1 else jnp.concatenate(rows, axis=0)
        in_specs.append(pl.BlockSpec(wp.shape, lambda b: (0, 0)))
        args.append(wp)
    in_specs.append(pl.BlockSpec((1, Cout), lambda b: (0, 0)))
    args.append(bias.reshape(1, Cout).astype(jnp.float32))

    kern = functools.partial(_upconv_kernel, n_in=n_in, lout=Lout, wrow=Wrow)
    sds = jax.ShapeDtypeStruct((B, Lout, Cout), jnp.bfloat16)
    outs = pl.pallas_call(
        kern,
        grid=(B,),
        in_specs=in_specs,
        out_specs=[pl.BlockSpec((1, Lout, Cout), lambda b: (b, 0, 0))] * 4,
        out_shape=[sds] * 4,
        compiler_params=_cparams(1),
    )(*args)
    par = [o.reshape(B, Hi, Wrow, Cout) for o in outs]
    top = jnp.stack([par[0], par[1]], axis=3)        # (B, Hi, Wrow, 2, C)
    bot = jnp.stack([par[2], par[3]], axis=3)
    y = jnp.stack([top, bot], axis=2)                # (B, Hi, 2, Wrow, 2, C)
    return y.reshape(B, 2 * Hi, 2 * Wrow, Cout)[:, :, :2 * Wi, :]


# ---------------------------------------------------------------------------
# Lane-dense 1x1 output head: out[b] = W (5,Cin_total) @ cat(feats)[b]^T + bias.
# The K-split list replaces the channel concat; the (5, H*W) output makes
# stores lane-dense and removes the trailing NCHW transpose.
# ---------------------------------------------------------------------------
def _head_kernel(*refs, n_in):
    xs = refs[:n_in]
    w_ref = refs[n_in]
    t_ref = refs[n_in + 1]
    o_ref = refs[n_in + 2]
    a = xs[0][0] if n_in == 1 else jnp.concatenate([x[0] for x in xs], axis=-1)
    # "NT" matmul: (5, C) x (tm, C)^T -> (5, tm)
    acc = lax.dot_general(w_ref[...], a, (((1,), (1,)), ((), ())),
                          preferred_element_type=jnp.float32)
    o_ref[0] = acc + t_ref[...]


def _head(feats, w, bias, H, W):
    """feats: list of (B,H,W,C_i) bf16; w: (5, sum C_i) bf16; bias: (5,) f32."""
    B = feats[0].shape[0]
    HW = H * W
    tm = HW if HW <= _HEAD_TM else _HEAD_TM
    n_m = pl.cdiv(HW, tm)
    n_out = w.shape[0]
    in_specs, args = [], []
    for f in feats:
        C = f.shape[-1]
        in_specs.append(pl.BlockSpec((1, tm, C), lambda b, m: (b, m, 0)))
        args.append(f.reshape(B, HW, C))
    in_specs.append(pl.BlockSpec(w.shape, lambda b, m: (0, 0)))
    args.append(w)
    in_specs.append(pl.BlockSpec((n_out, 1), lambda b, m: (0, 0)))
    args.append(bias.reshape(n_out, 1).astype(jnp.float32))
    kern = functools.partial(_head_kernel, n_in=len(feats))
    out = pl.pallas_call(
        kern,
        grid=(B, n_m),
        in_specs=in_specs,
        out_specs=pl.BlockSpec((1, n_out, tm), lambda b, m: (b, 0, m)),
        out_shape=jax.ShapeDtypeStruct((B, n_out, HW), jnp.float32),
        compiler_params=_cparams(2),
    )(*args)
    return out.reshape(B, n_out, H, W)


# ---------------------------------------------------------------------------
# Residual block: relu(bn2(conv2(relu(bn1(conv1(x)))))) + downsample(x),
# with the downsample 1x1 conv / identity fused into conv2's epilogue.
# ---------------------------------------------------------------------------
def _block(x, p):
    B, H, W, Cin = x.shape
    s = p["stride"]
    y = _conv3x3(x, p["w1"], p["t1"], stride=s, relu=True)       # (B,Ho,Wo,Cout)
    Ho, Wo = y.shape[1], y.shape[2]
    if "wd" in p:
        xd = x[:, ::s, ::s, :]
        xd = jnp.pad(xd, ((0, 0), (0, 0), (0, 2), (0, 0)))       # conv2 flat layout
        res = ("proj", xd.reshape(B, Ho * (Wo + 2), Cin), p["wd"], p["td"])
    else:
        xi = jnp.pad(x, ((0, 0), (0, 0), (0, 2), (0, 0)))
        res = ("add", xi.reshape(B, Ho * (Wo + 2), Cin))
    return _conv3x3(y, p["w2"], p["t2"], stride=1, relu=True, res=res)


# ---------------------------------------------------------------------------
# Deterministic parameter construction (synthetic, PyTorch-style layouts)
# ---------------------------------------------------------------------------
def _init_conv(key, cout, cin, k):
    wk, bk = jax.random.split(key)
    bound = 1.0 / (cin * k * k) ** 0.5
    w = jax.random.uniform(wk, (cout, cin, k, k), jnp.float32, -bound, bound)
    b = jax.random.uniform(bk, (cout,), jnp.float32, -bound, bound)
    return w, b


def _init_convT(key, cin, cout, k):
    wk, bk = jax.random.split(key)
    bound = 1.0 / (cin * k * k) ** 0.5
    w = jax.random.uniform(wk, (cin, cout, k, k), jnp.float32, -bound, bound)
    b = jax.random.uniform(bk, (cout,), jnp.float32, -bound, bound)
    return w, b


def _init_bn(key, c):
    k1, k2, k3, k4 = jax.random.split(key, 4)
    gamma = jax.random.uniform(k1, (c,), jnp.float32, 0.8, 1.2)
    beta = jax.random.normal(k2, (c,), jnp.float32) * 0.1
    mean = jax.random.normal(k3, (c,), jnp.float32) * 0.1
    var = jax.random.uniform(k4, (c,), jnp.float32, 0.5, 1.5)
    return (gamma, beta, mean, var, jnp.float32(1e-5))


def _init_block(key, cin, cout, stride):
    ks = jax.random.split(key, 6)
    w1, b1 = _init_conv(ks[0], cout, cin, 3)
    w2, b2 = _init_conv(ks[1], cout, cout, 3)
    p = {
        "stride": stride,
        "w1": w1, "b1": b1, "bn1": _init_bn(ks[2], cout),
        "w2": w2, "b2": b2, "bn2": _init_bn(ks[3], cout),
    }
    if stride != 1 or cin != cout:
        wd, bd = _init_conv(ks[4], cout, cin, 1)
        p.update({"wd": wd, "bd": bd, "bnd": _init_bn(ks[5], cout)})
    return p


def make_fcn_params(seed=42, n_input_channels=3):
    keys = jax.random.split(jax.random.PRNGKey(seed), 8)
    c1w, c1b = _init_conv(keys[0], 20, n_input_channels, 3)
    up3w, up3b = _init_convT(keys[3], 40, 20, 3)
    up1w, up1b = _init_convT(keys[4], 80, 40, 3)
    up2w, up2b = _init_convT(keys[5], 80, 40, 3)
    outw, outb = _init_conv(keys[6], 5, 60, 1)
    outnw, outnb = _init_conv(keys[7], 5, 20, 1)
    return {
        "conv1_w": c1w, "conv1_b": c1b,
        "block1": _init_block(keys[1], 20, 40, 2),
        "block2": _init_block(keys[2], 40, 80, 2),
        "up3_w": up3w, "up3_b": up3b,
        "up1_w": up1w, "up1_b": up1b,
        "up2_w": up2w, "up2_b": up2b,
        "out_w": outw, "out_b": outb,
        "out_ns_w": outnw, "out_ns_b": outnb,
    }


# ---------------------------------------------------------------------------
# Parameter folding: BN (inference mode), conv bias and input-normalization
# scale are folded into bf16 weight matrices + a single f32 per-channel shift.
# ---------------------------------------------------------------------------
_NORM_MEAN = jnp.array([0.2788, 0.2657, 0.2628], jnp.float32)
_NORM_STD = jnp.array([0.2058, 0.1943, 0.2246], jnp.float32)


def _fold_conv_bn(w, b, bn):
    cout, cin, k, _ = w.shape
    if bn is None:
        scale = jnp.ones((cout,), jnp.float32)
        shift = b
    else:
        gamma, beta, mean, var, eps = bn
        scale = gamma / jnp.sqrt(var + eps)
        shift = beta + (b - mean) * scale
    wmat = jnp.transpose(w, (2, 3, 1, 0)).reshape(k * k * cin, cout)
    wmat = (wmat * scale[None, :]).astype(jnp.bfloat16)
    return wmat, shift.astype(jnp.float32)


def prepare_fcn_params(params):
    fp = {}
    # conv1: fold 1/std of the normalization into the weights; the mean is
    # subtracted from the input in the wrapper so zero padding stays exact.
    inv = 1.0 / _NORM_STD
    w1 = params["conv1_w"] * inv[None, :, None, None]
    fp["conv1_w"], fp["conv1_t"] = _fold_conv_bn(w1, params["conv1_b"], None)
    for name in ("block1", "block2"):
        bp = params[name]
        q = {"stride": bp["stride"]}
        q["w1"], q["t1"] = _fold_conv_bn(bp["w1"], bp["b1"], bp["bn1"])
        q["w2"], q["t2"] = _fold_conv_bn(bp["w2"], bp["b2"], bp["bn2"])
        if "wd" in bp:
            q["wd"], q["td"] = _fold_conv_bn(bp["wd"], bp["bd"], bp["bnd"])
        fp[name] = q
    for name in ("up1", "up2", "up3"):
        w = params[f"{name}_w"]                      # (Cin, Cout, 3, 3)
        fp[f"{name}_w"] = jnp.transpose(w, (2, 3, 0, 1)).reshape(
            9, w.shape[0], w.shape[1]).astype(jnp.bfloat16)
        fp[f"{name}_t"] = params[f"{name}_b"].astype(jnp.float32)
    for name in ("out", "out_ns"):
        w = params[f"{name}_w"]                      # (5, Cin, 1, 1)
        fp[f"{name}_w"] = w[:, :, 0, 0].astype(jnp.bfloat16)    # (5, Cin)
        fp[f"{name}_t"] = params[f"{name}_b"].astype(jnp.float32)
    return fp


# ---------------------------------------------------------------------------
# FCN forward
# ---------------------------------------------------------------------------
def fcn_forward(fp, x_nchw):
    """x_nchw: (B, 3, H, W) float32  ->  (B, 5, H, W) float32."""
    B, _, H, W = x_nchw.shape
    x = jnp.transpose(x_nchw, (0, 2, 3, 1)).astype(jnp.float32)
    x = (x - _NORM_MEAN).astype(jnp.bfloat16)        # 1/std folded into conv1 weights

    x1 = _conv3x3(x, fp["conv1_w"], fp["conv1_t"], stride=1, relu=True)  # (B,H,W,20)

    if H == 1 or W == 1:
        return _head([x1], fp["out_ns_w"], fp["out_ns_t"], H, W)

    if H == 2 or W == 2:
        z = _block(x1, fp["block1"])
        z = _conv_transpose3x3_s2([(z, fp["up3_w"])], fp["up3_t"])
        return _head([z], fp["out_ns_w"], fp["out_ns_t"], z.shape[1], z.shape[2])

    x2 = _block(x1, fp["block1"])                    # (B, H/2, W/2, 40)
    x3 = _block(x2, fp["block2"])                    # (B, H/4, W/4, 80)
    x4 = _conv_transpose3x3_s2([(x3, fp["up1_w"])], fp["up1_t"])          # (B,H/2,W/2,40)
    # torch.cat([x4, x2], dim=1) -> upconv2  ==  K-split accumulation (no HBM concat)
    c4 = x4.shape[-1]
    x5 = _conv_transpose3x3_s2([(x4, fp["up2_w"][:, :c4, :]),
                                (x2, fp["up2_w"][:, c4:, :])], fp["up2_t"])  # (B,H,W,40)
    # torch.cat([x5, x1], dim=1) -> 1x1 output conv  ==  K-split lane-dense head
    return _head([x5, x1], fp["out_w"], fp["out_t"], H, W)


if __name__ == "__main__":
    raw = make_fcn_params(seed=42)
    fp = prepare_fcn_params(raw)

    key = jax.random.PRNGKey(0)
    x = jax.random.uniform(key, (2, 3, 16, 16), jnp.float32)   # image-like input

    fwd = jax.jit(functools.partial(fcn_forward, fp))
    y = fwd(x)
    jax.block_until_ready(y)

    assert y.shape == (2, 5, 16, 16), y.shape
    assert y.dtype == jnp.float32
    assert bool(jnp.all(jnp.isfinite(y)))
    print("KERNEL_OK")
</pallas_src>

<mosaic_0001>
module attributes {stable_mosaic.version = 11 : i64} {
  func.func @_conv3x3_kernel(%arg0: i32, %arg1: memref<1x1x342x3xbf16, #tpu.memory_space<vmem>>, %arg2: memref<27x20xbf16, #tpu.memory_space<vmem>>, %arg3: memref<1x20xf32, #tpu.memory_space<vmem>>, %arg4: memref<1x288x20xbf16, #tpu.memory_space<vmem>>) attributes {dimension_semantics = [#tpu.dimension_semantics<parallel>], iteration_bounds = array<i64: 2>, scalar_prefetch = 0 : i64, scratch_operands = 0 : i64, tpu.core_type = #tpu.core_type<tc>, window_params = [{transform_indices = @transform_0, window_bounds = array<i64: 1, 1, 342, 3>}, {pipeline_mode = #tpu.pipeline_mode<synchronous>, transform_indices = @transform_1, window_bounds = array<i64: 27, 20>}, {pipeline_mode = #tpu.pipeline_mode<synchronous>, transform_indices = @transform_2, window_bounds = array<i64: 1, 20>}, {transform_indices = @transform_3, window_bounds = array<i64: 1, 288, 20>}]} {
    %c0 = arith.constant 0 : index
    %c0_0 = arith.constant 0 : index
    %c0_1 = arith.constant 0 : index
    %c0_2 = arith.constant 0 : index
    %0 = vector.load %arg1[%c0, %c0_0, %c0_1, %c0_2] : memref<1x1x342x3xbf16, #tpu.memory_space<vmem>>, vector<1x1x288x3xbf16>
    %1 = vector.shape_cast %0 : vector<1x1x288x3xbf16> to vector<288x3xbf16>
    %c0_3 = arith.constant 0 : index
    %c0_4 = arith.constant 0 : index
    %c1 = arith.constant 1 : index
    %c0_5 = arith.constant 0 : index
    %2 = vector.load %arg1[%c0_3, %c0_4, %c1, %c0_5] : memref<1x1x342x3xbf16, #tpu.memory_space<vmem>>, vector<1x1x288x3xbf16>
    %3 = vector.shape_cast %2 : vector<1x1x288x3xbf16> to vector<288x3xbf16>
    %c0_6 = arith.constant 0 : index
    %c0_7 = arith.constant 0 : index
    %c2 = arith.constant 2 : index
    %c0_8 = arith.constant 0 : index
    %4 = vector.load %arg1[%c0_6, %c0_7, %c2, %c0_8] : memref<1x1x342x3xbf16, #tpu.memory_space<vmem>>, vector<1x1x288x3xbf16>
    %5 = vector.shape_cast %4 : vector<1x1x288x3xbf16> to vector<288x3xbf16>
    %c0_9 = arith.constant 0 : index
    %c0_10 = arith.constant 0 : index
    %c18 = arith.constant 18 : index
    %c0_11 = arith.constant 0 : index
    %6 = vector.load %arg1[%c0_9, %c0_10, %c18, %c0_11] : memref<1x1x342x3xbf16, #tpu.memory_space<vmem>>, vector<1x1x288x3xbf16>
    %7 = vector.shape_cast %6 : vector<1x1x288x3xbf16> to vector<288x3xbf16>
    %c0_12 = arith.constant 0 : index
    %c0_13 = arith.constant 0 : index
    %c19 = arith.constant 19 : index
    %c0_14 = arith.constant 0 : index
    %8 = vector.load %arg1[%c0_12, %c0_13, %c19, %c0_14] : memref<1x1x342x3xbf16, #tpu.memory_space<vmem>>, vector<1x1x288x3xbf16>
    %9 = vector.shape_cast %8 : vector<1x1x288x3xbf16> to vector<288x3xbf16>
    %c0_15 = arith.constant 0 : index
    %c0_16 = arith.constant 0 : index
    %c20 = arith.constant 20 : index
    %c0_17 = arith.constant 0 : index
    %10 = vector.load %arg1[%c0_15, %c0_16, %c20, %c0_17] : memref<1x1x342x3xbf16, #tpu.memory_space<vmem>>, vector<1x1x288x3xbf16>
    %11 = vector.shape_cast %10 : vector<1x1x288x3xbf16> to vector<288x3xbf16>
    %c0_18 = arith.constant 0 : index
    %c0_19 = arith.constant 0 : index
    %c36 = arith.constant 36 : index
    %c0_20 = arith.constant 0 : index
    %12 = vector.load %arg1[%c0_18, %c0_19, %c36, %c0_20] : memref<1x1x342x3xbf16, #tpu.memory_space<vmem>>, vector<1x1x288x3xbf16>
    %13 = vector.shape_cast %12 : vector<1x1x288x3xbf16> to vector<288x3xbf16>
    %c0_21 = arith.constant 0 : index
    %c0_22 = arith.constant 0 : index
    %c37 = arith.constant 37 : index
    %c0_23 = arith.constant 0 : index
    %14 = vector.load %arg1[%c0_21, %c0_22, %c37, %c0_23] : memref<1x1x342x3xbf16, #tpu.memory_space<vmem>>, vector<1x1x288x3xbf16>
    %15 = vector.shape_cast %14 : vector<1x1x288x3xbf16> to vector<288x3xbf16>
    %c0_24 = arith.constant 0 : index
    %c0_25 = arith.constant 0 : index
    %c38 = arith.constant 38 : index
    %c0_26 = arith.constant 0 : index
    %16 = vector.load %arg1[%c0_24, %c0_25, %c38, %c0_26] : memref<1x1x342x3xbf16, #tpu.memory_space<vmem>>, vector<1x1x288x3xbf16>
    %17 = vector.shape_cast %16 : vector<1x1x288x3xbf16> to vector<288x3xbf16>
    %18 = tpu.concatenate %1, %3, %5, %7, %9, %11, %13, %15, %17 in 1 : vector<288x3xbf16>, vector<288x3xbf16>, vector<288x3xbf16>, vector<288x3xbf16>, vector<288x3xbf16>, vector<288x3xbf16>, vector<288x3xbf16>, vector<288x3xbf16>, vector<288x3xbf16> -> vector<288x27xbf16>
    %c0_27 = arith.constant 0 : index
    %c0_28 = arith.constant 0 : index
    %19 = vector.load %arg2[%c0_27, %c0_28] : memref<27x20xbf16, #tpu.memory_space<vmem>>, vector<27x20xbf16>
    %cst = arith.constant dense<0.000000e+00> : vector<288x20xf32>
    %20 = tpu.matmul %18, %19, %cst {dimension_numbers = #tpu.dot_dimension_numbers<[1], [0], [0], [1], [0, 0, 1, 1], [], []>} : vector<288x27xbf16>, vector<27x20xbf16>, vector<288x20xf32> -> vector<288x20xf32>
    %c0_29 = arith.constant 0 : index
    %c0_30 = arith.constant 0 : index
    %21 = vector.load %arg3[%c0_29, %c0_30] : memref<1x20xf32, #tpu.memory_space<vmem>>, vector<1x20xf32>
    %22 = vector.broadcast %21 : vector<1x20xf32> to vector<288x20xf32>
    %23 = arith.addf %20, %22 : vector<288x20xf32>
    %cst_31 = arith.constant 0.000000e+00 : f32
    %24 = vector.broadcast %cst_31 : f32 to vector<288x20xf32>
    %25 = arith.maximumf %23, %24 : vector<288x20xf32>
    %26 = arith.truncf %25 : vector<288x20xf32> to vector<288x20xbf16>
    %c0_32 = arith.constant 0 : index
    %c0_33 = arith.constant 0 : index
    %c0_34 = arith.constant 0 : index
    %27 = vector.load %arg4[%c0_32, %c0_33, %c0_34] : memref<1x288x20xbf16, #tpu.memory_space<vmem>>, vector<1x288x20xbf16>
    %28 = vector.shape_cast %27 : vector<1x288x20xbf16> to vector<288x20xbf16>
    %29 = vector.shape_cast %26 : vector<288x20xbf16> to vector<1x288x20xbf16>
    tpu.vector_store %arg4[%c0_32, %c0_33, %c0_34], %29 {strides = array<i32>} : memref<1x288x20xbf16, #tpu.memory_space<vmem>>, vector<1x288x20xbf16>,
    return
  }
  func.func @transform_0(%arg0: i32) -> (i32, i32, i32, i32) {
    %c0_i32 = arith.constant 0 : i32
    %c0_i32_0 = arith.constant 0 : i32
    %c0_i32_1 = arith.constant 0 : i32
    %c0_i32_2 = arith.constant 0 : i32
    return %arg0, %c0_i32, %c0_i32_0, %c0_i32_1 : i32, i32, i32, i32
  }
  func.func @transform_1(%arg0: i32) -> (i32, i32) {
    %c0_i32 = arith.constant 0 : i32
    %c0_i32_0 = arith.constant 0 : i32
    %c0_i32_1 = arith.constant 0 : i32
    return %c0_i32, %c0_i32_0 : i32, i32
  }
  func.func @transform_2(%arg0: i32) -> (i32, i32) {
    %c0_i32 = arith.constant 0 : i32
    %c0_i32_0 = arith.constant 0 : i32
    %c0_i32_1 = arith.constant 0 : i32
    return %c0_i32, %c0_i32_0 : i32, i32
  }
  func.func @transform_3(%arg0: i32) -> (i32, i32, i32) {
    %c0_i32 = arith.constant 0 : i32
    %c0_i32_0 = arith.constant 0 : i32
    %c0_i32_1 = arith.constant 0 : i32
    return %arg0, %c0_i32, %c0_i32_0 : i32, i32, i32
  }
}

module attributes {stable_mosaic.version = 11 : i64} {
  func.func @_conv3x3_kernel(%arg0: i32, %arg1: memref<1x4x90x20xbf16, #tpu.memory_space<vmem>>, %arg2: memref<180x40xbf16, #tpu.memory_space<vmem>>, %arg3: memref<1x40xf32, #tpu.memory_space<vmem>>, %arg4: memref<1x72x40xbf16, #tpu.memory_space<vmem>>) attributes {dimension_semantics = [#tpu.dimension_semantics<parallel>], iteration_bounds = array<i64: 2>, scalar_prefetch = 0 : i64, scratch_operands = 0 : i64, tpu.core_type = #tpu.core_type<tc>, window_params = [{transform_indices = @transform_0, window_bounds = array<i64: 1, 4, 90, 20>}, {pipeline_mode = #tpu.pipeline_mode<synchronous>, transform_indices = @transform_1, window_bounds = array<i64: 180, 40>}, {pipeline_mode = #tpu.pipeline_mode<synchronous>, transform_indices = @transform_2, window_bounds = array<i64: 1, 40>}, {transform_indices = @transform_3, window_bounds = array<i64: 1, 72, 40>}]} {
    %c0 = arith.constant 0 : index
    %c0_0 = arith.constant 0 : index
    %c0_1 = arith.constant 0 : index
    %c0_2 = arith.constant 0 : index
    %0 = vector.load %arg1[%c0, %c0_0, %c0_1, %c0_2] : memref<1x4x90x20xbf16, #tpu.memory_space<vmem>>, vector<1x1x72x20xbf16>
    %1 = vector.shape_cast %0 : vector<1x1x72x20xbf16> to vector<72x20xbf16>
    %c0_3 = arith.constant 0 : index
    %c1 = arith.constant 1 : index
    %c0_4 = arith.constant 0 : index
    %c0_5 = arith.constant 0 : index
    %2 = vector.load %arg1[%c0_3, %c1, %c0_4, %c0_5] : memref<1x4x90x20xbf16, #tpu.memory_space<vmem>>, vector<1x1x72x20xbf16>
    %3 = vector.shape_cast %2 : vector<1x1x72x20xbf16> to vector<72x20xbf16>
    %c0_6 = arith.constant 0 : index
    %c0_7 = arith.constant 0 : index
    %c1_8 = arith.constant 1 : index
    %c0_9 = arith.constant 0 : index
    %4 = vector.load %arg1[%c0_6, %c0_7, %c1_8, %c0_9] : memref<1x4x90x20xbf16, #tpu.memory_space<vmem>>, vector<1x1x72x20xbf16>
    %5 = vector.shape_cast %4 : vector<1x1x72x20xbf16> to vector<72x20xbf16>
    %c0_10 = arith.constant 0 : index
    %c2 = arith.constant 2 : index
    %c0_11 = arith.constant 0 : index
    %c0_12 = arith.constant 0 : index
    %6 = vector.load %arg1[%c0_10, %c2, %c0_11, %c0_12] : memref<1x4x90x20xbf16, #tpu.memory_space<vmem>>, vector<1x1x72x20xbf16>
    %7 = vector.shape_cast %6 : vector<1x1x72x20xbf16> to vector<72x20xbf16>
    %c0_13 = arith.constant 0 : index
    %c3 = arith.constant 3 : index
    %c0_14 = arith.constant 0 : index
    %c0_15 = arith.constant 0 : index
    %8 = vector.load %arg1[%c0_13, %c3, %c0_14, %c0_15] : memref<1x4x90x20xbf16, #tpu.memory_space<vmem>>, vector<1x1x72x20xbf16>
    %9 = vector.shape_cast %8 : vector<1x1x72x20xbf16> to vector<72x20xbf16>
    %c0_16 = arith.constant 0 : index
    %c2_17 = arith.constant 2 : index
    %c1_18 = arith.constant 1 : index
    %c0_19 = arith.constant 0 : index
    %10 = vector.load %arg1[%c0_16, %c2_17, %c1_18, %c0_19] : memref<1x4x90x20xbf16, #tpu.memory_space<vmem>>, vector<1x1x72x20xbf16>
    %11 = vector.shape_cast %10 : vector<1x1x72x20xbf16> to vector<72x20xbf16>
    %c0_20 = arith.constant 0 : index
    %c0_21 = arith.constant 0 : index
    %c9 = arith.constant 9 : index
    %c0_22 = arith.constant 0 : index
    %12 = vector.load %arg1[%c0_20, %c0_21, %c9, %c0_22] : memref<1x4x90x20xbf16, #tpu.memory_space<vmem>>, vector<1x1x72x20xbf16>
    %13 = vector.shape_cast %12 : vector<1x1x72x20xbf16> to vector<72x20xbf16>
    %c0_23 = arith.constant 0 : index
    %c1_24 = arith.constant 1 : index
    %c9_25 = arith.constant 9 : index
    %c0_26 = arith.constant 0 : index
    %14 = vector.load %arg1[%c0_23, %c1_24, %c9_25, %c0_26] : memref<1x4x90x20xbf16, #tpu.memory_space<vmem>>, vector<1x1x72x20xbf16>
    %15 = vector.shape_cast %14 : vector<1x1x72x20xbf16> to vector<72x20xbf16>
    %c0_27 = arith.constant 0 : index
    %c0_28 = arith.constant 0 : index
    %c10 = arith.constant 10 : index
    %c0_29 = arith.constant 0 : index
    %16 = vector.load %arg1[%c0_27, %c0_28, %c10, %c0_29] : memref<1x4x90x20xbf16, #tpu.memory_space<vmem>>, vector<1x1x72x20xbf16>
    %17 = vector.shape_cast %16 : vector<1x1x72x20xbf16> to vector<72x20xbf16>
    %18 = tpu.concatenate %1, %3, %5, %7, %9, %11, %13, %15, %17 in 1 : vector<72x20xbf16>, vector<72x20xbf16>, vector<72x20xbf16>, vector<72x20xbf16>, vector<72x20xbf16>, vector<72x20xbf16>, vector<72x20xbf16>, vector<72x20xbf16>, vector<72x20xbf16> -> vector<72x180xbf16>
    %c0_30 = arith.constant 0 : index
    %c0_31 = arith.constant 0 : index
    %19 = vector.load %arg2[%c0_30, %c0_31] : memref<180x40xbf16, #tpu.memory_space<vmem>>, vector<180x40xbf16>
    %cst = arith.constant dense<0.000000e+00> : vector<72x40xf32>
    %20 = tpu.matmul %18, %19, %cst {dimension_numbers = #tpu.dot_dimension_numbers<[1], [0], [0], [1], [0, 0, 1, 1], [], []>} : vector<72x180xbf16>, vector<180x40xbf16>, vector<72x40xf32> -> vector<72x40xf32>
    %c0_32 = arith.constant 0 : index
    %c0_33 = arith.constant 0 : index
    %21 = vector.load %arg3[%c0_32, %c0_33] : memref<1x40xf32, #tpu.memory_space<vmem>>, vector<1x40xf32>
    %22 = vector.broadcast %21 : vector<1x40xf32> to vector<72x40xf32>
    %23 = arith.addf %20, %22 : vector<72x40xf32>
    %cst_34 = arith.constant 0.000000e+00 : f32
    %24 = vector.broadcast %cst_34 : f32 to vector<72x40xf32>
    %25 = arith.maximumf %23, %24 : vector<72x40xf32>
    %26 = arith.truncf %25 : vector<72x40xf32> to vector<72x40xbf16>
    %c0_35 = arith.constant 0 : index
    %c0_36 = arith.constant 0 : index
    %c0_37 = arith.constant 0 : index
    %27 = vector.load %arg4[%c0_35, %c0_36, %c0_37] : memref<1x72x40xbf16, #tpu.memory_space<vmem>>, vector<1x72x40xbf16>
    %28 = vector.shape_cast %27 : vector<1x72x40xbf16> to vector<72x40xbf16>
    %29 = vector.shape_cast %26 : vector<72x40xbf16> to vector<1x72x40xbf16>
    tpu.vector_store %arg4[%c0_35, %c0_36, %c0_37], %29 {strides = array<i32>} : memref<1x72x40xbf16, #tpu.memory_space<vmem>>, vector<1x72x40xbf16>,
    return
  }
  func.func @transform_0(%arg0: i32) -> (i32, i32, i32, i32) {
    %c0_i32 = arith.constant 0 : i32
    %c0_i32_0 = arith.constant 0 : i32
    %c0_i32_1 = arith.constant 0 : i32
    %c0_i32_2 = arith.constant 0 : i32
    return %arg0, %c0_i32, %c0_i32_0, %c0_i32_1 : i32, i32, i32, i32
  }
  func.func @transform_1(%arg0: i32) -> (i32, i32) {
    %c0_i32 = arith.constant 0 : i32
    %c0_i32_0 = arith.constant 0 : i32
    %c0_i32_1 = arith.constant 0 : i32
    return %c0_i32, %c0_i32_0 : i32, i32
  }
  func.func @transform_2(%arg0: i32) -> (i32, i32) {
    %c0_i32 = arith.constant 0 : i32
    %c0_i32_0 = arith.constant 0 : i32
    %c0_i32_1 = arith.constant 0 : i32
    return %c0_i32, %c0_i32_0 : i32, i32
  }
  func.func @transform_3(%arg0: i32) -> (i32, i32, i32) {
    %c0_i32 = arith.constant 0 : i32
    %c0_i32_0 = arith.constant 0 : i32
    %c0_i32_1 = arith.constant 0 : i32
    return %arg0, %c0_i32, %c0_i32_0 : i32, i32, i32
  }
}

module attributes {stable_mosaic.version = 11 : i64} {
  func.func @_conv3x3_kernel(%arg0: i32, %arg1: memref<1x1x110x40xbf16, #tpu.memory_space<vmem>>, %arg2: memref<360x40xbf16, #tpu.memory_space<vmem>>, %arg3: memref<1x40xf32, #tpu.memory_space<vmem>>, %arg4: memref<1x80x20xbf16, #tpu.memory_space<vmem>>, %arg5: memref<20x40xbf16, #tpu.memory_space<vmem>>, %arg6: memref<1x40xf32, #tpu.memory_space<vmem>>, %arg7: memref<1x80x40xbf16, #tpu.memory_space<vmem>>) attributes {dimension_semantics = [#tpu.dimension_semantics<parallel>], iteration_bounds = array<i64: 2>, scalar_prefetch = 0 : i64, scratch_operands = 0 : i64, tpu.core_type = #tpu.core_type<tc>, window_params = [{transform_indices = @transform_0, window_bounds = array<i64: 1, 1, 110, 40>}, {pipeline_mode = #tpu.pipeline_mode<synchronous>, transform_indices = @transform_1, window_bounds = array<i64: 360, 40>}, {pipeline_mode = #tpu.pipeline_mode<synchronous>, transform_indices = @transform_2, window_bounds = array<i64: 1, 40>}, {transform_indices = @transform_3, window_bounds = array<i64: 1, 80, 20>}, {pipeline_mode = #tpu.pipeline_mode<synchronous>, transform_indices = @transform_4, window_bounds = array<i64: 20, 40>}, {pipeline_mode = #tpu.pipeline_mode<synchronous>, transform_indices = @transform_5, window_bounds = array<i64: 1, 40>}, {transform_indices = @transform_6, window_bounds = array<i64: 1, 80, 40>}]} {
    %c0 = arith.constant 0 : index
    %c0_0 = arith.constant 0 : index
    %c0_1 = arith.constant 0 : index
    %c0_2 = arith.constant 0 : index
    %0 = vector.load %arg1[%c0, %c0_0, %c0_1, %c0_2] : memref<1x1x110x40xbf16, #tpu.memory_space<vmem>>, vector<1x1x80x40xbf16>
    %1 = vector.shape_cast %0 : vector<1x1x80x40xbf16> to vector<80x40xbf16>
    %c0_3 = arith.constant 0 : index
    %c0_4 = arith.constant 0 : index
    %c1 = arith.constant 1 : index
    %c0_5 = arith.constant 0 : index
    %2 = vector.load %arg1[%c0_3, %c0_4, %c1, %c0_5] : memref<1x1x110x40xbf16, #tpu.memory_space<vmem>>, vector<1x1x80x40xbf16>
    %3 = vector.shape_cast %2 : vector<1x1x80x40xbf16> to vector<80x40xbf16>
    %c0_6 = arith.constant 0 : index
    %c0_7 = arith.constant 0 : index
    %c2 = arith.constant 2 : index
    %c0_8 = arith.constant 0 : index
    %4 = vector.load %arg1[%c0_6, %c0_7, %c2, %c0_8] : memref<1x1x110x40xbf16, #tpu.memory_space<vmem>>, vector<1x1x80x40xbf16>
    %5 = vector.shape_cast %4 : vector<1x1x80x40xbf16> to vector<80x40xbf16>
    %c0_9 = arith.constant 0 : index
    %c0_10 = arith.constant 0 : index
    %c10 = arith.constant 10 : index
    %c0_11 = arith.constant 0 : index
    %6 = vector.load %arg1[%c0_9, %c0_10, %c10, %c0_11] : memref<1x1x110x40xbf16, #tpu.memory_space<vmem>>, vector<1x1x80x40xbf16>
    %7 = vector.shape_cast %6 : vector<1x1x80x40xbf16> to vector<80x40xbf16>
    %c0_12 = arith.constant 0 : index
    %c0_13 = arith.constant 0 : index
    %c11 = arith.constant 11 : index
    %c0_14 = arith.constant 0 : index
    %8 = vector.load %arg1[%c0_12, %c0_13, %c11, %c0_14] : memref<1x1x110x40xbf16, #tpu.memory_space<vmem>>, vector<1x1x80x40xbf16>
    %9 = vector.shape_cast %8 : vector<1x1x80x40xbf16> to vector<80x40xbf16>
    %c0_15 = arith.constant 0 : index
    %c0_16 = arith.constant 0 : index
    %c12 = arith.constant 12 : index
    %c0_17 = arith.constant 0 : index
    %10 = vector.load %arg1[%c0_15, %c0_16, %c12, %c0_17] : memref<1x1x110x40xbf16, #tpu.memory_space<vmem>>, vector<1x1x80x40xbf16>
    %11 = vector.shape_cast %10 : vector<1x1x80x40xbf16> to vector<80x40xbf16>
    %c0_18 = arith.constant 0 : index
    %c0_19 = arith.constant 0 : index
    %c20 = arith.constant 20 : index
    %c0_20 = arith.constant 0 : index
    %12 = vector.load %arg1[%c0_18, %c0_19, %c20, %c0_20] : memref<1x1x110x40xbf16, #tpu.memory_space<vmem>>, vector<1x1x80x40xbf16>
    %13 = vector.shape_cast %12 : vector<1x1x80x40xbf16> to vector<80x40xbf16>
    %c0_21 = arith.constant 0 : index
    %c0_22 = arith.constant 0 : index
    %c21 = arith.constant 21 : index
    %c0_23 = arith.constant 0 : index
    %14 = vector.load %arg1[%c0_21, %c0_22, %c21, %c0_23] : memref<1x1x110x40xbf16, #tpu.memory_space<vmem>>, vector<1x1x80x40xbf16>
    %15 = vector.shape_cast %14 : vector<1x1x80x40xbf16> to vector<80x40xbf16>
    %c0_24 = arith.constant 0 : index
    %c0_25 = arith.constant 0 : index
    %c22 = arith.constant 22 : index
    %c0_26 = arith.constant 0 : index
    %16 = vector.load %arg1[%c0_24, %c0_25, %c22, %c0_26] : memref<1x1x110x40xbf16, #tpu.memory_space<vmem>>, vector<1x1x80x40xbf16>
    %17 = vector.shape_cast %16 : vector<1x1x80x40xbf16> to vector<80x40xbf16>
    %18 = tpu.concatenate %1, %3, %5, %7, %9, %11, %13, %15, %17 in 1 : vector<80x40xbf16>, vector<80x40xbf16>, vector<80x40xbf16>, vector<80x40xbf16>, vector<80x40xbf16>, vector<80x40xbf16>, vector<80x40xbf16>, vector<80x40xbf16>, vector<80x40xbf16> -> vector<80x360xbf16>
    %c0_27 = arith.constant 0 : index
    %c0_28 = arith.constant 0 : index
    %19 = vector.load %arg2[%c0_27, %c0_28] : memref<360x40xbf16, #tpu.memory_space<vmem>>, vector<360x40xbf16>
    %cst = arith.constant dense<0.000000e+00> : vector<80x40xf32>
    %20 = tpu.matmul %18, %19, %cst {dimension_numbers = #tpu.dot_dimension_numbers<[1], [0], [0], [1], [0, 0, 1, 1], [], []>} : vector<80x360xbf16>, vector<360x40xbf16>, vector<80x40xf32> -> vector<80x40xf32>
    %c0_29 = arith.constant 0 : index
    %c0_30 = arith.constant 0 : index
    %21 = vector.load %arg3[%c0_29, %c0_30] : memref<1x40xf32, #tpu.memory_space<vmem>>, vector<1x40xf32>
    %22 = vector.broadcast %21 : vector<1x40xf32> to vector<80x40xf32>
    %23 = arith.addf %20, %22 : vector<80x40xf32>
    %cst_31 = arith.constant 0.000000e+00 : f32
    %24 = vector.broadcast %cst_31 : f32 to vector<80x40xf32>
    %25 = arith.maximumf %23, %24 : vector<80x40xf32>
    %c0_32 = arith.constant 0 : index
    %c0_33 = arith.constant 0 : index
    %c0_34 = arith.constant 0 : index
    %26 = vector.load %arg4[%c0_32, %c0_33, %c0_34] : memref<1x80x20xbf16, #tpu.memory_space<vmem>>, vector<1x80x20xbf16>
    %27 = vector.shape_cast %26 : vector<1x80x20xbf16> to vector<80x20xbf16>
    %c0_35 = arith.constant 0 : index
    %c0_36 = arith.constant 0 : index
    %28 = vector.load %arg5[%c0_35, %c0_36] : memref<20x40xbf16, #tpu.memory_space<vmem>>, vector<20x40xbf16>
    %cst_37 = arith.constant dense<0.000000e+00> : vector<80x40xf32>
    %29 = tpu.matmul %27, %28, %cst_37 {dimension_numbers = #tpu.dot_dimension_numbers<[1], [0], [0], [1], [0, 0, 1, 1], [], []>} : vector<80x20xbf16>, vector<20x40xbf16>, vector<80x40xf32> -> vector<80x40xf32>
    %30 = arith.addf %25, %29 : vector<80x40xf32>
    %c0_38 = arith.constant 0 : index
    %c0_39 = arith.constant 0 : index
    %31 = vector.load %arg6[%c0_38, %c0_39] : memref<1x40xf32, #tpu.memory_space<vmem>>, vector<1x40xf32>
    %32 = vector.broadcast %31 : vector<1x40xf32> to vector<80x40xf32>
    %33 = arith.addf %30, %32 : vector<80x40xf32>
    %34 = arith.truncf %33 : vector<80x40xf32> to vector<80x40xbf16>
    %c0_40 = arith.constant 0 : index
    %c0_41 = arith.constant 0 : index
    %c0_42 = arith.constant 0 : index
    %35 = vector.load %arg7[%c0_40, %c0_41, %c0_42] : memref<1x80x40xbf16, #tpu.memory_space<vmem>>, vector<1x80x40xbf16>
    %36 = vector.shape_cast %35 : vector<1x80x40xbf16> to vector<80x40xbf16>
    %37 = vector.shape_cast %34 : vector<80x40xbf16> to vector<1x80x40xbf16>
    tpu.vector_store %arg7[%c0_40, %c0_41, %c0_42], %37 {strides = array<i32>} : memref<1x80x40xbf16, #tpu.memory_space<vmem>>, vector<1x80x40xbf16>,
    return
  }
  func.func @transform_0(%arg0: i32) -> (i32, i32, i32, i32) {
    %c0_i32 = arith.constant 0 : i32
    %c0_i32_0 = arith.constant 0 : i32
    %c0_i32_1 = arith.constant 0 : i32
    %c0_i32_2 = arith.constant 0 : i32
    return %arg0, %c0_i32, %c0_i32_0, %c0_i32_1 : i32, i32, i32, i32
  }
  func.func @transform_1(%arg0: i32) -> (i32, i32) {
    %c0_i32 = arith.constant 0 : i32
    %c0_i32_0 = arith.constant 0 : i32
    %c0_i32_1 = arith.constant 0 : i32
    return %c0_i32, %c0_i32_0 : i32, i32
  }
  func.func @transform_2(%arg0: i32) -> (i32, i32) {
    %c0_i32 = arith.constant 0 : i32
    %c0_i32_0 = arith.constant 0 : i32
    %c0_i32_1 = arith.constant 0 : i32
    return %c0_i32, %c0_i32_0 : i32, i32
  }
  func.func @transform_3(%arg0: i32) -> (i32, i32, i32) {
    %c0_i32 = arith.constant 0 : i32
    %c0_i32_0 = arith.constant 0 : i32
    %c0_i32_1 = arith.constant 0 : i32
    return %arg0, %c0_i32, %c0_i32_0 : i32, i32, i32
  }
  func.func @transform_4(%arg0: i32) -> (i32, i32) {
    %c0_i32 = arith.constant 0 : i32
    %c0_i32_0 = arith.constant 0 : i32
    %c0_i32_1 = arith.constant 0 : i32
    return %c0_i32, %c0_i32_0 : i32, i32
  }
  func.func @transform_5(%arg0: i32) -> (i32, i32) {
    %c0_i32 = arith.constant 0 : i32
    %c0_i32_0 = arith.constant 0 : i32
    %c0_i32_1 = arith.constant 0 : i32
    return %c0_i32, %c0_i32_0 : i32, i32
  }
  func.func @transform_6(%arg0: i32) -> (i32, i32, i32) {
    %c0_i32 = arith.constant 0 : i32
    %c0_i32_0 = arith.constant 0 : i32
    %c0_i32_1 = arith.constant 0 : i32
    return %arg0, %c0_i32, %c0_i32_0 : i32, i32, i32
  }
}

module attributes {stable_mosaic.version = 11 : i64} {
  func.func @_conv3x3_kernel(%arg0: i32, %arg1: memref<1x4x30x40xbf16, #tpu.memory_space<vmem>>, %arg2: memref<360x80xbf16, #tpu.memory_space<vmem>>, %arg3: memref<1x80xf32, #tpu.memory_space<vmem>>, %arg4: memref<1x20x80xbf16, #tpu.memory_space<vmem>>) attributes {dimension_semantics = [#tpu.dimension_semantics<parallel>], iteration_bounds = array<i64: 2>, scalar_prefetch = 0 : i64, scratch_operands = 0 : i64, tpu.core_type = #tpu.core_type<tc>, window_params = [{transform_indices = @transform_0, window_bounds = array<i64: 1, 4, 30, 40>}, {pipeline_mode = #tpu.pipeline_mode<synchronous>, transform_indices = @transform_1, window_bounds = array<i64: 360, 80>}, {pipeline_mode = #tpu.pipeline_mode<synchronous>, transform_indices = @transform_2, window_bounds = array<i64: 1, 80>}, {transform_indices = @transform_3, window_bounds = array<i64: 1, 20, 80>}]} {
    %c0 = arith.constant 0 : index
    %c0_0 = arith.constant 0 : index
    %c0_1 = arith.constant 0 : index
    %c0_2 = arith.constant 0 : index
    %0 = vector.load %arg1[%c0, %c0_0, %c0_1, %c0_2] : memref<1x4x30x40xbf16, #tpu.memory_space<vmem>>, vector<1x1x20x40xbf16>
    %1 = vector.shape_cast %0 : vector<1x1x20x40xbf16> to vector<20x40xbf16>
    %c0_3 = arith.constant 0 : index
    %c1 = arith.constant 1 : index
    %c0_4 = arith.constant 0 : index
    %c0_5 = arith.constant 0 : index
    %2 = vector.load %arg1[%c0_3, %c1, %c0_4, %c0_5] : memref<1x4x30x40xbf16, #tpu.memory_space<vmem>>, vector<1x1x20x40xbf16>
    %3 = vector.shape_cast %2 : vector<1x1x20x40xbf16> to vector<20x40xbf16>
    %c0_6 = arith.constant 0 : index
    %c0_7 = arith.constant 0 : index
    %c1_8 = arith.constant 1 : index
    %c0_9 = arith.constant 0 : index
    %4 = vector.load %arg1[%c0_6, %c0_7, %c1_8, %c0_9] : memref<1x4x30x40xbf16, #tpu.memory_space<vmem>>, vector<1x1x20x40xbf16>
    %5 = vector.shape_cast %4 : vector<1x1x20x40xbf16> to vector<20x40xbf16>
    %c0_10 = arith.constant 0 : index
    %c2 = arith.constant 2 : index
    %c0_11 = arith.constant 0 : index
    %c0_12 = arith.constant 0 : index
    %6 = vector.load %arg1[%c0_10, %c2, %c0_11, %c0_12] : memref<1x4x30x40xbf16, #tpu.memory_space<vmem>>, vector<1x1x20x40xbf16>
    %7 = vector.shape_cast %6 : vector<1x1x20x40xbf16> to vector<20x40xbf16>
    %c0_13 = arith.constant 0 : index
    %c3 = arith.constant 3 : index
    %c0_14 = arith.constant 0 : index
    %c0_15 = arith.constant 0 : index
    %8 = vector.load %arg1[%c0_13, %c3, %c0_14, %c0_15] : memref<1x4x30x40xbf16, #tpu.memory_space<vmem>>, vector<1x1x20x40xbf16>
    %9 = vector.shape_cast %8 : vector<1x1x20x40xbf16> to vector<20x40xbf16>
    %c0_16 = arith.constant 0 : index
    %c2_17 = arith.constant 2 : index
    %c1_18 = arith.constant 1 : index
    %c0_19 = arith.constant 0 : index
    %10 = vector.load %arg1[%c0_16, %c2_17, %c1_18, %c0_19] : memref<1x4x30x40xbf16, #tpu.memory_space<vmem>>, vector<1x1x20x40xbf16>
    %11 = vector.shape_cast %10 : vector<1x1x20x40xbf16> to vector<20x40xbf16>
    %c0_20 = arith.constant 0 : index
    %c0_21 = arith.constant 0 : index
    %c5 = arith.constant 5 : index
    %c0_22 = arith.constant 0 : index
    %12 = vector.load %arg1[%c0_20, %c0_21, %c5, %c0_22] : memref<1x4x30x40xbf16, #tpu.memory_space<vmem>>, vector<1x1x20x40xbf16>
    %13 = vector.shape_cast %12 : vector<1x1x20x40xbf16> to vector<20x40xbf16>
    %c0_23 = arith.constant 0 : index
    %c1_24 = arith.constant 1 : index
    %c5_25 = arith.constant 5 : index
    %c0_26 = arith.constant 0 : index
    %14 = vector.load %arg1[%c0_23, %c1_24, %c5_25, %c0_26] : memref<1x4x30x40xbf16, #tpu.memory_space<vmem>>, vector<1x1x20x40xbf16>
    %15 = vector.shape_cast %14 : vector<1x1x20x40xbf16> to vector<20x40xbf16>
    %c0_27 = arith.constant 0 : index
    %c0_28 = arith.constant 0 : index
    %c6 = arith.constant 6 : index
    %c0_29 = arith.constant 0 : index
    %16 = vector.load %arg1[%c0_27, %c0_28, %c6, %c0_29] : memref<1x4x30x40xbf16, #tpu.memory_space<vmem>>, vector<1x1x20x40xbf16>
    %17 = vector.shape_cast %16 : vector<1x1x20x40xbf16> to vector<20x40xbf16>
    %18 = tpu.concatenate %1, %3, %5, %7, %9, %11, %13, %15, %17 in 1 : vector<20x40xbf16>, vector<20x40xbf16>, vector<20x40xbf16>, vector<20x40xbf16>, vector<20x40xbf16>, vector<20x40xbf16>, vector<20x40xbf16>, vector<20x40xbf16>, vector<20x40xbf16> -> vector<20x360xbf16>
    %c0_30 = arith.constant 0 : index
    %c0_31 = arith.constant 0 : index
    %19 = vector.load %arg2[%c0_30, %c0_31] : memref<360x80xbf16, #tpu.memory_space<vmem>>, vector<360x80xbf16>
    %cst = arith.constant dense<0.000000e+00> : vector<20x80xf32>
    %20 = tpu.matmul %18, %19, %cst {dimension_numbers = #tpu.dot_dimension_numbers<[1], [0], [0], [1], [0, 0, 1, 1], [], []>} : vector<20x360xbf16>, vector<360x80xbf16>, vector<20x80xf32> -> vector<20x80xf32>
    %c0_32 = arith.constant 0 : index
    %c0_33 = arith.constant 0 : index
    %21 = vector.load %arg3[%c0_32, %c0_33] : memref<1x80xf32, #tpu.memory_space<vmem>>, vector<1x80xf32>
    %22 = vector.broadcast %21 : vector<1x80xf32> to vector<20x80xf32>
    %23 = arith.addf %20, %22 : vector<20x80xf32>
    %cst_34 = arith.constant 0.000000e+00 : f32
    %24 = vector.broadcast %cst_34 : f32 to vector<20x80xf32>
    %25 = arith.maximumf %23, %24 : vector<20x80xf32>
    %26 = arith.truncf %25 : vector<20x80xf32> to vector<20x80xbf16>
    %c0_35 = arith.constant 0 : index
    %c0_36 = arith.constant 0 : index
    %c0_37 = arith.constant 0 : index
    %27 = vector.load %arg4[%c0_35, %c0_36, %c0_37] : memref<1x20x80xbf16, #tpu.memory_space<vmem>>, vector<1x20x80xbf16>
    %28 = vector.shape_cast %27 : vector<1x20x80xbf16> to vector<20x80xbf16>
    %29 = vector.shape_cast %26 : vector<20x80xbf16> to vector<1x20x80xbf16>
    tpu.vector_store %arg4[%c0_35, %c0_36, %c0_37], %29 {strides = array<i32>} : memref<1x20x80xbf16, #tpu.memory_space<vmem>>, vector<1x20x80xbf16>,
    return
  }
  func.func @transform_0(%arg0: i32) -> (i32, i32, i32, i32) {
    %c0_i32 = arith.constant 0 : i32
    %c0_i32_0 = arith.constant 0 : i32
    %c0_i32_1 = arith.constant 0 : i32
    %c0_i32_2 = arith.constant 0 : i32
    return %arg0, %c0_i32, %c0_i32_0, %c0_i32_1 : i32, i32, i32, i32
  }
  func.func @transform_1(%arg0: i32) -> (i32, i32) {
    %c0_i32 = arith.constant 0 : i32
    %c0_i32_0 = arith.constant 0 : i32
    %c0_i32_1 = arith.constant 0 : i32
    return %c0_i32, %c0_i32_0 : i32, i32
  }
  func.func @transform_2(%arg0: i32) -> (i32, i32) {
    %c0_i32 = arith.constant 0 : i32
    %c0_i32_0 = arith.constant 0 : i32
    %c0_i32_1 = arith.constant 0 : i32
    return %c0_i32, %c0_i32_0 : i32, i32
  }
  func.func @transform_3(%arg0: i32) -> (i32, i32, i32) {
    %c0_i32 = arith.constant 0 : i32
    %c0_i32_0 = arith.constant 0 : i32
    %c0_i32_1 = arith.constant 0 : i32
    return %arg0, %c0_i32, %c0_i32_0 : i32, i32, i32
  }
}

module attributes {stable_mosaic.version = 11 : i64} {
  func.func @_conv3x3_kernel(%arg0: i32, %arg1: memref<1x1x42x80xbf16, #tpu.memory_space<vmem>>, %arg2: memref<720x80xbf16, #tpu.memory_space<vmem>>, %arg3: memref<1x80xf32, #tpu.memory_space<vmem>>, %arg4: memref<1x24x40xbf16, #tpu.memory_space<vmem>>, %arg5: memref<40x80xbf16, #tpu.memory_space<vmem>>, %arg6: memref<1x80xf32, #tpu.memory_space<vmem>>, %arg7: memref<1x24x80xbf16, #tpu.memory_space<vmem>>) attributes {dimension_semantics = [#tpu.dimension_semantics<parallel>], iteration_bounds = array<i64: 2>, scalar_prefetch = 0 : i64, scratch_operands = 0 : i64, tpu.core_type = #tpu.core_type<tc>, window_params = [{transform_indices = @transform_0, window_bounds = array<i64: 1, 1, 42, 80>}, {pipeline_mode = #tpu.pipeline_mode<synchronous>, transform_indices = @transform_1, window_bounds = array<i64: 720, 80>}, {pipeline_mode = #tpu.pipeline_mode<synchronous>, transform_indices = @transform_2, window_bounds = array<i64: 1, 80>}, {transform_indices = @transform_3, window_bounds = array<i64: 1, 24, 40>}, {pipeline_mode = #tpu.pipeline_mode<synchronous>, transform_indices = @transform_4, window_bounds = array<i64: 40, 80>}, {pipeline_mode = #tpu.pipeline_mode<synchronous>, transform_indices = @transform_5, window_bounds = array<i64: 1, 80>}, {transform_indices = @transform_6, window_bounds = array<i64: 1, 24, 80>}]} {
    %c0 = arith.constant 0 : index
    %c0_0 = arith.constant 0 : index
    %c0_1 = arith.constant 0 : index
    %c0_2 = arith.constant 0 : index
    %0 = vector.load %arg1[%c0, %c0_0, %c0_1, %c0_2] : memref<1x1x42x80xbf16, #tpu.memory_space<vmem>>, vector<1x1x24x80xbf16>
    %1 = vector.shape_cast %0 : vector<1x1x24x80xbf16> to vector<24x80xbf16>
    %c0_3 = arith.constant 0 : index
    %c0_4 = arith.constant 0 : index
    %c1 = arith.constant 1 : index
    %c0_5 = arith.constant 0 : index
    %2 = vector.load %arg1[%c0_3, %c0_4, %c1, %c0_5] : memref<1x1x42x80xbf16, #tpu.memory_space<vmem>>, vector<1x1x24x80xbf16>
    %3 = vector.shape_cast %2 : vector<1x1x24x80xbf16> to vector<24x80xbf16>
    %c0_6 = arith.constant 0 : index
    %c0_7 = arith.constant 0 : index
    %c2 = arith.constant 2 : index
    %c0_8 = arith.constant 0 : index
    %4 = vector.load %arg1[%c0_6, %c0_7, %c2, %c0_8] : memref<1x1x42x80xbf16, #tpu.memory_space<vmem>>, vector<1x1x24x80xbf16>
    %5 = vector.shape_cast %4 : vector<1x1x24x80xbf16> to vector<24x80xbf16>
    %c0_9 = arith.constant 0 : index
    %c0_10 = arith.constant 0 : index
    %c6 = arith.constant 6 : index
    %c0_11 = arith.constant 0 : index
    %6 = vector.load %arg1[%c0_9, %c0_10, %c6, %c0_11] : memref<1x1x42x80xbf16, #tpu.memory_space<vmem>>, vector<1x1x24x80xbf16>
    %7 = vector.shape_cast %6 : vector<1x1x24x80xbf16> to vector<24x80xbf16>
    %c0_12 = arith.constant 0 : index
    %c0_13 = arith.constant 0 : index
    %c7 = arith.constant 7 : index
    %c0_14 = arith.constant 0 : index
    %8 = vector.load %arg1[%c0_12, %c0_13, %c7, %c0_14] : memref<1x1x42x80xbf16, #tpu.memory_space<vmem>>, vector<1x1x24x80xbf16>
    %9 = vector.shape_cast %8 : vector<1x1x24x80xbf16> to vector<24x80xbf16>
    %c0_15 = arith.constant 0 : index
    %c0_16 = arith.constant 0 : index
    %c8 = arith.constant 8 : index
    %c0_17 = arith.constant 0 : index
    %10 = vector.load %arg1[%c0_15, %c0_16, %c8, %c0_17] : memref<1x1x42x80xbf16, #tpu.memory_space<vmem>>, vector<1x1x24x80xbf16>
    %11 = vector.shape_cast %10 : vector<1x1x24x80xbf16> to vector<24x80xbf16>
    %c0_18 = arith.constant 0 : index
    %c0_19 = arith.constant 0 : index
    %c12 = arith.constant 12 : index
    %c0_20 = arith.constant 0 : index
    %12 = vector.load %arg1[%c0_18, %c0_19, %c12, %c0_20] : memref<1x1x42x80xbf16, #tpu.memory_space<vmem>>, vector<1x1x24x80xbf16>
    %13 = vector.shape_cast %12 : vector<1x1x24x80xbf16> to vector<24x80xbf16>
    %c0_21 = arith.constant 0 : index
    %c0_22 = arith.constant 0 : index
    %c13 = arith.constant 13 : index
    %c0_23 = arith.constant 0 : index
    %14 = vector.load %arg1[%c0_21, %c0_22, %c13, %c0_23] : memref<1x1x42x80xbf16, #tpu.memory_space<vmem>>, vector<1x1x24x80xbf16>
    %15 = vector.shape_cast %14 : vector<1x1x24x80xbf16> to vector<24x80xbf16>
    %c0_24 = arith.constant 0 : index
    %c0_25 = arith.constant 0 : index
    %c14 = arith.constant 14 : index
    %c0_26 = arith.constant 0 : index
    %16 = vector.load %arg1[%c0_24, %c0_25, %c14, %c0_26] : memref<1x1x42x80xbf16, #tpu.memory_space<vmem>>, vector<1x1x24x80xbf16>
    %17 = vector.shape_cast %16 : vector<1x1x24x80xbf16> to vector<24x80xbf16>
    %18 = tpu.concatenate %1, %3, %5, %7, %9, %11, %13, %15, %17 in 1 : vector<24x80xbf16>, vector<24x80xbf16>, vector<24x80xbf16>, vector<24x80xbf16>, vector<24x80xbf16>, vector<24x80xbf16>, vector<24x80xbf16>, vector<24x80xbf16>, vector<24x80xbf16> -> vector<24x720xbf16>
    %c0_27 = arith.constant 0 : index
    %c0_28 = arith.constant 0 : index
    %19 = vector.load %arg2[%c0_27, %c0_28] : memref<720x80xbf16, #tpu.memory_space<vmem>>, vector<720x80xbf16>
    %cst = arith.constant dense<0.000000e+00> : vector<24x80xf32>
    %20 = tpu.matmul %18, %19, %cst {dimension_numbers = #tpu.dot_dimension_numbers<[1], [0], [0], [1], [0, 0, 1, 1], [], []>} : vector<24x720xbf16>, vector<720x80xbf16>, vector<24x80xf32> -> vector<24x80xf32>
    %c0_29 = arith.constant 0 : index
    %c0_30 = arith.constant 0 : index
    %21 = vector.load %arg3[%c0_29, %c0_30] : memref<1x80xf32, #tpu.memory_space<vmem>>, vector<1x80xf32>
    %22 = vector.broadcast %21 : vector<1x80xf32> to vector<24x80xf32>
    %23 = arith.addf %20, %22 : vector<24x80xf32>
    %cst_31 = arith.constant 0.000000e+00 : f32
    %24 = vector.broadcast %cst_31 : f32 to vector<24x80xf32>
    %25 = arith.maximumf %23, %24 : vector<24x80xf32>
    %c0_32 = arith.constant 0 : index
    %c0_33 = arith.constant 0 : index
    %c0_34 = arith.constant 0 : index
    %26 = vector.load %arg4[%c0_32, %c0_33, %c0_34] : memref<1x24x40xbf16, #tpu.memory_space<vmem>>, vector<1x24x40xbf16>
    %27 = vector.shape_cast %26 : vector<1x24x40xbf16> to vector<24x40xbf16>
    %c0_35 = arith.constant 0 : index
    %c0_36 = arith.constant 0 : index
    %28 = vector.load %arg5[%c0_35, %c0_36] : memref<40x80xbf16, #tpu.memory_space<vmem>>, vector<40x80xbf16>
    %cst_37 = arith.constant dense<0.000000e+00> : vector<24x80xf32>
    %29 = tpu.matmul %27, %28, %cst_37 {dimension_numbers = #tpu.dot_dimension_numbers<[1], [0], [0], [1], [0, 0, 1, 1], [], []>} : vector<24x40xbf16>, vector<40x80xbf16>, vector<24x80xf32> -> vector<24x80xf32>
    %30 = arith.addf %25, %29 : vector<24x80xf32>
    %c0_38 = arith.constant 0 : index
    %c0_39 = arith.constant 0 : index
    %31 = vector.load %arg6[%c0_38, %c0_39] : memref<1x80xf32, #tpu.memory_space<vmem>>, vector<1x80xf32>
    %32 = vector.broadcast %31 : vector<1x80xf32> to vector<24x80xf32>
    %33 = arith.addf %30, %32 : vector<24x80xf32>
    %34 = arith.truncf %33 : vector<24x80xf32> to vector<24x80xbf16>
    %c0_40 = arith.constant 0 : index
    %c0_41 = arith.constant 0 : index
    %c0_42 = arith.constant 0 : index
    %35 = vector.load %arg7[%c0_40, %c0_41, %c0_42] : memref<1x24x80xbf16, #tpu.memory_space<vmem>>, vector<1x24x80xbf16>
    %36 = vector.shape_cast %35 : vector<1x24x80xbf16> to vector<24x80xbf16>
    %37 = vector.shape_cast %34 : vector<24x80xbf16> to vector<1x24x80xbf16>
    tpu.vector_store %arg7[%c0_40, %c0_41, %c0_42], %37 {strides = array<i32>} : memref<1x24x80xbf16, #tpu.memory_space<vmem>>, vector<1x24x80xbf16>,
    return
  }
  func.func @transform_0(%arg0: i32) -> (i32, i32, i32, i32) {
    %c0_i32 = arith.constant 0 : i32
    %c0_i32_0 = arith.constant 0 : i32
    %c0_i32_1 = arith.constant 0 : i32
    %c0_i32_2 = arith.constant 0 : i32
    return %arg0, %c0_i32, %c0_i32_0, %c0_i32_1 : i32, i32, i32, i32
  }
  func.func @transform_1(%arg0: i32) -> (i32, i32) {
    %c0_i32 = arith.constant 0 : i32
    %c0_i32_0 = arith.constant 0 : i32
    %c0_i32_1 = arith.constant 0 : i32
    return %c0_i32, %c0_i32_0 : i32, i32
  }
  func.func @transform_2(%arg0: i32) -> (i32, i32) {
    %c0_i32 = arith.constant 0 : i32
    %c0_i32_0 = arith.constant 0 : i32
    %c0_i32_1 = arith.constant 0 : i32
    return %c0_i32, %c0_i32_0 : i32, i32
  }
  func.func @transform_3(%arg0: i32) -> (i32, i32, i32) {
    %c0_i32 = arith.constant 0 : i32
    %c0_i32_0 = arith.constant 0 : i32
    %c0_i32_1 = arith.constant 0 : i32
    return %arg0, %c0_i32, %c0_i32_0 : i32, i32, i32
  }
  func.func @transform_4(%arg0: i32) -> (i32, i32) {
    %c0_i32 = arith.constant 0 : i32
    %c0_i32_0 = arith.constant 0 : i32
    %c0_i32_1 = arith.constant 0 : i32
    return %c0_i32, %c0_i32_0 : i32, i32
  }
  func.func @transform_5(%arg0: i32) -> (i32, i32) {
    %c0_i32 = arith.constant 0 : i32
    %c0_i32_0 = arith.constant 0 : i32
    %c0_i32_1 = arith.constant 0 : i32
    return %c0_i32, %c0_i32_0 : i32, i32
  }
  func.func @transform_6(%arg0: i32) -> (i32, i32, i32) {
    %c0_i32 = arith.constant 0 : i32
    %c0_i32_0 = arith.constant 0 : i32
    %c0_i32_1 = arith.constant 0 : i32
    return %arg0, %c0_i32, %c0_i32_0 : i32, i32, i32
  }
}

module attributes {stable_mosaic.version = 11 : i64} {
  func.func @_upconv_kernel(%arg0: i32, %arg1: memref<1x30x80xbf16, #tpu.memory_space<vmem>>, %arg2: memref<80x40xbf16, #tpu.memory_space<vmem>>, %arg3: memref<160x40xbf16, #tpu.memory_space<vmem>>, %arg4: memref<160x40xbf16, #tpu.memory_space<vmem>>, %arg5: memref<320x40xbf16, #tpu.memory_space<vmem>>, %arg6: memref<1x40xf32, #tpu.memory_space<vmem>>, %arg7: memref<1x20x40xbf16, #tpu.memory_space<vmem>>, %arg8: memref<1x20x40xbf16, #tpu.memory_space<vmem>>, %arg9: memref<1x20x40xbf16, #tpu.memory_space<vmem>>, %arg10: memref<1x20x40xbf16, #tpu.memory_space<vmem>>) attributes {dimension_semantics = [#tpu.dimension_semantics<parallel>], iteration_bounds = array<i64: 2>, scalar_prefetch = 0 : i64, scratch_operands = 0 : i64, tpu.core_type = #tpu.core_type<tc>, window_params = [{transform_indices = @transform_0, window_bounds = array<i64: 1, 30, 80>}, {pipeline_mode = #tpu.pipeline_mode<synchronous>, transform_indices = @transform_1, window_bounds = array<i64: 80, 40>}, {pipeline_mode = #tpu.pipeline_mode<synchronous>, transform_indices = @transform_2, window_bounds = array<i64: 160, 40>}, {pipeline_mode = #tpu.pipeline_mode<synchronous>, transform_indices = @transform_3, window_bounds = array<i64: 160, 40>}, {pipeline_mode = #tpu.pipeline_mode<synchronous>, transform_indices = @transform_4, window_bounds = array<i64: 320, 40>}, {pipeline_mode = #tpu.pipeline_mode<synchronous>, transform_indices = @transform_5, window_bounds = array<i64: 1, 40>}, {transform_indices = @transform_6, window_bounds = array<i64: 1, 20, 40>}, {transform_indices = @transform_7, window_bounds = array<i64: 1, 20, 40>}, {transform_indices = @transform_8, window_bounds = array<i64: 1, 20, 40>}, {transform_indices = @transform_9, window_bounds = array<i64: 1, 20, 40>}]} {
    %c0 = arith.constant 0 : index
    %c0_0 = arith.constant 0 : index
    %c0_1 = arith.constant 0 : index
    %0 = vector.load %arg1[%c0, %c0_0, %c0_1] : memref<1x30x80xbf16, #tpu.memory_space<vmem>>, vector<1x20x80xbf16>
    %1 = vector.shape_cast %0 : vector<1x20x80xbf16> to vector<20x80xbf16>
    %c0_2 = arith.constant 0 : index
    %c0_3 = arith.constant 0 : index
    %2 = vector.load %arg2[%c0_2, %c0_3] : memref<80x40xbf16, #tpu.memory_space<vmem>>, vector<80x40xbf16>
    %cst = arith.constant dense<0.000000e+00> : vector<20x40xf32>
    %3 = tpu.matmul %1, %2, %cst {dimension_numbers = #tpu.dot_dimension_numbers<[1], [0], [0], [1], [0, 0, 1, 1], [], []>} : vector<20x80xbf16>, vector<80x40xbf16>, vector<20x40xf32> -> vector<20x40xf32>
    %c0_4 = arith.constant 0 : index
    %c0_5 = arith.constant 0 : index
    %4 = vector.load %arg6[%c0_4, %c0_5] : memref<1x40xf32, #tpu.memory_space<vmem>>, vector<1x40xf32>
    %5 = vector.broadcast %4 : vector<1x40xf32> to vector<20x40xf32>
    %6 = arith.addf %3, %5 : vector<20x40xf32>
    %7 = arith.truncf %6 : vector<20x40xf32> to vector<20x40xbf16>
    %c0_6 = arith.constant 0 : index
    %c0_7 = arith.constant 0 : index
    %c0_8 = arith.constant 0 : index
    %8 = vector.load %arg7[%c0_6, %c0_7, %c0_8] : memref<1x20x40xbf16, #tpu.memory_space<vmem>>, vector<1x20x40xbf16>
    %9 = vector.shape_cast %8 : vector<1x20x40xbf16> to vector<20x40xbf16>
    %10 = vector.shape_cast %7 : vector<20x40xbf16> to vector<1x20x40xbf16>
    tpu.vector_store %arg7[%c0_6, %c0_7, %c0_8], %10 {strides = array<i32>} : memref<1x20x40xbf16, #tpu.memory_space<vmem>>, vector<1x20x40xbf16>,
    %c0_9 = arith.constant 0 : index
    %c0_10 = arith.constant 0 : index
    %c0_11 = arith.constant 0 : index
    %11 = vector.load %arg1[%c0_9, %c0_10, %c0_11] : memref<1x30x80xbf16, #tpu.memory_space<vmem>>, vector<1x20x80xbf16>
    %12 = vector.shape_cast %11 : vector<1x20x80xbf16> to vector<20x80xbf16>
    %c0_12 = arith.constant 0 : index
    %c1 = arith.constant 1 : index
    %c0_13 = arith.constant 0 : index
    %13 = vector.load %arg1[%c0_12, %c1, %c0_13] : memref<1x30x80xbf16, #tpu.memory_space<vmem>>, vector<1x20x80xbf16>
    %14 = vector.shape_cast %13 : vector<1x20x80xbf16> to vector<20x80xbf16>
    %15 = tpu.concatenate %12, %14 in 1 : vector<20x80xbf16>, vector<20x80xbf16> -> vector<20x160xbf16>
    %c0_14 = arith.constant 0 : index
    %c0_15 = arith.constant 0 : index
    %16 = vector.load %arg3[%c0_14, %c0_15] : memref<160x40xbf16, #tpu.memory_space<vmem>>, vector<160x40xbf16>
    %cst_16 = arith.constant dense<0.000000e+00> : vector<20x40xf32>
    %17 = tpu.matmul %15, %16, %cst_16 {dimension_numbers = #tpu.dot_dimension_numbers<[1], [0], [0], [1], [0, 0, 1, 1], [], []>} : vector<20x160xbf16>, vector<160x40xbf16>, vector<20x40xf32> -> vector<20x40xf32>
    %c0_17 = arith.constant 0 : index
    %c0_18 = arith.constant 0 : index
    %18 = vector.load %arg6[%c0_17, %c0_18] : memref<1x40xf32, #tpu.memory_space<vmem>>, vector<1x40xf32>
    %19 = vector.broadcast %18 : vector<1x40xf32> to vector<20x40xf32>
    %20 = arith.addf %17, %19 : vector<20x40xf32>
    %21 = arith.truncf %20 : vector<20x40xf32> to vector<20x40xbf16>
    %c0_19 = arith.constant 0 : index
    %c0_20 = arith.constant 0 : index
    %c0_21 = arith.constant 0 : index
    %22 = vector.load %arg8[%c0_19, %c0_20, %c0_21] : memref<1x20x40xbf16, #tpu.memory_space<vmem>>, vector<1x20x40xbf16>
    %23 = vector.shape_cast %22 : vector<1x20x40xbf16> to vector<20x40xbf16>
    %24 = vector.shape_cast %21 : vector<20x40xbf16> to vector<1x20x40xbf16>
    tpu.vector_store %arg8[%c0_19, %c0_20, %c0_21], %24 {strides = array<i32>} : memref<1x20x40xbf16, #tpu.memory_space<vmem>>, vector<1x20x40xbf16>,
    %c0_22 = arith.constant 0 : index
    %c0_23 = arith.constant 0 : index
    %c0_24 = arith.constant 0 : index
    %25 = vector.load %arg1[%c0_22, %c0_23, %c0_24] : memref<1x30x80xbf16, #tpu.memory_space<vmem>>, vector<1x20x80xbf16>
    %26 = vector.shape_cast %25 : vector<1x20x80xbf16> to vector<20x80xbf16>
    %c0_25 = arith.constant 0 : index
    %c5 = arith.constant 5 : index
    %c0_26 = arith.constant 0 : index
    %27 = vector.load %arg1[%c0_25, %c5, %c0_26] : memref<1x30x80xbf16, #tpu.memory_space<vmem>>, vector<1x20x80xbf16>
    %28 = vector.shape_cast %27 : vector<1x20x80xbf16> to vector<20x80xbf16>
    %29 = tpu.concatenate %26, %28 in 1 : vector<20x80xbf16>, vector<20x80xbf16> -> vector<20x160xbf16>
    %c0_27 = arith.constant 0 : index
    %c0_28 = arith.constant 0 : index
    %30 = vector.load %arg4[%c0_27, %c0_28] : memref<160x40xbf16, #tpu.memory_space<vmem>>, vector<160x40xbf16>
    %cst_29 = arith.constant dense<0.000000e+00> : vector<20x40xf32>
    %31 = tpu.matmul %29, %30, %cst_29 {dimension_numbers = #tpu.dot_dimension_numbers<[1], [0], [0], [1], [0, 0, 1, 1], [], []>} : vector<20x160xbf16>, vector<160x40xbf16>, vector<20x40xf32> -> vector<20x40xf32>
    %c0_30 = arith.constant 0 : index
    %c0_31 = arith.constant 0 : index
    %32 = vector.load %arg6[%c0_30, %c0_31] : memref<1x40xf32, #tpu.memory_space<vmem>>, vector<1x40xf32>
    %33 = vector.broadcast %32 : vector<1x40xf32> to vector<20x40xf32>
    %34 = arith.addf %31, %33 : vector<20x40xf32>
    %35 = arith.truncf %34 : vector<20x40xf32> to vector<20x40xbf16>
    %c0_32 = arith.constant 0 : index
    %c0_33 = arith.constant 0 : index
    %c0_34 = arith.constant 0 : index
    %36 = vector.load %arg9[%c0_32, %c0_33, %c0_34] : memref<1x20x40xbf16, #tpu.memory_space<vmem>>, vector<1x20x40xbf16>
    %37 = vector.shape_cast %36 : vector<1x20x40xbf16> to vector<20x40xbf16>
    %38 = vector.shape_cast %35 : vector<20x40xbf16> to vector<1x20x40xbf16>
    tpu.vector_store %arg9[%c0_32, %c0_33, %c0_34], %38 {strides = array<i32>} : memref<1x20x40xbf16, #tpu.memory_space<vmem>>, vector<1x20x40xbf16>,
    %c0_35 = arith.constant 0 : index
    %c0_36 = arith.constant 0 : index
    %c0_37 = arith.constant 0 : index
    %39 = vector.load %arg1[%c0_35, %c0_36, %c0_37] : memref<1x30x80xbf16, #tpu.memory_space<vmem>>, vector<1x20x80xbf16>
    %40 = vector.shape_cast %39 : vector<1x20x80xbf16> to vector<20x80xbf16>
    %c0_38 = arith.constant 0 : index
    %c1_39 = arith.constant 1 : index
    %c0_40 = arith.constant 0 : index
    %41 = vector.load %arg1[%c0_38, %c1_39, %c0_40] : memref<1x30x80xbf16, #tpu.memory_space<vmem>>, vector<1x20x80xbf16>
    %42 = vector.shape_cast %41 : vector<1x20x80xbf16> to vector<20x80xbf16>
    %c0_41 = arith.constant 0 : index
    %c5_42 = arith.constant 5 : index
    %c0_43 = arith.constant 0 : index
    %43 = vector.load %arg1[%c0_41, %c5_42, %c0_43] : memref<1x30x80xbf16, #tpu.memory_space<vmem>>, vector<1x20x80xbf16>
    %44 = vector.shape_cast %43 : vector<1x20x80xbf16> to vector<20x80xbf16>
    %c0_44 = arith.constant 0 : index
    %c6 = arith.constant 6 : index
    %c0_45 = arith.constant 0 : index
    %45 = vector.load %arg1[%c0_44, %c6, %c0_45] : memref<1x30x80xbf16, #tpu.memory_space<vmem>>, vector<1x20x80xbf16>
    %46 = vector.shape_cast %45 : vector<1x20x80xbf16> to vector<20x80xbf16>
    %47 = tpu.concatenate %40, %42, %44, %46 in 1 : vector<20x80xbf16>, vector<20x80xbf16>, vector<20x80xbf16>, vector<20x80xbf16> -> vector<20x320xbf16>
    %c0_46 = arith.constant 0 : index
    %c0_47 = arith.constant 0 : index
    %48 = vector.load %arg5[%c0_46, %c0_47] : memref<320x40xbf16, #tpu.memory_space<vmem>>, vector<320x40xbf16>
    %cst_48 = arith.constant dense<0.000000e+00> : vector<20x40xf32>
    %49 = tpu.matmul %47, %48, %cst_48 {dimension_numbers = #tpu.dot_dimension_numbers<[1], [0], [0], [1], [0, 0, 1, 1], [], []>} : vector<20x320xbf16>, vector<320x40xbf16>, vector<20x40xf32> -> vector<20x40xf32>
    %c0_49 = arith.constant 0 : index
    %c0_50 = arith.constant 0 : index
    %50 = vector.load %arg6[%c0_49, %c0_50] : memref<1x40xf32, #tpu.memory_space<vmem>>, vector<1x40xf32>
    %51 = vector.broadcast %50 : vector<1x40xf32> to vector<20x40xf32>
    %52 = arith.addf %49, %51 : vector<20x40xf32>
    %53 = arith.truncf %52 : vector<20x40xf32> to vector<20x40xbf16>
    %c0_51 = arith.constant 0 : index
    %c0_52 = arith.constant 0 : index
    %c0_53 = arith.constant 0 : index
    %54 = vector.load %arg10[%c0_51, %c0_52, %c0_53] : memref<1x20x40xbf16, #tpu.memory_space<vmem>>, vector<1x20x40xbf16>
    %55 = vector.shape_cast %54 : vector<1x20x40xbf16> to vector<20x40xbf16>
    %56 = vector.shape_cast %53 : vector<20x40xbf16> to vector<1x20x40xbf16>
    tpu.vector_store %arg10[%c0_51, %c0_52, %c0_53], %56 {strides = array<i32>} : memref<1x20x40xbf16, #tpu.memory_space<vmem>>, vector<1x20x40xbf16>,
    return
  }
  func.func @transform_0(%arg0: i32) -> (i32, i32, i32) {
    %c0_i32 = arith.constant 0 : i32
    %c0_i32_0 = arith.constant 0 : i32
    %c0_i32_1 = arith.constant 0 : i32
    return %arg0, %c0_i32, %c0_i32_0 : i32, i32, i32
  }
  func.func @transform_1(%arg0: i32) -> (i32, i32) {
    %c0_i32 = arith.constant 0 : i32
    %c0_i32_0 = arith.constant 0 : i32
    %c0_i32_1 = arith.constant 0 : i32
    return %c0_i32, %c0_i32_0 : i32, i32
  }
  func.func @transform_2(%arg0: i32) -> (i32, i32) {
    %c0_i32 = arith.constant 0 : i32
    %c0_i32_0 = arith.constant 0 : i32
    %c0_i32_1 = arith.constant 0 : i32
    return %c0_i32, %c0_i32_0 : i32, i32
  }
  func.func @transform_3(%arg0: i32) -> (i32, i32) {
    %c0_i32 = arith.constant 0 : i32
    %c0_i32_0 = arith.constant 0 : i32
    %c0_i32_1 = arith.constant 0 : i32
    return %c0_i32, %c0_i32_0 : i32, i32
  }
  func.func @transform_4(%arg0: i32) -> (i32, i32) {
    %c0_i32 = arith.constant 0 : i32
    %c0_i32_0 = arith.constant 0 : i32
    %c0_i32_1 = arith.constant 0 : i32
    return %c0_i32, %c0_i32_0 : i32, i32
  }
  func.func @transform_5(%arg0: i32) -> (i32, i32) {
    %c0_i32 = arith.constant 0 : i32
    %c0_i32_0 = arith.constant 0 : i32
    %c0_i32_1 = arith.constant 0 : i32
    return %c0_i32, %c0_i32_0 : i32, i32
  }
  func.func @transform_6(%arg0: i32) -> (i32, i32, i32) {
    %c0_i32 = arith.constant 0 : i32
    %c0_i32_0 = arith.constant 0 : i32
    %c0_i32_1 = arith.constant 0 : i32
    return %arg0, %c0_i32, %c0_i32_0 : i32, i32, i32
  }
  func.func @transform_7(%arg0: i32) -> (i32, i32, i32) {
    %c0_i32 = arith.constant 0 : i32
    %c0_i32_0 = arith.constant 0 : i32
    %c0_i32_1 = arith.constant 0 : i32
    return %arg0, %c0_i32, %c0_i32_0 : i32, i32, i32
  }
  func.func @transform_8(%arg0: i32) -> (i32, i32, i32) {
    %c0_i32 = arith.constant 0 : i32
    %c0_i32_0 = arith.constant 0 : i32
    %c0_i32_1 = arith.constant 0 : i32
    return %arg0, %c0_i32, %c0_i32_0 : i32, i32, i32
  }
  func.func @transform_9(%arg0: i32) -> (i32, i32, i32) {
    %c0_i32 = arith.constant 0 : i32
    %c0_i32_0 = arith.constant 0 : i32
    %c0_i32_1 = arith.constant 0 : i32
    return %arg0, %c0_i32, %c0_i32_0 : i32, i32, i32
  }
}

module attributes {stable_mosaic.version = 11 : i64} {
  func.func @_upconv_kernel(%arg0: i32, %arg1: memref<1x90x40xbf16, #tpu.memory_space<vmem>>, %arg2: memref<1x90x40xbf16, #tpu.memory_space<vmem>>, %arg3: memref<80x40xbf16, #tpu.memory_space<vmem>>, %arg4: memref<160x40xbf16, #tpu.memory_space<vmem>>, %arg5: memref<160x40xbf16, #tpu.memory_space<vmem>>, %arg6: memref<320x40xbf16, #tpu.memory_space<vmem>>, %arg7: memref<1x40xf32, #tpu.memory_space<vmem>>, %arg8: memref<1x72x40xbf16, #tpu.memory_space<vmem>>, %arg9: memref<1x72x40xbf16, #tpu.memory_space<vmem>>, %arg10: memref<1x72x40xbf16, #tpu.memory_space<vmem>>, %arg11: memref<1x72x40xbf16, #tpu.memory_space<vmem>>) attributes {dimension_semantics = [#tpu.dimension_semantics<parallel>], iteration_bounds = array<i64: 2>, scalar_prefetch = 0 : i64, scratch_operands = 0 : i64, tpu.core_type = #tpu.core_type<tc>, window_params = [{transform_indices = @transform_0, window_bounds = array<i64: 1, 90, 40>}, {transform_indices = @transform_1, window_bounds = array<i64: 1, 90, 40>}, {pipeline_mode = #tpu.pipeline_mode<synchronous>, transform_indices = @transform_2, window_bounds = array<i64: 80, 40>}, {pipeline_mode = #tpu.pipeline_mode<synchronous>, transform_indices = @transform_3, window_bounds = array<i64: 160, 40>}, {pipeline_mode = #tpu.pipeline_mode<synchronous>, transform_indices = @transform_4, window_bounds = array<i64: 160, 40>}, {pipeline_mode = #tpu.pipeline_mode<synchronous>, transform_indices = @transform_5, window_bounds = array<i64: 320, 40>}, {pipeline_mode = #tpu.pipeline_mode<synchronous>, transform_indices = @transform_6, window_bounds = array<i64: 1, 40>}, {transform_indices = @transform_7, window_bounds = array<i64: 1, 72, 40>}, {transform_indices = @transform_8, window_bounds = array<i64: 1, 72, 40>}, {transform_indices = @transform_9, window_bounds = array<i64: 1, 72, 40>}, {transform_indices = @transform_10, window_bounds = array<i64: 1, 72, 40>}]} {
    %c0 = arith.constant 0 : index
    %c0_0 = arith.constant 0 : index
    %c0_1 = arith.constant 0 : index
    %0 = vector.load %arg1[%c0, %c0_0, %c0_1] : memref<1x90x40xbf16, #tpu.memory_space<vmem>>, vector<1x72x40xbf16>
    %1 = vector.shape_cast %0 : vector<1x72x40xbf16> to vector<72x40xbf16>
    %c0_2 = arith.constant 0 : index
    %c0_3 = arith.constant 0 : index
    %c0_4 = arith.constant 0 : index
    %2 = vector.load %arg2[%c0_2, %c0_3, %c0_4] : memref<1x90x40xbf16, #tpu.memory_space<vmem>>, vector<1x72x40xbf16>
    %3 = vector.shape_cast %2 : vector<1x72x40xbf16> to vector<72x40xbf16>
    %4 = tpu.concatenate %1, %3 in 1 : vector<72x40xbf16>, vector<72x40xbf16> -> vector<72x80xbf16>
    %c0_5 = arith.constant 0 : index
    %c0_6 = arith.constant 0 : index
    %5 = vector.load %arg3[%c0_5, %c0_6] : memref<80x40xbf16, #tpu.memory_space<vmem>>, vector<80x40xbf16>
    %cst = arith.constant dense<0.000000e+00> : vector<72x40xf32>
    %6 = tpu.matmul %4, %5, %cst {dimension_numbers = #tpu.dot_dimension_numbers<[1], [0], [0], [1], [0, 0, 1, 1], [], []>} : vector<72x80xbf16>, vector<80x40xbf16>, vector<72x40xf32> -> vector<72x40xf32>
    %c0_7 = arith.constant 0 : index
    %c0_8 = arith.constant 0 : index
    %7 = vector.load %arg7[%c0_7, %c0_8] : memref<1x40xf32, #tpu.memory_space<vmem>>, vector<1x40xf32>
    %8 = vector.broadcast %7 : vector<1x40xf32> to vector<72x40xf32>
    %9 = arith.addf %6, %8 : vector<72x40xf32>
    %10 = arith.truncf %9 : vector<72x40xf32> to vector<72x40xbf16>
    %c0_9 = arith.constant 0 : index
    %c0_10 = arith.constant 0 : index
    %c0_11 = arith.constant 0 : index
    %11 = vector.load %arg8[%c0_9, %c0_10, %c0_11] : memref<1x72x40xbf16, #tpu.memory_space<vmem>>, vector<1x72x40xbf16>
    %12 = vector.shape_cast %11 : vector<1x72x40xbf16> to vector<72x40xbf16>
    %13 = vector.shape_cast %10 : vector<72x40xbf16> to vector<1x72x40xbf16>
    tpu.vector_store %arg8[%c0_9, %c0_10, %c0_11], %13 {strides = array<i32>} : memref<1x72x40xbf16, #tpu.memory_space<vmem>>, vector<1x72x40xbf16>,
    %c0_12 = arith.constant 0 : index
    %c0_13 = arith.constant 0 : index
    %c0_14 = arith.constant 0 : index
    %14 = vector.load %arg1[%c0_12, %c0_13, %c0_14] : memref<1x90x40xbf16, #tpu.memory_space<vmem>>, vector<1x72x40xbf16>
    %15 = vector.shape_cast %14 : vector<1x72x40xbf16> to vector<72x40xbf16>
    %c0_15 = arith.constant 0 : index
    %c0_16 = arith.constant 0 : index
    %c0_17 = arith.constant 0 : index
    %16 = vector.load %arg2[%c0_15, %c0_16, %c0_17] : memref<1x90x40xbf16, #tpu.memory_space<vmem>>, vector<1x72x40xbf16>
    %17 = vector.shape_cast %16 : vector<1x72x40xbf16> to vector<72x40xbf16>
    %c0_18 = arith.constant 0 : index
    %c1 = arith.constant 1 : index
    %c0_19 = arith.constant 0 : index
    %18 = vector.load %arg1[%c0_18, %c1, %c0_19] : memref<1x90x40xbf16, #tpu.memory_space<vmem>>, vector<1x72x40xbf16>
    %19 = vector.shape_cast %18 : vector<1x72x40xbf16> to vector<72x40xbf16>
    %c0_20 = arith.constant 0 : index
    %c1_21 = arith.constant 1 : index
    %c0_22 = arith.constant 0 : index
    %20 = vector.load %arg2[%c0_20, %c1_21, %c0_22] : memref<1x90x40xbf16, #tpu.memory_space<vmem>>, vector<1x72x40xbf16>
    %21 = vector.shape_cast %20 : vector<1x72x40xbf16> to vector<72x40xbf16>
    %22 = tpu.concatenate %15, %17, %19, %21 in 1 : vector<72x40xbf16>, vector<72x40xbf16>, vector<72x40xbf16>, vector<72x40xbf16> -> vector<72x160xbf16>
    %c0_23 = arith.constant 0 : index
    %c0_24 = arith.constant 0 : index
    %23 = vector.load %arg4[%c0_23, %c0_24] : memref<160x40xbf16, #tpu.memory_space<vmem>>, vector<160x40xbf16>
    %cst_25 = arith.constant dense<0.000000e+00> : vector<72x40xf32>
    %24 = tpu.matmul %22, %23, %cst_25 {dimension_numbers = #tpu.dot_dimension_numbers<[1], [0], [0], [1], [0, 0, 1, 1], [], []>} : vector<72x160xbf16>, vector<160x40xbf16>, vector<72x40xf32> -> vector<72x40xf32>
    %c0_26 = arith.constant 0 : index
    %c0_27 = arith.constant 0 : index
    %25 = vector.load %arg7[%c0_26, %c0_27] : memref<1x40xf32, #tpu.memory_space<vmem>>, vector<1x40xf32>
    %26 = vector.broadcast %25 : vector<1x40xf32> to vector<72x40xf32>
    %27 = arith.addf %24, %26 : vector<72x40xf32>
    %28 = arith.truncf %27 : vector<72x40xf32> to vector<72x40xbf16>
    %c0_28 = arith.constant 0 : index
    %c0_29 = arith.constant 0 : index
    %c0_30 = arith.constant 0 : index
    %29 = vector.load %arg9[%c0_28, %c0_29, %c0_30] : memref<1x72x40xbf16, #tpu.memory_space<vmem>>, vector<1x72x40xbf16>
    %30 = vector.shape_cast %29 : vector<1x72x40xbf16> to vector<72x40xbf16>
    %31 = vector.shape_cast %28 : vector<72x40xbf16> to vector<1x72x40xbf16>
    tpu.vector_store %arg9[%c0_28, %c0_29, %c0_30], %31 {strides = array<i32>} : memref<1x72x40xbf16, #tpu.memory_space<vmem>>, vector<1x72x40xbf16>,
    %c0_31 = arith.constant 0 : index
    %c0_32 = arith.constant 0 : index
    %c0_33 = arith.constant 0 : index
    %32 = vector.load %arg1[%c0_31, %c0_32, %c0_33] : memref<1x90x40xbf16, #tpu.memory_space<vmem>>, vector<1x72x40xbf16>
    %33 = vector.shape_cast %32 : vector<1x72x40xbf16> to vector<72x40xbf16>
    %c0_34 = arith.constant 0 : index
    %c0_35 = arith.constant 0 : index
    %c0_36 = arith.constant 0 : index
    %34 = vector.load %arg2[%c0_34, %c0_35, %c0_36] : memref<1x90x40xbf16, #tpu.memory_space<vmem>>, vector<1x72x40xbf16>
    %35 = vector.shape_cast %34 : vector<1x72x40xbf16> to vector<72x40xbf16>
    %c0_37 = arith.constant 0 : index
    %c9 = arith.constant 9 : index
    %c0_38 = arith.constant 0 : index
    %36 = vector.load %arg1[%c0_37, %c9, %c0_38] : memref<1x90x40xbf16, #tpu.memory_space<vmem>>, vector<1x72x40xbf16>
    %37 = vector.shape_cast %36 : vector<1x72x40xbf16> to vector<72x40xbf16>
    %c0_39 = arith.constant 0 : index
    %c9_40 = arith.constant 9 : index
    %c0_41 = arith.constant 0 : index
    %38 = vector.load %arg2[%c0_39, %c9_40, %c0_41] : memref<1x90x40xbf16, #tpu.memory_space<vmem>>, vector<1x72x40xbf16>
    %39 = vector.shape_cast %38 : vector<1x72x40xbf16> to vector<72x40xbf16>
    %40 = tpu.concatenate %33, %35, %37, %39 in 1 : vector<72x40xbf16>, vector<72x40xbf16>, vector<72x40xbf16>, vector<72x40xbf16> -> vector<72x160xbf16>
    %c0_42 = arith.constant 0 : index
    %c0_43 = arith.constant 0 : index
    %41 = vector.load %arg5[%c0_42, %c0_43] : memref<160x40xbf16, #tpu.memory_space<vmem>>, vector<160x40xbf16>
    %cst_44 = arith.constant dense<0.000000e+00> : vector<72x40xf32>
    %42 = tpu.matmul %40, %41, %cst_44 {dimension_numbers = #tpu.dot_dimension_numbers<[1], [0], [0], [1], [0, 0, 1, 1], [], []>} : vector<72x160xbf16>, vector<160x40xbf16>, vector<72x40xf32> -> vector<72x40xf32>
    %c0_45 = arith.constant 0 : index
    %c0_46 = arith.constant 0 : index
    %43 = vector.load %arg7[%c0_45, %c0_46] : memref<1x40xf32, #tpu.memory_space<vmem>>, vector<1x40xf32>
    %44 = vector.broadcast %43 : vector<1x40xf32> to vector<72x40xf32>
    %45 = arith.addf %42, %44 : vector<72x40xf32>
    %46 = arith.truncf %45 : vector<72x40xf32> to vector<72x40xbf16>
    %c0_47 = arith.constant 0 : index
    %c0_48 = arith.constant 0 : index
    %c0_49 = arith.constant 0 : index
    %47 = vector.load %arg10[%c0_47, %c0_48, %c0_49] : memref<1x72x40xbf16, #tpu.memory_space<vmem>>, vector<1x72x40xbf16>
    %48 = vector.shape_cast %47 : vector<1x72x40xbf16> to vector<72x40xbf16>
    %49 = vector.shape_cast %46 : vector<72x40xbf16> to vector<1x72x40xbf16>
    tpu.vector_store %arg10[%c0_47, %c0_48, %c0_49], %49 {strides = array<i32>} : memref<1x72x40xbf16, #tpu.memory_space<vmem>>, vector<1x72x40xbf16>,
    %c0_50 = arith.constant 0 : index
    %c0_51 = arith.constant 0 : index
    %c0_52 = arith.constant 0 : index
    %50 = vector.load %arg1[%c0_50, %c0_51, %c0_52] : memref<1x90x40xbf16, #tpu.memory_space<vmem>>, vector<1x72x40xbf16>
    %51 = vector.shape_cast %50 : vector<1x72x40xbf16> to vector<72x40xbf16>
    %c0_53 = arith.constant 0 : index
    %c0_54 = arith.constant 0 : index
    %c0_55 = arith.constant 0 : index
    %52 = vector.load %arg2[%c0_53, %c0_54, %c0_55] : memref<1x90x40xbf16, #tpu.memory_space<vmem>>, vector<1x72x40xbf16>
    %53 = vector.shape_cast %52 : vector<1x72x40xbf16> to vector<72x40xbf16>
    %c0_56 = arith.constant 0 : index
    %c1_57 = arith.constant 1 : index
    %c0_58 = arith.constant 0 : index
    %54 = vector.load %arg1[%c0_56, %c1_57, %c0_58] : memref<1x90x40xbf16, #tpu.memory_space<vmem>>, vector<1x72x40xbf16>
    %55 = vector.shape_cast %54 : vector<1x72x40xbf16> to vector<72x40xbf16>
    %c0_59 = arith.constant 0 : index
    %c1_60 = arith.constant 1 : index
    %c0_61 = arith.constant 0 : index
    %56 = vector.load %arg2[%c0_59, %c1_60, %c0_61] : memref<1x90x40xbf16, #tpu.memory_space<vmem>>, vector<1x72x40xbf16>
    %57 = vector.shape_cast %56 : vector<1x72x40xbf16> to vector<72x40xbf16>
    %c0_62 = arith.constant 0 : index
    %c9_63 = arith.constant 9 : index
    %c0_64 = arith.constant 0 : index
    %58 = vector.load %arg1[%c0_62, %c9_63, %c0_64] : memref<1x90x40xbf16, #tpu.memory_space<vmem>>, vector<1x72x40xbf16>
    %59 = vector.shape_cast %58 : vector<1x72x40xbf16> to vector<72x40xbf16>
    %c0_65 = arith.constant 0 : index
    %c9_66 = arith.constant 9 : index
    %c0_67 = arith.constant 0 : index
    %60 = vector.load %arg2[%c0_65, %c9_66, %c0_67] : memref<1x90x40xbf16, #tpu.memory_space<vmem>>, vector<1x72x40xbf16>
    %61 = vector.shape_cast %60 : vector<1x72x40xbf16> to vector<72x40xbf16>
    %c0_68 = arith.constant 0 : index
    %c10 = arith.constant 10 : index
    %c0_69 = arith.constant 0 : index
    %62 = vector.load %arg1[%c0_68, %c10, %c0_69] : memref<1x90x40xbf16, #tpu.memory_space<vmem>>, vector<1x72x40xbf16>
    %63 = vector.shape_cast %62 : vector<1x72x40xbf16> to vector<72x40xbf16>
    %c0_70 = arith.constant 0 : index
    %c10_71 = arith.constant 10 : index
    %c0_72 = arith.constant 0 : index
    %64 = vector.load %arg2[%c0_70, %c10_71, %c0_72] : memref<1x90x40xbf16, #tpu.memory_space<vmem>>, vector<1x72x40xbf16>
    %65 = vector.shape_cast %64 : vector<1x72x40xbf16> to vector<72x40xbf16>
    %66 = tpu.concatenate %51, %53, %55, %57, %59, %61, %63, %65 in 1 : vector<72x40xbf16>, vector<72x40xbf16>, vector<72x40xbf16>, vector<72x40xbf16>, vector<72x40xbf16>, vector<72x40xbf16>, vector<72x40xbf16>, vector<72x40xbf16> -> vector<72x320xbf16>
    %c0_73 = arith.constant 0 : index
    %c0_74 = arith.constant 0 : index
    %67 = vector.load %arg6[%c0_73, %c0_74] : memref<320x40xbf16, #tpu.memory_space<vmem>>, vector<320x40xbf16>
    %cst_75 = arith.constant dense<0.000000e+00> : vector<72x40xf32>
    %68 = tpu.matmul %66, %67, %cst_75 {dimension_numbers = #tpu.dot_dimension_numbers<[1], [0], [0], [1], [0, 0, 1, 1], [], []>} : vector<72x320xbf16>, vector<320x40xbf16>, vector<72x40xf32> -> vector<72x40xf32>
    %c0_76 = arith.constant 0 : index
    %c0_77 = arith.constant 0 : index
    %69 = vector.load %arg7[%c0_76, %c0_77] : memref<1x40xf32, #tpu.memory_space<vmem>>, vector<1x40xf32>
    %70 = vector.broadcast %69 : vector<1x40xf32> to vector<72x40xf32>
    %71 = arith.addf %68, %70 : vector<72x40xf32>
    %72 = arith.truncf %71 : vector<72x40xf32> to vector<72x40xbf16>
    %c0_78 = arith.constant 0 : index
    %c0_79 = arith.constant 0 : index
    %c0_80 = arith.constant 0 : index
    %73 = vector.load %arg11[%c0_78, %c0_79, %c0_80] : memref<1x72x40xbf16, #tpu.memory_space<vmem>>, vector<1x72x40xbf16>
    %74 = vector.shape_cast %73 : vector<1x72x40xbf16> to vector<72x40xbf16>
    %75 = vector.shape_cast %72 : vector<72x40xbf16> to vector<1x72x40xbf16>
    tpu.vector_store %arg11[%c0_78, %c0_79, %c0_80], %75 {strides = array<i32>} : memref<1x72x40xbf16, #tpu.memory_space<vmem>>, vector<1x72x40xbf16>,
    return
  }
  func.func @transform_0(%arg0: i32) -> (i32, i32, i32) {
    %c0_i32 = arith.constant 0 : i32
    %c0_i32_0 = arith.constant 0 : i32
    %c0_i32_1 = arith.constant 0 : i32
    return %arg0, %c0_i32, %c0_i32_0 : i32, i32, i32
  }
  func.func @transform_1(%arg0: i32) -> (i32, i32, i32) {
    %c0_i32 = arith.constant 0 : i32
    %c0_i32_0 = arith.constant 0 : i32
    %c0_i32_1 = arith.constant 0 : i32
    return %arg0, %c0_i32, %c0_i32_0 : i32, i32, i32
  }
  func.func @transform_2(%arg0: i32) -> (i32, i32) {
    %c0_i32 = arith.constant 0 : i32
    %c0_i32_0 = arith.constant 0 : i32
    %c0_i32_1 = arith.constant 0 : i32
    return %c0_i32, %c0_i32_0 : i32, i32
  }
  func.func @transform_3(%arg0: i32) -> (i32, i32) {
    %c0_i32 = arith.constant 0 : i32
    %c0_i32_0 = arith.constant 0 : i32
    %c0_i32_1 = arith.constant 0 : i32
    return %c0_i32, %c0_i32_0 : i32, i32
  }
  func.func @transform_4(%arg0: i32) -> (i32, i32) {
    %c0_i32 = arith.constant 0 : i32
    %c0_i32_0 = arith.constant 0 : i32
    %c0_i32_1 = arith.constant 0 : i32
    return %c0_i32, %c0_i32_0 : i32, i32
  }
  func.func @transform_5(%arg0: i32) -> (i32, i32) {
    %c0_i32 = arith.constant 0 : i32
    %c0_i32_0 = arith.constant 0 : i32
    %c0_i32_1 = arith.constant 0 : i32
    return %c0_i32, %c0_i32_0 : i32, i32
  }
  func.func @transform_6(%arg0: i32) -> (i32, i32) {
    %c0_i32 = arith.constant 0 : i32
    %c0_i32_0 = arith.constant 0 : i32
    %c0_i32_1 = arith.constant 0 : i32
    return %c0_i32, %c0_i32_0 : i32, i32
  }
  func.func @transform_7(%arg0: i32) -> (i32, i32, i32) {
    %c0_i32 = arith.constant 0 : i32
    %c0_i32_0 = arith.constant 0 : i32
    %c0_i32_1 = arith.constant 0 : i32
    return %arg0, %c0_i32, %c0_i32_0 : i32, i32, i32
  }
  func.func @transform_8(%arg0: i32) -> (i32, i32, i32) {
    %c0_i32 = arith.constant 0 : i32
    %c0_i32_0 = arith.constant 0 : i32
    %c0_i32_1 = arith.constant 0 : i32
    return %arg0, %c0_i32, %c0_i32_0 : i32, i32, i32
  }
  func.func @transform_9(%arg0: i32) -> (i32, i32, i32) {
    %c0_i32 = arith.constant 0 : i32
    %c0_i32_0 = arith.constant 0 : i32
    %c0_i32_1 = arith.constant 0 : i32
    return %arg0, %c0_i32, %c0_i32_0 : i32, i32, i32
  }
  func.func @transform_10(%arg0: i32) -> (i32, i32, i32) {
    %c0_i32 = arith.constant 0 : i32
    %c0_i32_0 = arith.constant 0 : i32
    %c0_i32_1 = arith.constant 0 : i32
    return %arg0, %c0_i32, %c0_i32_0 : i32, i32, i32
  }
}

module attributes {stable_mosaic.version = 11 : i64} {
  func.func @_head_kernel(%arg0: i32, %arg1: i32, %arg2: memref<1x256x40xbf16, #tpu.memory_space<vmem>>, %arg3: memref<1x256x20xbf16, #tpu.memory_space<vmem>>, %arg4: memref<5x60xbf16, #tpu.memory_space<vmem>>, %arg5: memref<5x1xf32, #tpu.memory_space<vmem>>, %arg6: memref<1x5x256xf32, #tpu.memory_space<vmem>>) attributes {dimension_semantics = [#tpu.dimension_semantics<parallel>, #tpu.dimension_semantics<parallel>], iteration_bounds = array<i64: 2, 1>, scalar_prefetch = 0 : i64, scratch_operands = 0 : i64, tpu.core_type = #tpu.core_type<tc>, window_params = [{transform_indices = @transform_0, window_bounds = array<i64: 1, 256, 40>}, {transform_indices = @transform_1, window_bounds = array<i64: 1, 256, 20>}, {pipeline_mode = #tpu.pipeline_mode<synchronous>, transform_indices = @transform_2, window_bounds = array<i64: 5, 60>}, {pipeline_mode = #tpu.pipeline_mode<synchronous>, transform_indices = @transform_3, window_bounds = array<i64: 5, 1>}, {transform_indices = @transform_4, window_bounds = array<i64: 1, 5, 256>}]} {
    %c0 = arith.constant 0 : index
    %c0_0 = arith.constant 0 : index
    %c0_1 = arith.constant 0 : index
    %0 = vector.load %arg2[%c0, %c0_0, %c0_1] : memref<1x256x40xbf16, #tpu.memory_space<vmem>>, vector<1x256x40xbf16>
    %1 = vector.shape_cast %0 : vector<1x256x40xbf16> to vector<256x40xbf16>
    %c0_2 = arith.constant 0 : index
    %c0_3 = arith.constant 0 : index
    %c0_4 = arith.constant 0 : index
    %2 = vector.load %arg3[%c0_2, %c0_3, %c0_4] : memref<1x256x20xbf16, #tpu.memory_space<vmem>>, vector<1x256x20xbf16>
    %3 = vector.shape_cast %2 : vector<1x256x20xbf16> to vector<256x20xbf16>
    %4 = tpu.concatenate %1, %3 in 1 : vector<256x40xbf16>, vector<256x20xbf16> -> vector<256x60xbf16>
    %c0_5 = arith.constant 0 : index
    %c0_6 = arith.constant 0 : index
    %5 = vector.load %arg4[%c0_5, %c0_6] : memref<5x60xbf16, #tpu.memory_space<vmem>>, vector<5x60xbf16>
    %cst = arith.constant dense<0.000000e+00> : vector<5x256xf32>
    %6 = tpu.matmul %5, %4, %cst {dimension_numbers = #tpu.dot_dimension_numbers<[1], [1], [0], [0], [0, 0, 1, 0], [], []>} : vector<5x60xbf16>, vector<256x60xbf16>, vector<5x256xf32> -> vector<5x256xf32>
    %c0_7 = arith.constant 0 : index
    %c0_8 = arith.constant 0 : index
    %7 = vector.load %arg5[%c0_7, %c0_8] : memref<5x1xf32, #tpu.memory_space<vmem>>, vector<5x1xf32>
    %8 = vector.broadcast %7 : vector<5x1xf32> to vector<5x256xf32>
    %9 = arith.addf %6, %8 : vector<5x256xf32>
    %c0_9 = arith.constant 0 : index
    %c0_10 = arith.constant 0 : index
    %c0_11 = arith.constant 0 : index
    %10 = vector.load %arg6[%c0_9, %c0_10, %c0_11] : memref<1x5x256xf32, #tpu.memory_space<vmem>>, vector<1x5x256xf32>
    %11 = vector.shape_cast %10 : vector<1x5x256xf32> to vector<5x256xf32>
    %12 = vector.shape_cast %9 : vector<5x256xf32> to vector<1x5x256xf32>
    tpu.vector_store %arg6[%c0_9, %c0_10, %c0_11], %12 {strides = array<i32>} : memref<1x5x256xf32, #tpu.memory_space<vmem>>, vector<1x5x256xf32>,
    return
  }
  func.func @transform_0(%arg0: i32, %arg1: i32) -> (i32, i32, i32) {
    %c0_i32 = arith.constant 0 : i32
    %c0_i32_0 = arith.constant 0 : i32
    return %arg0, %arg1, %c0_i32 : i32, i32, i32
  }
  func.func @transform_1(%arg0: i32, %arg1: i32) -> (i32, i32, i32) {
    %c0_i32 = arith.constant 0 : i32
    %c0_i32_0 = arith.constant 0 : i32
    return %arg0, %arg1, %c0_i32 : i32, i32, i32
  }
  func.func @transform_2(%arg0: i32, %arg1: i32) -> (i32, i32) {
    %c0_i32 = arith.constant 0 : i32
    %c0_i32_0 = arith.constant 0 : i32
    %c0_i32_1 = arith.constant 0 : i32
    return %c0_i32, %c0_i32_0 : i32, i32
  }
  func.func @transform_3(%arg0: i32, %arg1: i32) -> (i32, i32) {
    %c0_i32 = arith.constant 0 : i32
    %c0_i32_0 = arith.constant 0 : i32
    %c0_i32_1 = arith.constant 0 : i32
    return %c0_i32, %c0_i32_0 : i32, i32
  }
  func.func @transform_4(%arg0: i32, %arg1: i32) -> (i32, i32, i32) {
    %c0_i32 = arith.constant 0 : i32
    %c0_i32_0 = arith.constant 0 : i32
    return %arg0, %c0_i32, %arg1 : i32, i32, i32
  }
}

</mosaic_0001>

<llo_original>
// kernel: fcn_forward.8
$region0: #{fcn_forward.8}
  #allocation0 [shape = 'u32[]', space=smem, size = 0x4, offset = 0x4, fixed_abs, tag = 'smem constant byte address 0x4 - core index']
  #allocation1 [shape = 'u32[72,128]{1,0:T(1,128)}', space=vmem, size = 0x9000, scoped, tag = 'internal scratch']
  %s0 = inlined_call_operand.vmem [shape: bf16[2,1,342,3], index: 0, kind: input, shape index: {}]
  %s1 = inlined_call_operand.vmem [shape: bf16[27,20], index: 1, kind: input, shape index: {}]
  %s2 = inlined_call_operand.vmem [shape: f32[1,20], index: 2, kind: input, shape index: {}]
  %s3 = inlined_call_operand.vmem [shape: bf16[2,288,20], index: 3, kind: output, shape index: {}]
  %s4 = sld [smem:[#allocation0]]
  $region45: #{fcn_forward.8} parent=0
    _
  %s6 = ssub.s32 1, %s4
  %s7 = scalar_select 0, %s6, %s4
  loop: start=0, step=1, limit=4
  $region2: #{fcn_forward.8} parent=0 // loop_pre_header
    _
  $region3: #{fcn_forward.8} parent=0 // loop_header
    %s9 = sphi 0, %s13
    %p10 = scmp.ge.s32.totalorder %s9, 4
    %s19 = sphi 0, %s21
    %s22 = sphi 0, %s19
    %s23 = sphi 0, %s22
    %s39 = sphi 0, %s23
    %s43 = sphi 0, %s43
    %s45 = sphi 0, %s43
    %s46 = sphi 0, %s45
    %s60 = sphi 0, %s46
    %s64 = sphi 0, %s64
    %s66 = sphi 0, %s64
    %s67 = sphi 0, %s66
    %s81 = sphi 0, %s67
    %s87 = sphi 0, %s89
    %s90 = sphi 0, %s87
    %s91 = sphi 0, %s90
    %s107 = sphi 0, %s91
  $region4: #{fcn_forward.8} parent=0 // loop_header_branch
    %12 = sbr.rel (%p10) target = $region8
  $region5: #{fcn_forward.8} parent=0 // loop_body
    %s14 = ssub.s32 %s9, 1
    %s15 = ssub.s32 %s9, 2
    %s16 = sadd.s32 %s9, 1
    %s17 = ssub.s32 %s9, %s16
    %p18 = scmp.eq.s32.totalorder %s17, 0
    %s20 = sadd.s32 %s19, 1
    %s21 = scalar_select %p18, %s19, %s20
    %p24 = pneg %p18
    %p25 = scmp.eq.s32.totalorder %s9, 1
    %p26 = por %p24, %p25
    %p27 = scmp.ne.s32.totalorder %s19, %s22
    %p28 = scmp.eq.s32.totalorder %s9, 0
    %p29 = por %p27, %p28
    %p30 = scmp.ne.s32.totalorder %s19, %s22
    %p31 = scmp.eq.s32.totalorder %s14, 1
    %p32 = por %p30, %p31
    %p33 = scmp.ne.s32.totalorder %s22, %s23
    %p34 = scmp.eq.s32.totalorder %s14, 0
    %p35 = por %p33, %p34
    %p36 = scmp.ne.s32.totalorder %s22, %s23
    %p37 = scmp.eq.s32.totalorder %s15, 1
    %p38 = por %p36, %p37
    %p40 = scmp.ne.s32.totalorder %s23, %s39
    %p41 = scmp.eq.s32.totalorder %s15, 0
    %p42 = por %p40, %p41
    %s44 = sadd.s32 %s43, 1
    %p47 = scmp.eq.s32.totalorder %s9, 1
    %p48 = scmp.ne.s32.totalorder %s43, %s45
    %p49 = scmp.eq.s32.totalorder %s9, 0
    %p50 = por %p48, %p49
    %p51 = scmp.ne.s32.totalorder %s43, %s45
    %p52 = scmp.eq.s32.totalorder %s14, 1
    %p53 = por %p51, %p52
    %p54 = scmp.ne.s32.totalorder %s45, %s46
    %p55 = scmp.eq.s32.totalorder %s14, 0
    %p56 = por %p54, %p55
    %p57 = scmp.ne.s32.totalorder %s45, %s46
    %p58 = scmp.eq.s32.totalorder %s15, 1
    %p59 = por %p57, %p58
    %p61 = scmp.ne.s32.totalorder %s46, %s60
    %p62 = scmp.eq.s32.totalorder %s15, 0
    %p63 = por %p61, %p62
    %s65 = sadd.s32 %s64, 1
    %p68 = scmp.eq.s32.totalorder %s9, 1
    %p69 = scmp.ne.s32.totalorder %s64, %s66
    %p70 = scmp.eq.s32.totalorder %s9, 0
    %p71 = por %p69, %p70
    %p72 = scmp.ne.s32.totalorder %s64, %s66
    %p73 = scmp.eq.s32.totalorder %s14, 1
    %p74 = por %p72, %p73
    %p75 = scmp.ne.s32.totalorder %s66, %s67
    %p76 = scmp.eq.s32.totalorder %s14, 0
    %p77 = por %p75, %p76
    %p78 = scmp.ne.s32.totalorder %s66, %s67
    %p79 = scmp.eq.s32.totalorder %s15, 1
    %p80 = por %p78, %p79
    %p82 = scmp.ne.s32.totalorder %s67, %s81
    %p83 = scmp.eq.s32.totalorder %s15, 0
    %p84 = por %p82, %p83
    %s85 = ssub.s32 %s9, %s16
    %p86 = scmp.eq.s32.totalorder %s85, 0
    %s88 = sadd.s32 %s87, 1
    %s89 = scalar_select %p86, %s87, %s88
    %p92 = pneg %p86
    %p93 = scmp.eq.s32.totalorder %s9, 1
    %p94 = por %p92, %p93
    %p95 = scmp.ne.s32.totalorder %s87, %s90
    %p96 = scmp.eq.s32.totalorder %s9, 0
    %p97 = por %p95, %p96
    %p98 = scmp.ne.s32.totalorder %s87, %s90
    %p99 = scmp.eq.s32.totalorder %s14, 1
    %p100 = por %p98, %p99
    %p101 = scmp.ne.s32.totalorder %s90, %s91
    %p102 = scmp.eq.s32.totalorder %s14, 0
    %p103 = por %p101, %p102
    %p104 = scmp.ne.s32.totalorder %s90, %s91
    %p105 = scmp.eq.s32.totalorder %s15, 1
    %p106 = por %p104, %p105
    %p108 = scmp.ne.s32.totalorder %s91, %s107
    %p109 = scmp.eq.s32.totalorder %s15, 0
    %p110 = por %p108, %p109
    %p111 = scmp.le.s32.totalorder 1, %s9
    %p112 = scmp.lt.s32.totalorder %s9, 3
    %p113 = pnand %p111, %p112
    %p114 = pneg %p113
    // Predicated region
    $region9: #{fcn_forward.8} parent=5 // pred_check
      _
    $region10: #{fcn_forward.8} parent=5 // pred_check_branch
      %116 = sbr.rel (%p113) target = $region12
    $region11: #{fcn_forward.8} parent=5 // pred_region
      %s117 = ssub.s32 %s9, 1
      // Predicated region
      $region13: #{fcn_forward.8} parent=11 // pred_check
        %p118 = pneg %p56
      $region14: #{fcn_forward.8} parent=11 // pred_check_branch
        %120 = sbr.rel (%p118) target = $region16
      $region15: #{fcn_forward.8} parent=11 // pred_region
        _
      $region16: #{fcn_forward.8} parent=11 // pred_fallthru
        _
      // Predicated region
      $region17: #{fcn_forward.8} parent=11 // pred_check
        %p121 = pneg %p77
      $region18: #{fcn_forward.8} parent=11 // pred_check_branch
        %123 = sbr.rel (%p121) target = $region20
      $region19: #{fcn_forward.8} parent=11 // pred_region
        _
      $region20: #{fcn_forward.8} parent=11 // pred_fallthru
        _
    $region12: #{fcn_forward.8} parent=5 // pred_fallthru
      _
    %p124 = scmp.lt.s32.totalorder %s9, 2
    // Predicated region
    $region21: #{fcn_forward.8} parent=5 // pred_check
      %p125 = pneg %p124
    $region22: #{fcn_forward.8} parent=5 // pred_check_branch
      %127 = sbr.rel (%p125) target = $region24
    $region23: #{fcn_forward.8} parent=5 // pred_region
      // Predicated region
      $region25: #{fcn_forward.8} parent=23 // pred_check
        %p128 = pneg %p29
      $region26: #{fcn_forward.8} parent=23 // pred_check_branch
        %130 = sbr.rel (%p128) target = $region28
      $region27: #{fcn_forward.8} parent=23 // pred_region
        %p131 = scmp.lt.s32.totalorder %s9, 1
        %s132 = scalar_select %p131, %s9, 1
        %s133 = smul.addr %s132, 43
        %s134 = smul.addr %s133, 4
        %s135 = scalar_lea.vmem %s0, %s134
      $region28: #{fcn_forward.8} parent=23 // pred_fallthru
        _
    $region24: #{fcn_forward.8} parent=5 // pred_fallthru
      _
    %p136 = scmp.le.s32.totalorder 1, %s9
    %p137 = scmp.lt.s32.totalorder %s9, 3
    %p138 = pnand %p136, %p137
    %p139 = pneg %p138
    // Predicated region
    $region29: #{fcn_forward.8} parent=5 // pred_check
      _
    $region30: #{fcn_forward.8} parent=5 // pred_check_branch
      %141 = sbr.rel (%p138) target = $region32
    $region31: #{fcn_forward.8} parent=5 // pred_region
      %s142 = ssub.s32 %s9, 1
      %p143 = scmp.lt.s32.totalorder %s14, 1
      %s144 = scalar_select %p143, %s14, 1
      %s145 = smul.addr %s144, 43
      %s146 = smul.addr %s145, 4
      %s147 = scalar_lea.vmem %s0, %s146
      %p148 = pneg %p35
      %p149 = pneg %p32
      %p150 = pneg %p56
      %p151 = pneg %p53
      %p152 = pneg %p77
      %p153 = pneg %p74
      %p154 = pneg %p103
      %p155 = pneg %p100
      %p156 = scmp.lt.s32.totalorder %s14, 1
      %s157 = scalar_select %p156, %s14, 1
      %s158 = smul.addr %s157, 36
      %s159 = smul.addr %s158, 4
      %s160 = scalar_lea.vmem %s3, %s159
      %p161 = scmp.lt.s32.totalorder %s14, 1
      %s162 = scalar_select %p161, %s14, 1
      %s163 = smul.addr %s162, 43
      %s164 = smul.addr %s163, 4
      %s165 = scalar_lea.vmem %s0, %s164
      %p166 = scmp.lt.s32.totalorder %s14, 1
      %s167 = scalar_select %p166, %s14, 1
      %s168 = smul.addr %s167, 36
      %s169 = smul.addr %s168, 4
      %s170 = scalar_lea.vmem %s3, %s169
      %v172 = vld [vmem:[%s165] sm:$0xf]
      %v173 = vld [vmem:[%s165 + $0x4] sm:$0xf]
      %v174 = vld [vmem:[%s165 + $0x8] sm:$0xf]
      %v175 = vld [vmem:[%s165 + $0xc] sm:$0xf]
      %v176 = vld [vmem:[%s165 + $0x10] sm:$0xf]
      %v177 = vld [vmem:[%s165 + $0x14] sm:$0xf]
      %v178 = vld [vmem:[%s165 + $0x18] sm:$0xf]
      %v179 = vld [vmem:[%s165 + $0x1c] sm:$0xf]
      %v180 = vld [vmem:[%s165 + $0x20] sm:$0xf]
      %v181 = vld [vmem:[%s165 + $0x24] sm:$0xf]
      %v182 = vld [vmem:[%s165 + $0x28] sm:$0xf]
      %v183 = vld [vmem:[%s165 + $0x2c] sm:$0xf]
      %v184 = vld [vmem:[%s165 + $0x30] sm:$0xf]
      %v185 = vld [vmem:[%s165 + $0x34] sm:$0xf]
      %v186 = vld [vmem:[%s165 + $0x38] sm:$0xf]
      %v187 = vld [vmem:[%s165 + $0x3c] sm:$0xf]
      %v188 = vld [vmem:[%s165 + $0x40] sm:$0xf]
      %v189 = vld [vmem:[%s165 + $0x44] sm:$0xf]
      %v190 = vld [vmem:[%s165 + $0x48] sm:$0xf]
      %v191 = vld [vmem:[%s165 + $0x4c] sm:$0xf]
      %v192 = vld [vmem:[%s165 + $0x50] sm:$0xf]
      %v193 = vld [vmem:[%s165 + $0x54] sm:$0xf]
      %v194 = vld [vmem:[%s165 + $0x58] sm:$0xf]
      %v195 = vld [vmem:[%s165 + $0x5c] sm:$0xf]
      %v196 = vld [vmem:[%s165 + $0x60] sm:$0xf]
      %v197 = vld [vmem:[%s165 + $0x64] sm:$0xf]
      %v198 = vld [vmem:[%s165 + $0x68] sm:$0xf]
      %v199 = vld [vmem:[%s165 + $0x6c] sm:$0xf]
      %v200 = vld [vmem:[%s165 + $0x70] sm:$0xf]
      %v201 = vld [vmem:[%s165 + $0x74] sm:$0xf]
      %v202 = vld [vmem:[%s165 + $0x78] sm:$0xf]
      %v203 = vld [vmem:[%s165 + $0x7c] sm:$0xf]
      %v204 = vld [vmem:[%s165 + $0x80] sm:$0xf]
      %v205 = vld [vmem:[%s165 + $0x84] sm:$0xf]
      %v206 = vld [vmem:[%s165 + $0x88] sm:$0xf]
      %v207 = vld [vmem:[%s165 + $0x8c] sm:$0xf]
      %v208 = vld [vmem:[%s165 + $0x90] sm:$0x1]
      %v209 = vld [vmem:[%s165] sm:$0xe]
      %v210 = vld [vmem:[%s165 + $0x8] sm:$0xe]
      %v211 = vld [vmem:[%s165 + $0x90] sm:$0xf]
      %v212 = vld [vmem:[%s165 + $0x94] sm:$0xf]
      %v213 = vld [vmem:[%s165 + $0x98] sm:$0x1]
      %v214 = vld [vmem:[%s165 + $0x98] sm:$0x3]
      %v215 = vld [vmem:[%s165 + $0x8] sm:$0xc]
      %v216 = vld [vmem:[%s165 + $0x10] sm:$0xc]
      %v217 = vld [vmem:[%s165 + $0x98] sm:$0xf]
      %v218 = vld [vmem:[%s165 + $0x9c] sm:$0xf]
      %v219 = vld [vmem:[%s165 + $0xa0] sm:$0x3]
      %v220 = vld [vmem:[%s165 + $0xa0] sm:$0x7]
      %v221 = vld [vmem:[%s165 + $0x10] sm:$0x8]
      %v258 = vunpack.c.l.b16 %v172
      %v259 = vunpack.c.l.b16 %v173
      %v260 = vunpack.c.l.b16 %v174
      %v261 = vunpack.c.l.b16 %v175
      %v262 = vunpack.c.l.b16 %v176
      %v263 = vunpack.c.l.b16 %v177
      %v264 = vunpack.c.l.b16 %v178
      %v265 = vunpack.c.l.b16 %v179
      %v266 = vunpack.c.l.b16 %v180
      %v267 = vunpack.c.l.b16 %v181
      %v268 = vunpack.c.l.b16 %v182
      %v269 = vunpack.c.l.b16 %v183
      %v270 = vunpack.c.l.b16 %v184
      %v271 = vunpack.c.l.b16 %v185
      %v272 = vunpack.c.l.b16 %v186
      %v273 = vunpack.c.l.b16 %v187
      %v274 = vunpack.c.l.b16 %v188
      %v275 = vunpack.c.l.b16 %v189
      %v276 = vunpack.c.l.b16 %v190
      %v277 = vunpack.c.l.b16 %v191
      %v278 = vunpack.c.l.b16 %v192
      %v279 = vunpack.c.l.b16 %v193
      %v280 = vunpack.c.l.b16 %v194
      %v281 = vunpack.c.l.b16 %v195
      %v282 = vunpack.c.l.b16 %v196
      %v283 = vunpack.c.l.b16 %v197
      %v284 = vunpack.c.l.b16 %v198
      %v285 = vunpack.c.l.b16 %v199
      %v286 = vunpack.c.l.b16 %v200
      %v287 = vunpack.c.l.b16 %v201
      %v288 = vunpack.c.l.b16 %v202
      %v289 = vunpack.c.l.b16 %v203
      %v290 = vunpack.c.l.b16 %v204
      %v291 = vunpack.c.l.b16 %v205
      %v292 = vunpack.c.l.b16 %v206
      %v293 = vunpack.c.l.b16 %v207
      %v294 = vpack.c.b16 %v259, %v258
      %v295 = vpack.c.b16 %v261, %v260
      %v296 = vpack.c.b16 %v263, %v262
      %v297 = vpack.c.b16 %v265, %v264
      %v298 = vpack.c.b16 %v267, %v266
      %v299 = vpack.c.b16 %v269, %v268
      %v300 = vpack.c.b16 %v271, %v270
      %v301 = vpack.c.b16 %v273, %v272
      %v302 = vpack.c.b16 %v275, %v274
      %v303 = vpack.c.b16 %v277, %v276
      %v304 = vpack.c.b16 %v279, %v278
      %v305 = vpack.c.b16 %v281, %v280
      %v306 = vpack.c.b16 %v283, %v282
      %v307 = vpack.c.b16 %v285, %v284
      %v308 = vpack.c.b16 %v287, %v286
      %v309 = vpack.c.b16 %v289, %v288
      %v310 = vpack.c.b16 %v291, %v290
      %v311 = vpack.c.b16 %v293, %v292
      %v313 = vunpack.c.l.b16 %v208
      %v314 = vpack.c.b16 %v313, %v313
      %vm315 = vsmask.f32 7424
      %v317 = vshrl.u32 %v294, 16
      %v319 = vshll.u32 %v294, 16
      %v321 = vrot.slane %v319, 1
      %v322 = vor.u32 %v317, %v321
      %v324 = vshll.u32 %v295, 16
      %v326 = vrot.slane %v324, 1
      %v327 = vsel %vm315, %v322, %v326
      %v328 = vshrl.u32 %v295, 16
      %v330 = vor.u32 %v328, %v326
      %v332 = vshll.u32 %v296, 16
      %v334 = vrot.slane %v332, 1
      %v335 = vsel %vm315, %v330, %v334
      %v336 = vshrl.u32 %v296, 16
      %v338 = vor.u32 %v336, %v334
      %v340 = vshll.u32 %v297, 16
      %v342 = vrot.slane %v340, 1
      %v343 = vsel %vm315, %v338, %v342
      %v344 = vshrl.u32 %v297, 16
      %v346 = vor.u32 %v344, %v342
      %v348 = vshll.u32 %v298, 16
      %v350 = vrot.slane %v348, 1
      %v351 = vsel %vm315, %v346, %v350
      %v352 = vshrl.u32 %v298, 16
      %v354 = vor.u32 %v352, %v350
      %v356 = vshll.u32 %v299, 16
      %v358 = vrot.slane %v356, 1
      %v359 = vsel %vm315, %v354, %v358
      %v360 = vshrl.u32 %v299, 16
      %v362 = vor.u32 %v360, %v358
      %v364 = vshll.u32 %v300, 16
      %v366 = vrot.slane %v364, 1
      %v367 = vsel %vm315, %v362, %v366
      %v368 = vshrl.u32 %v300, 16
      %v370 = vor.u32 %v368, %v366
      %v372 = vshll.u32 %v301, 16
      %v374 = vrot.slane %v372, 1
      %v375 = vsel %vm315, %v370, %v374
      %v376 = vshrl.u32 %v301, 16
      %v378 = vor.u32 %v376, %v374
      %v380 = vshll.u32 %v302, 16
      %v382 = vrot.slane %v380, 1
      %v383 = vsel %vm315, %v378, %v382
      %v384 = vshrl.u32 %v302, 16
      %v386 = vor.u32 %v384, %v382
      %v388 = vshll.u32 %v303, 16
      %v390 = vrot.slane %v388, 1
      %v391 = vsel %vm315, %v386, %v390
      %v392 = vshrl.u32 %v303, 16
      %v394 = vor.u32 %v392, %v390
      %v396 = vshll.u32 %v304, 16
      %v398 = vrot.slane %v396, 1
      %v399 = vsel %vm315, %v394, %v398
      %v400 = vshrl.u32 %v304, 16
      %v402 = vor.u32 %v400, %v398
      %v404 = vshll.u32 %v305, 16
      %v406 = vrot.slane %v404, 1
      %v407 = vsel %vm315, %v402, %v406
      %v408 = vshrl.u32 %v305, 16
      %v410 = vor.u32 %v408, %v406
      %v412 = vshll.u32 %v306, 16
      %v414 = vrot.slane %v412, 1
      %v415 = vsel %vm315, %v410, %v414
      %v416 = vshrl.u32 %v306, 16
      %v418 = vor.u32 %v416, %v414
      %v420 = vshll.u32 %v307, 16
      %v422 = vrot.slane %v420, 1
      %v423 = vsel %vm315, %v418, %v422
      %v424 = vshrl.u32 %v307, 16
      %v426 = vor.u32 %v424, %v422
      %v428 = vshll.u32 %v308, 16
      %v430 = vrot.slane %v428, 1
      %v431 = vsel %vm315, %v426, %v430
      %v432 = vshrl.u32 %v308, 16
      %v434 = vor.u32 %v432, %v430
      %v436 = vshll.u32 %v309, 16
      %v438 = vrot.slane %v436, 1
      %v439 = vsel %vm315, %v434, %v438
      %v440 = vshrl.u32 %v309, 16
      %v442 = vor.u32 %v440, %v438
      %v444 = vshll.u32 %v310, 16
      %v446 = vrot.slane %v444, 1
      %v447 = vsel %vm315, %v442, %v446
      %v448 = vshrl.u32 %v310, 16
      %v450 = vor.u32 %v448, %v446
      %v452 = vshll.u32 %v311, 16
      %v454 = vrot.slane %v452, 1
      %v455 = vsel %vm315, %v450, %v454
      %v456 = vshrl.u32 %v311, 16
      %v458 = vor.u32 %v456, %v454
      %v460 = vshll.u32 %v314, 16
      %v462 = vrot.slane %v460, 1
      %v463 = vsel %vm315, %v458, %v462
      %464 = vrot.lane.b32.xlu0 %v327, 3
      %v465 = vpop.permute.xlu0 %464
      %466 = vrot.lane.b32.xlu0 %v335, 3
      %v467 = vpop.permute.xlu0 %466
      %468 = vrot.lane.b32.xlu0 %v343, 3
      %v469 = vpop.permute.xlu0 %468
      %470 = vrot.lane.b32.xlu0 %v351, 3
      %v471 = vpop.permute.xlu0 %470
      %472 = vrot.lane.b32.xlu0 %v359, 3
      %v473 = vpop.permute.xlu0 %472
      %474 = vrot.lane.b32.xlu0 %v367, 3
      %v475 = vpop.permute.xlu0 %474
      %476 = vrot.lane.b32.xlu0 %v375, 3
      %v477 = vpop.permute.xlu0 %476
      %478 = vrot.lane.b32.xlu0 %v383, 3
      %v479 = vpop.permute.xlu0 %478
      %480 = vrot.lane.b32.xlu0 %v391, 3
      %v481 = vpop.permute.xlu0 %480
      %482 = vrot.lane.b32.xlu0 %v399, 3
      %v483 = vpop.permute.xlu0 %482
      %484 = vrot.lane.b32.xlu0 %v407, 3
      %v485 = vpop.permute.xlu0 %484
      %486 = vrot.lane.b32.xlu0 %v415, 3
      %v487 = vpop.permute.xlu0 %486
      %488 = vrot.lane.b32.xlu0 %v423, 3
      %v489 = vpop.permute.xlu0 %488
      %490 = vrot.lane.b32.xlu0 %v431, 3
      %v491 = vpop.permute.xlu0 %490
      %492 = vrot.lane.b32.xlu0 %v439, 3
      %v493 = vpop.permute.xlu0 %492
      %494 = vrot.lane.b32.xlu0 %v447, 3
      %v495 = vpop.permute.xlu0 %494
      %496 = vrot.lane.b32.xlu0 %v455, 3
      %v497 = vpop.permute.xlu0 %496
      %498 = vrot.lane.b32.xlu0 %v463, 3
      %v499 = vpop.permute.xlu0 %498
      %v501 = vunpack.c.l.b16 %v209
      %v502 = vpack.c.b16 %v259, %v501
      %vm503 = vcmask 1046528
      %v504 = vrot.slane %v502, 1
      %v505 = vrot.slane %v295, 1
      %v506 = vsel %vm503, %v504, %v505
      %v507 = vrot.slane %v296, 1
      %v508 = vsel %vm503, %v505, %v507
      %v509 = vrot.slane %v297, 1
      %v510 = vsel %vm503, %v507, %v509
      %v511 = vrot.slane %v298, 1
      %v512 = vsel %vm503, %v509, %v511
      %v513 = vrot.slane %v299, 1
      %v514 = vsel %vm503, %v511, %v513
      %v515 = vrot.slane %v300, 1
      %v516 = vsel %vm503, %v513, %v515
      %v517 = vrot.slane %v301, 1
      %v518 = vsel %vm503, %v515, %v517
      %v519 = vrot.slane %v302, 1
      %v520 = vsel %vm503, %v517, %v519
      %v521 = vrot.slane %v303, 1
      %v522 = vsel %vm503, %v519, %v521
      %v523 = vrot.slane %v304, 1
      %v524 = vsel %vm503, %v521, %v523
      %v525 = vrot.slane %v305, 1
      %v526 = vsel %vm503, %v523, %v525
      %v527 = vrot.slane %v306, 1
      %v528 = vsel %vm503, %v525, %v527
      %v529 = vrot.slane %v307, 1
      %v530 = vsel %vm503, %v527, %v529
      %v531 = vrot.slane %v308, 1
      %v532 = vsel %vm503, %v529, %v531
      %v533 = vrot.slane %v309, 1
      %v534 = vsel %vm503, %v531, %v533
      %v535 = vrot.slane %v310, 1
      %v536 = vsel %vm503, %v533, %v535
      %v537 = vrot.slane %v311, 1
      %v538 = vsel %vm503, %v535, %v537
      %v539 = vrot.slane %v314, 1
      %v540 = vsel %vm503, %v537, %v539
      %541 = vrot.lane.b32.xlu0 %v506, 6
      %v542 = vpop.permute.xlu0 %541
      %543 = vrot.lane.b32.xlu0 %v508, 6
      %v544 = vpop.permute.xlu0 %543
      %545 = vrot.lane.b32.xlu0 %v510, 6
      %v546 = vpop.permute.xlu0 %545
      %547 = vrot.lane.b32.xlu0 %v512, 6
      %v548 = vpop.permute.xlu0 %547
      %549 = vrot.lane.b32.xlu0 %v514, 6
      %v550 = vpop.permute.xlu0 %549
      %551 = vrot.lane.b32.xlu0 %v516, 6
      %v552 = vpop.permute.xlu0 %551
      %553 = vrot.lane.b32.xlu0 %v518, 6
      %v554 = vpop.permute.xlu0 %553
      %555 = vrot.lane.b32.xlu0 %v520, 6
      %v556 = vpop.permute.xlu0 %555
      %557 = vrot.lane.b32.xlu0 %v522, 6
      %v558 = vpop.permute.xlu0 %557
      %559 = vrot.lane.b32.xlu0 %v524, 6
      %v560 = vpop.permute.xlu0 %559
      %561 = vrot.lane.b32.xlu0 %v526, 6
      %v562 = vpop.permute.xlu0 %561
      %563 = vrot.lane.b32.xlu0 %v528, 6
      %v564 = vpop.permute.xlu0 %563
      %565 = vrot.lane.b32.xlu0 %v530, 6
      %v566 = vpop.permute.xlu0 %565
      %567 = vrot.lane.b32.xlu0 %v532, 6
      %v568 = vpop.permute.xlu0 %567
      %569 = vrot.lane.b32.xlu0 %v534, 6
      %v570 = vpop.permute.xlu0 %569
      %571 = vrot.lane.b32.xlu0 %v536, 6
      %v572 = vpop.permute.xlu0 %571
      %573 = vrot.lane.b32.xlu0 %v538, 6
      %v574 = vpop.permute.xlu0 %573
      %575 = vrot.lane.b32.xlu0 %v540, 6
      %v576 = vpop.permute.xlu0 %575
      %v581 = vunpack.c.l.b16 %v210
      %v582 = vunpack.c.l.b16 %v211
      %v583 = vunpack.c.l.b16 %v212
      %v584 = vunpack.c.l.b16 %v213
      %v585 = vpack.c.b16 %v261, %v581
      %v586 = vpack.c.b16 %v583, %v582
      %v587 = vpack.c.b16 %v584, %v584
      %v588 = vrot.slane %v585, 1
      %v589 = vsel %vm503, %v588, %v507
      %v590 = vrot.slane %v586, 1
      %v591 = vsel %vm503, %v537, %v590
      %v592 = vrot.slane %v587, 1
      %v593 = vsel %vm503, %v590, %v592
      %594 = vrot.lane.b32.xlu0 %v589, 9
      %v595 = vpop.permute.xlu0 %594
      %596 = vrot.lane.b32.xlu0 %v510, 9
      %v597 = vpop.permute.xlu0 %596
      %598 = vrot.lane.b32.xlu0 %v512, 9
      %v599 = vpop.permute.xlu0 %598
      %600 = vrot.lane.b32.xlu0 %v514, 9
      %v601 = vpop.permute.xlu0 %600
      %602 = vrot.lane.b32.xlu0 %v516, 9
      %v603 = vpop.permute.xlu0 %602
      %604 = vrot.lane.b32.xlu0 %v518, 9
      %v605 = vpop.permute.xlu0 %604
      %606 = vrot.lane.b32.xlu0 %v520, 9
      %v607 = vpop.permute.xlu0 %606
      %608 = vrot.lane.b32.xlu0 %v522, 9
      %v609 = vpop.permute.xlu0 %608
      %610 = vrot.lane.b32.xlu0 %v524, 9
      %v611 = vpop.permute.xlu0 %610
      %612 = vrot.lane.b32.xlu0 %v526, 9
      %v613 = vpop.permute.xlu0 %612
      %614 = vrot.lane.b32.xlu0 %v528, 9
      %v615 = vpop.permute.xlu0 %614
      %616 = vrot.lane.b32.xlu0 %v530, 9
      %v617 = vpop.permute.xlu0 %616
      %618 = vrot.lane.b32.xlu0 %v532, 9
      %v619 = vpop.permute.xlu0 %618
      %620 = vrot.lane.b32.xlu0 %v534, 9
      %v621 = vpop.permute.xlu0 %620
      %622 = vrot.lane.b32.xlu0 %v536, 9
      %v623 = vpop.permute.xlu0 %622
      %624 = vrot.lane.b32.xlu0 %v538, 9
      %v625 = vpop.permute.xlu0 %624
      %626 = vrot.lane.b32.xlu0 %v591, 9
      %v627 = vpop.permute.xlu0 %626
      %628 = vrot.lane.b32.xlu0 %v593, 9
      %v629 = vpop.permute.xlu0 %628
      %v631 = vunpack.c.l.b16 %v214
      %v632 = vpack.c.b16 %v631, %v631
      %vm633 = vsmask.f32 6400
      %v635 = vshrl.u32 %v585, 16
      %v637 = vrot.slane %v635, 1
      %v638 = vshll.u32 %v585, 16
      %v640 = vrot.slane %v638, 2
      %v641 = vor.u32 %v637, %v640
      %v642 = vrot.slane %v336, 1
      %v643 = vrot.slane %v332, 2
      %v644 = vor.u32 %v642, %v643
      %v645 = vsel %vm633, %v641, %v644
      %v646 = vrot.slane %v344, 1
      %v647 = vrot.slane %v340, 2
      %v648 = vor.u32 %v646, %v647
      %v649 = vsel %vm633, %v644, %v648
      %v650 = vrot.slane %v352, 1
      %v651 = vrot.slane %v348, 2
      %v652 = vor.u32 %v650, %v651
      %v653 = vsel %vm633, %v648, %v652
      %v654 = vrot.slane %v360, 1
      %v655 = vrot.slane %v356, 2
      %v656 = vor.u32 %v654, %v655
      %v657 = vsel %vm633, %v652, %v656
      %v658 = vrot.slane %v368, 1
      %v659 = vrot.slane %v364, 2
      %v660 = vor.u32 %v658, %v659
      %v661 = vsel %vm633, %v656, %v660
      %v662 = vrot.slane %v376, 1
      %v663 = vrot.slane %v372, 2
      %v664 = vor.u32 %v662, %v663
      %v665 = vsel %vm633, %v660, %v664
      %v666 = vrot.slane %v384, 1
      %v667 = vrot.slane %v380, 2
      %v668 = vor.u32 %v666, %v667
      %v669 = vsel %vm633, %v664, %v668
      %v670 = vrot.slane %v392, 1
      %v671 = vrot.slane %v388, 2
      %v672 = vor.u32 %v670, %v671
      %v673 = vsel %vm633, %v668, %v672
      %v674 = vrot.slane %v400, 1
      %v675 = vrot.slane %v396, 2
      %v676 = vor.u32 %v674, %v675
      %v677 = vsel %vm633, %v672, %v676
      %v678 = vrot.slane %v408, 1
      %v679 = vrot.slane %v404, 2
      %v680 = vor.u32 %v678, %v679
      %v681 = vsel %vm633, %v676, %v680
      %v682 = vrot.slane %v416, 1
      %v683 = vrot.slane %v412, 2
      %v684 = vor.u32 %v682, %v683
      %v685 = vsel %vm633, %v680, %v684
      %v686 = vrot.slane %v424, 1
      %v687 = vrot.slane %v420, 2
      %v688 = vor.u32 %v686, %v687
      %v689 = vsel %vm633, %v684, %v688
      %v690 = vrot.slane %v432, 1
      %v691 = vrot.slane %v428, 2
      %v692 = vor.u32 %v690, %v691
      %v693 = vsel %vm633, %v688, %v692
      %v694 = vrot.slane %v440, 1
      %v695 = vrot.slane %v436, 2
      %v696 = vor.u32 %v694, %v695
      %v697 = vsel %vm633, %v692, %v696
      %v698 = vrot.slane %v448, 1
      %v699 = vrot.slane %v444, 2
      %v700 = vor.u32 %v698, %v699
      %v701 = vsel %vm633, %v696, %v700
      %v702 = vrot.slane %v456, 1
      %v703 = vrot.slane %v452, 2
      %v704 = vor.u32 %v702, %v703
      %v705 = vsel %vm633, %v700, %v704
      %v707 = vshrl.u32 %v586, 16
      %v709 = vrot.slane %v707, 1
      %v710 = vshll.u32 %v586, 16
      %v712 = vrot.slane %v710, 2
      %v713 = vor.u32 %v709, %v712
      %v714 = vsel %vm633, %v704, %v713
      %v716 = vshrl.u32 %v632, 16
      %v718 = vrot.slane %v716, 1
      %v719 = vshll.u32 %v632, 16
      %v721 = vrot.slane %v719, 2
      %v722 = vor.u32 %v718, %v721
      %v723 = vsel %vm633, %v713, %v722
      %724 = vrot.lane.b32.xlu0 %v645, 12
      %v725 = vpop.permute.xlu0 %724
      %726 = vrot.lane.b32.xlu0 %v649, 12
      %v727 = vpop.permute.xlu0 %726
      %728 = vrot.lane.b32.xlu0 %v653, 12
      %v729 = vpop.permute.xlu0 %728
      %730 = vrot.lane.b32.xlu0 %v657, 12
      %v731 = vpop.permute.xlu0 %730
      %732 = vrot.lane.b32.xlu0 %v661, 12
      %v733 = vpop.permute.xlu0 %732
      %734 = vrot.lane.b32.xlu0 %v665, 12
      %v735 = vpop.permute.xlu0 %734
      %736 = vrot.lane.b32.xlu0 %v669, 12
      %v737 = vpop.permute.xlu0 %736
      %738 = vrot.lane.b32.xlu0 %v673, 12
      %v739 = vpop.permute.xlu0 %738
      %740 = vrot.lane.b32.xlu0 %v677, 12
      %v741 = vpop.permute.xlu0 %740
      %742 = vrot.lane.b32.xlu0 %v681, 12
      %v743 = vpop.permute.xlu0 %742
      %744 = vrot.lane.b32.xlu0 %v685, 12
      %v745 = vpop.permute.xlu0 %744
      %746 = vrot.lane.b32.xlu0 %v689, 12
      %v747 = vpop.permute.xlu0 %746
      %748 = vrot.lane.b32.xlu0 %v693, 12
      %v749 = vpop.permute.xlu0 %748
      %750 = vrot.lane.b32.xlu0 %v697, 12
      %v751 = vpop.permute.xlu0 %750
      %752 = vrot.lane.b32.xlu0 %v701, 12
      %v753 = vpop.permute.xlu0 %752
      %754 = vrot.lane.b32.xlu0 %v705, 12
      %v755 = vpop.permute.xlu0 %754
      %756 = vrot.lane.b32.xlu0 %v714, 12
      %v757 = vpop.permute.xlu0 %756
      %758 = vrot.lane.b32.xlu0 %v723, 12
      %v759 = vpop.permute.xlu0 %758
      %v761 = vunpack.c.l.b16 %v215
      %v762 = vpack.c.b16 %v261, %v761
      %vm763 = vcmask 1045504
      %v764 = vrot.slane %v762, 2
      %v765 = vrot.slane %v296, 2
      %v766 = vsel %vm763, %v764, %v765
      %v767 = vrot.slane %v297, 2
      %v768 = vsel %vm763, %v765, %v767
      %v769 = vrot.slane %v298, 2
      %v770 = vsel %vm763, %v767, %v769
      %v771 = vrot.slane %v299, 2
      %v772 = vsel %vm763, %v769, %v771
      %v773 = vrot.slane %v300, 2
      %v774 = vsel %vm763, %v771, %v773
      %v775 = vrot.slane %v301, 2
      %v776 = vsel %vm763, %v773, %v775
      %v777 = vrot.slane %v302, 2
      %v778 = vsel %vm763, %v775, %v777
      %v779 = vrot.slane %v303, 2
      %v780 = vsel %vm763, %v777, %v779
      %v781 = vrot.slane %v304, 2
      %v782 = vsel %vm763, %v779, %v781
      %v783 = vrot.slane %v305, 2
      %v784 = vsel %vm763, %v781, %v783
      %v785 = vrot.slane %v306, 2
      %v786 = vsel %vm763, %v783, %v785
      %v787 = vrot.slane %v307, 2
      %v788 = vsel %vm763, %v785, %v787
      %v789 = vrot.slane %v308, 2
      %v790 = vsel %vm763, %v787, %v789
      %v791 = vrot.slane %v309, 2
      %v792 = vsel %vm763, %v789, %v791
      %v793 = vrot.slane %v310, 2
      %v794 = vsel %vm763, %v791, %v793
      %v795 = vrot.slane %v311, 2
      %v796 = vsel %vm763, %v793, %v795
      %v797 = vrot.slane %v586, 2
      %v798 = vsel %vm763, %v795, %v797
      %v799 = vrot.slane %v632, 2
      %v800 = vsel %vm763, %v797, %v799
      %801 = vrot.lane.b32.xlu0 %v766, 15
      %v802 = vpop.permute.xlu0 %801
      %803 = vrot.lane.b32.xlu0 %v768, 15
      %v804 = vpop.permute.xlu0 %803
      %805 = vrot.lane.b32.xlu0 %v770, 15
      %v806 = vpop.permute.xlu0 %805
      %807 = vrot.lane.b32.xlu0 %v772, 15
      %v808 = vpop.permute.xlu0 %807
      %809 = vrot.lane.b32.xlu0 %v774, 15
      %v810 = vpop.permute.xlu0 %809
      %811 = vrot.lane.b32.xlu0 %v776, 15
      %v812 = vpop.permute.xlu0 %811
      %813 = vrot.lane.b32.xlu0 %v778, 15
      %v814 = vpop.permute.xlu0 %813
      %815 = vrot.lane.b32.xlu0 %v780, 15
      %v816 = vpop.permute.xlu0 %815
      %817 = vrot.lane.b32.xlu0 %v782, 15
      %v818 = vpop.permute.xlu0 %817
      %819 = vrot.lane.b32.xlu0 %v784, 15
      %v820 = vpop.permute.xlu0 %819
      %821 = vrot.lane.b32.xlu0 %v786, 15
      %v822 = vpop.permute.xlu0 %821
      %823 = vrot.lane.b32.xlu0 %v788, 15
      %v824 = vpop.permute.xlu0 %823
      %825 = vrot.lane.b32.xlu0 %v790, 15
      %v826 = vpop.permute.xlu0 %825
      %827 = vrot.lane.b32.xlu0 %v792, 15
      %v828 = vpop.permute.xlu0 %827
      %829 = vrot.lane.b32.xlu0 %v794, 15
      %v830 = vpop.permute.xlu0 %829
      %831 = vrot.lane.b32.xlu0 %v796, 15
      %v832 = vpop.permute.xlu0 %831
      %833 = vrot.lane.b32.xlu0 %v798, 15
      %v834 = vpop.permute.xlu0 %833
      %835 = vrot.lane.b32.xlu0 %v800, 15
      %v836 = vpop.permute.xlu0 %835
      %v841 = vunpack.c.l.b16 %v216
      %v842 = vunpack.c.l.b16 %v217
      %v843 = vunpack.c.l.b16 %v218
      %v844 = vunpack.c.l.b16 %v219
      %v845 = vpack.c.b16 %v263, %v841
      %v846 = vpack.c.b16 %v843, %v842
      %v847 = vpack.c.b16 %v844, %v844
      %v848 = vrot.slane %v845, 2
      %v849 = vsel %vm763, %v848, %v767
      %v850 = vrot.slane %v846, 2
      %v851 = vsel %vm763, %v797, %v850
      %v852 = vrot.slane %v847, 2
      %v853 = vsel %vm763, %v850, %v852
      %854 = vrot.lane.b32.xlu0 %v849, 18
      %v855 = vpop.permute.xlu0 %854
      %856 = vrot.lane.b32.xlu0 %v770, 18
      %v857 = vpop.permute.xlu0 %856
      %858 = vrot.lane.b32.xlu0 %v772, 18
      %v859 = vpop.permute.xlu0 %858
      %860 = vrot.lane.b32.xlu0 %v774, 18
      %v861 = vpop.permute.xlu0 %860
      %862 = vrot.lane.b32.xlu0 %v776, 18
      %v863 = vpop.permute.xlu0 %862
      %864 = vrot.lane.b32.xlu0 %v778, 18
      %v865 = vpop.permute.xlu0 %864
      %866 = vrot.lane.b32.xlu0 %v780, 18
      %v867 = vpop.permute.xlu0 %866
      %868 = vrot.lane.b32.xlu0 %v782, 18
      %v869 = vpop.permute.xlu0 %868
      %870 = vrot.lane.b32.xlu0 %v784, 18
      %v871 = vpop.permute.xlu0 %870
      %872 = vrot.lane.b32.xlu0 %v786, 18
      %v873 = vpop.permute.xlu0 %872
      %874 = vrot.lane.b32.xlu0 %v788, 18
      %v875 = vpop.permute.xlu0 %874
      %876 = vrot.lane.b32.xlu0 %v790, 18
      %v877 = vpop.permute.xlu0 %876
      %878 = vrot.lane.b32.xlu0 %v792, 18
      %v879 = vpop.permute.xlu0 %878
      %880 = vrot.lane.b32.xlu0 %v794, 18
      %v881 = vpop.permute.xlu0 %880
      %882 = vrot.lane.b32.xlu0 %v796, 18
      %v883 = vpop.permute.xlu0 %882
      %884 = vrot.lane.b32.xlu0 %v798, 18
      %v885 = vpop.permute.xlu0 %884
      %886 = vrot.lane.b32.xlu0 %v851, 18
      %v887 = vpop.permute.xlu0 %886
      %888 = vrot.lane.b32.xlu0 %v853, 18
      %v889 = vpop.permute.xlu0 %888
      %v891 = vunpack.c.l.b16 %v220
      %v892 = vpack.c.b16 %v891, %v891
      %vm893 = vsmask.f32 5376
      %v895 = vshrl.u32 %v845, 16
      %v897 = vrot.slane %v895, 2
      %v898 = vshll.u32 %v845, 16
      %v900 = vrot.slane %v898, 3
      %v901 = vor.u32 %v897, %v900
      %v902 = vrot.slane %v344, 2
      %v903 = vrot.slane %v340, 3
      %v904 = vor.u32 %v902, %v903
      %v905 = vsel %vm893, %v901, %v904
      %v906 = vrot.slane %v352, 2
      %v907 = vrot.slane %v348, 3
      %v908 = vor.u32 %v906, %v907
      %v909 = vsel %vm893, %v904, %v908
      %v910 = vrot.slane %v360, 2
      %v911 = vrot.slane %v356, 3
      %v912 = vor.u32 %v910, %v911
      %v913 = vsel %vm893, %v908, %v912
      %v914 = vrot.slane %v368, 2
      %v915 = vrot.slane %v364, 3
      %v916 = vor.u32 %v914, %v915
      %v917 = vsel %vm893, %v912, %v916
      %v918 = vrot.slane %v376, 2
      %v919 = vrot.slane %v372, 3
      %v920 = vor.u32 %v918, %v919
      %v921 = vsel %vm893, %v916, %v920
      %v922 = vrot.slane %v384, 2
      %v923 = vrot.slane %v380, 3
      %v924 = vor.u32 %v922, %v923
      %v925 = vsel %vm893, %v920, %v924
      %v926 = vrot.slane %v392, 2
      %v927 = vrot.slane %v388, 3
      %v928 = vor.u32 %v926, %v927
      %v929 = vsel %vm893, %v924, %v928
      %v930 = vrot.slane %v400, 2
      %v931 = vrot.slane %v396, 3
      %v932 = vor.u32 %v930, %v931
      %v933 = vsel %vm893, %v928, %v932
      %v934 = vrot.slane %v408, 2
      %v935 = vrot.slane %v404, 3
      %v936 = vor.u32 %v934, %v935
      %v937 = vsel %vm893, %v932, %v936
      %v938 = vrot.slane %v416, 2
      %v939 = vrot.slane %v412, 3
      %v940 = vor.u32 %v938, %v939
      %v941 = vsel %vm893, %v936, %v940
      %v942 = vrot.slane %v424, 2
      %v943 = vrot.slane %v420, 3
      %v944 = vor.u32 %v942, %v943
      %v945 = vsel %vm893, %v940, %v944
      %v946 = vrot.slane %v432, 2
      %v947 = vrot.slane %v428, 3
      %v948 = vor.u32 %v946, %v947
      %v949 = vsel %vm893, %v944, %v948
      %v950 = vrot.slane %v440, 2
      %v951 = vrot.slane %v436, 3
      %v952 = vor.u32 %v950, %v951
      %v953 = vsel %vm893, %v948, %v952
      %v954 = vrot.slane %v448, 2
      %v955 = vrot.slane %v444, 3
      %v956 = vor.u32 %v954, %v955
      %v957 = vsel %vm893, %v952, %v956
      %v958 = vrot.slane %v456, 2
      %v959 = vrot.slane %v452, 3
      %v960 = vor.u32 %v958, %v959
      %v961 = vsel %vm893, %v956, %v960
      %v962 = vrot.slane %v707, 2
      %v963 = vrot.slane %v710, 3
      %v964 = vor.u32 %v962, %v963
      %v965 = vsel %vm893, %v960, %v964
      %v967 = vshrl.u32 %v846, 16
      %v969 = vrot.slane %v967, 2
      %v970 = vshll.u32 %v846, 16
      %v972 = vrot.slane %v970, 3
      %v973 = vor.u32 %v969, %v972
      %v974 = vsel %vm893, %v964, %v973
      %v976 = vshrl.u32 %v892, 16
      %v978 = vrot.slane %v976, 2
      %v979 = vshll.u32 %v892, 16
      %v981 = vrot.slane %v979, 3
      %v982 = vor.u32 %v978, %v981
      %v983 = vsel %vm893, %v973, %v982
      %984 = vrot.lane.b32.xlu0 %v905, 21
      %v985 = vpop.permute.xlu0 %984
      %986 = vrot.lane.b32.xlu0 %v909, 21
      %v987 = vpop.permute.xlu0 %986
      %988 = vrot.lane.b32.xlu0 %v913, 21
      %v989 = vpop.permute.xlu0 %988
      %990 = vrot.lane.b32.xlu0 %v917, 21
      %v991 = vpop.permute.xlu0 %990
      %992 = vrot.lane.b32.xlu0 %v921, 21
      %v993 = vpop.permute.xlu0 %992
      %994 = vrot.lane.b32.xlu0 %v925, 21
      %v995 = vpop.permute.xlu0 %994
      %996 = vrot.lane.b32.xlu0 %v929, 21
      %v997 = vpop.permute.xlu0 %996
      %998 = vrot.lane.b32.xlu0 %v933, 21
      %v999 = vpop.permute.xlu0 %998
      %1000 = vrot.lane.b32.xlu0 %v937, 21
      %v1001 = vpop.permute.xlu0 %1000
      %1002 = vrot.lane.b32.xlu0 %v941, 21
      %v1003 = vpop.permute.xlu0 %1002
      %1004 = vrot.lane.b32.xlu0 %v945, 21
      %v1005 = vpop.permute.xlu0 %1004
      %1006 = vrot.lane.b32.xlu0 %v949, 21
      %v1007 = vpop.permute.xlu0 %1006
      %1008 = vrot.lane.b32.xlu0 %v953, 21
      %v1009 = vpop.permute.xlu0 %1008
      %1010 = vrot.lane.b32.xlu0 %v957, 21
      %v1011 = vpop.permute.xlu0 %1010
      %1012 = vrot.lane.b32.xlu0 %v961, 21
      %v1013 = vpop.permute.xlu0 %1012
      %1014 = vrot.lane.b32.xlu0 %v965, 21
      %v1015 = vpop.permute.xlu0 %1014
      %1016 = vrot.lane.b32.xlu0 %v974, 21
      %v1017 = vpop.permute.xlu0 %1016
      %1018 = vrot.lane.b32.xlu0 %v983, 21
      %v1019 = vpop.permute.xlu0 %1018
      %v1021 = vunpack.c.l.b16 %v221
      %v1022 = vpack.c.b16 %v263, %v1021
      %vm1023 = vcmask 1044480
      %v1024 = vrot.slane %v1022, 3
      %v1025 = vrot.slane %v297, 3
      %v1026 = vsel %vm1023, %v1024, %v1025
      %v1027 = vrot.slane %v298, 3
      %v1028 = vsel %vm1023, %v1025, %v1027
      %v1029 = vrot.slane %v299, 3
      %v1030 = vsel %vm1023, %v1027, %v1029
      %v1031 = vrot.slane %v300, 3
      %v1032 = vsel %vm1023, %v1029, %v1031
      %v1033 = vrot.slane %v301, 3
      %v1034 = vsel %vm1023, %v1031, %v1033
      %v1035 = vrot.slane %v302, 3
      %v1036 = vsel %vm1023, %v1033, %v1035
      %v1037 = vrot.slane %v303, 3
      %v1038 = vsel %vm1023, %v1035, %v1037
      %v1039 = vrot.slane %v304, 3
      %v1040 = vsel %vm1023, %v1037, %v1039
      %v1041 = vrot.slane %v305, 3
      %v1042 = vsel %vm1023, %v1039, %v1041
      %v1043 = vrot.slane %v306, 3
      %v1044 = vsel %vm1023, %v1041, %v1043
      %v1045 = vrot.slane %v307, 3
      %v1046 = vsel %vm1023, %v1043, %v1045
      %v1047 = vrot.slane %v308, 3
      %v1048 = vsel %vm1023, %v1045, %v1047
      %v1049 = vrot.slane %v309, 3
      %v1050 = vsel %vm1023, %v1047, %v1049
      %v1051 = vrot.slane %v310, 3
      %v1052 = vsel %vm1023, %v1049, %v1051
      %v1053 = vrot.slane %v311, 3
      %v1054 = vsel %vm1023, %v1051, %v1053
      %v1055 = vrot.slane %v586, 3
      %v1056 = vsel %vm1023, %v1053, %v1055
      %v1057 = vrot.slane %v846, 3
      %v1058 = vsel %vm1023, %v1055, %v1057
      %v1059 = vrot.slane %v892, 3
      %v1060 = vsel %vm1023, %v1057, %v1059
      %1061 = vrot.lane.b32.xlu0 %v1026, 24
      %v1062 = vpop.permute.xlu0 %1061
      %1063 = vrot.lane.b32.xlu0 %v1028, 24
      %v1064 = vpop.permute.xlu0 %1063
      %1065 = vrot.lane.b32.xlu0 %v1030, 24
      %v1066 = vpop.permute.xlu0 %1065
      %1067 = vrot.lane.b32.xlu0 %v1032, 24
      %v1068 = vpop.permute.xlu0 %1067
      %1069 = vrot.lane.b32.xlu0 %v1034, 24
      %v1070 = vpop.permute.xlu0 %1069
      %1071 = vrot.lane.b32.xlu0 %v1036, 24
      %v1072 = vpop.permute.xlu0 %1071
      %1073 = vrot.lane.b32.xlu0 %v1038, 24
      %v1074 = vpop.permute.xlu0 %1073
      %1075 = vrot.lane.b32.xlu0 %v1040, 24
      %v1076 = vpop.permute.xlu0 %1075
      %1077 = vrot.lane.b32.xlu0 %v1042, 24
      %v1078 = vpop.permute.xlu0 %1077
      %1079 = vrot.lane.b32.xlu0 %v1044, 24
      %v1080 = vpop.permute.xlu0 %1079
      %1081 = vrot.lane.b32.xlu0 %v1046, 24
      %v1082 = vpop.permute.xlu0 %1081
      %1083 = vrot.lane.b32.xlu0 %v1048, 24
      %v1084 = vpop.permute.xlu0 %1083
      %1085 = vrot.lane.b32.xlu0 %v1050, 24
      %v1086 = vpop.permute.xlu0 %1085
      %1087 = vrot.lane.b32.xlu0 %v1052, 24
      %v1088 = vpop.permute.xlu0 %1087
      %1089 = vrot.lane.b32.xlu0 %v1054, 24
      %v1090 = vpop.permute.xlu0 %1089
      %1091 = vrot.lane.b32.xlu0 %v1056, 24
      %v1092 = vpop.permute.xlu0 %1091
      %1093 = vrot.lane.b32.xlu0 %v1058, 24
      %v1094 = vpop.permute.xlu0 %1093
      %1095 = vrot.lane.b32.xlu0 %v1060, 24
      %v1096 = vpop.permute.xlu0 %1095
      %vm1097 = vcmask 23552
      %v1099 = vsel %vm1097, %v294, %v465
      %v1101 = vsel %vm1097, %v295, %v467
      %v1103 = vsel %vm1097, %v296, %v469
      %v1105 = vsel %vm1097, %v297, %v471
      %v1107 = vsel %vm1097, %v298, %v473
      %v1109 = vsel %vm1097, %v299, %v475
      %v1111 = vsel %vm1097, %v300, %v477
      %v1113 = vsel %vm1097, %v301, %v479
      %v1115 = vsel %vm1097, %v302, %v481
      %v1117 = vsel %vm1097, %v303, %v483
      %v1119 = vsel %vm1097, %v304, %v485
      %v1121 = vsel %vm1097, %v305, %v487
      %v1123 = vsel %vm1097, %v306, %v489
      %v1125 = vsel %vm1097, %v307, %v491
      %v1127 = vsel %vm1097, %v308, %v493
      %v1129 = vsel %vm1097, %v309, %v495
      %v1131 = vsel %vm1097, %v310, %v497
      %v1133 = vsel %vm1097, %v311, %v499
      %vm1134 = vcmask 48128
      %v1136 = vsel %vm1134, %v1099, %v542
      %v1138 = vsel %vm1134, %v1101, %v544
      %v1140 = vsel %vm1134, %v1103, %v546
      %v1142 = vsel %vm1134, %v1105, %v548
      %v1144 = vsel %vm1134, %v1107, %v550
      %v1146 = vsel %vm1134, %v1109, %v552
      %v1148 = vsel %vm1134, %v1111, %v554
      %v1150 = vsel %vm1134, %v1113, %v556
      %v1152 = vsel %vm1134, %v1115, %v558
      %v1154 = vsel %vm1134, %v1117, %v560
      %v1156 = vsel %vm1134, %v1119, %v562
      %v1158 = vsel %vm1134, %v1121, %v564
      %v1160 = vsel %vm1134, %v1123, %v566
      %v1162 = vsel %vm1134, %v1125, %v568
      %v1164 = vsel %vm1134, %v1127, %v570
      %v1166 = vsel %vm1134, %v1129, %v572
      %v1168 = vsel %vm1134, %v1131, %v574
      %v1170 = vsel %vm1134, %v1133, %v576
      %vm1171 = vcmask 72704
      %v1173 = vsel %vm1171, %v1136, %v595
      %v1175 = vsel %vm1171, %v1138, %v597
      %v1177 = vsel %vm1171, %v1140, %v599
      %v1179 = vsel %vm1171, %v1142, %v601
      %v1181 = vsel %vm1171, %v1144, %v603
      %v1183 = vsel %vm1171, %v1146, %v605
      %v1185 = vsel %vm1171, %v1148, %v607
      %v1187 = vsel %vm1171, %v1150, %v609
      %v1189 = vsel %vm1171, %v1152, %v611
      %v1191 = vsel %vm1171, %v1154, %v613
      %v1193 = vsel %vm1171, %v1156, %v615
      %v1195 = vsel %vm1171, %v1158, %v617
      %v1197 = vsel %vm1171, %v1160, %v619
      %v1199 = vsel %vm1171, %v1162, %v621
      %v1201 = vsel %vm1171, %v1164, %v623
      %v1203 = vsel %vm1171, %v1166, %v625
      %v1205 = vsel %vm1171, %v1168, %v627
      %v1207 = vsel %vm1171, %v1170, %v629
      %vm1208 = vcmask 97280
      %v1210 = vsel %vm1208, %v1173, %v725
      %v1212 = vsel %vm1208, %v1175, %v727
      %v1214 = vsel %vm1208, %v1177, %v729
      %v1216 = vsel %vm1208, %v1179, %v731
      %v1218 = vsel %vm1208, %v1181, %v733
      %v1220 = vsel %vm1208, %v1183, %v735
      %v1222 = vsel %vm1208, %v1185, %v737
      %v1224 = vsel %vm1208, %v1187, %v739
      %v1226 = vsel %vm1208, %v1189, %v741
      %v1228 = vsel %vm1208, %v1191, %v743
      %v1230 = vsel %vm1208, %v1193, %v745
      %v1232 = vsel %vm1208, %v1195, %v747
      %v1234 = vsel %vm1208, %v1197, %v749
      %v1236 = vsel %vm1208, %v1199, %v751
      %v1238 = vsel %vm1208, %v1201, %v753
      %v1240 = vsel %vm1208, %v1203, %v755
      %v1242 = vsel %vm1208, %v1205, %v757
      %v1244 = vsel %vm1208, %v1207, %v759
      %vm1245 = vcmask 121856
      %v1247 = vsel %vm1245, %v1210, %v802
      %v1249 = vsel %vm1245, %v1212, %v804
      %v1251 = vsel %vm1245, %v1214, %v806
      %v1253 = vsel %vm1245, %v1216, %v808
      %v1255 = vsel %vm1245, %v1218, %v810
      %v1257 = vsel %vm1245, %v1220, %v812
      %v1259 = vsel %vm1245, %v1222, %v814
      %v1261 = vsel %vm1245, %v1224, %v816
      %v1263 = vsel %vm1245, %v1226, %v818
      %v1265 = vsel %vm1245, %v1228, %v820
      %v1267 = vsel %vm1245, %v1230, %v822
      %v1269 = vsel %vm1245, %v1232, %v824
      %v1271 = vsel %vm1245, %v1234, %v826
      %v1273 = vsel %vm1245, %v1236, %v828
      %v1275 = vsel %vm1245, %v1238, %v830
      %v1277 = vsel %vm1245, %v1240, %v832
      %v1279 = vsel %vm1245, %v1242, %v834
      %v1281 = vsel %vm1245, %v1244, %v836
      %vm1282 = vcmask 146432
      %v1284 = vsel %vm1282, %v1247, %v855
      %v1286 = vsel %vm1282, %v1249, %v857
      %v1288 = vsel %vm1282, %v1251, %v859
      %v1290 = vsel %vm1282, %v1253, %v861
      %v1292 = vsel %vm1282, %v1255, %v863
      %v1294 = vsel %vm1282, %v1257, %v865
      %v1296 = vsel %vm1282, %v1259, %v867
      %v1298 = vsel %vm1282, %v1261, %v869
      %v1300 = vsel %vm1282, %v1263, %v871
      %v1302 = vsel %vm1282, %v1265, %v873
      %v1304 = vsel %vm1282, %v1267, %v875
      %v1306 = vsel %vm1282, %v1269, %v877
      %v1308 = vsel %vm1282, %v1271, %v879
      %v1310 = vsel %vm1282, %v1273, %v881
      %v1312 = vsel %vm1282, %v1275, %v883
      %v1314 = vsel %vm1282, %v1277, %v885
      %v1316 = vsel %vm1282, %v1279, %v887
      %v1318 = vsel %vm1282, %v1281, %v889
      %vm1319 = vcmask 171008
      %v1321 = vsel %vm1319, %v1284, %v985
      %v1323 = vsel %vm1319, %v1286, %v987
      %v1325 = vsel %vm1319, %v1288, %v989
      %v1327 = vsel %vm1319, %v1290, %v991
      %v1329 = vsel %vm1319, %v1292, %v993
      %v1331 = vsel %vm1319, %v1294, %v995
      %v1333 = vsel %vm1319, %v1296, %v997
      %v1335 = vsel %vm1319, %v1298, %v999
      %v1337 = vsel %vm1319, %v1300, %v1001
      %v1339 = vsel %vm1319, %v1302, %v1003
      %v1341 = vsel %vm1319, %v1304, %v1005
      %v1343 = vsel %vm1319, %v1306, %v1007
      %v1345 = vsel %vm1319, %v1308, %v1009
      %v1347 = vsel %vm1319, %v1310, %v1011
      %v1349 = vsel %vm1319, %v1312, %v1013
      %v1351 = vsel %vm1319, %v1314, %v1015
      %v1353 = vsel %vm1319, %v1316, %v1017
      %v1355 = vsel %vm1319, %v1318, %v1019
      %vm1356 = vcmask 195584
      %v1358 = vsel %vm1356, %v1321, %v1062
      %v1360 = vsel %vm1356, %v1323, %v1064
      %v1362 = vsel %vm1356, %v1325, %v1066
      %v1364 = vsel %vm1356, %v1327, %v1068
      %v1366 = vsel %vm1356, %v1329, %v1070
      %v1368 = vsel %vm1356, %v1331, %v1072
      %v1370 = vsel %vm1356, %v1333, %v1074
      %v1372 = vsel %vm1356, %v1335, %v1076
      %v1374 = vsel %vm1356, %v1337, %v1078
      %v1376 = vsel %vm1356, %v1339, %v1080
      %v1378 = vsel %vm1356, %v1341, %v1082
      %v1380 = vsel %vm1356, %v1343, %v1084
      %v1382 = vsel %vm1356, %v1345, %v1086
      %v1384 = vsel %vm1356, %v1347, %v1088
      %v1386 = vsel %vm1356, %v1349, %v1090
      %v1388 = vsel %vm1356, %v1351, %v1092
      %v1390 = vsel %vm1356, %v1353, %v1094
      %v1392 = vsel %vm1356, %v1355, %v1096
      %v1393 = vld [vmem:[%s1] sm:$0xf]
      %v1394 = vld [vmem:[%s1 + $0x4] sm:$0xf]
      %v1395 = vld [vmem:[%s1 + $0x8] sm:$0xf]
      %v1396 = vld [vmem:[%s1 + $0xc] sm:$0x3]
      %v1397 = vld [vmem:[%s2] sm:$0x1]
      %v1399 = vperm.slane %v1397, 0
      %v1405 = vunpack.c.l.b16 %v1393
      %v1406 = vunpack.c.l.b16 %v1394
      %v1407 = vunpack.c.l.b16 %v1395
      %v1408 = vunpack.c.l.b16 %v1396
      %v1409 = vpack.c.b16 %v1406, %v1405
      %v1410 = vpack.c.b16 %v1408, %v1407
      %vm1412 = vcmask 220160
      %v1413 = vsel %vm1412, %v1358, 0
      %v1415 = vsel %vm1412, %v1360, 0
      %v1417 = vsel %vm1412, %v1362, 0
      %v1419 = vsel %vm1412, %v1364, 0
      %v1421 = vsel %vm1412, %v1366, 0
      %v1423 = vsel %vm1412, %v1368, 0
      %v1425 = vsel %vm1412, %v1370, 0
      %v1427 = vsel %vm1412, %v1372, 0
      %v1429 = vsel %vm1412, %v1374, 0
      %v1431 = vsel %vm1412, %v1376, 0
      %v1433 = vsel %vm1412, %v1378, 0
      %v1435 = vsel %vm1412, %v1380, 0
      %v1437 = vsel %vm1412, %v1382, 0
      %v1439 = vsel %vm1412, %v1384, 0
      %v1441 = vsel %vm1412, %v1386, 0
      %v1443 = vsel %vm1412, %v1388, 0
      %v1445 = vsel %vm1412, %v1390, 0
      %v1447 = vsel %vm1412, %v1392, 0
      %vm1449 = vcmask 1044480
      %vm1450 = vcmask 1045504
      %v1451 = vsel %vm1449, 4294967295, 65535
      %v1452 = vsel %vm1450, %v1451, 0
      %v1454 = vand.u32 %v1410, %v1452
      %1456 = vmatpush.bf16.msra.mxu0 0
      %1457 = vmatpush.bf16.msra.mxu0 0
      %1458 = vmatpush.bf16.msra.mxu0 0
      %1459 = vmatpush.bf16.msra.mxu0 0
      %1460 = vmatpush.bf16.msra.mxu0 0
      %1461 = vmatpush.bf16.msra.mxu0 0
      %1462 = vmatpush.bf16.msra.mxu0 %v1454
      %1463 = vmatpush.bf16.msra.mxu0 %v1409
      %1464 = vmatmul.bf16.gmra.mxu0 %v1413
      %v1465 = vpop.f32.mrf.mxu0
      %v1466 = vadd.f32 %v1399, %v1465
      %v1467 = vpop.f32.mrf.mxu0
      %v1468 = vadd.f32 %v1399, %v1467
      %1469 = vmatmul.bf16.gmra.mxu0 %v1415
      %v1470 = vpop.f32.mrf.mxu0
      %v1471 = vadd.f32 %v1399, %v1470
      %v1472 = vpop.f32.mrf.mxu0
      %v1473 = vadd.f32 %v1399, %v1472
      %1474 = vmatmul.bf16.gmra.mxu0 %v1417
      %v1475 = vpop.f32.mrf.mxu0
      %v1476 = vadd.f32 %v1399, %v1475
      %v1477 = vpop.f32.mrf.mxu0
      %v1478 = vadd.f32 %v1399, %v1477
      %1479 = vmatmul.bf16.gmra.mxu0 %v1419
      %v1480 = vpop.f32.mrf.mxu0
      %v1481 = vadd.f32 %v1399, %v1480
      %v1482 = vpop.f32.mrf.mxu0
      %v1483 = vadd.f32 %v1399, %v1482
      %1484 = vmatmul.bf16.gmra.mxu0 %v1421
      %v1485 = vpop.f32.mrf.mxu0
      %v1486 = vadd.f32 %v1399, %v1485
      %v1487 = vpop.f32.mrf.mxu0
      %v1488 = vadd.f32 %v1399, %v1487
      %1489 = vmatmul.bf16.gmra.mxu0 %v1423
      %v1490 = vpop.f32.mrf.mxu0
      %v1491 = vadd.f32 %v1399, %v1490
      %v1492 = vpop.f32.mrf.mxu0
      %v1493 = vadd.f32 %v1399, %v1492
      %1494 = vmatmul.bf16.gmra.mxu0 %v1425
      %v1495 = vpop.f32.mrf.mxu0
      %v1496 = vadd.f32 %v1399, %v1495
      %v1497 = vpop.f32.mrf.mxu0
      %v1498 = vadd.f32 %v1399, %v1497
      %1499 = vmatmul.bf16.gmra.mxu0 %v1427
      %v1500 = vpop.f32.mrf.mxu0
      %v1501 = vadd.f32 %v1399, %v1500
      %v1502 = vpop.f32.mrf.mxu0
      %v1503 = vadd.f32 %v1399, %v1502
      %1504 = vmatmul.bf16.gmra.mxu0 %v1429
      %v1505 = vpop.f32.mrf.mxu0
      %v1506 = vadd.f32 %v1399, %v1505
      %v1507 = vpop.f32.mrf.mxu0
      %v1508 = vadd.f32 %v1399, %v1507
      %1509 = vmatmul.bf16.gmra.mxu0 %v1431
      %v1510 = vpop.f32.mrf.mxu0
      %v1511 = vadd.f32 %v1399, %v1510
      %v1512 = vpop.f32.mrf.mxu0
      %v1513 = vadd.f32 %v1399, %v1512
      %1514 = vmatmul.bf16.gmra.mxu0 %v1433
      %v1515 = vpop.f32.mrf.mxu0
      %v1516 = vadd.f32 %v1399, %v1515
      %v1517 = vpop.f32.mrf.mxu0
      %v1518 = vadd.f32 %v1399, %v1517
      %1519 = vmatmul.bf16.gmra.mxu0 %v1435
      %v1520 = vpop.f32.mrf.mxu0
      %v1521 = vadd.f32 %v1399, %v1520
      %v1522 = vpop.f32.mrf.mxu0
      %v1523 = vadd.f32 %v1399, %v1522
      %1524 = vmatmul.bf16.gmra.mxu0 %v1437
      %v1525 = vpop.f32.mrf.mxu0
      %v1526 = vadd.f32 %v1399, %v1525
      %v1527 = vpop.f32.mrf.mxu0
      %v1528 = vadd.f32 %v1399, %v1527
      %1529 = vmatmul.bf16.gmra.mxu0 %v1439
      %v1530 = vpop.f32.mrf.mxu0
      %v1531 = vadd.f32 %v1399, %v1530
      %v1532 = vpop.f32.mrf.mxu0
      %v1533 = vadd.f32 %v1399, %v1532
      %1534 = vmatmul.bf16.gmra.mxu0 %v1441
      %v1535 = vpop.f32.mrf.mxu0
      %v1536 = vadd.f32 %v1399, %v1535
      %v1537 = vpop.f32.mrf.mxu0
      %v1538 = vadd.f32 %v1399, %v1537
      %1539 = vmatmul.bf16.gmra.mxu0 %v1443
      %v1540 = vpop.f32.mrf.mxu0
      %v1541 = vadd.f32 %v1399, %v1540
      %v1542 = vpop.f32.mrf.mxu0
      %v1543 = vadd.f32 %v1399, %v1542
      %1544 = vmatmul.bf16.gmra.mxu0 %v1445
      %v1545 = vpop.f32.mrf.mxu0
      %v1546 = vadd.f32 %v1399, %v1545
      %v1547 = vpop.f32.mrf.mxu0
      %v1548 = vadd.f32 %v1399, %v1547
      %1549 = vmatmul.bf16.gmra.mxu0 %v1447
      %v1550 = vpop.f32.mrf.mxu0
      %v1551 = vadd.f32 %v1399, %v1550
      %v1552 = vpop.f32.mrf.mxu0
      %v1553 = vadd.f32 %v1399, %v1552
      %1554 = vdwg.mxu0
      %v1555 = vmax.f32 %v1466, 0.0
      %v1556 = vmax.f32 %v1468, 0.0
      %v1557 = vmax.f32 %v1471, 0.0
      %v1558 = vmax.f32 %v1473, 0.0
      %v1559 = vmax.f32 %v1476, 0.0
      %v1560 = vmax.f32 %v1478, 0.0
      %v1561 = vmax.f32 %v1481, 0.0
      %v1562 = vmax.f32 %v1483, 0.0
      %v1563 = vmax.f32 %v1486, 0.0
      %v1564 = vmax.f32 %v1488, 0.0
      %v1565 = vmax.f32 %v1491, 0.0
      %v1566 = vmax.f32 %v1493, 0.0
      %v1567 = vmax.f32 %v1496, 0.0
      %v1568 = vmax.f32 %v1498, 0.0
      %v1569 = vmax.f32 %v1501, 0.0
      %v1570 = vmax.f32 %v1503, 0.0
      %v1571 = vmax.f32 %v1506, 0.0
      %v1572 = vmax.f32 %v1508, 0.0
      %v1573 = vmax.f32 %v1511, 0.0
      %v1574 = vmax.f32 %v1513, 0.0
      %v1575 = vmax.f32 %v1516, 0.0
      %v1576 = vmax.f32 %v1518, 0.0
      %v1577 = vmax.f32 %v1521, 0.0
      %v1578 = vmax.f32 %v1523, 0.0
      %v1579 = vmax.f32 %v1526, 0.0
      %v1580 = vmax.f32 %v1528, 0.0
      %v1581 = vmax.f32 %v1531, 0.0
      %v1582 = vmax.f32 %v1533, 0.0
      %v1583 = vmax.f32 %v1536, 0.0
      %v1584 = vmax.f32 %v1538, 0.0
      %v1585 = vmax.f32 %v1541, 0.0
      %v1586 = vmax.f32 %v1543, 0.0
      %v1587 = vmax.f32 %v1546, 0.0
      %v1588 = vmax.f32 %v1548, 0.0
      %v1589 = vmax.f32 %v1551, 0.0
      %v1590 = vmax.f32 %v1553, 0.0
      %v1591 = vpack.c.bf16 %v1555, %v1555
      %v1592 = vpack.c.bf16 %v1556, %v1556
      %v1593 = vpack.c.bf16 %v1557, %v1557
      %v1594 = vpack.c.bf16 %v1558, %v1558
      %v1595 = vpack.c.bf16 %v1559, %v1559
      %v1596 = vpack.c.bf16 %v1560, %v1560
      %v1597 = vpack.c.bf16 %v1561, %v1561
      %v1598 = vpack.c.bf16 %v1562, %v1562
      %v1599 = vpack.c.bf16 %v1563, %v1563
      %v1600 = vpack.c.bf16 %v1564, %v1564
      %v1601 = vpack.c.bf16 %v1565, %v1565
      %v1602 = vpack.c.bf16 %v1566, %v1566
      %v1603 = vpack.c.bf16 %v1567, %v1567
      %v1604 = vpack.c.bf16 %v1568, %v1568
      %v1605 = vpack.c.bf16 %v1569, %v1569
      %v1606 = vpack.c.bf16 %v1570, %v1570
      %v1607 = vpack.c.bf16 %v1571, %v1571
      %v1608 = vpack.c.bf16 %v1572, %v1572
      %v1609 = vpack.c.bf16 %v1573, %v1573
      %v1610 = vpack.c.bf16 %v1574, %v1574
      %v1611 = vpack.c.bf16 %v1575, %v1575
      %v1612 = vpack.c.bf16 %v1576, %v1576
      %v1613 = vpack.c.bf16 %v1577, %v1577
      %v1614 = vpack.c.bf16 %v1578, %v1578
      %v1615 = vpack.c.bf16 %v1579, %v1579
      %v1616 = vpack.c.bf16 %v1580, %v1580
      %v1617 = vpack.c.bf16 %v1581, %v1581
      %v1618 = vpack.c.bf16 %v1582, %v1582
      %v1619 = vpack.c.bf16 %v1583, %v1583
      %v1620 = vpack.c.bf16 %v1584, %v1584
      %v1621 = vpack.c.bf16 %v1585, %v1585
      %v1622 = vpack.c.bf16 %v1586, %v1586
      %v1623 = vpack.c.bf16 %v1587, %v1587
      %v1624 = vpack.c.bf16 %v1588, %v1588
      %v1625 = vpack.c.bf16 %v1589, %v1589
      %v1626 = vpack.c.bf16 %v1590, %v1590
      %vm1627 = vcmask 158720
      %1628 = vst.msk [vmem:[%s170] sm:$0xf] %vm1627, %v1591
      %1629 = vst.msk [vmem:[%s170 + $0x4] sm:$0xf] %vm1627, %v1592
      %1630 = vst.msk [vmem:[%s170 + $0x8] sm:$0xf] %vm1627, %v1593
      %1631 = vst.msk [vmem:[%s170 + $0xc] sm:$0xf] %vm1627, %v1594
      %1632 = vst.msk [vmem:[%s170 + $0x10] sm:$0xf] %vm1627, %v1595
      %1633 = vst.msk [vmem:[%s170 + $0x14] sm:$0xf] %vm1627, %v1596
      %1634 = vst.msk [vmem:[%s170 + $0x18] sm:$0xf] %vm1627, %v1597
      %1635 = vst.msk [vmem:[%s170 + $0x1c] sm:$0xf] %vm1627, %v1598
      %1636 = vst.msk [vmem:[%s170 + $0x20] sm:$0xf] %vm1627, %v1599
      %1637 = vst.msk [vmem:[%s170 + $0x24] sm:$0xf] %vm1627, %v1600
      %1638 = vst.msk [vmem:[%s170 + $0x28] sm:$0xf] %vm1627, %v1601
      %1639 = vst.msk [vmem:[%s170 + $0x2c] sm:$0xf] %vm1627, %v1602
      %1640 = vst.msk [vmem:[%s170 + $0x30] sm:$0xf] %vm1627, %v1603
      %1641 = vst.msk [vmem:[%s170 + $0x34] sm:$0xf] %vm1627, %v1604
      %1642 = vst.msk [vmem:[%s170 + $0x38] sm:$0xf] %vm1627, %v1605
      %1643 = vst.msk [vmem:[%s170 + $0x3c] sm:$0xf] %vm1627, %v1606
      %1644 = vst.msk [vmem:[%s170 + $0x40] sm:$0xf] %vm1627, %v1607
      %1645 = vst.msk [vmem:[%s170 + $0x44] sm:$0xf] %vm1627, %v1608
      %1646 = vst.msk [vmem:[%s170 + $0x48] sm:$0xf] %vm1627, %v1609
      %1647 = vst.msk [vmem:[%s170 + $0x4c] sm:$0xf] %vm1627, %v1610
      %1648 = vst.msk [vmem:[%s170 + $0x50] sm:$0xf] %vm1627, %v1611
      %1649 = vst.msk [vmem:[%s170 + $0x54] sm:$0xf] %vm1627, %v1612
      %1650 = vst.msk [vmem:[%s170 + $0x58] sm:$0xf] %vm1627, %v1613
      %1651 = vst.msk [vmem:[%s170 + $0x5c] sm:$0xf] %vm1627, %v1614
      %1652 = vst.msk [vmem:[%s170 + $0x60] sm:$0xf] %vm1627, %v1615
      %1653 = vst.msk [vmem:[%s170 + $0x64] sm:$0xf] %vm1627, %v1616
      %1654 = vst.msk [vmem:[%s170 + $0x68] sm:$0xf] %vm1627, %v1617
      %1655 = vst.msk [vmem:[%s170 + $0x6c] sm:$0xf] %vm1627, %v1618
      %1656 = vst.msk [vmem:[%s170 + $0x70] sm:$0xf] %vm1627, %v1619
      %1657 = vst.msk [vmem:[%s170 + $0x74] sm:$0xf] %vm1627, %v1620
      %1658 = vst.msk [vmem:[%s170 + $0x78] sm:$0xf] %vm1627, %v1621
      %1659 = vst.msk [vmem:[%s170 + $0x7c] sm:$0xf] %vm1627, %v1622
      %1660 = vst.msk [vmem:[%s170 + $0x80] sm:$0xf] %vm1627, %v1623
      %1661 = vst.msk [vmem:[%s170 + $0x84] sm:$0xf] %vm1627, %v1624
      %1662 = vst.msk [vmem:[%s170 + $0x88] sm:$0xf] %vm1627, %v1625
      %1663 = vst.msk [vmem:[%s170 + $0x8c] sm:$0xf] %vm1627, %v1626
      %p1664 = scmp.lt.s32.totalorder %s14, 1
      %s1665 = scalar_select %p1664, %s14, 1
      %s1666 = smul.addr %s1665, 36
      %s1667 = smul.addr %s1666, 4
      %s1668 = scalar_lea.vmem %s3, %s1667
      // Predicated region
      $region33: #{fcn_forward.8} parent=31 // pred_check
        %p1669 = pneg %p100
      $region34: #{fcn_forward.8} parent=31 // pred_check_branch
        %1671 = sbr.rel (%p1669) target = $region36
      $region35: #{fcn_forward.8} parent=31 // pred_region
        _
      $region36: #{fcn_forward.8} parent=31 // pred_fallthru
        _
    $region32: #{fcn_forward.8} parent=5 // pred_fallthru
      _
    %p1672 = scmp.le.s32.totalorder 2, %s9
    // Predicated region
    $region37: #{fcn_forward.8} parent=5 // pred_check
      %p1673 = pneg %p1672
    $region38: #{fcn_forward.8} parent=5 // pred_check_branch
      %1675 = sbr.rel (%p1673) target = $region40
    $region39: #{fcn_forward.8} parent=5 // pred_region
      %s1676 = ssub.s32 %s9, 2
      // Predicated region
      $region41: #{fcn_forward.8} parent=39 // pred_check
        %p1677 = pneg %p106
      $region42: #{fcn_forward.8} parent=39 // pred_check_branch
        %1679 = sbr.rel (%p1677) target = $region44
      $region43: #{fcn_forward.8} parent=39 // pred_region
        %p1680 = scmp.lt.s32.totalorder %s15, 1
        %s1681 = scalar_select %p1680, %s15, 1
        %s1682 = smul.addr %s1681, 36
        %s1683 = smul.addr %s1682, 4
        %s1684 = scalar_lea.vmem %s3, %s1683
      $region44: #{fcn_forward.8} parent=39 // pred_fallthru
        _
    $region40: #{fcn_forward.8} parent=5 // pred_fallthru
      _
  $region6: #{fcn_forward.8} parent=0 // loop_footer
    %s13 = sadd.s32 1, %s9
  $region7: #{fcn_forward.8} parent=0 // loop_footer_branch
    %8 = sbr.rel target = $region3
  $region8: #{fcn_forward.8} parent=0 // loop_exit
    _

// kernel: fcn_forward.9
$region0: #{fcn_forward.9}
  #allocation0 [shape = 'u32[]', space=smem, size = 0x4, offset = 0x4, fixed_abs, tag = 'smem constant byte address 0x4 - core index']
  #allocation1 [shape = 'u32[72,128]{1,0:T(1,128)}', space=vmem, size = 0x9000, scoped, tag = 'internal scratch']
  %s0 = inlined_call_operand.vmem [shape: bf16[2,4,90,20], index: 0, kind: input, shape index: {}]
  %s1 = inlined_call_operand.vmem [shape: bf16[180,40], index: 1, kind: input, shape index: {}]
  %s2 = inlined_call_operand.vmem [shape: f32[1,40], index: 2, kind: input, shape index: {}]
  %s3 = inlined_call_operand.vmem [shape: bf16[2,72,40], index: 3, kind: output, shape index: {}]
  %s4 = sld [smem:[#allocation0]]
  $region45: #{fcn_forward.9} parent=0
    _
  %s6 = ssub.s32 1, %s4
  %s7 = scalar_select 0, %s6, %s4
  loop: start=0, step=1, limit=4
  $region2: #{fcn_forward.9} parent=0 // loop_pre_header
    _
  $region3: #{fcn_forward.9} parent=0 // loop_header
    %s9 = sphi 0, %s13
    %p10 = scmp.ge.s32.totalorder %s9, 4
    %s19 = sphi 0, %s21
    %s22 = sphi 0, %s19
    %s23 = sphi 0, %s22
    %s39 = sphi 0, %s23
    %s43 = sphi 0, %s43
    %s45 = sphi 0, %s43
    %s46 = sphi 0, %s45
    %s60 = sphi 0, %s46
    %s64 = sphi 0, %s64
    %s66 = sphi 0, %s64
    %s67 = sphi 0, %s66
    %s81 = sphi 0, %s67
    %s87 = sphi 0, %s89
    %s90 = sphi 0, %s87
    %s91 = sphi 0, %s90
    %s107 = sphi 0, %s91
  $region4: #{fcn_forward.9} parent=0 // loop_header_branch
    %12 = sbr.rel (%p10) target = $region8
  $region5: #{fcn_forward.9} parent=0 // loop_body
    %s14 = ssub.s32 %s9, 1
    %s15 = ssub.s32 %s9, 2
    %s16 = sadd.s32 %s9, 1
    %s17 = ssub.s32 %s9, %s16
    %p18 = scmp.eq.s32.totalorder %s17, 0
    %s20 = sadd.s32 %s19, 1
    %s21 = scalar_select %p18, %s19, %s20
    %p24 = pneg %p18
    %p25 = scmp.eq.s32.totalorder %s9, 1
    %p26 = por %p24, %p25
    %p27 = scmp.ne.s32.totalorder %s19, %s22
    %p28 = scmp.eq.s32.totalorder %s9, 0
    %p29 = por %p27, %p28
    %p30 = scmp.ne.s32.totalorder %s19, %s22
    %p31 = scmp.eq.s32.totalorder %s14, 1
    %p32 = por %p30, %p31
    %p33 = scmp.ne.s32.totalorder %s22, %s23
    %p34 = scmp.eq.s32.totalorder %s14, 0
    %p35 = por %p33, %p34
    %p36 = scmp.ne.s32.totalorder %s22, %s23
    %p37 = scmp.eq.s32.totalorder %s15, 1
    %p38 = por %p36, %p37
    %p40 = scmp.ne.s32.totalorder %s23, %s39
    %p41 = scmp.eq.s32.totalorder %s15, 0
    %p42 = por %p40, %p41
    %s44 = sadd.s32 %s43, 1
    %p47 = scmp.eq.s32.totalorder %s9, 1
    %p48 = scmp.ne.s32.totalorder %s43, %s45
    %p49 = scmp.eq.s32.totalorder %s9, 0
    %p50 = por %p48, %p49
    %p51 = scmp.ne.s32.totalorder %s43, %s45
    %p52 = scmp.eq.s32.totalorder %s14, 1
    %p53 = por %p51, %p52
    %p54 = scmp.ne.s32.totalorder %s45, %s46
    %p55 = scmp.eq.s32.totalorder %s14, 0
    %p56 = por %p54, %p55
    %p57 = scmp.ne.s32.totalorder %s45, %s46
    %p58 = scmp.eq.s32.totalorder %s15, 1
    %p59 = por %p57, %p58
    %p61 = scmp.ne.s32.totalorder %s46, %s60
    %p62 = scmp.eq.s32.totalorder %s15, 0
    %p63 = por %p61, %p62
    %s65 = sadd.s32 %s64, 1
    %p68 = scmp.eq.s32.totalorder %s9, 1
    %p69 = scmp.ne.s32.totalorder %s64, %s66
    %p70 = scmp.eq.s32.totalorder %s9, 0
    %p71 = por %p69, %p70
    %p72 = scmp.ne.s32.totalorder %s64, %s66
    %p73 = scmp.eq.s32.totalorder %s14, 1
    %p74 = por %p72, %p73
    %p75 = scmp.ne.s32.totalorder %s66, %s67
    %p76 = scmp.eq.s32.totalorder %s14, 0
    %p77 = por %p75, %p76
    %p78 = scmp.ne.s32.totalorder %s66, %s67
    %p79 = scmp.eq.s32.totalorder %s15, 1
    %p80 = por %p78, %p79
    %p82 = scmp.ne.s32.totalorder %s67, %s81
    %p83 = scmp.eq.s32.totalorder %s15, 0
    %p84 = por %p82, %p83
    %s85 = ssub.s32 %s9, %s16
    %p86 = scmp.eq.s32.totalorder %s85, 0
    %s88 = sadd.s32 %s87, 1
    %s89 = scalar_select %p86, %s87, %s88
    %p92 = pneg %p86
    %p93 = scmp.eq.s32.totalorder %s9, 1
    %p94 = por %p92, %p93
    %p95 = scmp.ne.s32.totalorder %s87, %s90
    %p96 = scmp.eq.s32.totalorder %s9, 0
    %p97 = por %p95, %p96
    %p98 = scmp.ne.s32.totalorder %s87, %s90
    %p99 = scmp.eq.s32.totalorder %s14, 1
    %p100 = por %p98, %p99
    %p101 = scmp.ne.s32.totalorder %s90, %s91
    %p102 = scmp.eq.s32.totalorder %s14, 0
    %p103 = por %p101, %p102
    %p104 = scmp.ne.s32.totalorder %s90, %s91
    %p105 = scmp.eq.s32.totalorder %s15, 1
    %p106 = por %p104, %p105
    %p108 = scmp.ne.s32.totalorder %s91, %s107
    %p109 = scmp.eq.s32.totalorder %s15, 0
    %p110 = por %p108, %p109
    %p111 = scmp.le.s32.totalorder 1, %s9
    %p112 = scmp.lt.s32.totalorder %s9, 3
    %p113 = pnand %p111, %p112
    %p114 = pneg %p113
    // Predicated region
    $region9: #{fcn_forward.9} parent=5 // pred_check
      _
    $region10: #{fcn_forward.9} parent=5 // pred_check_branch
      %116 = sbr.rel (%p113) target = $region12
    $region11: #{fcn_forward.9} parent=5 // pred_region
      %s117 = ssub.s32 %s9, 1
      // Predicated region
      $region13: #{fcn_forward.9} parent=11 // pred_check
        %p118 = pneg %p56
      $region14: #{fcn_forward.9} parent=11 // pred_check_branch
        %120 = sbr.rel (%p118) target = $region16
      $region15: #{fcn_forward.9} parent=11 // pred_region
        _
      $region16: #{fcn_forward.9} parent=11 // pred_fallthru
        _
      // Predicated region
      $region17: #{fcn_forward.9} parent=11 // pred_check
        %p121 = pneg %p77
      $region18: #{fcn_forward.9} parent=11 // pred_check_branch
        %123 = sbr.rel (%p121) target = $region20
      $region19: #{fcn_forward.9} parent=11 // pred_region
        _
      $region20: #{fcn_forward.9} parent=11 // pred_fallthru
        _
    $region12: #{fcn_forward.9} parent=5 // pred_fallthru
      _
    %p124 = scmp.lt.s32.totalorder %s9, 2
    // Predicated region
    $region21: #{fcn_forward.9} parent=5 // pred_check
      %p125 = pneg %p124
    $region22: #{fcn_forward.9} parent=5 // pred_check_branch
      %127 = sbr.rel (%p125) target = $region24
    $region23: #{fcn_forward.9} parent=5 // pred_region
      // Predicated region
      $region25: #{fcn_forward.9} parent=23 // pred_check
        %p128 = pneg %p29
      $region26: #{fcn_forward.9} parent=23 // pred_check_branch
        %130 = sbr.rel (%p128) target = $region28
      $region27: #{fcn_forward.9} parent=23 // pred_region
        %p131 = scmp.lt.s32.totalorder %s9, 1
        %s132 = scalar_select %p131, %s9, 1
        %s133 = smul.addr %s132, 48
        %s134 = smul.addr %s133, 4
        %s135 = scalar_lea.vmem %s0, %s134
      $region28: #{fcn_forward.9} parent=23 // pred_fallthru
        _
    $region24: #{fcn_forward.9} parent=5 // pred_fallthru
      _
    %p136 = scmp.le.s32.totalorder 1, %s9
    %p137 = scmp.lt.s32.totalorder %s9, 3
    %p138 = pnand %p136, %p137
    %p139 = pneg %p138
    // Predicated region
    $region29: #{fcn_forward.9} parent=5 // pred_check
      _
    $region30: #{fcn_forward.9} parent=5 // pred_check_branch
      %141 = sbr.rel (%p138) target = $region32
    $region31: #{fcn_forward.9} parent=5 // pred_region
      %s142 = ssub.s32 %s9, 1
      %p143 = scmp.lt.s32.totalorder %s14, 1
      %s144 = scalar_select %p143, %s14, 1
      %s145 = smul.addr %s144, 48
      %s146 = smul.addr %s145, 4
      %s147 = scalar_lea.vmem %s0, %s146
      %p148 = pneg %p35
      %p149 = pneg %p32
      %p150 = pneg %p56
      %p151 = pneg %p53
      %p152 = pneg %p77
      %p153 = pneg %p74
      %p154 = pneg %p103
      %p155 = pneg %p100
      %p156 = scmp.lt.s32.totalorder %s14, 1
      %s157 = scalar_select %p156, %s14, 1
      %s158 = smul.addr %s157, 9
      %s159 = smul.addr %s158, 4
      %s160 = scalar_lea.vmem %s3, %s159
      %p161 = scmp.lt.s32.totalorder %s14, 1
      %s162 = scalar_select %p161, %s14, 1
      %s163 = smul.addr %s162, 48
      %s164 = smul.addr %s163, 4
      %s165 = scalar_lea.vmem %s0, %s164
      %p166 = scmp.lt.s32.totalorder %s14, 1
      %s167 = scalar_select %p166, %s14, 1
      %s168 = smul.addr %s167, 9
      %s169 = smul.addr %s168, 4
      %s170 = scalar_lea.vmem %s3, %s169
      %v172 = vld [vmem:[%s165] sm:$0xf]
      %v173 = vld [vmem:[%s165 + $0x4] sm:$0xf]
      %v174 = vld [vmem:[%s165 + $0x8] sm:$0xf]
      %v175 = vld [vmem:[%s165 + $0xc] sm:$0xf]
      %v176 = vld [vmem:[%s165 + $0x10] sm:$0xf]
      %v177 = vld [vmem:[%s165 + $0x14] sm:$0xf]
      %v178 = vld [vmem:[%s165 + $0x18] sm:$0xf]
      %v179 = vld [vmem:[%s165 + $0x1c] sm:$0xf]
      %v180 = vld [vmem:[%s165 + $0x20] sm:$0xf]
      %s181 = scalar_lea.vmem %s165, 48
      %v182 = vld [vmem:[%s181] sm:$0xf]
      %v183 = vld [vmem:[%s181 + $0x4] sm:$0xf]
      %v184 = vld [vmem:[%s181 + $0x8] sm:$0xf]
      %v185 = vld [vmem:[%s181 + $0xc] sm:$0xf]
      %v186 = vld [vmem:[%s181 + $0x10] sm:$0xf]
      %v187 = vld [vmem:[%s181 + $0x14] sm:$0xf]
      %v188 = vld [vmem:[%s181 + $0x18] sm:$0xf]
      %v189 = vld [vmem:[%s181 + $0x1c] sm:$0xf]
      %v190 = vld [vmem:[%s181 + $0x20] sm:$0xf]
      %v191 = vld [vmem:[%s165 + $0x24] sm:$0x1]
      %s192 = scalar_lea.vmem %s165, 96
      %v193 = vld [vmem:[%s192] sm:$0xf]
      %v194 = vld [vmem:[%s192 + $0x4] sm:$0xf]
      %v195 = vld [vmem:[%s192 + $0x8] sm:$0xf]
      %v196 = vld [vmem:[%s192 + $0xc] sm:$0xf]
      %v197 = vld [vmem:[%s192 + $0x10] sm:$0xf]
      %v198 = vld [vmem:[%s192 + $0x14] sm:$0xf]
      %v199 = vld [vmem:[%s192 + $0x18] sm:$0xf]
      %v200 = vld [vmem:[%s192 + $0x1c] sm:$0xf]
      %v201 = vld [vmem:[%s192 + $0x20] sm:$0xf]
      %s202 = scalar_lea.vmem %s165, 144
      %v203 = vld [vmem:[%s202] sm:$0xf]
      %v204 = vld [vmem:[%s202 + $0x4] sm:$0xf]
      %v205 = vld [vmem:[%s202 + $0x8] sm:$0xf]
      %v206 = vld [vmem:[%s202 + $0xc] sm:$0xf]
      %v207 = vld [vmem:[%s202 + $0x10] sm:$0xf]
      %v208 = vld [vmem:[%s202 + $0x14] sm:$0xf]
      %v209 = vld [vmem:[%s202 + $0x18] sm:$0xf]
      %v210 = vld [vmem:[%s202 + $0x1c] sm:$0xf]
      %v211 = vld [vmem:[%s202 + $0x20] sm:$0xf]
      %v212 = vld [vmem:[%s192 + $0x24] sm:$0x1]
      %v213 = vld [vmem:[%s165 + $0x24] sm:$0xf]
      %v214 = vld [vmem:[%s165 + $0x28] sm:$0x1]
      %v215 = vld [vmem:[%s181 + $0x24] sm:$0xf]
      %v216 = vld [vmem:[%s181 + $0x28] sm:$0x1]
      %v217 = vld [vmem:[%s165 + $0x4] sm:$0xe]
      %v227 = vunpack.c.l.b16 %v172
      %v228 = vunpack.c.l.b16 %v173
      %v229 = vunpack.c.l.b16 %v174
      %v230 = vunpack.c.l.b16 %v175
      %v231 = vunpack.c.l.b16 %v176
      %v232 = vunpack.c.l.b16 %v177
      %v233 = vunpack.c.l.b16 %v178
      %v234 = vunpack.c.l.b16 %v179
      %v235 = vunpack.c.l.b16 %v180
      %v236 = vpack.c.b16 %v228, %v227
      %v237 = vpack.c.b16 %v230, %v229
      %v238 = vpack.c.b16 %v232, %v231
      %v239 = vpack.c.b16 %v234, %v233
      %v240 = vpack.c.b16 %v235, %v235
      %v250 = vunpack.c.l.b16 %v182
      %v251 = vunpack.c.l.b16 %v183
      %v252 = vunpack.c.l.b16 %v184
      %v253 = vunpack.c.l.b16 %v185
      %v254 = vunpack.c.l.b16 %v186
      %v255 = vunpack.c.l.b16 %v187
      %v256 = vunpack.c.l.b16 %v188
      %v257 = vunpack.c.l.b16 %v189
      %v258 = vunpack.c.l.b16 %v190
      %v259 = vpack.c.b16 %v251, %v250
      %v260 = vpack.c.b16 %v253, %v252
      %v261 = vpack.c.b16 %v255, %v254
      %v262 = vpack.c.b16 %v257, %v256
      %v263 = vpack.c.b16 %v258, %v258
      %264 = vrot.lane.b32.xlu0 %v259, 20
      %v265 = vpop.permute.xlu0 %264
      %266 = vrot.lane.b32.xlu0 %v260, 20
      %v267 = vpop.permute.xlu0 %266
      %268 = vrot.lane.b32.xlu0 %v261, 20
      %v269 = vpop.permute.xlu0 %268
      %270 = vrot.lane.b32.xlu0 %v262, 20
      %v271 = vpop.permute.xlu0 %270
      %272 = vrot.lane.b32.xlu0 %v263, 20
      %v273 = vpop.permute.xlu0 %272
      %v275 = vunpack.c.l.b16 %v191
      %v276 = vpack.c.b16 %v275, %v235
      %vm277 = vsmask.f32 7424
      %v279 = vshrl.u32 %v236, 16
      %v281 = vshll.u32 %v236, 16
      %v283 = vrot.slane %v281, 1
      %v284 = vor.u32 %v279, %v283
      %v286 = vshll.u32 %v237, 16
      %v288 = vrot.slane %v286, 1
      %v289 = vsel %vm277, %v284, %v288
      %v290 = vshrl.u32 %v237, 16
      %v292 = vor.u32 %v290, %v288
      %v294 = vshll.u32 %v238, 16
      %v296 = vrot.slane %v294, 1
      %v297 = vsel %vm277, %v292, %v296
      %v298 = vshrl.u32 %v238, 16
      %v300 = vor.u32 %v298, %v296
      %v302 = vshll.u32 %v239, 16
      %v304 = vrot.slane %v302, 1
      %v305 = vsel %vm277, %v300, %v304
      %v306 = vshrl.u32 %v239, 16
      %v308 = vor.u32 %v306, %v304
      %v310 = vshll.u32 %v276, 16
      %v312 = vrot.slane %v310, 1
      %v313 = vsel %vm277, %v308, %v312
      %v314 = vshrl.u32 %v276, 16
      %v316 = vor.u32 %v314, %v312
      %317 = vrot.lane.b32.xlu0 %v289, 40
      %v318 = vpop.permute.xlu0 %317
      %319 = vrot.lane.b32.xlu0 %v297, 40
      %v320 = vpop.permute.xlu0 %319
      %321 = vrot.lane.b32.xlu0 %v305, 40
      %v322 = vpop.permute.xlu0 %321
      %323 = vrot.lane.b32.xlu0 %v313, 40
      %v324 = vpop.permute.xlu0 %323
      %325 = vrot.lane.b32.xlu0 %v316, 40
      %v326 = vpop.permute.xlu0 %325
      %v336 = vunpack.c.l.b16 %v193
      %v337 = vunpack.c.l.b16 %v194
      %v338 = vunpack.c.l.b16 %v195
      %v339 = vunpack.c.l.b16 %v196
      %v340 = vunpack.c.l.b16 %v197
      %v341 = vunpack.c.l.b16 %v198
      %v342 = vunpack.c.l.b16 %v199
      %v343 = vunpack.c.l.b16 %v200
      %v344 = vunpack.c.l.b16 %v201
      %v345 = vpack.c.b16 %v337, %v336
      %v346 = vpack.c.b16 %v339, %v338
      %v347 = vpack.c.b16 %v341, %v340
      %v348 = vpack.c.b16 %v343, %v342
      %v349 = vpack.c.b16 %v344, %v344
      %350 = vrot.lane.b32.xlu0 %v345, 60
      %v351 = vpop.permute.xlu0 %350
      %352 = vrot.lane.b32.xlu0 %v346, 60
      %v353 = vpop.permute.xlu0 %352
      %354 = vrot.lane.b32.xlu0 %v347, 60
      %v355 = vpop.permute.xlu0 %354
      %356 = vrot.lane.b32.xlu0 %v348, 60
      %v357 = vpop.permute.xlu0 %356
      %358 = vrot.lane.b32.xlu0 %v349, 60
      %v359 = vpop.permute.xlu0 %358
      %v369 = vunpack.c.l.b16 %v203
      %v370 = vunpack.c.l.b16 %v204
      %v371 = vunpack.c.l.b16 %v205
      %v372 = vunpack.c.l.b16 %v206
      %v373 = vunpack.c.l.b16 %v207
      %v374 = vunpack.c.l.b16 %v208
      %v375 = vunpack.c.l.b16 %v209
      %v376 = vunpack.c.l.b16 %v210
      %v377 = vunpack.c.l.b16 %v211
      %v378 = vpack.c.b16 %v370, %v369
      %v379 = vpack.c.b16 %v372, %v371
      %v380 = vpack.c.b16 %v374, %v373
      %v381 = vpack.c.b16 %v376, %v375
      %v382 = vpack.c.b16 %v377, %v377
      %383 = vrot.lane.b32.xlu0 %v378, 80
      %v384 = vpop.permute.xlu0 %383
      %385 = vrot.lane.b32.xlu0 %v379, 80
      %v386 = vpop.permute.xlu0 %385
      %387 = vrot.lane.b32.xlu0 %v380, 80
      %v388 = vpop.permute.xlu0 %387
      %389 = vrot.lane.b32.xlu0 %v381, 80
      %v390 = vpop.permute.xlu0 %389
      %391 = vrot.lane.b32.xlu0 %v382, 80
      %v392 = vpop.permute.xlu0 %391
      %v394 = vunpack.c.l.b16 %v212
      %v395 = vpack.c.b16 %v394, %v344
      %v397 = vshrl.u32 %v345, 16
      %v399 = vshll.u32 %v345, 16
      %v401 = vrot.slane %v399, 1
      %v402 = vor.u32 %v397, %v401
      %v404 = vshll.u32 %v346, 16
      %v406 = vrot.slane %v404, 1
      %v407 = vsel %vm277, %v402, %v406
      %v408 = vshrl.u32 %v346, 16
      %v410 = vor.u32 %v408, %v406
      %v412 = vshll.u32 %v347, 16
      %v414 = vrot.slane %v412, 1
      %v415 = vsel %vm277, %v410, %v414
      %v416 = vshrl.u32 %v347, 16
      %v418 = vor.u32 %v416, %v414
      %v420 = vshll.u32 %v348, 16
      %v422 = vrot.slane %v420, 1
      %v423 = vsel %vm277, %v418, %v422
      %v424 = vshrl.u32 %v348, 16
      %v426 = vor.u32 %v424, %v422
      %v428 = vshll.u32 %v395, 16
      %v430 = vrot.slane %v428, 1
      %v431 = vsel %vm277, %v426, %v430
      %v432 = vshrl.u32 %v395, 16
      %v434 = vor.u32 %v432, %v430
      %435 = vrot.lane.b32.xlu0 %v407, 100
      %v436 = vpop.permute.xlu0 %435
      %437 = vrot.lane.b32.xlu0 %v415, 100
      %v438 = vpop.permute.xlu0 %437
      %439 = vrot.lane.b32.xlu0 %v423, 100
      %v440 = vpop.permute.xlu0 %439
      %441 = vrot.lane.b32.xlu0 %v431, 100
      %v442 = vpop.permute.xlu0 %441
      %443 = vrot.lane.b32.xlu0 %v434, 100
      %v444 = vpop.permute.xlu0 %443
      %v447 = vunpack.c.l.b16 %v213
      %v448 = vunpack.c.l.b16 %v214
      %v449 = vpack.c.b16 %v229, %v228
      %v450 = vpack.c.b16 %v231, %v230
      %v451 = vpack.c.b16 %v233, %v232
      %v452 = vpack.c.b16 %v235, %v234
      %v453 = vpack.c.b16 %v448, %v447
      %v455 = vshrl.u32 %v449, 16
      %v457 = vshll.u32 %v449, 16
      %v459 = vrot.slane %v457, 1
      %v460 = vor.u32 %v455, %v459
      %v462 = vshll.u32 %v450, 16
      %v464 = vrot.slane %v462, 1
      %v465 = vsel %vm277, %v460, %v464
      %v466 = vshrl.u32 %v450, 16
      %v468 = vor.u32 %v466, %v464
      %v470 = vshll.u32 %v451, 16
      %v472 = vrot.slane %v470, 1
      %v473 = vsel %vm277, %v468, %v472
      %v474 = vshrl.u32 %v451, 16
      %v476 = vor.u32 %v474, %v472
      %v478 = vshll.u32 %v452, 16
      %v480 = vrot.slane %v478, 1
      %v481 = vsel %vm277, %v476, %v480
      %v482 = vshrl.u32 %v452, 16
      %v484 = vor.u32 %v482, %v480
      %v486 = vshll.u32 %v453, 16
      %v488 = vrot.slane %v486, 1
      %v489 = vsel %vm277, %v484, %v488
      %v490 = vshrl.u32 %v453, 16
      %v492 = vor.u32 %v490, %v488
      %493 = vrot.lane.b32.xlu0 %v465, 120
      %v494 = vpop.permute.xlu0 %493
      %495 = vrot.lane.b32.xlu0 %v473, 120
      %v496 = vpop.permute.xlu0 %495
      %497 = vrot.lane.b32.xlu0 %v481, 120
      %v498 = vpop.permute.xlu0 %497
      %499 = vrot.lane.b32.xlu0 %v489, 120
      %v500 = vpop.permute.xlu0 %499
      %501 = vrot.lane.b32.xlu0 %v492, 120
      %v502 = vpop.permute.xlu0 %501
      %v505 = vunpack.c.l.b16 %v215
      %v506 = vunpack.c.l.b16 %v216
      %v507 = vpack.c.b16 %v252, %v251
      %v508 = vpack.c.b16 %v254, %v253
      %v509 = vpack.c.b16 %v256, %v255
      %v510 = vpack.c.b16 %v258, %v257
      %v511 = vpack.c.b16 %v506, %v505
      %v513 = vshrl.u32 %v507, 16
      %v515 = vshll.u32 %v507, 16
      %v517 = vrot.slane %v515, 1
      %v518 = vor.u32 %v513, %v517
      %v520 = vshll.u32 %v508, 16
      %v522 = vrot.slane %v520, 1
      %v523 = vsel %vm277, %v518, %v522
      %v524 = vshrl.u32 %v508, 16
      %v526 = vor.u32 %v524, %v522
      %v528 = vshll.u32 %v509, 16
      %v530 = vrot.slane %v528, 1
      %v531 = vsel %vm277, %v526, %v530
      %v532 = vshrl.u32 %v509, 16
      %v534 = vor.u32 %v532, %v530
      %v536 = vshll.u32 %v510, 16
      %v538 = vrot.slane %v536, 1
      %v539 = vsel %vm277, %v534, %v538
      %v540 = vshrl.u32 %v510, 16
      %v542 = vor.u32 %v540, %v538
      %v544 = vshll.u32 %v511, 16
      %v546 = vrot.slane %v544, 1
      %v547 = vsel %vm277, %v542, %v546
      %v548 = vshrl.u32 %v511, 16
      %v550 = vor.u32 %v548, %v546
      %551 = vrot.lane.b32.xlu0 %v523, 12
      %v552 = vpop.permute.xlu0 %551
      %553 = vrot.lane.b32.xlu0 %v531, 12
      %v554 = vpop.permute.xlu0 %553
      %555 = vrot.lane.b32.xlu0 %v539, 12
      %v556 = vpop.permute.xlu0 %555
      %557 = vrot.lane.b32.xlu0 %v547, 12
      %v558 = vpop.permute.xlu0 %557
      %559 = vrot.lane.b32.xlu0 %v550, 12
      %v560 = vpop.permute.xlu0 %559
      %v562 = vunpack.c.l.b16 %v217
      %v563 = vpack.c.b16 %v229, %v562
      %vm564 = vcmask 1046528
      %v565 = vrot.slane %v563, 1
      %v566 = vrot.slane %v450, 1
      %v567 = vsel %vm564, %v565, %v566
      %v568 = vrot.slane %v451, 1
      %v569 = vsel %vm564, %v566, %v568
      %v570 = vrot.slane %v452, 1
      %v571 = vsel %vm564, %v568, %v570
      %v572 = vrot.slane %v453, 1
      %v573 = vsel %vm564, %v570, %v572
      %574 = vrot.lane.b32.xlu0 %v567, 32
      %v575 = vpop.permute.xlu0 %574
      %576 = vrot.lane.b32.xlu0 %v569, 32
      %v577 = vpop.permute.xlu0 %576
      %578 = vrot.lane.b32.xlu0 %v571, 32
      %v579 = vpop.permute.xlu0 %578
      %580 = vrot.lane.b32.xlu0 %v573, 32
      %v581 = vpop.permute.xlu0 %580
      %582 = vrot.lane.b32.xlu0 %v572, 32
      %v583 = vpop.permute.xlu0 %582
      %vm584 = vcmask 162816
      %v586 = vsel %vm584, %v236, %v265
      %v588 = vsel %vm584, %v237, %v267
      %v590 = vsel %vm584, %v238, %v269
      %v592 = vsel %vm584, %v239, %v271
      %v595 = vsel %vm584, %v240, %v273
      %vm596 = vcmask 326656
      %v598 = vsel %vm596, %v586, %v318
      %v600 = vsel %vm596, %v588, %v320
      %v602 = vsel %vm596, %v590, %v322
      %v604 = vsel %vm596, %v592, %v324
      %v606 = vsel %vm596, %v595, %v326
      %vm607 = vcmask 490496
      %v609 = vsel %vm607, %v598, %v351
      %v611 = vsel %vm607, %v600, %v353
      %v613 = vsel %vm607, %v602, %v355
      %v615 = vsel %vm607, %v604, %v357
      %v617 = vsel %vm607, %v606, %v359
      %vm618 = vcmask 654336
      %v620 = vsel %vm618, %v609, %v384
      %v622 = vsel %vm618, %v611, %v386
      %v624 = vsel %vm618, %v613, %v388
      %v626 = vsel %vm618, %v615, %v390
      %v628 = vsel %vm618, %v617, %v392
      %vm629 = vcmask 818176
      %v631 = vsel %vm629, %v620, %v436
      %v633 = vsel %vm629, %v622, %v438
      %v635 = vsel %vm629, %v624, %v440
      %v637 = vsel %vm629, %v626, %v442
      %v639 = vsel %vm629, %v628, %v444
      %vm640 = vcmask 982016
      %v642 = vsel %vm640, %v631, %v494
      %v645 = vsel %vm640, %v633, %v496
      %v648 = vsel %vm640, %v635, %v498
      %v651 = vsel %vm640, %v637, %v500
      %v654 = vsel %vm640, %v639, %v502
      %vm656 = vcmask 97280
      %v658 = vsel %vm656, %v494, %v552
      %v660 = vsel %vm656, %v496, %v554
      %v662 = vsel %vm656, %v498, %v556
      %v664 = vsel %vm656, %v500, %v558
      %v666 = vsel %vm656, %v502, %v560
      %vm667 = vcmask 261120
      %v669 = vsel %vm667, %v658, %v575
      %v671 = vsel %vm667, %v660, %v577
      %v673 = vsel %vm667, %v662, %v579
      %v675 = vsel %vm667, %v664, %v581
      %v677 = vsel %vm667, %v666, %v583
      %v678 = vld [vmem:[%s1] sm:$0xf]
      %v679 = vld [vmem:[%s1 + $0x4] sm:$0xf]
      %v680 = vld [vmem:[%s1 + $0x8] sm:$0xf]
      %v681 = vld [vmem:[%s1 + $0xc] sm:$0xf]
      %v682 = vld [vmem:[%s1 + $0x10] sm:$0xf]
      %v683 = vld [vmem:[%s1 + $0x14] sm:$0xf]
      %v684 = vld [vmem:[%s1 + $0x18] sm:$0xf]
      %v685 = vld [vmem:[%s1 + $0x1c] sm:$0xf]
      %v686 = vld [vmem:[%s1 + $0x20] sm:$0xf]
      %v687 = vld [vmem:[%s1 + $0x24] sm:$0xf]
      %v688 = vld [vmem:[%s1 + $0x28] sm:$0xf]
      %v689 = vld [vmem:[%s1 + $0x2c] sm:$0xf]
      %v690 = vld [vmem:[%s1 + $0x30] sm:$0xf]
      %v691 = vld [vmem:[%s1 + $0x34] sm:$0xf]
      %v692 = vld [vmem:[%s1 + $0x38] sm:$0xf]
      %v693 = vld [vmem:[%s1 + $0x3c] sm:$0xf]
      %v694 = vld [vmem:[%s1 + $0x40] sm:$0xf]
      %v695 = vld [vmem:[%s1 + $0x44] sm:$0xf]
      %v696 = vld [vmem:[%s1 + $0x48] sm:$0xf]
      %v697 = vld [vmem:[%s1 + $0x4c] sm:$0xf]
      %v698 = vld [vmem:[%s1 + $0x50] sm:$0xf]
      %v699 = vld [vmem:[%s1 + $0x54] sm:$0xf]
      %v700 = vld [vmem:[%s1 + $0x58] sm:$0x3]
      %v701 = vld [vmem:[%s2] sm:$0x1]
      %v703 = vperm.slane %v701, 0
      %v728 = vunpack.c.l.b16 %v678
      %v729 = vunpack.c.l.b16 %v679
      %v730 = vunpack.c.l.b16 %v680
      %v731 = vunpack.c.l.b16 %v681
      %v732 = vunpack.c.l.b16 %v682
      %v733 = vunpack.c.l.b16 %v683
      %v734 = vunpack.c.l.b16 %v684
      %v735 = vunpack.c.l.b16 %v685
      %v736 = vunpack.c.l.b16 %v686
      %v737 = vunpack.c.l.b16 %v687
      %v738 = vunpack.c.l.b16 %v688
      %v739 = vunpack.c.l.b16 %v689
      %v740 = vunpack.c.l.b16 %v690
      %v741 = vunpack.c.l.b16 %v691
      %v742 = vunpack.c.l.b16 %v692
      %v743 = vunpack.c.l.b16 %v693
      %v744 = vunpack.c.l.b16 %v694
      %v745 = vunpack.c.l.b16 %v695
      %v746 = vunpack.c.l.b16 %v696
      %v747 = vunpack.c.l.b16 %v697
      %v748 = vunpack.c.l.b16 %v698
      %v749 = vunpack.c.l.b16 %v699
      %v750 = vunpack.c.l.b16 %v700
      %v751 = vpack.c.b16 %v729, %v728
      %v752 = vpack.c.b16 %v731, %v730
      %v753 = vpack.c.b16 %v733, %v732
      %v754 = vpack.c.b16 %v735, %v734
      %v755 = vpack.c.b16 %v737, %v736
      %v756 = vpack.c.b16 %v739, %v738
      %v757 = vpack.c.b16 %v741, %v740
      %v758 = vpack.c.b16 %v743, %v742
      %v759 = vpack.c.b16 %v745, %v744
      %v760 = vpack.c.b16 %v747, %v746
      %v761 = vpack.c.b16 %v749, %v748
      %v762 = vpack.c.b16 %v750, %v750
      %vm774 = vcmask 424960
      %v775 = vsel %vm774, %v669, 0
      %v777 = vsel %vm774, %v671, 0
      %v779 = vsel %vm774, %v673, 0
      %v781 = vsel %vm774, %v675, 0
      %v783 = vsel %vm774, %v677, 0
      %vm785 = vcmask 1041408
      %v787 = vsel %vm785, %v762, 0
      %789 = vmatpush.bf16.msra.mxu0 %v758
      %790 = vmatpush.bf16.msra.mxu0 %v757
      %791 = vmatpush.bf16.msra.mxu0 %v756
      %792 = vmatpush.bf16.msra.mxu0 %v755
      %793 = vmatpush.bf16.msra.mxu0 %v754
      %794 = vmatpush.bf16.msra.mxu0 %v753
      %795 = vmatpush.bf16.msra.mxu0 %v752
      %796 = vmatpush.bf16.msra.mxu0 %v751
      %797 = vmatmul.bf16.gmra.mxu0 %v642
      %v798 = vpop.f32.mrf.mxu0
      %v799 = vadd.f32 %v703, %v798
      %v800 = vpop.f32.mrf.mxu0
      %v801 = vadd.f32 %v703, %v800
      %802 = vmatmul.bf16.gmra.mxu0 %v645
      %v803 = vpop.f32.mrf.mxu0
      %v804 = vadd.f32 %v703, %v803
      %v805 = vpop.f32.mrf.mxu0
      %v806 = vadd.f32 %v703, %v805
      %807 = vmatmul.bf16.gmra.mxu0 %v648
      %v808 = vpop.f32.mrf.mxu0
      %v809 = vadd.f32 %v703, %v808
      %v810 = vpop.f32.mrf.mxu0
      %v811 = vadd.f32 %v703, %v810
      %812 = vmatmul.bf16.gmra.mxu0 %v651
      %v813 = vpop.f32.mrf.mxu0
      %v814 = vadd.f32 %v703, %v813
      %v815 = vpop.f32.mrf.mxu0
      %v816 = vadd.f32 %v703, %v815
      %817 = vmatmul.bf16.gmra.mxu0 %v654
      %v818 = vpop.f32.mrf.mxu0
      %v819 = vadd.f32 %v703, %v818
      %v820 = vpop.f32.mrf.mxu0
      %821 = vdwg.mxu0
      %822 = vmatpush.bf16.msra.mxu0 0
      %823 = vmatpush.bf16.msra.mxu0 0
      %824 = vmatpush.bf16.msra.mxu0 0
      %825 = vmatpush.bf16.msra.mxu0 0
      %826 = vmatpush.bf16.msra.mxu0 %v787
      %827 = vmatpush.bf16.msra.mxu0 %v761
      %828 = vmatpush.bf16.msra.mxu0 %v760
      %829 = vmatpush.bf16.msra.mxu0 %v759
      %830 = vmatmul.bf16.gmra.mxu0 %v775
      %v831 = vpop.f32.mrf.mxu0
      %v832 = vadd.f32 %v799, %v831
      %v833 = vpop.f32.mrf.mxu0
      %v834 = vadd.f32 %v801, %v833
      %835 = vmatmul.bf16.gmra.mxu0 %v777
      %v836 = vpop.f32.mrf.mxu0
      %v837 = vadd.f32 %v804, %v836
      %v838 = vpop.f32.mrf.mxu0
      %v839 = vadd.f32 %v806, %v838
      %840 = vmatmul.bf16.gmra.mxu0 %v779
      %v841 = vpop.f32.mrf.mxu0
      %v842 = vadd.f32 %v809, %v841
      %v843 = vpop.f32.mrf.mxu0
      %v844 = vadd.f32 %v811, %v843
      %845 = vmatmul.bf16.gmra.mxu0 %v781
      %v846 = vpop.f32.mrf.mxu0
      %v847 = vadd.f32 %v814, %v846
      %v848 = vpop.f32.mrf.mxu0
      %v849 = vadd.f32 %v816, %v848
      %850 = vmatmul.bf16.gmra.mxu0 %v783
      %v851 = vpop.f32.mrf.mxu0
      %v852 = vadd.f32 %v819, %v851
      %v853 = vpop.f32.mrf.mxu0
      %854 = vdwg.mxu0
      %v855 = vmax.f32 %v832, 0.0
      %v856 = vmax.f32 %v834, 0.0
      %v857 = vmax.f32 %v837, 0.0
      %v858 = vmax.f32 %v839, 0.0
      %v859 = vmax.f32 %v842, 0.0
      %v860 = vmax.f32 %v844, 0.0
      %v861 = vmax.f32 %v847, 0.0
      %v862 = vmax.f32 %v849, 0.0
      %v863 = vmax.f32 %v852, 0.0
      %v864 = vpack.c.bf16 %v855, %v855
      %v865 = vpack.c.bf16 %v856, %v856
      %v866 = vpack.c.bf16 %v857, %v857
      %v867 = vpack.c.bf16 %v858, %v858
      %v868 = vpack.c.bf16 %v859, %v859
      %v869 = vpack.c.bf16 %v860, %v860
      %v870 = vpack.c.bf16 %v861, %v861
      %v871 = vpack.c.bf16 %v862, %v862
      %v872 = vpack.c.bf16 %v863, %v863
      %vm873 = vcmask 322560
      %874 = vst.msk [vmem:[%s170] sm:$0xf] %vm873, %v864
      %875 = vst.msk [vmem:[%s170 + $0x4] sm:$0xf] %vm873, %v865
      %876 = vst.msk [vmem:[%s170 + $0x8] sm:$0xf] %vm873, %v866
      %877 = vst.msk [vmem:[%s170 + $0xc] sm:$0xf] %vm873, %v867
      %878 = vst.msk [vmem:[%s170 + $0x10] sm:$0xf] %vm873, %v868
      %879 = vst.msk [vmem:[%s170 + $0x14] sm:$0xf] %vm873, %v869
      %880 = vst.msk [vmem:[%s170 + $0x18] sm:$0xf] %vm873, %v870
      %881 = vst.msk [vmem:[%s170 + $0x1c] sm:$0xf] %vm873, %v871
      %882 = vst.msk [vmem:[%s170 + $0x20] sm:$0xf] %vm873, %v872
      %p883 = scmp.lt.s32.totalorder %s14, 1
      %s884 = scalar_select %p883, %s14, 1
      %s885 = smul.addr %s884, 9
      %s886 = smul.addr %s885, 4
      %s887 = scalar_lea.vmem %s3, %s886
      // Predicated region
      $region33: #{fcn_forward.9} parent=31 // pred_check
        %p888 = pneg %p100
      $region34: #{fcn_forward.9} parent=31 // pred_check_branch
        %890 = sbr.rel (%p888) target = $region36
      $region35: #{fcn_forward.9} parent=31 // pred_region
        _
      $region36: #{fcn_forward.9} parent=31 // pred_fallthru
        _
    $region32: #{fcn_forward.9} parent=5 // pred_fallthru
      _
    %p891 = scmp.le.s32.totalorder 2, %s9
    // Predicated region
    $region37: #{fcn_forward.9} parent=5 // pred_check
      %p892 = pneg %p891
    $region38: #{fcn_forward.9} parent=5 // pred_check_branch
      %894 = sbr.rel (%p892) target = $region40
    $region39: #{fcn_forward.9} parent=5 // pred_region
      %s895 = ssub.s32 %s9, 2
      // Predicated region
      $region41: #{fcn_forward.9} parent=39 // pred_check
        %p896 = pneg %p106
      $region42: #{fcn_forward.9} parent=39 // pred_check_branch
        %898 = sbr.rel (%p896) target = $region44
      $region43: #{fcn_forward.9} parent=39 // pred_region
        %p899 = scmp.lt.s32.totalorder %s15, 1
        %s900 = scalar_select %p899, %s15, 1
        %s901 = smul.addr %s900, 9
        %s902 = smul.addr %s901, 4
        %s903 = scalar_lea.vmem %s3, %s902
      $region44: #{fcn_forward.9} parent=39 // pred_fallthru
        _
    $region40: #{fcn_forward.9} parent=5 // pred_fallthru
      _
  $region6: #{fcn_forward.9} parent=0 // loop_footer
    %s13 = sadd.s32 1, %s9
  $region7: #{fcn_forward.9} parent=0 // loop_footer_branch
    %8 = sbr.rel target = $region3
  $region8: #{fcn_forward.9} parent=0 // loop_exit
    _

// kernel: fcn_forward.10
$region0: #{fcn_forward.10}
  #allocation0 [shape = 'u32[]', space=smem, size = 0x4, offset = 0x4, fixed_abs, tag = 'smem constant byte address 0x4 - core index']
  #allocation1 [shape = 'u32[72,128]{1,0:T(1,128)}', space=vmem, size = 0x9000, scoped, tag = 'internal scratch']
  %s0 = inlined_call_operand.vmem [shape: bf16[2,1,110,40], index: 0, kind: input, shape index: {}]
  %s1 = inlined_call_operand.vmem [shape: bf16[360,40], index: 1, kind: input, shape index: {}]
  %s2 = inlined_call_operand.vmem [shape: f32[1,40], index: 2, kind: input, shape index: {}]
  %s3 = inlined_call_operand.vmem [shape: bf16[2,80,20], index: 3, kind: input, shape index: {}]
  %s4 = inlined_call_operand.vmem [shape: bf16[20,40], index: 4, kind: input, shape index: {}]
  %s5 = inlined_call_operand.vmem [shape: f32[1,40], index: 5, kind: input, shape index: {}]
  %s6 = inlined_call_operand.vmem [shape: bf16[2,80,40], index: 6, kind: output, shape index: {}]
  %s7 = sld [smem:[#allocation0]]
  $region57: #{fcn_forward.10} parent=0
    _
  %s9 = ssub.s32 1, %s7
  %s10 = scalar_select 0, %s9, %s7
  loop: start=0, step=1, limit=4
  $region2: #{fcn_forward.10} parent=0 // loop_pre_header
    _
  $region3: #{fcn_forward.10} parent=0 // loop_header
    %s12 = sphi 0, %s16
    %p13 = scmp.ge.s32.totalorder %s12, 4
    %s22 = sphi 0, %s24
    %s25 = sphi 0, %s22
    %s26 = sphi 0, %s25
    %s42 = sphi 0, %s26
    %s46 = sphi 0, %s46
    %s48 = sphi 0, %s46
    %s49 = sphi 0, %s48
    %s63 = sphi 0, %s49
    %s67 = sphi 0, %s67
    %s69 = sphi 0, %s67
    %s70 = sphi 0, %s69
    %s84 = sphi 0, %s70
    %s90 = sphi 0, %s92
    %s93 = sphi 0, %s90
    %s94 = sphi 0, %s93
    %s110 = sphi 0, %s94
    %s114 = sphi 0, %s114
    %s116 = sphi 0, %s114
    %s117 = sphi 0, %s116
    %s131 = sphi 0, %s117
    %s135 = sphi 0, %s135
    %s137 = sphi 0, %s135
    %s138 = sphi 0, %s137
    %s152 = sphi 0, %s138
    %s158 = sphi 0, %s160
    %s161 = sphi 0, %s158
    %s162 = sphi 0, %s161
    %s178 = sphi 0, %s162
  $region4: #{fcn_forward.10} parent=0 // loop_header_branch
    %15 = sbr.rel (%p13) target = $region8
  $region5: #{fcn_forward.10} parent=0 // loop_body
    %s17 = ssub.s32 %s12, 1
    %s18 = ssub.s32 %s12, 2
    %s19 = sadd.s32 %s12, 1
    %s20 = ssub.s32 %s12, %s19
    %p21 = scmp.eq.s32.totalorder %s20, 0
    %s23 = sadd.s32 %s22, 1
    %s24 = scalar_select %p21, %s22, %s23
    %p27 = pneg %p21
    %p28 = scmp.eq.s32.totalorder %s12, 1
    %p29 = por %p27, %p28
    %p30 = scmp.ne.s32.totalorder %s22, %s25
    %p31 = scmp.eq.s32.totalorder %s12, 0
    %p32 = por %p30, %p31
    %p33 = scmp.ne.s32.totalorder %s22, %s25
    %p34 = scmp.eq.s32.totalorder %s17, 1
    %p35 = por %p33, %p34
    %p36 = scmp.ne.s32.totalorder %s25, %s26
    %p37 = scmp.eq.s32.totalorder %s17, 0
    %p38 = por %p36, %p37
    %p39 = scmp.ne.s32.totalorder %s25, %s26
    %p40 = scmp.eq.s32.totalorder %s18, 1
    %p41 = por %p39, %p40
    %p43 = scmp.ne.s32.totalorder %s26, %s42
    %p44 = scmp.eq.s32.totalorder %s18, 0
    %p45 = por %p43, %p44
    %s47 = sadd.s32 %s46, 1
    %p50 = scmp.eq.s32.totalorder %s12, 1
    %p51 = scmp.ne.s32.totalorder %s46, %s48
    %p52 = scmp.eq.s32.totalorder %s12, 0
    %p53 = por %p51, %p52
    %p54 = scmp.ne.s32.totalorder %s46, %s48
    %p55 = scmp.eq.s32.totalorder %s17, 1
    %p56 = por %p54, %p55
    %p57 = scmp.ne.s32.totalorder %s48, %s49
    %p58 = scmp.eq.s32.totalorder %s17, 0
    %p59 = por %p57, %p58
    %p60 = scmp.ne.s32.totalorder %s48, %s49
    %p61 = scmp.eq.s32.totalorder %s18, 1
    %p62 = por %p60, %p61
    %p64 = scmp.ne.s32.totalorder %s49, %s63
    %p65 = scmp.eq.s32.totalorder %s18, 0
    %p66 = por %p64, %p65
    %s68 = sadd.s32 %s67, 1
    %p71 = scmp.eq.s32.totalorder %s12, 1
    %p72 = scmp.ne.s32.totalorder %s67, %s69
    %p73 = scmp.eq.s32.totalorder %s12, 0
    %p74 = por %p72, %p73
    %p75 = scmp.ne.s32.totalorder %s67, %s69
    %p76 = scmp.eq.s32.totalorder %s17, 1
    %p77 = por %p75, %p76
    %p78 = scmp.ne.s32.totalorder %s69, %s70
    %p79 = scmp.eq.s32.totalorder %s17, 0
    %p80 = por %p78, %p79
    %p81 = scmp.ne.s32.totalorder %s69, %s70
    %p82 = scmp.eq.s32.totalorder %s18, 1
    %p83 = por %p81, %p82
    %p85 = scmp.ne.s32.totalorder %s70, %s84
    %p86 = scmp.eq.s32.totalorder %s18, 0
    %p87 = por %p85, %p86
    %s88 = ssub.s32 %s12, %s19
    %p89 = scmp.eq.s32.totalorder %s88, 0
    %s91 = sadd.s32 %s90, 1
    %s92 = scalar_select %p89, %s90, %s91
    %p95 = pneg %p89
    %p96 = scmp.eq.s32.totalorder %s12, 1
    %p97 = por %p95, %p96
    %p98 = scmp.ne.s32.totalorder %s90, %s93
    %p99 = scmp.eq.s32.totalorder %s12, 0
    %p100 = por %p98, %p99
    %p101 = scmp.ne.s32.totalorder %s90, %s93
    %p102 = scmp.eq.s32.totalorder %s17, 1
    %p103 = por %p101, %p102
    %p104 = scmp.ne.s32.totalorder %s93, %s94
    %p105 = scmp.eq.s32.totalorder %s17, 0
    %p106 = por %p104, %p105
    %p107 = scmp.ne.s32.totalorder %s93, %s94
    %p108 = scmp.eq.s32.totalorder %s18, 1
    %p109 = por %p107, %p108
    %p111 = scmp.ne.s32.totalorder %s94, %s110
    %p112 = scmp.eq.s32.totalorder %s18, 0
    %p113 = por %p111, %p112
    %s115 = sadd.s32 %s114, 1
    %p118 = scmp.eq.s32.totalorder %s12, 1
    %p119 = scmp.ne.s32.totalorder %s114, %s116
    %p120 = scmp.eq.s32.totalorder %s12, 0
    %p121 = por %p119, %p120
    %p122 = scmp.ne.s32.totalorder %s114, %s116
    %p123 = scmp.eq.s32.totalorder %s17, 1
    %p124 = por %p122, %p123
    %p125 = scmp.ne.s32.totalorder %s116, %s117
    %p126 = scmp.eq.s32.totalorder %s17, 0
    %p127 = por %p125, %p126
    %p128 = scmp.ne.s32.totalorder %s116, %s117
    %p129 = scmp.eq.s32.totalorder %s18, 1
    %p130 = por %p128, %p129
    %p132 = scmp.ne.s32.totalorder %s117, %s131
    %p133 = scmp.eq.s32.totalorder %s18, 0
    %p134 = por %p132, %p133
    %s136 = sadd.s32 %s135, 1
    %p139 = scmp.eq.s32.totalorder %s12, 1
    %p140 = scmp.ne.s32.totalorder %s135, %s137
    %p141 = scmp.eq.s32.totalorder %s12, 0
    %p142 = por %p140, %p141
    %p143 = scmp.ne.s32.totalorder %s135, %s137
    %p144 = scmp.eq.s32.totalorder %s17, 1
    %p145 = por %p143, %p144
    %p146 = scmp.ne.s32.totalorder %s137, %s138
    %p147 = scmp.eq.s32.totalorder %s17, 0
    %p148 = por %p146, %p147
    %p149 = scmp.ne.s32.totalorder %s137, %s138
    %p150 = scmp.eq.s32.totalorder %s18, 1
    %p151 = por %p149, %p150
    %p153 = scmp.ne.s32.totalorder %s138, %s152
    %p154 = scmp.eq.s32.totalorder %s18, 0
    %p155 = por %p153, %p154
    %s156 = ssub.s32 %s12, %s19
    %p157 = scmp.eq.s32.totalorder %s156, 0
    %s159 = sadd.s32 %s158, 1
    %s160 = scalar_select %p157, %s158, %s159
    %p163 = pneg %p157
    %p164 = scmp.eq.s32.totalorder %s12, 1
    %p165 = por %p163, %p164
    %p166 = scmp.ne.s32.totalorder %s158, %s161
    %p167 = scmp.eq.s32.totalorder %s12, 0
    %p168 = por %p166, %p167
    %p169 = scmp.ne.s32.totalorder %s158, %s161
    %p170 = scmp.eq.s32.totalorder %s17, 1
    %p171 = por %p169, %p170
    %p172 = scmp.ne.s32.totalorder %s161, %s162
    %p173 = scmp.eq.s32.totalorder %s17, 0
    %p174 = por %p172, %p173
    %p175 = scmp.ne.s32.totalorder %s161, %s162
    %p176 = scmp.eq.s32.totalorder %s18, 1
    %p177 = por %p175, %p176
    %p179 = scmp.ne.s32.totalorder %s162, %s178
    %p180 = scmp.eq.s32.totalorder %s18, 0
    %p181 = por %p179, %p180
    %p182 = scmp.le.s32.totalorder 1, %s12
    %p183 = scmp.lt.s32.totalorder %s12, 3
    %p184 = pnand %p182, %p183
    %p185 = pneg %p184
    // Predicated region
    $region9: #{fcn_forward.10} parent=5 // pred_check
      _
    $region10: #{fcn_forward.10} parent=5 // pred_check_branch
      %187 = sbr.rel (%p184) target = $region12
    $region11: #{fcn_forward.10} parent=5 // pred_region
      %s188 = ssub.s32 %s12, 1
      // Predicated region
      $region13: #{fcn_forward.10} parent=11 // pred_check
        %p189 = pneg %p59
      $region14: #{fcn_forward.10} parent=11 // pred_check_branch
        %191 = sbr.rel (%p189) target = $region16
      $region15: #{fcn_forward.10} parent=11 // pred_region
        _
      $region16: #{fcn_forward.10} parent=11 // pred_fallthru
        _
      // Predicated region
      $region17: #{fcn_forward.10} parent=11 // pred_check
        %p192 = pneg %p80
      $region18: #{fcn_forward.10} parent=11 // pred_check_branch
        %194 = sbr.rel (%p192) target = $region20
      $region19: #{fcn_forward.10} parent=11 // pred_region
        _
      $region20: #{fcn_forward.10} parent=11 // pred_fallthru
        _
      // Predicated region
      $region21: #{fcn_forward.10} parent=11 // pred_check
        %p195 = pneg %p127
      $region22: #{fcn_forward.10} parent=11 // pred_check_branch
        %197 = sbr.rel (%p195) target = $region24
      $region23: #{fcn_forward.10} parent=11 // pred_region
        _
      $region24: #{fcn_forward.10} parent=11 // pred_fallthru
        _
      // Predicated region
      $region25: #{fcn_forward.10} parent=11 // pred_check
        %p198 = pneg %p148
      $region26: #{fcn_forward.10} parent=11 // pred_check_branch
        %200 = sbr.rel (%p198) target = $region28
      $region27: #{fcn_forward.10} parent=11 // pred_region
        _
      $region28: #{fcn_forward.10} parent=11 // pred_fallthru
        _
    $region12: #{fcn_forward.10} parent=5 // pred_fallthru
      _
    %p201 = scmp.lt.s32.totalorder %s12, 2
    // Predicated region
    $region29: #{fcn_forward.10} parent=5 // pred_check
      %p202 = pneg %p201
    $region30: #{fcn_forward.10} parent=5 // pred_check_branch
      %204 = sbr.rel (%p202) target = $region32
    $region31: #{fcn_forward.10} parent=5 // pred_region
      // Predicated region
      $region33: #{fcn_forward.10} parent=31 // pred_check
        %p205 = pneg %p32
      $region34: #{fcn_forward.10} parent=31 // pred_check_branch
        %207 = sbr.rel (%p205) target = $region36
      $region35: #{fcn_forward.10} parent=31 // pred_region
        %p208 = scmp.lt.s32.totalorder %s12, 1
        %s209 = scalar_select %p208, %s12, 1
        %s210 = smul.addr %s209, 14
        %s211 = smul.addr %s210, 4
        %s212 = scalar_lea.vmem %s0, %s211
      $region36: #{fcn_forward.10} parent=31 // pred_fallthru
        _
      // Predicated region
      $region37: #{fcn_forward.10} parent=31 // pred_check
        %p213 = pneg %p100
      $region38: #{fcn_forward.10} parent=31 // pred_check_branch
        %215 = sbr.rel (%p213) target = $region40
      $region39: #{fcn_forward.10} parent=31 // pred_region
        %p216 = scmp.lt.s32.totalorder %s12, 1
        %s217 = scalar_select %p216, %s12, 1
        %s218 = smul.addr %s217, 10
        %s219 = smul.addr %s218, 4
        %s220 = scalar_lea.vmem %s3, %s219
      $region40: #{fcn_forward.10} parent=31 // pred_fallthru
        _
    $region32: #{fcn_forward.10} parent=5 // pred_fallthru
      _
    %p221 = scmp.le.s32.totalorder 1, %s12
    %p222 = scmp.lt.s32.totalorder %s12, 3
    %p223 = pnand %p221, %p222
    %p224 = pneg %p223
    // Predicated region
    $region41: #{fcn_forward.10} parent=5 // pred_check
      _
    $region42: #{fcn_forward.10} parent=5 // pred_check_branch
      %226 = sbr.rel (%p223) target = $region44
    $region43: #{fcn_forward.10} parent=5 // pred_region
      %s227 = ssub.s32 %s12, 1
      %p228 = scmp.lt.s32.totalorder %s17, 1
      %s229 = scalar_select %p228, %s17, 1
      %s230 = smul.addr %s229, 14
      %s231 = smul.addr %s230, 4
      %s232 = scalar_lea.vmem %s0, %s231
      %p233 = pneg %p38
      %p234 = pneg %p35
      %p235 = pneg %p59
      %p236 = pneg %p56
      %p237 = pneg %p80
      %p238 = pneg %p77
      %p239 = scmp.lt.s32.totalorder %s17, 1
      %s240 = scalar_select %p239, %s17, 1
      %s241 = smul.addr %s240, 10
      %s242 = smul.addr %s241, 4
      %s243 = scalar_lea.vmem %s3, %s242
      %p244 = pneg %p106
      %p245 = pneg %p103
      %p246 = pneg %p127
      %p247 = pneg %p124
      %p248 = pneg %p148
      %p249 = pneg %p145
      %p250 = pneg %p174
      %p251 = pneg %p171
      %p252 = scmp.lt.s32.totalorder %s17, 1
      %s253 = scalar_select %p252, %s17, 1
      %s254 = smul.addr %s253, 10
      %s255 = smul.addr %s254, 4
      %s256 = scalar_lea.vmem %s6, %s255
      %p257 = scmp.lt.s32.totalorder %s17, 1
      %s258 = scalar_select %p257, %s17, 1
      %s259 = smul.addr %s258, 14
      %s260 = smul.addr %s259, 4
      %s261 = scalar_lea.vmem %s0, %s260
      %p262 = scmp.lt.s32.totalorder %s17, 1
      %s263 = scalar_select %p262, %s17, 1
      %s264 = smul.addr %s263, 10
      %s265 = smul.addr %s264, 4
      %s266 = scalar_lea.vmem %s3, %s265
      %p267 = scmp.lt.s32.totalorder %s17, 1
      %s268 = scalar_select %p267, %s17, 1
      %s269 = smul.addr %s268, 10
      %s270 = smul.addr %s269, 4
      %s271 = scalar_lea.vmem %s6, %s270
      %v273 = vld [vmem:[%s261] sm:$0xf]
      %v274 = vld [vmem:[%s261 + $0x4] sm:$0xf]
      %v275 = vld [vmem:[%s261 + $0x8] sm:$0xf]
      %v276 = vld [vmem:[%s261 + $0xc] sm:$0xf]
      %v277 = vld [vmem:[%s261 + $0x10] sm:$0xf]
      %v278 = vld [vmem:[%s261 + $0x14] sm:$0xf]
      %v279 = vld [vmem:[%s261 + $0x18] sm:$0xf]
      %v280 = vld [vmem:[%s261 + $0x1c] sm:$0xf]
      %v281 = vld [vmem:[%s261 + $0x20] sm:$0xf]
      %v282 = vld [vmem:[%s261 + $0x24] sm:$0xf]
      %v283 = vld [vmem:[%s261 + $0x28] sm:$0x1]
      %v284 = vld [vmem:[%s261] sm:$0xe]
      %v285 = vld [vmem:[%s261 + $0x4] sm:$0xe]
      %v286 = vld [vmem:[%s261 + $0x28] sm:$0xf]
      %v287 = vld [vmem:[%s261 + $0x2c] sm:$0x1]
      %v288 = vld [vmem:[%s261 + $0x2c] sm:$0x3]
      %v289 = vld [vmem:[%s261 + $0x4] sm:$0xc]
      %v290 = vld [vmem:[%s261 + $0x8] sm:$0xc]
      %v291 = vld [vmem:[%s261 + $0x2c] sm:$0xf]
      %v292 = vld [vmem:[%s261 + $0x30] sm:$0x3]
      %v293 = vld [vmem:[%s261 + $0x30] sm:$0x7]
      %v294 = vld [vmem:[%s261 + $0x8] sm:$0x8]
      %v305 = vunpack.c.l.b16 %v273
      %v306 = vunpack.c.l.b16 %v274
      %v307 = vunpack.c.l.b16 %v275
      %v308 = vunpack.c.l.b16 %v276
      %v309 = vunpack.c.l.b16 %v277
      %v310 = vunpack.c.l.b16 %v278
      %v311 = vunpack.c.l.b16 %v279
      %v312 = vunpack.c.l.b16 %v280
      %v313 = vunpack.c.l.b16 %v281
      %v314 = vunpack.c.l.b16 %v282
      %v315 = vpack.c.b16 %v306, %v305
      %v316 = vpack.c.b16 %v308, %v307
      %v317 = vpack.c.b16 %v310, %v309
      %v318 = vpack.c.b16 %v312, %v311
      %v319 = vpack.c.b16 %v314, %v313
      %v321 = vunpack.c.l.b16 %v283
      %v322 = vpack.c.b16 %v321, %v321
      %vm323 = vsmask.f32 7424
      %v325 = vshrl.u32 %v315, 16
      %v327 = vshll.u32 %v315, 16
      %v329 = vrot.slane %v327, 1
      %v330 = vor.u32 %v325, %v329
      %v332 = vshll.u32 %v316, 16
      %v334 = vrot.slane %v332, 1
      %v335 = vsel %vm323, %v330, %v334
      %v336 = vshrl.u32 %v316, 16
      %v338 = vor.u32 %v336, %v334
      %v340 = vshll.u32 %v317, 16
      %v342 = vrot.slane %v340, 1
      %v343 = vsel %vm323, %v338, %v342
      %v344 = vshrl.u32 %v317, 16
      %v346 = vor.u32 %v344, %v342
      %v348 = vshll.u32 %v318, 16
      %v350 = vrot.slane %v348, 1
      %v351 = vsel %vm323, %v346, %v350
      %v352 = vshrl.u32 %v318, 16
      %v354 = vor.u32 %v352, %v350
      %v356 = vshll.u32 %v319, 16
      %v358 = vrot.slane %v356, 1
      %v359 = vsel %vm323, %v354, %v358
      %v360 = vshrl.u32 %v319, 16
      %v362 = vor.u32 %v360, %v358
      %v364 = vshll.u32 %v322, 16
      %v366 = vrot.slane %v364, 1
      %v367 = vsel %vm323, %v362, %v366
      %368 = vrot.lane.b32.xlu0 %v335, 40
      %v369 = vpop.permute.xlu0 %368
      %370 = vrot.lane.b32.xlu0 %v343, 40
      %v371 = vpop.permute.xlu0 %370
      %372 = vrot.lane.b32.xlu0 %v351, 40
      %v373 = vpop.permute.xlu0 %372
      %374 = vrot.lane.b32.xlu0 %v359, 40
      %v375 = vpop.permute.xlu0 %374
      %376 = vrot.lane.b32.xlu0 %v367, 40
      %v377 = vpop.permute.xlu0 %376
      %v379 = vunpack.c.l.b16 %v284
      %v380 = vpack.c.b16 %v306, %v379
      %vm381 = vcmask 1046528
      %v382 = vrot.slane %v380, 1
      %v383 = vrot.slane %v316, 1
      %v384 = vsel %vm381, %v382, %v383
      %v385 = vrot.slane %v317, 1
      %v386 = vsel %vm381, %v383, %v385
      %v387 = vrot.slane %v318, 1
      %v388 = vsel %vm381, %v385, %v387
      %v389 = vrot.slane %v319, 1
      %v390 = vsel %vm381, %v387, %v389
      %v391 = vrot.slane %v322, 1
      %v392 = vsel %vm381, %v389, %v391
      %393 = vrot.lane.b32.xlu0 %v384, 80
      %v394 = vpop.permute.xlu0 %393
      %395 = vrot.lane.b32.xlu0 %v386, 80
      %v396 = vpop.permute.xlu0 %395
      %397 = vrot.lane.b32.xlu0 %v388, 80
      %v398 = vpop.permute.xlu0 %397
      %399 = vrot.lane.b32.xlu0 %v390, 80
      %v400 = vpop.permute.xlu0 %399
      %401 = vrot.lane.b32.xlu0 %v392, 80
      %v402 = vpop.permute.xlu0 %401
      %v406 = vunpack.c.l.b16 %v285
      %v407 = vunpack.c.l.b16 %v286
      %v408 = vunpack.c.l.b16 %v287
      %v409 = vpack.c.b16 %v307, %v406
      %v410 = vpack.c.b16 %v309, %v308
      %v411 = vpack.c.b16 %v311, %v310
      %v412 = vpack.c.b16 %v313, %v312
      %v413 = vpack.c.b16 %v407, %v314
      %v414 = vpack.c.b16 %v408, %v408
      %v415 = vrot.slane %v409, 1
      %v416 = vrot.slane %v410, 1
      %v417 = vsel %vm381, %v415, %v416
      %v418 = vrot.slane %v411, 1
      %v419 = vsel %vm381, %v416, %v418
      %v420 = vrot.slane %v412, 1
      %v421 = vsel %vm381, %v418, %v420
      %v422 = vrot.slane %v413, 1
      %v423 = vsel %vm381, %v420, %v422
      %v424 = vrot.slane %v414, 1
      %v425 = vsel %vm381, %v422, %v424
      %426 = vrot.lane.b32.xlu0 %v417, 120
      %v427 = vpop.permute.xlu0 %426
      %428 = vrot.lane.b32.xlu0 %v419, 120
      %v429 = vpop.permute.xlu0 %428
      %430 = vrot.lane.b32.xlu0 %v421, 120
      %v431 = vpop.permute.xlu0 %430
      %432 = vrot.lane.b32.xlu0 %v423, 120
      %v433 = vpop.permute.xlu0 %432
      %434 = vrot.lane.b32.xlu0 %v425, 120
      %v435 = vpop.permute.xlu0 %434
      %v437 = vunpack.c.l.b16 %v288
      %v438 = vpack.c.b16 %v437, %v437
      %vm439 = vsmask.f32 6400
      %v441 = vshrl.u32 %v409, 16
      %v443 = vrot.slane %v441, 1
      %v444 = vshll.u32 %v409, 16
      %v446 = vrot.slane %v444, 2
      %v447 = vor.u32 %v443, %v446
      %v449 = vshrl.u32 %v410, 16
      %v451 = vrot.slane %v449, 1
      %v452 = vshll.u32 %v410, 16
      %v454 = vrot.slane %v452, 2
      %v455 = vor.u32 %v451, %v454
      %v456 = vsel %vm439, %v447, %v455
      %v458 = vshrl.u32 %v411, 16
      %v460 = vrot.slane %v458, 1
      %v461 = vshll.u32 %v411, 16
      %v463 = vrot.slane %v461, 2
      %v464 = vor.u32 %v460, %v463
      %v465 = vsel %vm439, %v455, %v464
      %v467 = vshrl.u32 %v412, 16
      %v469 = vrot.slane %v467, 1
      %v470 = vshll.u32 %v412, 16
      %v472 = vrot.slane %v470, 2
      %v473 = vor.u32 %v469, %v472
      %v474 = vsel %vm439, %v464, %v473
      %v476 = vshrl.u32 %v413, 16
      %v478 = vrot.slane %v476, 1
      %v479 = vshll.u32 %v413, 16
      %v481 = vrot.slane %v479, 2
      %v482 = vor.u32 %v478, %v481
      %v483 = vsel %vm439, %v473, %v482
      %v485 = vshrl.u32 %v438, 16
      %v487 = vrot.slane %v485, 1
      %v488 = vshll.u32 %v438, 16
      %v490 = vrot.slane %v488, 2
      %v491 = vor.u32 %v487, %v490
      %v492 = vsel %vm439, %v482, %v491
      %493 = vrot.lane.b32.xlu0 %v456, 32
      %v494 = vpop.permute.xlu0 %493
      %495 = vrot.lane.b32.xlu0 %v465, 32
      %v496 = vpop.permute.xlu0 %495
      %497 = vrot.lane.b32.xlu0 %v474, 32
      %v498 = vpop.permute.xlu0 %497
      %499 = vrot.lane.b32.xlu0 %v483, 32
      %v500 = vpop.permute.xlu0 %499
      %501 = vrot.lane.b32.xlu0 %v492, 32
      %v502 = vpop.permute.xlu0 %501
      %v504 = vunpack.c.l.b16 %v289
      %v505 = vpack.c.b16 %v307, %v504
      %vm506 = vcmask 1045504
      %v507 = vrot.slane %v505, 2
      %v508 = vrot.slane %v410, 2
      %v509 = vsel %vm506, %v507, %v508
      %v510 = vrot.slane %v411, 2
      %v511 = vsel %vm506, %v508, %v510
      %v512 = vrot.slane %v412, 2
      %v513 = vsel %vm506, %v510, %v512
      %v514 = vrot.slane %v413, 2
      %v515 = vsel %vm506, %v512, %v514
      %v516 = vrot.slane %v438, 2
      %v517 = vsel %vm506, %v514, %v516
      %518 = vrot.lane.b32.xlu0 %v509, 72
      %v519 = vpop.permute.xlu0 %518
      %520 = vrot.lane.b32.xlu0 %v511, 72
      %v521 = vpop.permute.xlu0 %520
      %522 = vrot.lane.b32.xlu0 %v513, 72
      %v523 = vpop.permute.xlu0 %522
      %524 = vrot.lane.b32.xlu0 %v515, 72
      %v525 = vpop.permute.xlu0 %524
      %526 = vrot.lane.b32.xlu0 %v517, 72
      %v527 = vpop.permute.xlu0 %526
      %v531 = vunpack.c.l.b16 %v290
      %v532 = vunpack.c.l.b16 %v291
      %v533 = vunpack.c.l.b16 %v292
      %v534 = vpack.c.b16 %v308, %v531
      %v535 = vpack.c.b16 %v532, %v407
      %v536 = vpack.c.b16 %v533, %v533
      %v537 = vrot.slane %v534, 2
      %v538 = vrot.slane %v317, 2
      %v539 = vsel %vm506, %v537, %v538
      %v540 = vrot.slane %v318, 2
      %v541 = vsel %vm506, %v538, %v540
      %v542 = vrot.slane %v319, 2
      %v543 = vsel %vm506, %v540, %v542
      %v544 = vrot.slane %v535, 2
      %v545 = vsel %vm506, %v542, %v544
      %v546 = vrot.slane %v536, 2
      %v547 = vsel %vm506, %v544, %v546
      %548 = vrot.lane.b32.xlu0 %v539, 112
      %v549 = vpop.permute.xlu0 %548
      %550 = vrot.lane.b32.xlu0 %v541, 112
      %v551 = vpop.permute.xlu0 %550
      %552 = vrot.lane.b32.xlu0 %v543, 112
      %v553 = vpop.permute.xlu0 %552
      %554 = vrot.lane.b32.xlu0 %v545, 112
      %v555 = vpop.permute.xlu0 %554
      %556 = vrot.lane.b32.xlu0 %v547, 112
      %v557 = vpop.permute.xlu0 %556
      %v559 = vunpack.c.l.b16 %v293
      %v560 = vpack.c.b16 %v559, %v559
      %vm561 = vsmask.f32 5376
      %v563 = vshrl.u32 %v534, 16
      %v565 = vrot.slane %v563, 2
      %v566 = vshll.u32 %v534, 16
      %v568 = vrot.slane %v566, 3
      %v569 = vor.u32 %v565, %v568
      %v570 = vrot.slane %v344, 2
      %v571 = vrot.slane %v340, 3
      %v572 = vor.u32 %v570, %v571
      %v573 = vsel %vm561, %v569, %v572
      %v574 = vrot.slane %v352, 2
      %v575 = vrot.slane %v348, 3
      %v576 = vor.u32 %v574, %v575
      %v577 = vsel %vm561, %v572, %v576
      %v578 = vrot.slane %v360, 2
      %v579 = vrot.slane %v356, 3
      %v580 = vor.u32 %v578, %v579
      %v581 = vsel %vm561, %v576, %v580
      %v583 = vshrl.u32 %v535, 16
      %v585 = vrot.slane %v583, 2
      %v586 = vshll.u32 %v535, 16
      %v588 = vrot.slane %v586, 3
      %v589 = vor.u32 %v585, %v588
      %v590 = vsel %vm561, %v580, %v589
      %v592 = vshrl.u32 %v560, 16
      %v594 = vrot.slane %v592, 2
      %v595 = vshll.u32 %v560, 16
      %v597 = vrot.slane %v595, 3
      %v598 = vor.u32 %v594, %v597
      %v599 = vsel %vm561, %v589, %v598
      %600 = vrot.lane.b32.xlu0 %v573, 24
      %v601 = vpop.permute.xlu0 %600
      %602 = vrot.lane.b32.xlu0 %v577, 24
      %v603 = vpop.permute.xlu0 %602
      %604 = vrot.lane.b32.xlu0 %v581, 24
      %v605 = vpop.permute.xlu0 %604
      %606 = vrot.lane.b32.xlu0 %v590, 24
      %v607 = vpop.permute.xlu0 %606
      %608 = vrot.lane.b32.xlu0 %v599, 24
      %v609 = vpop.permute.xlu0 %608
      %v611 = vunpack.c.l.b16 %v294
      %v612 = vpack.c.b16 %v308, %v611
      %vm613 = vcmask 1044480
      %v614 = vrot.slane %v612, 3
      %v615 = vrot.slane %v317, 3
      %v616 = vsel %vm613, %v614, %v615
      %v617 = vrot.slane %v318, 3
      %v618 = vsel %vm613, %v615, %v617
      %v619 = vrot.slane %v319, 3
      %v620 = vsel %vm613, %v617, %v619
      %v621 = vrot.slane %v535, 3
      %v622 = vsel %vm613, %v619, %v621
      %v623 = vrot.slane %v560, 3
      %v624 = vsel %vm613, %v621, %v623
      %625 = vrot.lane.b32.xlu0 %v616, 64
      %v626 = vpop.permute.xlu0 %625
      %627 = vrot.lane.b32.xlu0 %v618, 64
      %v628 = vpop.permute.xlu0 %627
      %629 = vrot.lane.b32.xlu0 %v620, 64
      %v630 = vpop.permute.xlu0 %629
      %631 = vrot.lane.b32.xlu0 %v622, 64
      %v632 = vpop.permute.xlu0 %631
      %633 = vrot.lane.b32.xlu0 %v624, 64
      %v634 = vpop.permute.xlu0 %633
      %vm635 = vcmask 326656
      %v637 = vsel %vm635, %v315, %v369
      %v639 = vsel %vm635, %v316, %v371
      %v641 = vsel %vm635, %v317, %v373
      %v643 = vsel %vm635, %v318, %v375
      %v645 = vsel %vm635, %v319, %v377
      %vm646 = vcmask 654336
      %v648 = vsel %vm646, %v637, %v394
      %v650 = vsel %vm646, %v639, %v396
      %v652 = vsel %vm646, %v641, %v398
      %v654 = vsel %vm646, %v643, %v400
      %v656 = vsel %vm646, %v645, %v402
      %vm657 = vcmask 982016
      %v659 = vsel %vm657, %v648, %v427
      %v662 = vsel %vm657, %v650, %v429
      %v665 = vsel %vm657, %v652, %v431
      %v668 = vsel %vm657, %v654, %v433
      %v671 = vsel %vm657, %v656, %v435
      %vm673 = vcmask 261120
      %v675 = vsel %vm673, %v427, %v494
      %v677 = vsel %vm673, %v429, %v496
      %v679 = vsel %vm673, %v431, %v498
      %v681 = vsel %vm673, %v433, %v500
      %v683 = vsel %vm673, %v435, %v502
      %vm684 = vcmask 588800
      %v686 = vsel %vm684, %v675, %v519
      %v688 = vsel %vm684, %v677, %v521
      %v690 = vsel %vm684, %v679, %v523
      %v692 = vsel %vm684, %v681, %v525
      %v694 = vsel %vm684, %v683, %v527
      %vm695 = vcmask 916480
      %v697 = vsel %vm695, %v686, %v549
      %v700 = vsel %vm695, %v688, %v551
      %v703 = vsel %vm695, %v690, %v553
      %v706 = vsel %vm695, %v692, %v555
      %v709 = vsel %vm695, %v694, %v557
      %vm711 = vcmask 195584
      %v713 = vsel %vm711, %v549, %v601
      %v715 = vsel %vm711, %v551, %v603
      %v717 = vsel %vm711, %v553, %v605
      %v719 = vsel %vm711, %v555, %v607
      %v721 = vsel %vm711, %v557, %v609
      %vm722 = vcmask 523264
      %v724 = vsel %vm722, %v713, %v626
      %v726 = vsel %vm722, %v715, %v628
      %v728 = vsel %vm722, %v717, %v630
      %v730 = vsel %vm722, %v719, %v632
      %v732 = vsel %vm722, %v721, %v634
      %v733 = vld [vmem:[%s1] sm:$0xf]
      %v734 = vld [vmem:[%s1 + $0x4] sm:$0xf]
      %v735 = vld [vmem:[%s1 + $0x8] sm:$0xf]
      %v736 = vld [vmem:[%s1 + $0xc] sm:$0xf]
      %v737 = vld [vmem:[%s1 + $0x10] sm:$0xf]
      %v738 = vld [vmem:[%s1 + $0x14] sm:$0xf]
      %v739 = vld [vmem:[%s1 + $0x18] sm:$0xf]
      %v740 = vld [vmem:[%s1 + $0x1c] sm:$0xf]
      %v741 = vld [vmem:[%s1 + $0x20] sm:$0xf]
      %v742 = vld [vmem:[%s1 + $0x24] sm:$0xf]
      %v743 = vld [vmem:[%s1 + $0x28] sm:$0xf]
      %v744 = vld [vmem:[%s1 + $0x2c] sm:$0xf]
      %v745 = vld [vmem:[%s1 + $0x30] sm:$0xf]
      %v746 = vld [vmem:[%s1 + $0x34] sm:$0xf]
      %v747 = vld [vmem:[%s1 + $0x38] sm:$0xf]
      %v748 = vld [vmem:[%s1 + $0x3c] sm:$0xf]
      %v749 = vld [vmem:[%s1 + $0x40] sm:$0xf]
      %v750 = vld [vmem:[%s1 + $0x44] sm:$0xf]
      %v751 = vld [vmem:[%s1 + $0x48] sm:$0xf]
      %v752 = vld [vmem:[%s1 + $0x4c] sm:$0xf]
      %v753 = vld [vmem:[%s1 + $0x50] sm:$0xf]
      %v754 = vld [vmem:[%s1 + $0x54] sm:$0xf]
      %v755 = vld [vmem:[%s1 + $0x58] sm:$0xf]
      %v756 = vld [vmem:[%s1 + $0x5c] sm:$0xf]
      %v757 = vld [vmem:[%s1 + $0x60] sm:$0xf]
      %v758 = vld [vmem:[%s1 + $0x64] sm:$0xf]
      %v759 = vld [vmem:[%s1 + $0x68] sm:$0xf]
      %v760 = vld [vmem:[%s1 + $0x6c] sm:$0xf]
      %v761 = vld [vmem:[%s1 + $0x70] sm:$0xf]
      %v762 = vld [vmem:[%s1 + $0x74] sm:$0xf]
      %v763 = vld [vmem:[%s1 + $0x78] sm:$0xf]
      %v764 = vld [vmem:[%s1 + $0x7c] sm:$0xf]
      %v765 = vld [vmem:[%s1 + $0x80] sm:$0xf]
      %v766 = vld [vmem:[%s1 + $0x84] sm:$0xf]
      %v767 = vld [vmem:[%s1 + $0x88] sm:$0xf]
      %v768 = vld [vmem:[%s1 + $0x8c] sm:$0xf]
      %v769 = vld [vmem:[%s1 + $0x90] sm:$0xf]
      %v770 = vld [vmem:[%s1 + $0x94] sm:$0xf]
      %v771 = vld [vmem:[%s1 + $0x98] sm:$0xf]
      %v772 = vld [vmem:[%s1 + $0x9c] sm:$0xf]
      %v773 = vld [vmem:[%s1 + $0xa0] sm:$0xf]
      %v774 = vld [vmem:[%s1 + $0xa4] sm:$0xf]
      %v775 = vld [vmem:[%s1 + $0xa8] sm:$0xf]
      %v776 = vld [vmem:[%s1 + $0xac] sm:$0xf]
      %v777 = vld [vmem:[%s1 + $0xb0] sm:$0xf]
      %v778 = vld [vmem:[%s2] sm:$0x1]
      %v780 = vperm.slane %v778, 0
      %v827 = vunpack.c.l.b16 %v733
      %v828 = vunpack.c.l.b16 %v734
      %v829 = vunpack.c.l.b16 %v735
      %v830 = vunpack.c.l.b16 %v736
      %v831 = vunpack.c.l.b16 %v737
      %v832 = vunpack.c.l.b16 %v738
      %v833 = vunpack.c.l.b16 %v739
      %v834 = vunpack.c.l.b16 %v740
      %v835 = vunpack.c.l.b16 %v741
      %v836 = vunpack.c.l.b16 %v742
      %v837 = vunpack.c.l.b16 %v743
      %v838 = vunpack.c.l.b16 %v744
      %v839 = vunpack.c.l.b16 %v745
      %v840 = vunpack.c.l.b16 %v746
      %v841 = vunpack.c.l.b16 %v747
      %v842 = vunpack.c.l.b16 %v748
      %v843 = vunpack.c.l.b16 %v749
      %v844 = vunpack.c.l.b16 %v750
      %v845 = vunpack.c.l.b16 %v751
      %v846 = vunpack.c.l.b16 %v752
      %v847 = vunpack.c.l.b16 %v753
      %v848 = vunpack.c.l.b16 %v754
      %v849 = vunpack.c.l.b16 %v755
      %v850 = vunpack.c.l.b16 %v756
      %v851 = vunpack.c.l.b16 %v757
      %v852 = vunpack.c.l.b16 %v758
      %v853 = vunpack.c.l.b16 %v759
      %v854 = vunpack.c.l.b16 %v760
      %v855 = vunpack.c.l.b16 %v761
      %v856 = vunpack.c.l.b16 %v762
      %v857 = vunpack.c.l.b16 %v763
      %v858 = vunpack.c.l.b16 %v764
      %v859 = vunpack.c.l.b16 %v765
      %v860 = vunpack.c.l.b16 %v766
      %v861 = vunpack.c.l.b16 %v767
      %v862 = vunpack.c.l.b16 %v768
      %v863 = vunpack.c.l.b16 %v769
      %v864 = vunpack.c.l.b16 %v770
      %v865 = vunpack.c.l.b16 %v771
      %v866 = vunpack.c.l.b16 %v772
      %v867 = vunpack.c.l.b16 %v773
      %v868 = vunpack.c.l.b16 %v774
      %v869 = vunpack.c.l.b16 %v775
      %v870 = vunpack.c.l.b16 %v776
      %v871 = vunpack.c.l.b16 %v777
      %v872 = vpack.c.b16 %v828, %v827
      %v873 = vpack.c.b16 %v830, %v829
      %v874 = vpack.c.b16 %v832, %v831
      %v875 = vpack.c.b16 %v834, %v833
      %v876 = vpack.c.b16 %v836, %v835
      %v877 = vpack.c.b16 %v838, %v837
      %v878 = vpack.c.b16 %v840, %v839
      %v879 = vpack.c.b16 %v842, %v841
      %v880 = vpack.c.b16 %v844, %v843
      %v881 = vpack.c.b16 %v846, %v845
      %v882 = vpack.c.b16 %v848, %v847
      %v883 = vpack.c.b16 %v850, %v849
      %v884 = vpack.c.b16 %v852, %v851
      %v885 = vpack.c.b16 %v854, %v853
      %v886 = vpack.c.b16 %v856, %v855
      %v887 = vpack.c.b16 %v858, %v857
      %v888 = vpack.c.b16 %v860, %v859
      %v889 = vpack.c.b16 %v862, %v861
      %v890 = vpack.c.b16 %v864, %v863
      %v891 = vpack.c.b16 %v866, %v865
      %v892 = vpack.c.b16 %v868, %v867
      %v893 = vpack.c.b16 %v870, %v869
      %v894 = vpack.c.b16 %v871, %v871
      %vm917 = vcmask 850944
      %v918 = vsel %vm917, %v724, 0
      %v920 = vsel %vm917, %v726, 0
      %v922 = vsel %vm917, %v728, 0
      %v924 = vsel %vm917, %v730, 0
      %v926 = vsel %vm917, %v732, 0
      %vm928 = vcmask 1043456
      %v930 = vsel %vm928, %v894, 0
      %932 = vmatpush.bf16.msra.mxu0 %v879
      %933 = vmatpush.bf16.msra.mxu0 %v878
      %934 = vmatpush.bf16.msra.mxu0 %v877
      %935 = vmatpush.bf16.msra.mxu0 %v876
      %936 = vmatpush.bf16.msra.mxu0 %v875
      %937 = vmatpush.bf16.msra.mxu0 %v874
      %938 = vmatpush.bf16.msra.mxu0 %v873
      %939 = vmatpush.bf16.msra.mxu0 %v872
      %940 = vmatmul.bf16.gmra.mxu0 %v659
      %v941 = vpop.f32.mrf.mxu0
      %v942 = vadd.f32 %v780, %v941
      %v943 = vpop.f32.mrf.mxu0
      %v944 = vadd.f32 %v780, %v943
      %945 = vmatmul.bf16.gmra.mxu0 %v662
      %v946 = vpop.f32.mrf.mxu0
      %v947 = vadd.f32 %v780, %v946
      %v948 = vpop.f32.mrf.mxu0
      %v949 = vadd.f32 %v780, %v948
      %950 = vmatmul.bf16.gmra.mxu0 %v665
      %v951 = vpop.f32.mrf.mxu0
      %v952 = vadd.f32 %v780, %v951
      %v953 = vpop.f32.mrf.mxu0
      %v954 = vadd.f32 %v780, %v953
      %955 = vmatmul.bf16.gmra.mxu0 %v668
      %v956 = vpop.f32.mrf.mxu0
      %v957 = vadd.f32 %v780, %v956
      %v958 = vpop.f32.mrf.mxu0
      %v959 = vadd.f32 %v780, %v958
      %960 = vmatmul.bf16.gmra.mxu0 %v671
      %v961 = vpop.f32.mrf.mxu0
      %v962 = vadd.f32 %v780, %v961
      %v963 = vpop.f32.mrf.mxu0
      %v964 = vadd.f32 %v780, %v963
      %965 = vdwg.mxu0
      %966 = vmatpush.bf16.msra.mxu0 %v887
      %967 = vmatpush.bf16.msra.mxu0 %v886
      %968 = vmatpush.bf16.msra.mxu0 %v885
      %969 = vmatpush.bf16.msra.mxu0 %v884
      %970 = vmatpush.bf16.msra.mxu0 %v883
      %971 = vmatpush.bf16.msra.mxu0 %v882
      %972 = vmatpush.bf16.msra.mxu0 %v881
      %973 = vmatpush.bf16.msra.mxu0 %v880
      %974 = vmatmul.bf16.gmra.mxu0 %v697
      %v975 = vpop.f32.mrf.mxu0
      %v976 = vadd.f32 %v942, %v975
      %v977 = vpop.f32.mrf.mxu0
      %v978 = vadd.f32 %v944, %v977
      %979 = vmatmul.bf16.gmra.mxu0 %v700
      %v980 = vpop.f32.mrf.mxu0
      %v981 = vadd.f32 %v947, %v980
      %v982 = vpop.f32.mrf.mxu0
      %v983 = vadd.f32 %v949, %v982
      %984 = vmatmul.bf16.gmra.mxu0 %v703
      %v985 = vpop.f32.mrf.mxu0
      %v986 = vadd.f32 %v952, %v985
      %v987 = vpop.f32.mrf.mxu0
      %v988 = vadd.f32 %v954, %v987
      %989 = vmatmul.bf16.gmra.mxu0 %v706
      %v990 = vpop.f32.mrf.mxu0
      %v991 = vadd.f32 %v957, %v990
      %v992 = vpop.f32.mrf.mxu0
      %v993 = vadd.f32 %v959, %v992
      %994 = vmatmul.bf16.gmra.mxu0 %v709
      %v995 = vpop.f32.mrf.mxu0
      %v996 = vadd.f32 %v962, %v995
      %v997 = vpop.f32.mrf.mxu0
      %v998 = vadd.f32 %v964, %v997
      %999 = vdwg.mxu0
      %1000 = vmatpush.bf16.msra.mxu0 0
      %1001 = vmatpush.bf16.msra.mxu0 %v930
      %1002 = vmatpush.bf16.msra.mxu0 %v893
      %1003 = vmatpush.bf16.msra.mxu0 %v892
      %1004 = vmatpush.bf16.msra.mxu0 %v891
      %1005 = vmatpush.bf16.msra.mxu0 %v890
      %1006 = vmatpush.bf16.msra.mxu0 %v889
      %1007 = vmatpush.bf16.msra.mxu0 %v888
      %1008 = vmatmul.bf16.gmra.mxu0 %v918
      %v1009 = vpop.f32.mrf.mxu0
      %v1010 = vadd.f32 %v976, %v1009
      %v1011 = vpop.f32.mrf.mxu0
      %v1012 = vadd.f32 %v978, %v1011
      %1013 = vmatmul.bf16.gmra.mxu0 %v920
      %v1014 = vpop.f32.mrf.mxu0
      %v1015 = vadd.f32 %v981, %v1014
      %v1016 = vpop.f32.mrf.mxu0
      %v1017 = vadd.f32 %v983, %v1016
      %1018 = vmatmul.bf16.gmra.mxu0 %v922
      %v1019 = vpop.f32.mrf.mxu0
      %v1020 = vadd.f32 %v986, %v1019
      %v1021 = vpop.f32.mrf.mxu0
      %v1022 = vadd.f32 %v988, %v1021
      %1023 = vmatmul.bf16.gmra.mxu0 %v924
      %v1024 = vpop.f32.mrf.mxu0
      %v1025 = vadd.f32 %v991, %v1024
      %v1026 = vpop.f32.mrf.mxu0
      %v1027 = vadd.f32 %v993, %v1026
      %1028 = vmatmul.bf16.gmra.mxu0 %v926
      %v1029 = vpop.f32.mrf.mxu0
      %v1030 = vadd.f32 %v996, %v1029
      %v1031 = vpop.f32.mrf.mxu0
      %v1032 = vadd.f32 %v998, %v1031
      %1033 = vdwg.mxu0
      %v1034 = vmax.f32 %v1010, 0.0
      %v1035 = vmax.f32 %v1012, 0.0
      %v1036 = vmax.f32 %v1015, 0.0
      %v1037 = vmax.f32 %v1017, 0.0
      %v1038 = vmax.f32 %v1020, 0.0
      %v1039 = vmax.f32 %v1022, 0.0
      %v1040 = vmax.f32 %v1025, 0.0
      %v1041 = vmax.f32 %v1027, 0.0
      %v1042 = vmax.f32 %v1030, 0.0
      %v1043 = vmax.f32 %v1032, 0.0
      %v1044 = vld [vmem:[%s266] sm:$0xf]
      %v1045 = vld [vmem:[%s266 + $0x4] sm:$0xf]
      %v1046 = vld [vmem:[%s266 + $0x8] sm:$0xf]
      %v1047 = vld [vmem:[%s266 + $0xc] sm:$0xf]
      %v1048 = vld [vmem:[%s266 + $0x10] sm:$0xf]
      %v1049 = vld [vmem:[%s266 + $0x14] sm:$0xf]
      %v1050 = vld [vmem:[%s266 + $0x18] sm:$0xf]
      %v1051 = vld [vmem:[%s266 + $0x1c] sm:$0xf]
      %v1052 = vld [vmem:[%s266 + $0x20] sm:$0xf]
      %v1053 = vld [vmem:[%s266 + $0x24] sm:$0xf]
      %v1054 = vld [vmem:[%s4] sm:$0xf]
      %v1055 = vld [vmem:[%s4 + $0x4] sm:$0xf]
      %v1056 = vld [vmem:[%s4 + $0x8] sm:$0x3]
      %v1067 = vunpack.c.l.b16 %v1044
      %v1068 = vunpack.c.l.b16 %v1045
      %v1069 = vunpack.c.l.b16 %v1046
      %v1070 = vunpack.c.l.b16 %v1047
      %v1071 = vunpack.c.l.b16 %v1048
      %v1072 = vunpack.c.l.b16 %v1049
      %v1073 = vunpack.c.l.b16 %v1050
      %v1074 = vunpack.c.l.b16 %v1051
      %v1075 = vunpack.c.l.b16 %v1052
      %v1076 = vunpack.c.l.b16 %v1053
      %v1077 = vpack.c.b16 %v1068, %v1067
      %v1078 = vpack.c.b16 %v1070, %v1069
      %v1079 = vpack.c.b16 %v1072, %v1071
      %v1080 = vpack.c.b16 %v1074, %v1073
      %v1081 = vpack.c.b16 %v1076, %v1075
      %v1085 = vunpack.c.l.b16 %v1054
      %v1086 = vunpack.c.l.b16 %v1055
      %v1087 = vunpack.c.l.b16 %v1056
      %v1088 = vpack.c.b16 %v1086, %v1085
      %v1089 = vpack.c.b16 %v1087, %v1087
      %vm1091 = vcmask 162816
      %v1093 = vsel %vm1091, %v1077, 0
      %v1096 = vsel %vm1091, %v1078, 0
      %v1099 = vsel %vm1091, %v1079, 0
      %v1102 = vsel %vm1091, %v1080, 0
      %v1105 = vsel %vm1091, %v1081, 0
      %vm1107 = vcmask 1041408
      %v1109 = vsel %vm1107, %v1089, 0
      %1111 = vmatpush.bf16.msra.mxu0 0
      %1112 = vmatpush.bf16.msra.mxu0 0
      %1113 = vmatpush.bf16.msra.mxu0 0
      %1114 = vmatpush.bf16.msra.mxu0 0
      %1115 = vmatpush.bf16.msra.mxu0 0
      %1116 = vmatpush.bf16.msra.mxu0 0
      %1117 = vmatpush.bf16.msra.mxu0 %v1109
      %1118 = vmatpush.bf16.msra.mxu0 %v1088
      %1119 = vmatmul.bf16.gmra.mxu0 %v1093
      %v1120 = vpop.f32.mrf.mxu0
      %v1121 = vadd.f32 0.0, %v1120
      %v1122 = vpop.f32.mrf.mxu0
      %v1123 = vadd.f32 0.0, %v1122
      %1124 = vmatmul.bf16.gmra.mxu0 %v1096
      %v1125 = vpop.f32.mrf.mxu0
      %v1126 = vadd.f32 0.0, %v1125
      %v1127 = vpop.f32.mrf.mxu0
      %v1128 = vadd.f32 0.0, %v1127
      %1129 = vmatmul.bf16.gmra.mxu0 %v1099
      %v1130 = vpop.f32.mrf.mxu0
      %v1131 = vadd.f32 0.0, %v1130
      %v1132 = vpop.f32.mrf.mxu0
      %v1133 = vadd.f32 0.0, %v1132
      %1134 = vmatmul.bf16.gmra.mxu0 %v1102
      %v1135 = vpop.f32.mrf.mxu0
      %v1136 = vadd.f32 0.0, %v1135
      %v1137 = vpop.f32.mrf.mxu0
      %v1138 = vadd.f32 0.0, %v1137
      %1139 = vmatmul.bf16.gmra.mxu0 %v1105
      %v1140 = vpop.f32.mrf.mxu0
      %v1141 = vadd.f32 0.0, %v1140
      %v1142 = vpop.f32.mrf.mxu0
      %v1143 = vadd.f32 0.0, %v1142
      %1144 = vdwg.mxu0
      %v1145 = vadd.f32 %v1034, %v1121
      %v1146 = vadd.f32 %v1035, %v1123
      %v1147 = vadd.f32 %v1036, %v1126
      %v1148 = vadd.f32 %v1037, %v1128
      %v1149 = vadd.f32 %v1038, %v1131
      %v1150 = vadd.f32 %v1039, %v1133
      %v1151 = vadd.f32 %v1040, %v1136
      %v1152 = vadd.f32 %v1041, %v1138
      %v1153 = vadd.f32 %v1042, %v1141
      %v1154 = vadd.f32 %v1043, %v1143
      %v1155 = vld [vmem:[%s5] sm:$0x1]
      %v1157 = vperm.slane %v1155, 0
      %v1159 = vadd.f32 %v1145, %v1157
      %v1160 = vadd.f32 %v1146, %v1157
      %v1161 = vadd.f32 %v1147, %v1157
      %v1162 = vadd.f32 %v1148, %v1157
      %v1163 = vadd.f32 %v1149, %v1157
      %v1164 = vadd.f32 %v1150, %v1157
      %v1165 = vadd.f32 %v1151, %v1157
      %v1166 = vadd.f32 %v1152, %v1157
      %v1167 = vadd.f32 %v1153, %v1157
      %v1168 = vadd.f32 %v1154, %v1157
      %v1169 = vpack.c.bf16 %v1159, %v1159
      %v1170 = vpack.c.bf16 %v1160, %v1160
      %v1171 = vpack.c.bf16 %v1161, %v1161
      %v1172 = vpack.c.bf16 %v1162, %v1162
      %v1173 = vpack.c.bf16 %v1163, %v1163
      %v1174 = vpack.c.bf16 %v1164, %v1164
      %v1175 = vpack.c.bf16 %v1165, %v1165
      %v1176 = vpack.c.bf16 %v1166, %v1166
      %v1177 = vpack.c.bf16 %v1167, %v1167
      %v1178 = vpack.c.bf16 %v1168, %v1168
      %vm1179 = vcmask 322560
      %1180 = vst.msk [vmem:[%s271] sm:$0xf] %vm1179, %v1169
      %1181 = vst.msk [vmem:[%s271 + $0x4] sm:$0xf] %vm1179, %v1170
      %1182 = vst.msk [vmem:[%s271 + $0x8] sm:$0xf] %vm1179, %v1171
      %1183 = vst.msk [vmem:[%s271 + $0xc] sm:$0xf] %vm1179, %v1172
      %1184 = vst.msk [vmem:[%s271 + $0x10] sm:$0xf] %vm1179, %v1173
      %1185 = vst.msk [vmem:[%s271 + $0x14] sm:$0xf] %vm1179, %v1174
      %1186 = vst.msk [vmem:[%s271 + $0x18] sm:$0xf] %vm1179, %v1175
      %1187 = vst.msk [vmem:[%s271 + $0x1c] sm:$0xf] %vm1179, %v1176
      %1188 = vst.msk [vmem:[%s271 + $0x20] sm:$0xf] %vm1179, %v1177
      %1189 = vst.msk [vmem:[%s271 + $0x24] sm:$0xf] %vm1179, %v1178
      %p1190 = scmp.lt.s32.totalorder %s17, 1
      %s1191 = scalar_select %p1190, %s17, 1
      %s1192 = smul.addr %s1191, 10
      %s1193 = smul.addr %s1192, 4
      %s1194 = scalar_lea.vmem %s6, %s1193
      // Predicated region
      $region45: #{fcn_forward.10} parent=43 // pred_check
        %p1195 = pneg %p171
      $region46: #{fcn_forward.10} parent=43 // pred_check_branch
        %1197 = sbr.rel (%p1195) target = $region48
      $region47: #{fcn_forward.10} parent=43 // pred_region
        _
      $region48: #{fcn_forward.10} parent=43 // pred_fallthru
        _
    $region44: #{fcn_forward.10} parent=5 // pred_fallthru
      _
    %p1198 = scmp.le.s32.totalorder 2, %s12
    // Predicated region
    $region49: #{fcn_forward.10} parent=5 // pred_check
      %p1199 = pneg %p1198
    $region50: #{fcn_forward.10} parent=5 // pred_check_branch
      %1201 = sbr.rel (%p1199) target = $region52
    $region51: #{fcn_forward.10} parent=5 // pred_region
      %s1202 = ssub.s32 %s12, 2
      // Predicated region
      $region53: #{fcn_forward.10} parent=51 // pred_check
        %p1203 = pneg %p177
      $region54: #{fcn_forward.10} parent=51 // pred_check_branch
        %1205 = sbr.rel (%p1203) target = $region56
      $region55: #{fcn_forward.10} parent=51 // pred_region
        %p1206 = scmp.lt.s32.totalorder %s18, 1
        %s1207 = scalar_select %p1206, %s18, 1
        %s1208 = smul.addr %s1207, 10
        %s1209 = smul.addr %s1208, 4
        %s1210 = scalar_lea.vmem %s6, %s1209
      $region56: #{fcn_forward.10} parent=51 // pred_fallthru
        _
    $region52: #{fcn_forward.10} parent=5 // pred_fallthru
      _
  $region6: #{fcn_forward.10} parent=0 // loop_footer
    %s16 = sadd.s32 1, %s12
  $region7: #{fcn_forward.10} parent=0 // loop_footer_branch
    %11 = sbr.rel target = $region3
  $region8: #{fcn_forward.10} parent=0 // loop_exit
    _

// kernel: fcn_forward.11
$region0: #{fcn_forward.11}
  #allocation0 [shape = 'u32[]', space=smem, size = 0x4, offset = 0x4, fixed_abs, tag = 'smem constant byte address 0x4 - core index']
  #allocation1 [shape = 'u32[72,128]{1,0:T(1,128)}', space=vmem, size = 0x9000, scoped, tag = 'internal scratch']
  %s0 = inlined_call_operand.vmem [shape: bf16[2,4,30,40], index: 0, kind: input, shape index: {}]
  %s1 = inlined_call_operand.vmem [shape: bf16[360,80], index: 1, kind: input, shape index: {}]
  %s2 = inlined_call_operand.vmem [shape: f32[1,80], index: 2, kind: input, shape index: {}]
  %s3 = inlined_call_operand.vmem [shape: bf16[2,20,80], index: 3, kind: output, shape index: {}]
  %s4 = sld [smem:[#allocation0]]
  $region45: #{fcn_forward.11} parent=0
    _
  %s6 = ssub.s32 1, %s4
  %s7 = scalar_select 0, %s6, %s4
  loop: start=0, step=1, limit=4
  $region2: #{fcn_forward.11} parent=0 // loop_pre_header
    _
  $region3: #{fcn_forward.11} parent=0 // loop_header
    %s9 = sphi 0, %s13
    %p10 = scmp.ge.s32.totalorder %s9, 4
    %s19 = sphi 0, %s21
    %s22 = sphi 0, %s19
    %s23 = sphi 0, %s22
    %s39 = sphi 0, %s23
    %s43 = sphi 0, %s43
    %s45 = sphi 0, %s43
    %s46 = sphi 0, %s45
    %s60 = sphi 0, %s46
    %s64 = sphi 0, %s64
    %s66 = sphi 0, %s64
    %s67 = sphi 0, %s66
    %s81 = sphi 0, %s67
    %s87 = sphi 0, %s89
    %s90 = sphi 0, %s87
    %s91 = sphi 0, %s90
    %s107 = sphi 0, %s91
  $region4: #{fcn_forward.11} parent=0 // loop_header_branch
    %12 = sbr.rel (%p10) target = $region8
  $region5: #{fcn_forward.11} parent=0 // loop_body
    %s14 = ssub.s32 %s9, 1
    %s15 = ssub.s32 %s9, 2
    %s16 = sadd.s32 %s9, 1
    %s17 = ssub.s32 %s9, %s16
    %p18 = scmp.eq.s32.totalorder %s17, 0
    %s20 = sadd.s32 %s19, 1
    %s21 = scalar_select %p18, %s19, %s20
    %p24 = pneg %p18
    %p25 = scmp.eq.s32.totalorder %s9, 1
    %p26 = por %p24, %p25
    %p27 = scmp.ne.s32.totalorder %s19, %s22
    %p28 = scmp.eq.s32.totalorder %s9, 0
    %p29 = por %p27, %p28
    %p30 = scmp.ne.s32.totalorder %s19, %s22
    %p31 = scmp.eq.s32.totalorder %s14, 1
    %p32 = por %p30, %p31
    %p33 = scmp.ne.s32.totalorder %s22, %s23
    %p34 = scmp.eq.s32.totalorder %s14, 0
    %p35 = por %p33, %p34
    %p36 = scmp.ne.s32.totalorder %s22, %s23
    %p37 = scmp.eq.s32.totalorder %s15, 1
    %p38 = por %p36, %p37
    %p40 = scmp.ne.s32.totalorder %s23, %s39
    %p41 = scmp.eq.s32.totalorder %s15, 0
    %p42 = por %p40, %p41
    %s44 = sadd.s32 %s43, 1
    %p47 = scmp.eq.s32.totalorder %s9, 1
    %p48 = scmp.ne.s32.totalorder %s43, %s45
    %p49 = scmp.eq.s32.totalorder %s9, 0
    %p50 = por %p48, %p49
    %p51 = scmp.ne.s32.totalorder %s43, %s45
    %p52 = scmp.eq.s32.totalorder %s14, 1
    %p53 = por %p51, %p52
    %p54 = scmp.ne.s32.totalorder %s45, %s46
    %p55 = scmp.eq.s32.totalorder %s14, 0
    %p56 = por %p54, %p55
    %p57 = scmp.ne.s32.totalorder %s45, %s46
    %p58 = scmp.eq.s32.totalorder %s15, 1
    %p59 = por %p57, %p58
    %p61 = scmp.ne.s32.totalorder %s46, %s60
    %p62 = scmp.eq.s32.totalorder %s15, 0
    %p63 = por %p61, %p62
    %s65 = sadd.s32 %s64, 1
    %p68 = scmp.eq.s32.totalorder %s9, 1
    %p69 = scmp.ne.s32.totalorder %s64, %s66
    %p70 = scmp.eq.s32.totalorder %s9, 0
    %p71 = por %p69, %p70
    %p72 = scmp.ne.s32.totalorder %s64, %s66
    %p73 = scmp.eq.s32.totalorder %s14, 1
    %p74 = por %p72, %p73
    %p75 = scmp.ne.s32.totalorder %s66, %s67
    %p76 = scmp.eq.s32.totalorder %s14, 0
    %p77 = por %p75, %p76
    %p78 = scmp.ne.s32.totalorder %s66, %s67
    %p79 = scmp.eq.s32.totalorder %s15, 1
    %p80 = por %p78, %p79
    %p82 = scmp.ne.s32.totalorder %s67, %s81
    %p83 = scmp.eq.s32.totalorder %s15, 0
    %p84 = por %p82, %p83
    %s85 = ssub.s32 %s9, %s16
    %p86 = scmp.eq.s32.totalorder %s85, 0
    %s88 = sadd.s32 %s87, 1
    %s89 = scalar_select %p86, %s87, %s88
    %p92 = pneg %p86
    %p93 = scmp.eq.s32.totalorder %s9, 1
    %p94 = por %p92, %p93
    %p95 = scmp.ne.s32.totalorder %s87, %s90
    %p96 = scmp.eq.s32.totalorder %s9, 0
    %p97 = por %p95, %p96
    %p98 = scmp.ne.s32.totalorder %s87, %s90
    %p99 = scmp.eq.s32.totalorder %s14, 1
    %p100 = por %p98, %p99
    %p101 = scmp.ne.s32.totalorder %s90, %s91
    %p102 = scmp.eq.s32.totalorder %s14, 0
    %p103 = por %p101, %p102
    %p104 = scmp.ne.s32.totalorder %s90, %s91
    %p105 = scmp.eq.s32.totalorder %s15, 1
    %p106 = por %p104, %p105
    %p108 = scmp.ne.s32.totalorder %s91, %s107
    %p109 = scmp.eq.s32.totalorder %s15, 0
    %p110 = por %p108, %p109
    %p111 = scmp.le.s32.totalorder 1, %s9
    %p112 = scmp.lt.s32.totalorder %s9, 3
    %p113 = pnand %p111, %p112
    %p114 = pneg %p113
    // Predicated region
    $region9: #{fcn_forward.11} parent=5 // pred_check
      _
    $region10: #{fcn_forward.11} parent=5 // pred_check_branch
      %116 = sbr.rel (%p113) target = $region12
    $region11: #{fcn_forward.11} parent=5 // pred_region
      %s117 = ssub.s32 %s9, 1
      // Predicated region
      $region13: #{fcn_forward.11} parent=11 // pred_check
        %p118 = pneg %p56
      $region14: #{fcn_forward.11} parent=11 // pred_check_branch
        %120 = sbr.rel (%p118) target = $region16
      $region15: #{fcn_forward.11} parent=11 // pred_region
        _
      $region16: #{fcn_forward.11} parent=11 // pred_fallthru
        _
      // Predicated region
      $region17: #{fcn_forward.11} parent=11 // pred_check
        %p121 = pneg %p77
      $region18: #{fcn_forward.11} parent=11 // pred_check_branch
        %123 = sbr.rel (%p121) target = $region20
      $region19: #{fcn_forward.11} parent=11 // pred_region
        _
      $region20: #{fcn_forward.11} parent=11 // pred_fallthru
        _
    $region12: #{fcn_forward.11} parent=5 // pred_fallthru
      _
    %p124 = scmp.lt.s32.totalorder %s9, 2
    // Predicated region
    $region21: #{fcn_forward.11} parent=5 // pred_check
      %p125 = pneg %p124
    $region22: #{fcn_forward.11} parent=5 // pred_check_branch
      %127 = sbr.rel (%p125) target = $region24
    $region23: #{fcn_forward.11} parent=5 // pred_region
      // Predicated region
      $region25: #{fcn_forward.11} parent=23 // pred_check
        %p128 = pneg %p29
      $region26: #{fcn_forward.11} parent=23 // pred_check_branch
        %130 = sbr.rel (%p128) target = $region28
      $region27: #{fcn_forward.11} parent=23 // pred_region
        %p131 = scmp.lt.s32.totalorder %s9, 1
        %s132 = scalar_select %p131, %s9, 1
        %s133 = smul.addr %s132, 16
        %s134 = smul.addr %s133, 4
        %s135 = scalar_lea.vmem %s0, %s134
      $region28: #{fcn_forward.11} parent=23 // pred_fallthru
        _
    $region24: #{fcn_forward.11} parent=5 // pred_fallthru
      _
    %p136 = scmp.le.s32.totalorder 1, %s9
    %p137 = scmp.lt.s32.totalorder %s9, 3
    %p138 = pnand %p136, %p137
    %p139 = pneg %p138
    // Predicated region
    $region29: #{fcn_forward.11} parent=5 // pred_check
      _
    $region30: #{fcn_forward.11} parent=5 // pred_check_branch
      %141 = sbr.rel (%p138) target = $region32
    $region31: #{fcn_forward.11} parent=5 // pred_region
      %s142 = ssub.s32 %s9, 1
      %p143 = scmp.lt.s32.totalorder %s14, 1
      %s144 = scalar_select %p143, %s14, 1
      %s145 = smul.addr %s144, 16
      %s146 = smul.addr %s145, 4
      %s147 = scalar_lea.vmem %s0, %s146
      %p148 = pneg %p35
      %p149 = pneg %p32
      %p150 = pneg %p56
      %p151 = pneg %p53
      %p152 = pneg %p77
      %p153 = pneg %p74
      %p154 = pneg %p103
      %p155 = pneg %p100
      %p156 = scmp.lt.s32.totalorder %s14, 1
      %s157 = scalar_select %p156, %s14, 1
      %s158 = smul.addr %s157, 3
      %s159 = smul.addr %s158, 4
      %s160 = scalar_lea.vmem %s3, %s159
      %p161 = scmp.lt.s32.totalorder %s14, 1
      %s162 = scalar_select %p161, %s14, 1
      %s163 = smul.addr %s162, 16
      %s164 = smul.addr %s163, 4
      %s165 = scalar_lea.vmem %s0, %s164
      %p166 = scmp.lt.s32.totalorder %s14, 1
      %s167 = scalar_select %p166, %s14, 1
      %s168 = smul.addr %s167, 3
      %s169 = smul.addr %s168, 4
      %s170 = scalar_lea.vmem %s3, %s169
      %v172 = vld [vmem:[%s165] sm:$0xf]
      %v173 = vld [vmem:[%s165 + $0x4] sm:$0xf]
      %v174 = vld [vmem:[%s165 + $0x8] sm:$0x3]
      %s175 = scalar_lea.vmem %s165, 16
      %v176 = vld [vmem:[%s175] sm:$0xf]
      %v177 = vld [vmem:[%s175 + $0x4] sm:$0xf]
      %v178 = vld [vmem:[%s175 + $0x8] sm:$0x3]
      %v179 = vld [vmem:[%s165 + $0x8] sm:$0x7]
      %s180 = scalar_lea.vmem %s165, 32
      %v181 = vld [vmem:[%s180] sm:$0xf]
      %v182 = vld [vmem:[%s180 + $0x4] sm:$0xf]
      %v183 = vld [vmem:[%s180 + $0x8] sm:$0x3]
      %s184 = scalar_lea.vmem %s165, 48
      %v185 = vld [vmem:[%s184] sm:$0xf]
      %v186 = vld [vmem:[%s184 + $0x4] sm:$0xf]
      %v187 = vld [vmem:[%s184 + $0x8] sm:$0x3]
      %v188 = vld [vmem:[%s180 + $0x8] sm:$0x7]
      %v189 = vld [vmem:[%s165] sm:$0xc]
      %v190 = vld [vmem:[%s165 + $0x8] sm:$0xf]
      %v191 = vld [vmem:[%s165 + $0xc] sm:$0x1]
      %v192 = vld [vmem:[%s175] sm:$0xc]
      %v193 = vld [vmem:[%s175 + $0x8] sm:$0xf]
      %v194 = vld [vmem:[%s175 + $0xc] sm:$0x1]
      %v195 = vld [vmem:[%s165] sm:$0x8]
      %v199 = vunpack.c.l.b16 %v172
      %v200 = vunpack.c.l.b16 %v173
      %v201 = vunpack.c.l.b16 %v174
      %v202 = vpack.c.b16 %v200, %v199
      %v203 = vpack.c.b16 %v201, %v201
      %v207 = vunpack.c.l.b16 %v176
      %v208 = vunpack.c.l.b16 %v177
      %v209 = vunpack.c.l.b16 %v178
      %v210 = vpack.c.b16 %v208, %v207
      %v211 = vpack.c.b16 %v209, %v209
      %212 = vrot.lane.b32.xlu0 %v210, 40
      %v213 = vpop.permute.xlu0 %212
      %214 = vrot.lane.b32.xlu0 %v211, 40
      %v215 = vpop.permute.xlu0 %214
      %v217 = vunpack.c.l.b16 %v179
      %v218 = vpack.c.b16 %v217, %v217
      %vm219 = vsmask.f32 7424
      %v221 = vshrl.u32 %v202, 16
      %v223 = vshll.u32 %v202, 16
      %v225 = vrot.slane %v223, 1
      %v226 = vor.u32 %v221, %v225
      %v228 = vshll.u32 %v218, 16
      %v230 = vrot.slane %v228, 1
      %v231 = vsel %vm219, %v226, %v230
      %v232 = vshrl.u32 %v218, 16
      %v234 = vor.u32 %v232, %v230
      %235 = vrot.lane.b32.xlu0 %v231, 80
      %v236 = vpop.permute.xlu0 %235
      %237 = vrot.lane.b32.xlu0 %v234, 80
      %v238 = vpop.permute.xlu0 %237
      %v242 = vunpack.c.l.b16 %v181
      %v243 = vunpack.c.l.b16 %v182
      %v244 = vunpack.c.l.b16 %v183
      %v245 = vpack.c.b16 %v243, %v242
      %v246 = vpack.c.b16 %v244, %v244
      %247 = vrot.lane.b32.xlu0 %v245, 120
      %v248 = vpop.permute.xlu0 %247
      %249 = vrot.lane.b32.xlu0 %v246, 120
      %v250 = vpop.permute.xlu0 %249
      %v254 = vunpack.c.l.b16 %v185
      %v255 = vunpack.c.l.b16 %v186
      %v256 = vunpack.c.l.b16 %v187
      %v257 = vpack.c.b16 %v255, %v254
      %v258 = vpack.c.b16 %v256, %v256
      %259 = vrot.lane.b32.xlu0 %v257, 32
      %v260 = vpop.permute.xlu0 %259
      %261 = vrot.lane.b32.xlu0 %v258, 32
      %v262 = vpop.permute.xlu0 %261
      %v264 = vunpack.c.l.b16 %v188
      %v265 = vpack.c.b16 %v264, %v264
      %v267 = vshrl.u32 %v245, 16
      %v269 = vshll.u32 %v245, 16
      %v271 = vrot.slane %v269, 1
      %v272 = vor.u32 %v267, %v271
      %v274 = vshll.u32 %v265, 16
      %v276 = vrot.slane %v274, 1
      %v277 = vsel %vm219, %v272, %v276
      %v278 = vshrl.u32 %v265, 16
      %v280 = vor.u32 %v278, %v276
      %281 = vrot.lane.b32.xlu0 %v277, 72
      %v282 = vpop.permute.xlu0 %281
      %283 = vrot.lane.b32.xlu0 %v280, 72
      %v284 = vpop.permute.xlu0 %283
      %v288 = vunpack.c.l.b16 %v189
      %v289 = vunpack.c.l.b16 %v190
      %v290 = vunpack.c.l.b16 %v191
      %v291 = vpack.c.b16 %v200, %v288
      %v292 = vpack.c.b16 %v290, %v289
      %vm293 = vsmask.f32 5376
      %v295 = vshrl.u32 %v291, 16
      %v297 = vrot.slane %v295, 2
      %v298 = vshll.u32 %v291, 16
      %v300 = vrot.slane %v298, 3
      %v301 = vor.u32 %v297, %v300
      %v303 = vshrl.u32 %v292, 16
      %v305 = vrot.slane %v303, 2
      %v306 = vshll.u32 %v292, 16
      %v308 = vrot.slane %v306, 3
      %v309 = vor.u32 %v305, %v308
      %v310 = vsel %vm293, %v301, %v309
      %311 = vrot.lane.b32.xlu0 %v310, 112
      %v312 = vpop.permute.xlu0 %311
      %313 = vrot.lane.b32.xlu0 %v309, 112
      %v314 = vpop.permute.xlu0 %313
      %v318 = vunpack.c.l.b16 %v192
      %v319 = vunpack.c.l.b16 %v193
      %v320 = vunpack.c.l.b16 %v194
      %v321 = vpack.c.b16 %v208, %v318
      %v322 = vpack.c.b16 %v320, %v319
      %v324 = vshrl.u32 %v321, 16
      %v326 = vrot.slane %v324, 2
      %v327 = vshll.u32 %v321, 16
      %v329 = vrot.slane %v327, 3
      %v330 = vor.u32 %v326, %v329
      %v332 = vshrl.u32 %v322, 16
      %v334 = vrot.slane %v332, 2
      %v335 = vshll.u32 %v322, 16
      %v337 = vrot.slane %v335, 3
      %v338 = vor.u32 %v334, %v337
      %v339 = vsel %vm293, %v330, %v338
      %340 = vrot.lane.b32.xlu0 %v339, 24
      %v341 = vpop.permute.xlu0 %340
      %342 = vrot.lane.b32.xlu0 %v338, 24
      %v343 = vpop.permute.xlu0 %342
      %v345 = vunpack.c.l.b16 %v195
      %v346 = vpack.c.b16 %v200, %v345
      %vm347 = vcmask 1044480
      %v348 = vrot.slane %v346, 3
      %v349 = vrot.slane %v292, 3
      %v350 = vsel %vm347, %v348, %v349
      %351 = vrot.lane.b32.xlu0 %v350, 64
      %v352 = vpop.permute.xlu0 %351
      %353 = vrot.lane.b32.xlu0 %v349, 64
      %v354 = vpop.permute.xlu0 %353
      %vm355 = vcmask 326656
      %v357 = vsel %vm355, %v202, %v213
      %v360 = vsel %vm355, %v203, %v215
      %vm361 = vcmask 654336
      %v363 = vsel %vm361, %v357, %v236
      %v365 = vsel %vm361, %v360, %v238
      %vm366 = vcmask 982016
      %v368 = vsel %vm366, %v363, %v248
      %v371 = vsel %vm366, %v365, %v250
      %vm373 = vcmask 261120
      %v375 = vsel %vm373, %v248, %v260
      %v377 = vsel %vm373, %v250, %v262
      %vm378 = vcmask 588800
      %v380 = vsel %vm378, %v375, %v282
      %v382 = vsel %vm378, %v377, %v284
      %vm383 = vcmask 916480
      %v385 = vsel %vm383, %v380, %v312
      %v388 = vsel %vm383, %v382, %v314
      %vm390 = vcmask 195584
      %v392 = vsel %vm390, %v312, %v341
      %v394 = vsel %vm390, %v314, %v343
      %vm395 = vcmask 523264
      %v397 = vsel %vm395, %v392, %v352
      %v399 = vsel %vm395, %v394, %v354
      %v400 = vld [vmem:[%s1] sm:$0xf]
      %v401 = vld [vmem:[%s1 + $0x4] sm:$0xf]
      %v402 = vld [vmem:[%s1 + $0x8] sm:$0xf]
      %v403 = vld [vmem:[%s1 + $0xc] sm:$0xf]
      %v404 = vld [vmem:[%s1 + $0x10] sm:$0xf]
      %v405 = vld [vmem:[%s1 + $0x14] sm:$0xf]
      %v406 = vld [vmem:[%s1 + $0x18] sm:$0xf]
      %v407 = vld [vmem:[%s1 + $0x1c] sm:$0xf]
      %v408 = vld [vmem:[%s1 + $0x20] sm:$0xf]
      %v409 = vld [vmem:[%s1 + $0x24] sm:$0xf]
      %v410 = vld [vmem:[%s1 + $0x28] sm:$0xf]
      %v411 = vld [vmem:[%s1 + $0x2c] sm:$0xf]
      %v412 = vld [vmem:[%s1 + $0x30] sm:$0xf]
      %v413 = vld [vmem:[%s1 + $0x34] sm:$0xf]
      %v414 = vld [vmem:[%s1 + $0x38] sm:$0xf]
      %v415 = vld [vmem:[%s1 + $0x3c] sm:$0xf]
      %v416 = vld [vmem:[%s1 + $0x40] sm:$0xf]
      %v417 = vld [vmem:[%s1 + $0x44] sm:$0xf]
      %v418 = vld [vmem:[%s1 + $0x48] sm:$0xf]
      %v419 = vld [vmem:[%s1 + $0x4c] sm:$0xf]
      %v420 = vld [vmem:[%s1 + $0x50] sm:$0xf]
      %v421 = vld [vmem:[%s1 + $0x54] sm:$0xf]
      %v422 = vld [vmem:[%s1 + $0x58] sm:$0xf]
      %v423 = vld [vmem:[%s1 + $0x5c] sm:$0xf]
      %v424 = vld [vmem:[%s1 + $0x60] sm:$0xf]
      %v425 = vld [vmem:[%s1 + $0x64] sm:$0xf]
      %v426 = vld [vmem:[%s1 + $0x68] sm:$0xf]
      %v427 = vld [vmem:[%s1 + $0x6c] sm:$0xf]
      %v428 = vld [vmem:[%s1 + $0x70] sm:$0xf]
      %v429 = vld [vmem:[%s1 + $0x74] sm:$0xf]
      %v430 = vld [vmem:[%s1 + $0x78] sm:$0xf]
      %v431 = vld [vmem:[%s1 + $0x7c] sm:$0xf]
      %v432 = vld [vmem:[%s1 + $0x80] sm:$0xf]
      %v433 = vld [vmem:[%s1 + $0x84] sm:$0xf]
      %v434 = vld [vmem:[%s1 + $0x88] sm:$0xf]
      %v435 = vld [vmem:[%s1 + $0x8c] sm:$0xf]
      %v436 = vld [vmem:[%s1 + $0x90] sm:$0xf]
      %v437 = vld [vmem:[%s1 + $0x94] sm:$0xf]
      %v438 = vld [vmem:[%s1 + $0x98] sm:$0xf]
      %v439 = vld [vmem:[%s1 + $0x9c] sm:$0xf]
      %v440 = vld [vmem:[%s1 + $0xa0] sm:$0xf]
      %v441 = vld [vmem:[%s1 + $0xa4] sm:$0xf]
      %v442 = vld [vmem:[%s1 + $0xa8] sm:$0xf]
      %v443 = vld [vmem:[%s1 + $0xac] sm:$0xf]
      %v444 = vld [vmem:[%s1 + $0xb0] sm:$0xf]
      %v445 = vld [vmem:[%s2] sm:$0x1]
      %v447 = vperm.slane %v445, 0
      %v494 = vunpack.c.l.b16 %v400
      %v495 = vunpack.c.l.b16 %v401
      %v496 = vunpack.c.l.b16 %v402
      %v497 = vunpack.c.l.b16 %v403
      %v498 = vunpack.c.l.b16 %v404
      %v499 = vunpack.c.l.b16 %v405
      %v500 = vunpack.c.l.b16 %v406
      %v501 = vunpack.c.l.b16 %v407
      %v502 = vunpack.c.l.b16 %v408
      %v503 = vunpack.c.l.b16 %v409
      %v504 = vunpack.c.l.b16 %v410
      %v505 = vunpack.c.l.b16 %v411
      %v506 = vunpack.c.l.b16 %v412
      %v507 = vunpack.c.l.b16 %v413
      %v508 = vunpack.c.l.b16 %v414
      %v509 = vunpack.c.l.b16 %v415
      %v510 = vunpack.c.l.b16 %v416
      %v511 = vunpack.c.l.b16 %v417
      %v512 = vunpack.c.l.b16 %v418
      %v513 = vunpack.c.l.b16 %v419
      %v514 = vunpack.c.l.b16 %v420
      %v515 = vunpack.c.l.b16 %v421
      %v516 = vunpack.c.l.b16 %v422
      %v517 = vunpack.c.l.b16 %v423
      %v518 = vunpack.c.l.b16 %v424
      %v519 = vunpack.c.l.b16 %v425
      %v520 = vunpack.c.l.b16 %v426
      %v521 = vunpack.c.l.b16 %v427
      %v522 = vunpack.c.l.b16 %v428
      %v523 = vunpack.c.l.b16 %v429
      %v524 = vunpack.c.l.b16 %v430
      %v525 = vunpack.c.l.b16 %v431
      %v526 = vunpack.c.l.b16 %v432
      %v527 = vunpack.c.l.b16 %v433
      %v528 = vunpack.c.l.b16 %v434
      %v529 = vunpack.c.l.b16 %v435
      %v530 = vunpack.c.l.b16 %v436
      %v531 = vunpack.c.l.b16 %v437
      %v532 = vunpack.c.l.b16 %v438
      %v533 = vunpack.c.l.b16 %v439
      %v534 = vunpack.c.l.b16 %v440
      %v535 = vunpack.c.l.b16 %v441
      %v536 = vunpack.c.l.b16 %v442
      %v537 = vunpack.c.l.b16 %v443
      %v538 = vunpack.c.l.b16 %v444
      %v539 = vpack.c.b16 %v495, %v494
      %v540 = vpack.c.b16 %v497, %v496
      %v541 = vpack.c.b16 %v499, %v498
      %v542 = vpack.c.b16 %v501, %v500
      %v543 = vpack.c.b16 %v503, %v502
      %v544 = vpack.c.b16 %v505, %v504
      %v545 = vpack.c.b16 %v507, %v506
      %v546 = vpack.c.b16 %v509, %v508
      %v547 = vpack.c.b16 %v511, %v510
      %v548 = vpack.c.b16 %v513, %v512
      %v549 = vpack.c.b16 %v515, %v514
      %v550 = vpack.c.b16 %v517, %v516
      %v551 = vpack.c.b16 %v519, %v518
      %v552 = vpack.c.b16 %v521, %v520
      %v553 = vpack.c.b16 %v523, %v522
      %v554 = vpack.c.b16 %v525, %v524
      %v555 = vpack.c.b16 %v527, %v526
      %v556 = vpack.c.b16 %v529, %v528
      %v557 = vpack.c.b16 %v531, %v530
      %v558 = vpack.c.b16 %v533, %v532
      %v559 = vpack.c.b16 %v535, %v534
      %v560 = vpack.c.b16 %v537, %v536
      %v561 = vpack.c.b16 %v538, %v538
      %vm584 = vcmask 850944
      %v585 = vsel %vm584, %v397, 0
      %v587 = vsel %vm584, %v399, 0
      %vm589 = vcmask 1043456
      %v591 = vsel %vm589, %v561, 0
      %593 = vmatpush.bf16.msra.mxu0 %v546
      %594 = vmatpush.bf16.msra.mxu0 %v545
      %595 = vmatpush.bf16.msra.mxu0 %v544
      %596 = vmatpush.bf16.msra.mxu0 %v543
      %597 = vmatpush.bf16.msra.mxu0 %v542
      %598 = vmatpush.bf16.msra.mxu0 %v541
      %599 = vmatpush.bf16.msra.mxu0 %v540
      %600 = vmatpush.bf16.msra.mxu0 %v539
      %601 = vmatmul.bf16.gmra.mxu0 %v368
      %v602 = vpop.f32.mrf.mxu0
      %v603 = vadd.f32 %v447, %v602
      %v604 = vpop.f32.mrf.mxu0
      %v605 = vadd.f32 %v447, %v604
      %606 = vmatmul.bf16.gmra.mxu0 %v371
      %v607 = vpop.f32.mrf.mxu0
      %v608 = vadd.f32 %v447, %v607
      %v609 = vpop.f32.mrf.mxu0
      %610 = vdwg.mxu0
      %611 = vmatpush.bf16.msra.mxu0 %v554
      %612 = vmatpush.bf16.msra.mxu0 %v553
      %613 = vmatpush.bf16.msra.mxu0 %v552
      %614 = vmatpush.bf16.msra.mxu0 %v551
      %615 = vmatpush.bf16.msra.mxu0 %v550
      %616 = vmatpush.bf16.msra.mxu0 %v549
      %617 = vmatpush.bf16.msra.mxu0 %v548
      %618 = vmatpush.bf16.msra.mxu0 %v547
      %619 = vmatmul.bf16.gmra.mxu0 %v385
      %v620 = vpop.f32.mrf.mxu0
      %v621 = vadd.f32 %v603, %v620
      %v622 = vpop.f32.mrf.mxu0
      %v623 = vadd.f32 %v605, %v622
      %624 = vmatmul.bf16.gmra.mxu0 %v388
      %v625 = vpop.f32.mrf.mxu0
      %v626 = vadd.f32 %v608, %v625
      %v627 = vpop.f32.mrf.mxu0
      %628 = vdwg.mxu0
      %629 = vmatpush.bf16.msra.mxu0 0
      %630 = vmatpush.bf16.msra.mxu0 %v591
      %631 = vmatpush.bf16.msra.mxu0 %v560
      %632 = vmatpush.bf16.msra.mxu0 %v559
      %633 = vmatpush.bf16.msra.mxu0 %v558
      %634 = vmatpush.bf16.msra.mxu0 %v557
      %635 = vmatpush.bf16.msra.mxu0 %v556
      %636 = vmatpush.bf16.msra.mxu0 %v555
      %637 = vmatmul.bf16.gmra.mxu0 %v585
      %v638 = vpop.f32.mrf.mxu0
      %v639 = vadd.f32 %v621, %v638
      %v640 = vpop.f32.mrf.mxu0
      %v641 = vadd.f32 %v623, %v640
      %642 = vmatmul.bf16.gmra.mxu0 %v587
      %v643 = vpop.f32.mrf.mxu0
      %v644 = vadd.f32 %v626, %v643
      %v645 = vpop.f32.mrf.mxu0
      %646 = vdwg.mxu0
      %v647 = vmax.f32 %v639, 0.0
      %v648 = vmax.f32 %v641, 0.0
      %v649 = vmax.f32 %v644, 0.0
      %v650 = vpack.c.bf16 %v647, %v647
      %v651 = vpack.c.bf16 %v648, %v648
      %v652 = vpack.c.bf16 %v649, %v649
      %vm653 = vcmask 650240
      %654 = vst.msk [vmem:[%s170] sm:$0xf] %vm653, %v650
      %655 = vst.msk [vmem:[%s170 + $0x4] sm:$0xf] %vm653, %v651
      %vm656 = vcmask 648192
      %657 = vst.msk [vmem:[%s170 + $0x8] sm:$0x3] %vm656, %v652
      %p658 = scmp.lt.s32.totalorder %s14, 1
      %s659 = scalar_select %p658, %s14, 1
      %s660 = smul.addr %s659, 3
      %s661 = smul.addr %s660, 4
      %s662 = scalar_lea.vmem %s3, %s661
      // Predicated region
      $region33: #{fcn_forward.11} parent=31 // pred_check
        %p663 = pneg %p100
      $region34: #{fcn_forward.11} parent=31 // pred_check_branch
        %665 = sbr.rel (%p663) target = $region36
      $region35: #{fcn_forward.11} parent=31 // pred_region
        _
      $region36: #{fcn_forward.11} parent=31 // pred_fallthru
        _
    $region32: #{fcn_forward.11} parent=5 // pred_fallthru
      _
    %p666 = scmp.le.s32.totalorder 2, %s9
    // Predicated region
    $region37: #{fcn_forward.11} parent=5 // pred_check
      %p667 = pneg %p666
    $region38: #{fcn_forward.11} parent=5 // pred_check_branch
      %669 = sbr.rel (%p667) target = $region40
    $region39: #{fcn_forward.11} parent=5 // pred_region
      %s670 = ssub.s32 %s9, 2
      // Predicated region
      $region41: #{fcn_forward.11} parent=39 // pred_check
        %p671 = pneg %p106
      $region42: #{fcn_forward.11} parent=39 // pred_check_branch
        %673 = sbr.rel (%p671) target = $region44
      $region43: #{fcn_forward.11} parent=39 // pred_region
        %p674 = scmp.lt.s32.totalorder %s15, 1
        %s675 = scalar_select %p674, %s15, 1
        %s676 = smul.addr %s675, 3
        %s677 = smul.addr %s676, 4
        %s678 = scalar_lea.vmem %s3, %s677
      $region44: #{fcn_forward.11} parent=39 // pred_fallthru
        _
    $region40: #{fcn_forward.11} parent=5 // pred_fallthru
      _
  $region6: #{fcn_forward.11} parent=0 // loop_footer
    %s13 = sadd.s32 1, %s9
  $region7: #{fcn_forward.11} parent=0 // loop_footer_branch
    %8 = sbr.rel target = $region3
  $region8: #{fcn_forward.11} parent=0 // loop_exit
    _

// kernel: fcn_forward.12
$region0: #{fcn_forward.12}
  #allocation0 [shape = 'u32[]', space=smem, size = 0x4, offset = 0x4, fixed_abs, tag = 'smem constant byte address 0x4 - core index']
  #allocation1 [shape = 'u32[72,128]{1,0:T(1,128)}', space=vmem, size = 0x9000, scoped, tag = 'internal scratch']
  %s0 = inlined_call_operand.vmem [shape: bf16[2,1,42,80], index: 0, kind: input, shape index: {}]
  %s1 = inlined_call_operand.vmem [shape: bf16[720,80], index: 1, kind: input, shape index: {}]
  %s2 = inlined_call_operand.vmem [shape: f32[1,80], index: 2, kind: input, shape index: {}]
  %s3 = inlined_call_operand.vmem [shape: bf16[2,24,40], index: 3, kind: input, shape index: {}]
  %s4 = inlined_call_operand.vmem [shape: bf16[40,80], index: 4, kind: input, shape index: {}]
  %s5 = inlined_call_operand.vmem [shape: f32[1,80], index: 5, kind: input, shape index: {}]
  %s6 = inlined_call_operand.vmem [shape: bf16[2,24,80], index: 6, kind: output, shape index: {}]
  %s7 = sld [smem:[#allocation0]]
  $region57: #{fcn_forward.12} parent=0
    _
  %s9 = ssub.s32 1, %s7
  %s10 = scalar_select 0, %s9, %s7
  loop: start=0, step=1, limit=4
  $region2: #{fcn_forward.12} parent=0 // loop_pre_header
    _
  $region3: #{fcn_forward.12} parent=0 // loop_header
    %s12 = sphi 0, %s16
    %p13 = scmp.ge.s32.totalorder %s12, 4
    %s22 = sphi 0, %s24
    %s25 = sphi 0, %s22
    %s26 = sphi 0, %s25
    %s42 = sphi 0, %s26
    %s46 = sphi 0, %s46
    %s48 = sphi 0, %s46
    %s49 = sphi 0, %s48
    %s63 = sphi 0, %s49
    %s67 = sphi 0, %s67
    %s69 = sphi 0, %s67
    %s70 = sphi 0, %s69
    %s84 = sphi 0, %s70
    %s90 = sphi 0, %s92
    %s93 = sphi 0, %s90
    %s94 = sphi 0, %s93
    %s110 = sphi 0, %s94
    %s114 = sphi 0, %s114
    %s116 = sphi 0, %s114
    %s117 = sphi 0, %s116
    %s131 = sphi 0, %s117
    %s135 = sphi 0, %s135
    %s137 = sphi 0, %s135
    %s138 = sphi 0, %s137
    %s152 = sphi 0, %s138
    %s158 = sphi 0, %s160
    %s161 = sphi 0, %s158
    %s162 = sphi 0, %s161
    %s178 = sphi 0, %s162
  $region4: #{fcn_forward.12} parent=0 // loop_header_branch
    %15 = sbr.rel (%p13) target = $region8
  $region5: #{fcn_forward.12} parent=0 // loop_body
    %s17 = ssub.s32 %s12, 1
    %s18 = ssub.s32 %s12, 2
    %s19 = sadd.s32 %s12, 1
    %s20 = ssub.s32 %s12, %s19
    %p21 = scmp.eq.s32.totalorder %s20, 0
    %s23 = sadd.s32 %s22, 1
    %s24 = scalar_select %p21, %s22, %s23
    %p27 = pneg %p21
    %p28 = scmp.eq.s32.totalorder %s12, 1
    %p29 = por %p27, %p28
    %p30 = scmp.ne.s32.totalorder %s22, %s25
    %p31 = scmp.eq.s32.totalorder %s12, 0
    %p32 = por %p30, %p31
    %p33 = scmp.ne.s32.totalorder %s22, %s25
    %p34 = scmp.eq.s32.totalorder %s17, 1
    %p35 = por %p33, %p34
    %p36 = scmp.ne.s32.totalorder %s25, %s26
    %p37 = scmp.eq.s32.totalorder %s17, 0
    %p38 = por %p36, %p37
    %p39 = scmp.ne.s32.totalorder %s25, %s26
    %p40 = scmp.eq.s32.totalorder %s18, 1
    %p41 = por %p39, %p40
    %p43 = scmp.ne.s32.totalorder %s26, %s42
    %p44 = scmp.eq.s32.totalorder %s18, 0
    %p45 = por %p43, %p44
    %s47 = sadd.s32 %s46, 1
    %p50 = scmp.eq.s32.totalorder %s12, 1
    %p51 = scmp.ne.s32.totalorder %s46, %s48
    %p52 = scmp.eq.s32.totalorder %s12, 0
    %p53 = por %p51, %p52
    %p54 = scmp.ne.s32.totalorder %s46, %s48
    %p55 = scmp.eq.s32.totalorder %s17, 1
    %p56 = por %p54, %p55
    %p57 = scmp.ne.s32.totalorder %s48, %s49
    %p58 = scmp.eq.s32.totalorder %s17, 0
    %p59 = por %p57, %p58
    %p60 = scmp.ne.s32.totalorder %s48, %s49
    %p61 = scmp.eq.s32.totalorder %s18, 1
    %p62 = por %p60, %p61
    %p64 = scmp.ne.s32.totalorder %s49, %s63
    %p65 = scmp.eq.s32.totalorder %s18, 0
    %p66 = por %p64, %p65
    %s68 = sadd.s32 %s67, 1
    %p71 = scmp.eq.s32.totalorder %s12, 1
    %p72 = scmp.ne.s32.totalorder %s67, %s69
    %p73 = scmp.eq.s32.totalorder %s12, 0
    %p74 = por %p72, %p73
    %p75 = scmp.ne.s32.totalorder %s67, %s69
    %p76 = scmp.eq.s32.totalorder %s17, 1
    %p77 = por %p75, %p76
    %p78 = scmp.ne.s32.totalorder %s69, %s70
    %p79 = scmp.eq.s32.totalorder %s17, 0
    %p80 = por %p78, %p79
    %p81 = scmp.ne.s32.totalorder %s69, %s70
    %p82 = scmp.eq.s32.totalorder %s18, 1
    %p83 = por %p81, %p82
    %p85 = scmp.ne.s32.totalorder %s70, %s84
    %p86 = scmp.eq.s32.totalorder %s18, 0
    %p87 = por %p85, %p86
    %s88 = ssub.s32 %s12, %s19
    %p89 = scmp.eq.s32.totalorder %s88, 0
    %s91 = sadd.s32 %s90, 1
    %s92 = scalar_select %p89, %s90, %s91
    %p95 = pneg %p89
    %p96 = scmp.eq.s32.totalorder %s12, 1
    %p97 = por %p95, %p96
    %p98 = scmp.ne.s32.totalorder %s90, %s93
    %p99 = scmp.eq.s32.totalorder %s12, 0
    %p100 = por %p98, %p99
    %p101 = scmp.ne.s32.totalorder %s90, %s93
    %p102 = scmp.eq.s32.totalorder %s17, 1
    %p103 = por %p101, %p102
    %p104 = scmp.ne.s32.totalorder %s93, %s94
    %p105 = scmp.eq.s32.totalorder %s17, 0
    %p106 = por %p104, %p105
    %p107 = scmp.ne.s32.totalorder %s93, %s94
    %p108 = scmp.eq.s32.totalorder %s18, 1
    %p109 = por %p107, %p108
    %p111 = scmp.ne.s32.totalorder %s94, %s110
    %p112 = scmp.eq.s32.totalorder %s18, 0
    %p113 = por %p111, %p112
    %s115 = sadd.s32 %s114, 1
    %p118 = scmp.eq.s32.totalorder %s12, 1
    %p119 = scmp.ne.s32.totalorder %s114, %s116
    %p120 = scmp.eq.s32.totalorder %s12, 0
    %p121 = por %p119, %p120
    %p122 = scmp.ne.s32.totalorder %s114, %s116
    %p123 = scmp.eq.s32.totalorder %s17, 1
    %p124 = por %p122, %p123
    %p125 = scmp.ne.s32.totalorder %s116, %s117
    %p126 = scmp.eq.s32.totalorder %s17, 0
    %p127 = por %p125, %p126
    %p128 = scmp.ne.s32.totalorder %s116, %s117
    %p129 = scmp.eq.s32.totalorder %s18, 1
    %p130 = por %p128, %p129
    %p132 = scmp.ne.s32.totalorder %s117, %s131
    %p133 = scmp.eq.s32.totalorder %s18, 0
    %p134 = por %p132, %p133
    %s136 = sadd.s32 %s135, 1
    %p139 = scmp.eq.s32.totalorder %s12, 1
    %p140 = scmp.ne.s32.totalorder %s135, %s137
    %p141 = scmp.eq.s32.totalorder %s12, 0
    %p142 = por %p140, %p141
    %p143 = scmp.ne.s32.totalorder %s135, %s137
    %p144 = scmp.eq.s32.totalorder %s17, 1
    %p145 = por %p143, %p144
    %p146 = scmp.ne.s32.totalorder %s137, %s138
    %p147 = scmp.eq.s32.totalorder %s17, 0
    %p148 = por %p146, %p147
    %p149 = scmp.ne.s32.totalorder %s137, %s138
    %p150 = scmp.eq.s32.totalorder %s18, 1
    %p151 = por %p149, %p150
    %p153 = scmp.ne.s32.totalorder %s138, %s152
    %p154 = scmp.eq.s32.totalorder %s18, 0
    %p155 = por %p153, %p154
    %s156 = ssub.s32 %s12, %s19
    %p157 = scmp.eq.s32.totalorder %s156, 0
    %s159 = sadd.s32 %s158, 1
    %s160 = scalar_select %p157, %s158, %s159
    %p163 = pneg %p157
    %p164 = scmp.eq.s32.totalorder %s12, 1
    %p165 = por %p163, %p164
    %p166 = scmp.ne.s32.totalorder %s158, %s161
    %p167 = scmp.eq.s32.totalorder %s12, 0
    %p168 = por %p166, %p167
    %p169 = scmp.ne.s32.totalorder %s158, %s161
    %p170 = scmp.eq.s32.totalorder %s17, 1
    %p171 = por %p169, %p170
    %p172 = scmp.ne.s32.totalorder %s161, %s162
    %p173 = scmp.eq.s32.totalorder %s17, 0
    %p174 = por %p172, %p173
    %p175 = scmp.ne.s32.totalorder %s161, %s162
    %p176 = scmp.eq.s32.totalorder %s18, 1
    %p177 = por %p175, %p176
    %p179 = scmp.ne.s32.totalorder %s162, %s178
    %p180 = scmp.eq.s32.totalorder %s18, 0
    %p181 = por %p179, %p180
    %p182 = scmp.le.s32.totalorder 1, %s12
    %p183 = scmp.lt.s32.totalorder %s12, 3
    %p184 = pnand %p182, %p183
    %p185 = pneg %p184
    // Predicated region
    $region9: #{fcn_forward.12} parent=5 // pred_check
      _
    $region10: #{fcn_forward.12} parent=5 // pred_check_branch
      %187 = sbr.rel (%p184) target = $region12
    $region11: #{fcn_forward.12} parent=5 // pred_region
      %s188 = ssub.s32 %s12, 1
      // Predicated region
      $region13: #{fcn_forward.12} parent=11 // pred_check
        %p189 = pneg %p59
      $region14: #{fcn_forward.12} parent=11 // pred_check_branch
        %191 = sbr.rel (%p189) target = $region16
      $region15: #{fcn_forward.12} parent=11 // pred_region
        _
      $region16: #{fcn_forward.12} parent=11 // pred_fallthru
        _
      // Predicated region
      $region17: #{fcn_forward.12} parent=11 // pred_check
        %p192 = pneg %p80
      $region18: #{fcn_forward.12} parent=11 // pred_check_branch
        %194 = sbr.rel (%p192) target = $region20
      $region19: #{fcn_forward.12} parent=11 // pred_region
        _
      $region20: #{fcn_forward.12} parent=11 // pred_fallthru
        _
      // Predicated region
      $region21: #{fcn_forward.12} parent=11 // pred_check
        %p195 = pneg %p127
      $region22: #{fcn_forward.12} parent=11 // pred_check_branch
        %197 = sbr.rel (%p195) target = $region24
      $region23: #{fcn_forward.12} parent=11 // pred_region
        _
      $region24: #{fcn_forward.12} parent=11 // pred_fallthru
        _
      // Predicated region
      $region25: #{fcn_forward.12} parent=11 // pred_check
        %p198 = pneg %p148
      $region26: #{fcn_forward.12} parent=11 // pred_check_branch
        %200 = sbr.rel (%p198) target = $region28
      $region27: #{fcn_forward.12} parent=11 // pred_region
        _
      $region28: #{fcn_forward.12} parent=11 // pred_fallthru
        _
    $region12: #{fcn_forward.12} parent=5 // pred_fallthru
      _
    %p201 = scmp.lt.s32.totalorder %s12, 2
    // Predicated region
    $region29: #{fcn_forward.12} parent=5 // pred_check
      %p202 = pneg %p201
    $region30: #{fcn_forward.12} parent=5 // pred_check_branch
      %204 = sbr.rel (%p202) target = $region32
    $region31: #{fcn_forward.12} parent=5 // pred_region
      // Predicated region
      $region33: #{fcn_forward.12} parent=31 // pred_check
        %p205 = pneg %p32
      $region34: #{fcn_forward.12} parent=31 // pred_check_branch
        %207 = sbr.rel (%p205) target = $region36
      $region35: #{fcn_forward.12} parent=31 // pred_region
        %p208 = scmp.lt.s32.totalorder %s12, 1
        %s209 = scalar_select %p208, %s12, 1
        %s210 = smul.addr %s209, 6
        %s211 = smul.addr %s210, 4
        %s212 = scalar_lea.vmem %s0, %s211
      $region36: #{fcn_forward.12} parent=31 // pred_fallthru
        _
      // Predicated region
      $region37: #{fcn_forward.12} parent=31 // pred_check
        %p213 = pneg %p100
      $region38: #{fcn_forward.12} parent=31 // pred_check_branch
        %215 = sbr.rel (%p213) target = $region40
      $region39: #{fcn_forward.12} parent=31 // pred_region
        %p216 = scmp.lt.s32.totalorder %s12, 1
        %s217 = scalar_select %p216, %s12, 1
        %s218 = smul.addr %s217, 3
        %s219 = smul.addr %s218, 4
        %s220 = scalar_lea.vmem %s3, %s219
      $region40: #{fcn_forward.12} parent=31 // pred_fallthru
        _
    $region32: #{fcn_forward.12} parent=5 // pred_fallthru
      _
    %p221 = scmp.le.s32.totalorder 1, %s12
    %p222 = scmp.lt.s32.totalorder %s12, 3
    %p223 = pnand %p221, %p222
    %p224 = pneg %p223
    // Predicated region
    $region41: #{fcn_forward.12} parent=5 // pred_check
      _
    $region42: #{fcn_forward.12} parent=5 // pred_check_branch
      %226 = sbr.rel (%p223) target = $region44
    $region43: #{fcn_forward.12} parent=5 // pred_region
      %s227 = ssub.s32 %s12, 1
      %p228 = scmp.lt.s32.totalorder %s17, 1
      %s229 = scalar_select %p228, %s17, 1
      %s230 = smul.addr %s229, 6
      %s231 = smul.addr %s230, 4
      %s232 = scalar_lea.vmem %s0, %s231
      %p233 = pneg %p38
      %p234 = pneg %p35
      %p235 = pneg %p59
      %p236 = pneg %p56
      %p237 = pneg %p80
      %p238 = pneg %p77
      %p239 = scmp.lt.s32.totalorder %s17, 1
      %s240 = scalar_select %p239, %s17, 1
      %s241 = smul.addr %s240, 3
      %s242 = smul.addr %s241, 4
      %s243 = scalar_lea.vmem %s3, %s242
      %p244 = pneg %p106
      %p245 = pneg %p103
      %p246 = pneg %p127
      %p247 = pneg %p124
      %p248 = pneg %p148
      %p249 = pneg %p145
      %p250 = pneg %p174
      %p251 = pneg %p171
      %p252 = scmp.lt.s32.totalorder %s17, 1
      %s253 = scalar_select %p252, %s17, 1
      %s254 = smul.addr %s253, 3
      %s255 = smul.addr %s254, 4
      %s256 = scalar_lea.vmem %s6, %s255
      %p257 = scmp.lt.s32.totalorder %s17, 1
      %s258 = scalar_select %p257, %s17, 1
      %s259 = smul.addr %s258, 6
      %s260 = smul.addr %s259, 4
      %s261 = scalar_lea.vmem %s0, %s260
      %p262 = scmp.lt.s32.totalorder %s17, 1
      %s263 = scalar_select %p262, %s17, 1
      %s264 = smul.addr %s263, 3
      %s265 = smul.addr %s264, 4
      %s266 = scalar_lea.vmem %s3, %s265
      %p267 = scmp.lt.s32.totalorder %s17, 1
      %s268 = scalar_select %p267, %s17, 1
      %s269 = smul.addr %s268, 3
      %s270 = smul.addr %s269, 4
      %s271 = scalar_lea.vmem %s6, %s270
      %v273 = vld [vmem:[%s261] sm:$0xf]
      %v274 = vld [vmem:[%s261 + $0x4] sm:$0xf]
      %v275 = vld [vmem:[%s261 + $0x8] sm:$0xf]
      %v276 = vld [vmem:[%s261 + $0xc] sm:$0x1]
      %v277 = vld [vmem:[%s261] sm:$0xe]
      %v278 = vld [vmem:[%s261] sm:$0x8]
      %v279 = vld [vmem:[%s261 + $0xc] sm:$0x7]
      %v280 = vld [vmem:[%s261 + $0xc] sm:$0xf]
      %v281 = vld [vmem:[%s261 + $0x4] sm:$0xc]
      %v282 = vld [vmem:[%s261 + $0x10] sm:$0x3]
      %v283 = vld [vmem:[%s261 + $0x10] sm:$0x7]
      %v284 = vld [vmem:[%s261 + $0x4] sm:$0x8]
      %v288 = vunpack.c.l.b16 %v273
      %v289 = vunpack.c.l.b16 %v274
      %v290 = vunpack.c.l.b16 %v275
      %v291 = vpack.c.b16 %v289, %v288
      %v292 = vpack.c.b16 %v290, %v290
      %v294 = vunpack.c.l.b16 %v276
      %v295 = vpack.c.b16 %v294, %v290
      %vm296 = vsmask.f32 7424
      %v298 = vshrl.u32 %v291, 16
      %v300 = vshll.u32 %v291, 16
      %v302 = vrot.slane %v300, 1
      %v303 = vor.u32 %v298, %v302
      %v305 = vshll.u32 %v295, 16
      %v307 = vrot.slane %v305, 1
      %v308 = vsel %vm296, %v303, %v307
      %v309 = vshrl.u32 %v295, 16
      %v311 = vor.u32 %v309, %v307
      %312 = vrot.lane.b32.xlu0 %v308, 80
      %v313 = vpop.permute.xlu0 %312
      %314 = vrot.lane.b32.xlu0 %v311, 80
      %v315 = vpop.permute.xlu0 %314
      %v317 = vunpack.c.l.b16 %v277
      %v318 = vpack.c.b16 %v289, %v317
      %vm319 = vcmask 1046528
      %v320 = vrot.slane %v318, 1
      %v321 = vrot.slane %v295, 1
      %v322 = vsel %vm319, %v320, %v321
      %323 = vrot.lane.b32.xlu0 %v322, 32
      %v324 = vpop.permute.xlu0 %323
      %325 = vrot.lane.b32.xlu0 %v321, 32
      %v326 = vpop.permute.xlu0 %325
      %v329 = vunpack.c.l.b16 %v278
      %v330 = vunpack.c.l.b16 %v279
      %v331 = vpack.c.b16 %v289, %v329
      %v332 = vpack.c.b16 %v330, %v290
      %vm333 = vcmask 1044480
      %v334 = vrot.slane %v331, 3
      %v335 = vrot.slane %v332, 3
      %v336 = vsel %vm333, %v334, %v335
      %337 = vrot.lane.b32.xlu0 %v336, 112
      %v338 = vpop.permute.xlu0 %337
      %339 = vrot.lane.b32.xlu0 %v335, 112
      %v340 = vpop.permute.xlu0 %339
      %v342 = vunpack.c.l.b16 %v280
      %v343 = vpack.c.b16 %v342, %v290
      %vm344 = vsmask.f32 4352
      %v346 = vshrl.u32 %v331, 16
      %v348 = vrot.slane %v346, 3
      %v349 = vshll.u32 %v331, 16
      %v351 = vrot.slane %v349, 4
      %v352 = vor.u32 %v348, %v351
      %v354 = vshrl.u32 %v343, 16
      %v356 = vrot.slane %v354, 3
      %v357 = vshll.u32 %v343, 16
      %v359 = vrot.slane %v357, 4
      %v360 = vor.u32 %v356, %v359
      %v361 = vsel %vm344, %v352, %v360
      %362 = vrot.lane.b32.xlu0 %v361, 64
      %v363 = vpop.permute.xlu0 %362
      %364 = vrot.lane.b32.xlu0 %v360, 64
      %v365 = vpop.permute.xlu0 %364
      %v366 = vpack.c.b16 %v290, %v289
      %v367 = vpack.c.b16 %v342, %v342
      %368 = vrot.lane.b32.xlu0 %v366, 16
      %v369 = vpop.permute.xlu0 %368
      %370 = vrot.lane.b32.xlu0 %v367, 16
      %v371 = vpop.permute.xlu0 %370
      %v374 = vunpack.c.l.b16 %v281
      %v375 = vunpack.c.l.b16 %v282
      %v376 = vpack.c.b16 %v290, %v374
      %v377 = vpack.c.b16 %v375, %v342
      %vm378 = vcmask 1045504
      %v379 = vrot.slane %v376, 2
      %v380 = vrot.slane %v377, 2
      %v381 = vsel %vm378, %v379, %v380
      %382 = vrot.lane.b32.xlu0 %v381, 96
      %v383 = vpop.permute.xlu0 %382
      %384 = vrot.lane.b32.xlu0 %v380, 96
      %v385 = vpop.permute.xlu0 %384
      %v387 = vunpack.c.l.b16 %v283
      %v388 = vpack.c.b16 %v387, %v342
      %vm389 = vsmask.f32 5376
      %v391 = vshrl.u32 %v376, 16
      %v393 = vrot.slane %v391, 2
      %v394 = vshll.u32 %v376, 16
      %v396 = vrot.slane %v394, 3
      %v397 = vor.u32 %v393, %v396
      %v399 = vshrl.u32 %v388, 16
      %v401 = vrot.slane %v399, 2
      %v402 = vshll.u32 %v388, 16
      %v404 = vrot.slane %v402, 3
      %v405 = vor.u32 %v401, %v404
      %v406 = vsel %vm389, %v397, %v405
      %407 = vrot.lane.b32.xlu0 %v406, 48
      %v408 = vpop.permute.xlu0 %407
      %409 = vrot.lane.b32.xlu0 %v405, 48
      %v410 = vpop.permute.xlu0 %409
      %v412 = vunpack.c.l.b16 %v284
      %v413 = vpack.c.b16 %v290, %v412
      %v414 = vrot.slane %v413, 3
      %v415 = vrot.slane %v388, 3
      %v416 = vsel %vm333, %v414, %v415
      %vm417 = vcmask 654336
      %v419 = vsel %vm417, %v291, %v313
      %v423 = vsel %vm417, %v292, %v315
      %vm425 = vcmask 261120
      %v427 = vsel %vm425, %v313, %v324
      %v429 = vsel %vm425, %v315, %v326
      %vm430 = vcmask 916480
      %v432 = vsel %vm430, %v427, %v338
      %v435 = vsel %vm430, %v429, %v340
      %vm437 = vcmask 523264
      %v439 = vsel %vm437, %v338, %v363
      %v442 = vsel %vm437, %v340, %v365
      %vm444 = vcmask 130048
      %v446 = vsel %vm444, %v363, %v369
      %v448 = vsel %vm444, %v365, %v371
      %vm449 = vcmask 785408
      %v451 = vsel %vm449, %v446, %v383
      %v454 = vsel %vm449, %v448, %v385
      %vm456 = vcmask 392192
      %v458 = vsel %vm456, %v383, %v408
      %v461 = vsel %vm456, %v385, %v410
      %v463 = vld [vmem:[%s1] sm:$0xf]
      %v464 = vld [vmem:[%s1 + $0x4] sm:$0xf]
      %v465 = vld [vmem:[%s1 + $0x8] sm:$0xf]
      %v466 = vld [vmem:[%s1 + $0xc] sm:$0xf]
      %v467 = vld [vmem:[%s1 + $0x10] sm:$0xf]
      %v468 = vld [vmem:[%s1 + $0x14] sm:$0xf]
      %v469 = vld [vmem:[%s1 + $0x18] sm:$0xf]
      %v470 = vld [vmem:[%s1 + $0x1c] sm:$0xf]
      %v471 = vld [vmem:[%s1 + $0x20] sm:$0xf]
      %v472 = vld [vmem:[%s1 + $0x24] sm:$0xf]
      %v473 = vld [vmem:[%s1 + $0x28] sm:$0xf]
      %v474 = vld [vmem:[%s1 + $0x2c] sm:$0xf]
      %v475 = vld [vmem:[%s1 + $0x30] sm:$0xf]
      %v476 = vld [vmem:[%s1 + $0x34] sm:$0xf]
      %v477 = vld [vmem:[%s1 + $0x38] sm:$0xf]
      %v478 = vld [vmem:[%s1 + $0x3c] sm:$0xf]
      %v479 = vld [vmem:[%s1 + $0x40] sm:$0xf]
      %v480 = vld [vmem:[%s1 + $0x44] sm:$0xf]
      %v481 = vld [vmem:[%s1 + $0x48] sm:$0xf]
      %v482 = vld [vmem:[%s1 + $0x4c] sm:$0xf]
      %v483 = vld [vmem:[%s1 + $0x50] sm:$0xf]
      %v484 = vld [vmem:[%s1 + $0x54] sm:$0xf]
      %v485 = vld [vmem:[%s1 + $0x58] sm:$0xf]
      %v486 = vld [vmem:[%s1 + $0x5c] sm:$0xf]
      %v487 = vld [vmem:[%s1 + $0x60] sm:$0xf]
      %v488 = vld [vmem:[%s1 + $0x64] sm:$0xf]
      %v489 = vld [vmem:[%s1 + $0x68] sm:$0xf]
      %v490 = vld [vmem:[%s1 + $0x6c] sm:$0xf]
      %v491 = vld [vmem:[%s1 + $0x70] sm:$0xf]
      %v492 = vld [vmem:[%s1 + $0x74] sm:$0xf]
      %v493 = vld [vmem:[%s1 + $0x78] sm:$0xf]
      %v494 = vld [vmem:[%s1 + $0x7c] sm:$0xf]
      %v495 = vld [vmem:[%s1 + $0x80] sm:$0xf]
      %v496 = vld [vmem:[%s1 + $0x84] sm:$0xf]
      %v497 = vld [vmem:[%s1 + $0x88] sm:$0xf]
      %v498 = vld [vmem:[%s1 + $0x8c] sm:$0xf]
      %v499 = vld [vmem:[%s1 + $0x90] sm:$0xf]
      %v500 = vld [vmem:[%s1 + $0x94] sm:$0xf]
      %v501 = vld [vmem:[%s1 + $0x98] sm:$0xf]
      %v502 = vld [vmem:[%s1 + $0x9c] sm:$0xf]
      %v503 = vld [vmem:[%s1 + $0xa0] sm:$0xf]
      %v504 = vld [vmem:[%s1 + $0xa4] sm:$0xf]
      %v505 = vld [vmem:[%s1 + $0xa8] sm:$0xf]
      %v506 = vld [vmem:[%s1 + $0xac] sm:$0xf]
      %v507 = vld [vmem:[%s1 + $0xb0] sm:$0xf]
      %v508 = vld [vmem:[%s1 + $0xb4] sm:$0xf]
      %v509 = vld [vmem:[%s1 + $0xb8] sm:$0xf]
      %v510 = vld [vmem:[%s1 + $0xbc] sm:$0xf]
      %v511 = vld [vmem:[%s1 + $0xc0] sm:$0xf]
      %v512 = vld [vmem:[%s1 + $0xc4] sm:$0xf]
      %v513 = vld [vmem:[%s1 + $0xc8] sm:$0xf]
      %v514 = vld [vmem:[%s1 + $0xcc] sm:$0xf]
      %v515 = vld [vmem:[%s1 + $0xd0] sm:$0xf]
      %v516 = vld [vmem:[%s1 + $0xd4] sm:$0xf]
      %v517 = vld [vmem:[%s1 + $0xd8] sm:$0xf]
      %v518 = vld [vmem:[%s1 + $0xdc] sm:$0xf]
      %v519 = vld [vmem:[%s1 + $0xe0] sm:$0xf]
      %v520 = vld [vmem:[%s1 + $0xe4] sm:$0xf]
      %v521 = vld [vmem:[%s1 + $0xe8] sm:$0xf]
      %v522 = vld [vmem:[%s1 + $0xec] sm:$0xf]
      %v523 = vld [vmem:[%s1 + $0xf0] sm:$0xf]
      %v524 = vld [vmem:[%s1 + $0xf4] sm:$0xf]
      %v525 = vld [vmem:[%s1 + $0xf8] sm:$0xf]
      %v526 = vld [vmem:[%s1 + $0xfc] sm:$0xf]
      %v527 = vld [vmem:[%s1 + $0x100] sm:$0xf]
      %v528 = vld [vmem:[%s1 + $0x104] sm:$0xf]
      %v529 = vld [vmem:[%s1 + $0x108] sm:$0xf]
      %v530 = vld [vmem:[%s1 + $0x10c] sm:$0xf]
      %v531 = vld [vmem:[%s1 + $0x110] sm:$0xf]
      %v532 = vld [vmem:[%s1 + $0x114] sm:$0xf]
      %v533 = vld [vmem:[%s1 + $0x118] sm:$0xf]
      %v534 = vld [vmem:[%s1 + $0x11c] sm:$0xf]
      %v535 = vld [vmem:[%s1 + $0x120] sm:$0xf]
      %v536 = vld [vmem:[%s1 + $0x124] sm:$0xf]
      %v537 = vld [vmem:[%s1 + $0x128] sm:$0xf]
      %v538 = vld [vmem:[%s1 + $0x12c] sm:$0xf]
      %v539 = vld [vmem:[%s1 + $0x130] sm:$0xf]
      %v540 = vld [vmem:[%s1 + $0x134] sm:$0xf]
      %v541 = vld [vmem:[%s1 + $0x138] sm:$0xf]
      %v542 = vld [vmem:[%s1 + $0x13c] sm:$0xf]
      %v543 = vld [vmem:[%s1 + $0x140] sm:$0xf]
      %v544 = vld [vmem:[%s1 + $0x144] sm:$0xf]
      %v545 = vld [vmem:[%s1 + $0x148] sm:$0xf]
      %v546 = vld [vmem:[%s1 + $0x14c] sm:$0xf]
      %v547 = vld [vmem:[%s1 + $0x150] sm:$0xf]
      %v548 = vld [vmem:[%s1 + $0x154] sm:$0xf]
      %v549 = vld [vmem:[%s1 + $0x158] sm:$0xf]
      %v550 = vld [vmem:[%s1 + $0x15c] sm:$0xf]
      %v551 = vld [vmem:[%s1 + $0x160] sm:$0xf]
      %v552 = vld [vmem:[%s1 + $0x164] sm:$0xf]
      %v553 = vld [vmem:[%s2] sm:$0x1]
      %v555 = vperm.slane %v553, 0
      %v647 = vunpack.c.l.b16 %v463
      %v648 = vunpack.c.l.b16 %v464
      %v649 = vunpack.c.l.b16 %v465
      %v650 = vunpack.c.l.b16 %v466
      %v651 = vunpack.c.l.b16 %v467
      %v652 = vunpack.c.l.b16 %v468
      %v653 = vunpack.c.l.b16 %v469
      %v654 = vunpack.c.l.b16 %v470
      %v655 = vunpack.c.l.b16 %v471
      %v656 = vunpack.c.l.b16 %v472
      %v657 = vunpack.c.l.b16 %v473
      %v658 = vunpack.c.l.b16 %v474
      %v659 = vunpack.c.l.b16 %v475
      %v660 = vunpack.c.l.b16 %v476
      %v661 = vunpack.c.l.b16 %v477
      %v662 = vunpack.c.l.b16 %v478
      %v663 = vunpack.c.l.b16 %v479
      %v664 = vunpack.c.l.b16 %v480
      %v665 = vunpack.c.l.b16 %v481
      %v666 = vunpack.c.l.b16 %v482
      %v667 = vunpack.c.l.b16 %v483
      %v668 = vunpack.c.l.b16 %v484
      %v669 = vunpack.c.l.b16 %v485
      %v670 = vunpack.c.l.b16 %v486
      %v671 = vunpack.c.l.b16 %v487
      %v672 = vunpack.c.l.b16 %v488
      %v673 = vunpack.c.l.b16 %v489
      %v674 = vunpack.c.l.b16 %v490
      %v675 = vunpack.c.l.b16 %v491
      %v676 = vunpack.c.l.b16 %v492
      %v677 = vunpack.c.l.b16 %v493
      %v678 = vunpack.c.l.b16 %v494
      %v679 = vunpack.c.l.b16 %v495
      %v680 = vunpack.c.l.b16 %v496
      %v681 = vunpack.c.l.b16 %v497
      %v682 = vunpack.c.l.b16 %v498
      %v683 = vunpack.c.l.b16 %v499
      %v684 = vunpack.c.l.b16 %v500
      %v685 = vunpack.c.l.b16 %v501
      %v686 = vunpack.c.l.b16 %v502
      %v687 = vunpack.c.l.b16 %v503
      %v688 = vunpack.c.l.b16 %v504
      %v689 = vunpack.c.l.b16 %v505
      %v690 = vunpack.c.l.b16 %v506
      %v691 = vunpack.c.l.b16 %v507
      %v692 = vunpack.c.l.b16 %v508
      %v693 = vunpack.c.l.b16 %v509
      %v694 = vunpack.c.l.b16 %v510
      %v695 = vunpack.c.l.b16 %v511
      %v696 = vunpack.c.l.b16 %v512
      %v697 = vunpack.c.l.b16 %v513
      %v698 = vunpack.c.l.b16 %v514
      %v699 = vunpack.c.l.b16 %v515
      %v700 = vunpack.c.l.b16 %v516
      %v701 = vunpack.c.l.b16 %v517
      %v702 = vunpack.c.l.b16 %v518
      %v703 = vunpack.c.l.b16 %v519
      %v704 = vunpack.c.l.b16 %v520
      %v705 = vunpack.c.l.b16 %v521
      %v706 = vunpack.c.l.b16 %v522
      %v707 = vunpack.c.l.b16 %v523
      %v708 = vunpack.c.l.b16 %v524
      %v709 = vunpack.c.l.b16 %v525
      %v710 = vunpack.c.l.b16 %v526
      %v711 = vunpack.c.l.b16 %v527
      %v712 = vunpack.c.l.b16 %v528
      %v713 = vunpack.c.l.b16 %v529
      %v714 = vunpack.c.l.b16 %v530
      %v715 = vunpack.c.l.b16 %v531
      %v716 = vunpack.c.l.b16 %v532
      %v717 = vunpack.c.l.b16 %v533
      %v718 = vunpack.c.l.b16 %v534
      %v719 = vunpack.c.l.b16 %v535
      %v720 = vunpack.c.l.b16 %v536
      %v721 = vunpack.c.l.b16 %v537
      %v722 = vunpack.c.l.b16 %v538
      %v723 = vunpack.c.l.b16 %v539
      %v724 = vunpack.c.l.b16 %v540
      %v725 = vunpack.c.l.b16 %v541
      %v726 = vunpack.c.l.b16 %v542
      %v727 = vunpack.c.l.b16 %v543
      %v728 = vunpack.c.l.b16 %v544
      %v729 = vunpack.c.l.b16 %v545
      %v730 = vunpack.c.l.b16 %v546
      %v731 = vunpack.c.l.b16 %v547
      %v732 = vunpack.c.l.b16 %v548
      %v733 = vunpack.c.l.b16 %v549
      %v734 = vunpack.c.l.b16 %v550
      %v735 = vunpack.c.l.b16 %v551
      %v736 = vunpack.c.l.b16 %v552
      %v737 = vpack.c.b16 %v648, %v647
      %v738 = vpack.c.b16 %v650, %v649
      %v739 = vpack.c.b16 %v652, %v651
      %v740 = vpack.c.b16 %v654, %v653
      %v741 = vpack.c.b16 %v656, %v655
      %v742 = vpack.c.b16 %v658, %v657
      %v743 = vpack.c.b16 %v660, %v659
      %v744 = vpack.c.b16 %v662, %v661
      %v745 = vpack.c.b16 %v664, %v663
      %v746 = vpack.c.b16 %v666, %v665
      %v747 = vpack.c.b16 %v668, %v667
      %v748 = vpack.c.b16 %v670, %v669
      %v749 = vpack.c.b16 %v672, %v671
      %v750 = vpack.c.b16 %v674, %v673
      %v751 = vpack.c.b16 %v676, %v675
      %v752 = vpack.c.b16 %v678, %v677
      %v753 = vpack.c.b16 %v680, %v679
      %v754 = vpack.c.b16 %v682, %v681
      %v755 = vpack.c.b16 %v684, %v683
      %v756 = vpack.c.b16 %v686, %v685
      %v757 = vpack.c.b16 %v688, %v687
      %v758 = vpack.c.b16 %v690, %v689
      %v759 = vpack.c.b16 %v692, %v691
      %v760 = vpack.c.b16 %v694, %v693
      %v761 = vpack.c.b16 %v696, %v695
      %v762 = vpack.c.b16 %v698, %v697
      %v763 = vpack.c.b16 %v700, %v699
      %v764 = vpack.c.b16 %v702, %v701
      %v765 = vpack.c.b16 %v704, %v703
      %v766 = vpack.c.b16 %v706, %v705
      %v767 = vpack.c.b16 %v708, %v707
      %v768 = vpack.c.b16 %v710, %v709
      %v769 = vpack.c.b16 %v712, %v711
      %v770 = vpack.c.b16 %v714, %v713
      %v771 = vpack.c.b16 %v716, %v715
      %v772 = vpack.c.b16 %v718, %v717
      %v773 = vpack.c.b16 %v720, %v719
      %v774 = vpack.c.b16 %v722, %v721
      %v775 = vpack.c.b16 %v724, %v723
      %v776 = vpack.c.b16 %v726, %v725
      %v777 = vpack.c.b16 %v728, %v727
      %v778 = vpack.c.b16 %v730, %v729
      %v779 = vpack.c.b16 %v732, %v731
      %v780 = vpack.c.b16 %v734, %v733
      %v781 = vpack.c.b16 %v736, %v735
      %v828 = vsel %vm417, %v416, 0
      %v831 = vsel %vm417, %v415, 0
      %833 = vmatpush.bf16.msra.mxu0 %v744
      %834 = vmatpush.bf16.msra.mxu0 %v743
      %835 = vmatpush.bf16.msra.mxu0 %v742
      %836 = vmatpush.bf16.msra.mxu0 %v741
      %837 = vmatpush.bf16.msra.mxu0 %v740
      %838 = vmatpush.bf16.msra.mxu0 %v739
      %839 = vmatpush.bf16.msra.mxu0 %v738
      %840 = vmatpush.bf16.msra.mxu0 %v737
      %841 = vmatmul.bf16.gmra.mxu0 %v419
      %v842 = vpop.f32.mrf.mxu0
      %v843 = vadd.f32 %v555, %v842
      %v844 = vpop.f32.mrf.mxu0
      %v845 = vadd.f32 %v555, %v844
      %846 = vmatmul.bf16.gmra.mxu0 %v423
      %v847 = vpop.f32.mrf.mxu0
      %v848 = vadd.f32 %v555, %v847
      %v849 = vpop.f32.mrf.mxu0
      %850 = vdwg.mxu0
      %851 = vmatpush.bf16.msra.mxu0 %v752
      %852 = vmatpush.bf16.msra.mxu0 %v751
      %853 = vmatpush.bf16.msra.mxu0 %v750
      %854 = vmatpush.bf16.msra.mxu0 %v749
      %855 = vmatpush.bf16.msra.mxu0 %v748
      %856 = vmatpush.bf16.msra.mxu0 %v747
      %857 = vmatpush.bf16.msra.mxu0 %v746
      %858 = vmatpush.bf16.msra.mxu0 %v745
      %859 = vmatmul.bf16.gmra.mxu0 %v432
      %v860 = vpop.f32.mrf.mxu0
      %v861 = vadd.f32 %v843, %v860
      %v862 = vpop.f32.mrf.mxu0
      %v863 = vadd.f32 %v845, %v862
      %864 = vmatmul.bf16.gmra.mxu0 %v435
      %v865 = vpop.f32.mrf.mxu0
      %v866 = vadd.f32 %v848, %v865
      %v867 = vpop.f32.mrf.mxu0
      %868 = vdwg.mxu0
      %869 = vmatpush.bf16.msra.mxu0 %v760
      %870 = vmatpush.bf16.msra.mxu0 %v759
      %871 = vmatpush.bf16.msra.mxu0 %v758
      %872 = vmatpush.bf16.msra.mxu0 %v757
      %873 = vmatpush.bf16.msra.mxu0 %v756
      %874 = vmatpush.bf16.msra.mxu0 %v755
      %875 = vmatpush.bf16.msra.mxu0 %v754
      %876 = vmatpush.bf16.msra.mxu0 %v753
      %877 = vmatmul.bf16.gmra.mxu0 %v439
      %v878 = vpop.f32.mrf.mxu0
      %v879 = vadd.f32 %v861, %v878
      %v880 = vpop.f32.mrf.mxu0
      %v881 = vadd.f32 %v863, %v880
      %882 = vmatmul.bf16.gmra.mxu0 %v442
      %v883 = vpop.f32.mrf.mxu0
      %v884 = vadd.f32 %v866, %v883
      %v885 = vpop.f32.mrf.mxu0
      %886 = vdwg.mxu0
      %887 = vmatpush.bf16.msra.mxu0 %v768
      %888 = vmatpush.bf16.msra.mxu0 %v767
      %889 = vmatpush.bf16.msra.mxu0 %v766
      %890 = vmatpush.bf16.msra.mxu0 %v765
      %891 = vmatpush.bf16.msra.mxu0 %v764
      %892 = vmatpush.bf16.msra.mxu0 %v763
      %893 = vmatpush.bf16.msra.mxu0 %v762
      %894 = vmatpush.bf16.msra.mxu0 %v761
      %895 = vmatmul.bf16.gmra.mxu0 %v451
      %v896 = vpop.f32.mrf.mxu0
      %v897 = vadd.f32 %v879, %v896
      %v898 = vpop.f32.mrf.mxu0
      %v899 = vadd.f32 %v881, %v898
      %900 = vmatmul.bf16.gmra.mxu0 %v454
      %v901 = vpop.f32.mrf.mxu0
      %v902 = vadd.f32 %v884, %v901
      %v903 = vpop.f32.mrf.mxu0
      %904 = vdwg.mxu0
      %905 = vmatpush.bf16.msra.mxu0 %v776
      %906 = vmatpush.bf16.msra.mxu0 %v775
      %907 = vmatpush.bf16.msra.mxu0 %v774
      %908 = vmatpush.bf16.msra.mxu0 %v773
      %909 = vmatpush.bf16.msra.mxu0 %v772
      %910 = vmatpush.bf16.msra.mxu0 %v771
      %911 = vmatpush.bf16.msra.mxu0 %v770
      %912 = vmatpush.bf16.msra.mxu0 %v769
      %913 = vmatmul.bf16.gmra.mxu0 %v458
      %v914 = vpop.f32.mrf.mxu0
      %v915 = vadd.f32 %v897, %v914
      %v916 = vpop.f32.mrf.mxu0
      %v917 = vadd.f32 %v899, %v916
      %918 = vmatmul.bf16.gmra.mxu0 %v461
      %v919 = vpop.f32.mrf.mxu0
      %v920 = vadd.f32 %v902, %v919
      %v921 = vpop.f32.mrf.mxu0
      %922 = vdwg.mxu0
      %923 = vmatpush.bf16.msra.mxu0 0
      %924 = vmatpush.bf16.msra.mxu0 0
      %925 = vmatpush.bf16.msra.mxu0 0
      %926 = vmatpush.bf16.msra.mxu0 %v781
      %927 = vmatpush.bf16.msra.mxu0 %v780
      %928 = vmatpush.bf16.msra.mxu0 %v779
      %929 = vmatpush.bf16.msra.mxu0 %v778
      %930 = vmatpush.bf16.msra.mxu0 %v777
      %931 = vmatmul.bf16.gmra.mxu0 %v828
      %v932 = vpop.f32.mrf.mxu0
      %v933 = vadd.f32 %v915, %v932
      %v934 = vpop.f32.mrf.mxu0
      %v935 = vadd.f32 %v917, %v934
      %936 = vmatmul.bf16.gmra.mxu0 %v831
      %v937 = vpop.f32.mrf.mxu0
      %v938 = vadd.f32 %v920, %v937
      %v939 = vpop.f32.mrf.mxu0
      %940 = vdwg.mxu0
      %v941 = vmax.f32 %v933, 0.0
      %v942 = vmax.f32 %v935, 0.0
      %v943 = vmax.f32 %v938, 0.0
      %v944 = vld [vmem:[%s266] sm:$0xf]
      %v945 = vld [vmem:[%s266 + $0x4] sm:$0xf]
      %v946 = vld [vmem:[%s266 + $0x8] sm:$0xf]
      %v947 = vld [vmem:[%s4] sm:$0xf]
      %v948 = vld [vmem:[%s4 + $0x4] sm:$0xf]
      %v949 = vld [vmem:[%s4 + $0x8] sm:$0xf]
      %v950 = vld [vmem:[%s4 + $0xc] sm:$0xf]
      %v951 = vld [vmem:[%s4 + $0x10] sm:$0xf]
      %v955 = vunpack.c.l.b16 %v944
      %v956 = vunpack.c.l.b16 %v945
      %v957 = vunpack.c.l.b16 %v946
      %v958 = vpack.c.b16 %v956, %v955
      %v959 = vpack.c.b16 %v957, %v957
      %v965 = vunpack.c.l.b16 %v947
      %v966 = vunpack.c.l.b16 %v948
      %v967 = vunpack.c.l.b16 %v949
      %v968 = vunpack.c.l.b16 %v950
      %v969 = vunpack.c.l.b16 %v951
      %v970 = vpack.c.b16 %v966, %v965
      %v971 = vpack.c.b16 %v968, %v967
      %v972 = vpack.c.b16 %v969, %v969
      %vm975 = vcmask 326656
      %v977 = vsel %vm975, %v958, 0
      %v980 = vsel %vm975, %v959, 0
      %vm982 = vcmask 1043456
      %v984 = vsel %vm982, %v972, 0
      %986 = vmatpush.bf16.msra.mxu0 0
      %987 = vmatpush.bf16.msra.mxu0 0
      %988 = vmatpush.bf16.msra.mxu0 0
      %989 = vmatpush.bf16.msra.mxu0 0
      %990 = vmatpush.bf16.msra.mxu0 0
      %991 = vmatpush.bf16.msra.mxu0 %v984
      %992 = vmatpush.bf16.msra.mxu0 %v971
      %993 = vmatpush.bf16.msra.mxu0 %v970
      %994 = vmatmul.bf16.gmra.mxu0 %v977
      %v995 = vpop.f32.mrf.mxu0
      %v996 = vadd.f32 0.0, %v995
      %v997 = vpop.f32.mrf.mxu0
      %v998 = vadd.f32 0.0, %v997
      %999 = vmatmul.bf16.gmra.mxu0 %v980
      %v1000 = vpop.f32.mrf.mxu0
      %v1001 = vadd.f32 0.0, %v1000
      %v1002 = vpop.f32.mrf.mxu0
      %1003 = vdwg.mxu0
      %v1004 = vadd.f32 %v941, %v996
      %v1005 = vadd.f32 %v942, %v998
      %v1006 = vadd.f32 %v943, %v1001
      %v1007 = vld [vmem:[%s5] sm:$0x1]
      %v1009 = vperm.slane %v1007, 0
      %v1011 = vadd.f32 %v1004, %v1009
      %v1012 = vadd.f32 %v1005, %v1009
      %v1013 = vadd.f32 %v1006, %v1009
      %v1014 = vpack.c.bf16 %v1011, %v1011
      %v1015 = vpack.c.bf16 %v1012, %v1012
      %v1016 = vpack.c.bf16 %v1013, %v1013
      %vm1017 = vcmask 650240
      %1018 = vst.msk [vmem:[%s271] sm:$0xf] %vm1017, %v1014
      %1019 = vst.msk [vmem:[%s271 + $0x4] sm:$0xf] %vm1017, %v1015
      %1020 = vst.msk [vmem:[%s271 + $0x8] sm:$0xf] %vm1017, %v1016
      %p1021 = scmp.lt.s32.totalorder %s17, 1
      %s1022 = scalar_select %p1021, %s17, 1
      %s1023 = smul.addr %s1022, 3
      %s1024 = smul.addr %s1023, 4
      %s1025 = scalar_lea.vmem %s6, %s1024
      // Predicated region
      $region45: #{fcn_forward.12} parent=43 // pred_check
        %p1026 = pneg %p171
      $region46: #{fcn_forward.12} parent=43 // pred_check_branch
        %1028 = sbr.rel (%p1026) target = $region48
      $region47: #{fcn_forward.12} parent=43 // pred_region
        _
      $region48: #{fcn_forward.12} parent=43 // pred_fallthru
        _
    $region44: #{fcn_forward.12} parent=5 // pred_fallthru
      _
    %p1029 = scmp.le.s32.totalorder 2, %s12
    // Predicated region
    $region49: #{fcn_forward.12} parent=5 // pred_check
      %p1030 = pneg %p1029
    $region50: #{fcn_forward.12} parent=5 // pred_check_branch
      %1032 = sbr.rel (%p1030) target = $region52
    $region51: #{fcn_forward.12} parent=5 // pred_region
      %s1033 = ssub.s32 %s12, 2
      // Predicated region
      $region53: #{fcn_forward.12} parent=51 // pred_check
        %p1034 = pneg %p177
      $region54: #{fcn_forward.12} parent=51 // pred_check_branch
        %1036 = sbr.rel (%p1034) target = $region56
      $region55: #{fcn_forward.12} parent=51 // pred_region
        %p1037 = scmp.lt.s32.totalorder %s18, 1
        %s1038 = scalar_select %p1037, %s18, 1
        %s1039 = smul.addr %s1038, 3
        %s1040 = smul.addr %s1039, 4
        %s1041 = scalar_lea.vmem %s6, %s1040
      $region56: #{fcn_forward.12} parent=51 // pred_fallthru
        _
    $region52: #{fcn_forward.12} parent=5 // pred_fallthru
      _
  $region6: #{fcn_forward.12} parent=0 // loop_footer
    %s16 = sadd.s32 1, %s12
  $region7: #{fcn_forward.12} parent=0 // loop_footer_branch
    %11 = sbr.rel target = $region3
  $region8: #{fcn_forward.12} parent=0 // loop_exit
    _

// kernel: fcn_forward.13
$region0: #{fcn_forward.13}
  #allocation0 [shape = 'u32[]', space=smem, size = 0x4, offset = 0x4, fixed_abs, tag = 'smem constant byte address 0x4 - core index']
  #allocation1 [shape = 'u32[72,128]{1,0:T(1,128)}', space=vmem, size = 0x9000, scoped, tag = 'internal scratch']
  %s0 = inlined_call_operand.vmem [shape: bf16[2,30,80], index: 0, kind: input, shape index: {}]
  %s1 = inlined_call_operand.vmem [shape: bf16[80,40], index: 1, kind: input, shape index: {}]
  %s2 = inlined_call_operand.vmem [shape: bf16[160,40], index: 2, kind: input, shape index: {}]
  %s3 = inlined_call_operand.vmem [shape: bf16[160,40], index: 3, kind: input, shape index: {}]
  %s4 = inlined_call_operand.vmem [shape: bf16[320,40], index: 4, kind: input, shape index: {}]
  %s5 = inlined_call_operand.vmem [shape: f32[1,40], index: 5, kind: input, shape index: {}]
  %s6 = inlined_call_operand.vmem [shape: bf16[2,20,40], index: 6, kind: output, shape index: {0}]
  %s7 = inlined_call_operand.vmem [shape: bf16[2,20,40], index: 7, kind: output, shape index: {1}]
  %s8 = inlined_call_operand.vmem [shape: bf16[2,20,40], index: 8, kind: output, shape index: {2}]
  %s9 = inlined_call_operand.vmem [shape: bf16[2,20,40], index: 9, kind: output, shape index: {3}]
  %10 = xla_tuple %s6, %s7, %s8, %s9
  %s11 = sld [smem:[#allocation0]]
  $region81: #{fcn_forward.13} parent=0
    _
  %s13 = ssub.s32 1, %s11
  %s14 = scalar_select 0, %s13, %s11
  loop: start=0, step=1, limit=4
  $region2: #{fcn_forward.13} parent=0 // loop_pre_header
    _
  $region3: #{fcn_forward.13} parent=0 // loop_header
    %s16 = sphi 0, %s20
    %p17 = scmp.ge.s32.totalorder %s16, 4
    %s26 = sphi 0, %s28
    %s29 = sphi 0, %s26
    %s30 = sphi 0, %s29
    %s46 = sphi 0, %s30
    %s50 = sphi 0, %s50
    %s52 = sphi 0, %s50
    %s53 = sphi 0, %s52
    %s67 = sphi 0, %s53
    %s71 = sphi 0, %s71
    %s73 = sphi 0, %s71
    %s74 = sphi 0, %s73
    %s88 = sphi 0, %s74
    %s92 = sphi 0, %s92
    %s94 = sphi 0, %s92
    %s95 = sphi 0, %s94
    %s109 = sphi 0, %s95
    %s113 = sphi 0, %s113
    %s115 = sphi 0, %s113
    %s116 = sphi 0, %s115
    %s130 = sphi 0, %s116
    %s134 = sphi 0, %s134
    %s136 = sphi 0, %s134
    %s137 = sphi 0, %s136
    %s151 = sphi 0, %s137
    %s157 = sphi 0, %s159
    %s160 = sphi 0, %s157
    %s161 = sphi 0, %s160
    %s177 = sphi 0, %s161
    %s183 = sphi 0, %s185
    %s186 = sphi 0, %s183
    %s187 = sphi 0, %s186
    %s203 = sphi 0, %s187
    %s209 = sphi 0, %s211
    %s212 = sphi 0, %s209
    %s213 = sphi 0, %s212
    %s229 = sphi 0, %s213
    %s235 = sphi 0, %s237
    %s238 = sphi 0, %s235
    %s239 = sphi 0, %s238
    %s255 = sphi 0, %s239
  $region4: #{fcn_forward.13} parent=0 // loop_header_branch
    %19 = sbr.rel (%p17) target = $region8
  $region5: #{fcn_forward.13} parent=0 // loop_body
    %s21 = ssub.s32 %s16, 1
    %s22 = ssub.s32 %s16, 2
    %s23 = sadd.s32 %s16, 1
    %s24 = ssub.s32 %s16, %s23
    %p25 = scmp.eq.s32.totalorder %s24, 0
    %s27 = sadd.s32 %s26, 1
    %s28 = scalar_select %p25, %s26, %s27
    %p31 = pneg %p25
    %p32 = scmp.eq.s32.totalorder %s16, 1
    %p33 = por %p31, %p32
    %p34 = scmp.ne.s32.totalorder %s26, %s29
    %p35 = scmp.eq.s32.totalorder %s16, 0
    %p36 = por %p34, %p35
    %p37 = scmp.ne.s32.totalorder %s26, %s29
    %p38 = scmp.eq.s32.totalorder %s21, 1
    %p39 = por %p37, %p38
    %p40 = scmp.ne.s32.totalorder %s29, %s30
    %p41 = scmp.eq.s32.totalorder %s21, 0
    %p42 = por %p40, %p41
    %p43 = scmp.ne.s32.totalorder %s29, %s30
    %p44 = scmp.eq.s32.totalorder %s22, 1
    %p45 = por %p43, %p44
    %p47 = scmp.ne.s32.totalorder %s30, %s46
    %p48 = scmp.eq.s32.totalorder %s22, 0
    %p49 = por %p47, %p48
    %s51 = sadd.s32 %s50, 1
    %p54 = scmp.eq.s32.totalorder %s16, 1
    %p55 = scmp.ne.s32.totalorder %s50, %s52
    %p56 = scmp.eq.s32.totalorder %s16, 0
    %p57 = por %p55, %p56
    %p58 = scmp.ne.s32.totalorder %s50, %s52
    %p59 = scmp.eq.s32.totalorder %s21, 1
    %p60 = por %p58, %p59
    %p61 = scmp.ne.s32.totalorder %s52, %s53
    %p62 = scmp.eq.s32.totalorder %s21, 0
    %p63 = por %p61, %p62
    %p64 = scmp.ne.s32.totalorder %s52, %s53
    %p65 = scmp.eq.s32.totalorder %s22, 1
    %p66 = por %p64, %p65
    %p68 = scmp.ne.s32.totalorder %s53, %s67
    %p69 = scmp.eq.s32.totalorder %s22, 0
    %p70 = por %p68, %p69
    %s72 = sadd.s32 %s71, 1
    %p75 = scmp.eq.s32.totalorder %s16, 1
    %p76 = scmp.ne.s32.totalorder %s71, %s73
    %p77 = scmp.eq.s32.totalorder %s16, 0
    %p78 = por %p76, %p77
    %p79 = scmp.ne.s32.totalorder %s71, %s73
    %p80 = scmp.eq.s32.totalorder %s21, 1
    %p81 = por %p79, %p80
    %p82 = scmp.ne.s32.totalorder %s73, %s74
    %p83 = scmp.eq.s32.totalorder %s21, 0
    %p84 = por %p82, %p83
    %p85 = scmp.ne.s32.totalorder %s73, %s74
    %p86 = scmp.eq.s32.totalorder %s22, 1
    %p87 = por %p85, %p86
    %p89 = scmp.ne.s32.totalorder %s74, %s88
    %p90 = scmp.eq.s32.totalorder %s22, 0
    %p91 = por %p89, %p90
    %s93 = sadd.s32 %s92, 1
    %p96 = scmp.eq.s32.totalorder %s16, 1
    %p97 = scmp.ne.s32.totalorder %s92, %s94
    %p98 = scmp.eq.s32.totalorder %s16, 0
    %p99 = por %p97, %p98
    %p100 = scmp.ne.s32.totalorder %s92, %s94
    %p101 = scmp.eq.s32.totalorder %s21, 1
    %p102 = por %p100, %p101
    %p103 = scmp.ne.s32.totalorder %s94, %s95
    %p104 = scmp.eq.s32.totalorder %s21, 0
    %p105 = por %p103, %p104
    %p106 = scmp.ne.s32.totalorder %s94, %s95
    %p107 = scmp.eq.s32.totalorder %s22, 1
    %p108 = por %p106, %p107
    %p110 = scmp.ne.s32.totalorder %s95, %s109
    %p111 = scmp.eq.s32.totalorder %s22, 0
    %p112 = por %p110, %p111
    %s114 = sadd.s32 %s113, 1
    %p117 = scmp.eq.s32.totalorder %s16, 1
    %p118 = scmp.ne.s32.totalorder %s113, %s115
    %p119 = scmp.eq.s32.totalorder %s16, 0
    %p120 = por %p118, %p119
    %p121 = scmp.ne.s32.totalorder %s113, %s115
    %p122 = scmp.eq.s32.totalorder %s21, 1
    %p123 = por %p121, %p122
    %p124 = scmp.ne.s32.totalorder %s115, %s116
    %p125 = scmp.eq.s32.totalorder %s21, 0
    %p126 = por %p124, %p125
    %p127 = scmp.ne.s32.totalorder %s115, %s116
    %p128 = scmp.eq.s32.totalorder %s22, 1
    %p129 = por %p127, %p128
    %p131 = scmp.ne.s32.totalorder %s116, %s130
    %p132 = scmp.eq.s32.totalorder %s22, 0
    %p133 = por %p131, %p132
    %s135 = sadd.s32 %s134, 1
    %p138 = scmp.eq.s32.totalorder %s16, 1
    %p139 = scmp.ne.s32.totalorder %s134, %s136
    %p140 = scmp.eq.s32.totalorder %s16, 0
    %p141 = por %p139, %p140
    %p142 = scmp.ne.s32.totalorder %s134, %s136
    %p143 = scmp.eq.s32.totalorder %s21, 1
    %p144 = por %p142, %p143
    %p145 = scmp.ne.s32.totalorder %s136, %s137
    %p146 = scmp.eq.s32.totalorder %s21, 0
    %p147 = por %p145, %p146
    %p148 = scmp.ne.s32.totalorder %s136, %s137
    %p149 = scmp.eq.s32.totalorder %s22, 1
    %p150 = por %p148, %p149
    %p152 = scmp.ne.s32.totalorder %s137, %s151
    %p153 = scmp.eq.s32.totalorder %s22, 0
    %p154 = por %p152, %p153
    %s155 = ssub.s32 %s16, %s23
    %p156 = scmp.eq.s32.totalorder %s155, 0
    %s158 = sadd.s32 %s157, 1
    %s159 = scalar_select %p156, %s157, %s158
    %p162 = pneg %p156
    %p163 = scmp.eq.s32.totalorder %s16, 1
    %p164 = por %p162, %p163
    %p165 = scmp.ne.s32.totalorder %s157, %s160
    %p166 = scmp.eq.s32.totalorder %s16, 0
    %p167 = por %p165, %p166
    %p168 = scmp.ne.s32.totalorder %s157, %s160
    %p169 = scmp.eq.s32.totalorder %s21, 1
    %p170 = por %p168, %p169
    %p171 = scmp.ne.s32.totalorder %s160, %s161
    %p172 = scmp.eq.s32.totalorder %s21, 0
    %p173 = por %p171, %p172
    %p174 = scmp.ne.s32.totalorder %s160, %s161
    %p175 = scmp.eq.s32.totalorder %s22, 1
    %p176 = por %p174, %p175
    %p178 = scmp.ne.s32.totalorder %s161, %s177
    %p179 = scmp.eq.s32.totalorder %s22, 0
    %p180 = por %p178, %p179
    %s181 = ssub.s32 %s16, %s23
    %p182 = scmp.eq.s32.totalorder %s181, 0
    %s184 = sadd.s32 %s183, 1
    %s185 = scalar_select %p182, %s183, %s184
    %p188 = pneg %p182
    %p189 = scmp.eq.s32.totalorder %s16, 1
    %p190 = por %p188, %p189
    %p191 = scmp.ne.s32.totalorder %s183, %s186
    %p192 = scmp.eq.s32.totalorder %s16, 0
    %p193 = por %p191, %p192
    %p194 = scmp.ne.s32.totalorder %s183, %s186
    %p195 = scmp.eq.s32.totalorder %s21, 1
    %p196 = por %p194, %p195
    %p197 = scmp.ne.s32.totalorder %s186, %s187
    %p198 = scmp.eq.s32.totalorder %s21, 0
    %p199 = por %p197, %p198
    %p200 = scmp.ne.s32.totalorder %s186, %s187
    %p201 = scmp.eq.s32.totalorder %s22, 1
    %p202 = por %p200, %p201
    %p204 = scmp.ne.s32.totalorder %s187, %s203
    %p205 = scmp.eq.s32.totalorder %s22, 0
    %p206 = por %p204, %p205
    %s207 = ssub.s32 %s16, %s23
    %p208 = scmp.eq.s32.totalorder %s207, 0
    %s210 = sadd.s32 %s209, 1
    %s211 = scalar_select %p208, %s209, %s210
    %p214 = pneg %p208
    %p215 = scmp.eq.s32.totalorder %s16, 1
    %p216 = por %p214, %p215
    %p217 = scmp.ne.s32.totalorder %s209, %s212
    %p218 = scmp.eq.s32.totalorder %s16, 0
    %p219 = por %p217, %p218
    %p220 = scmp.ne.s32.totalorder %s209, %s212
    %p221 = scmp.eq.s32.totalorder %s21, 1
    %p222 = por %p220, %p221
    %p223 = scmp.ne.s32.totalorder %s212, %s213
    %p224 = scmp.eq.s32.totalorder %s21, 0
    %p225 = por %p223, %p224
    %p226 = scmp.ne.s32.totalorder %s212, %s213
    %p227 = scmp.eq.s32.totalorder %s22, 1
    %p228 = por %p226, %p227
    %p230 = scmp.ne.s32.totalorder %s213, %s229
    %p231 = scmp.eq.s32.totalorder %s22, 0
    %p232 = por %p230, %p231
    %s233 = ssub.s32 %s16, %s23
    %p234 = scmp.eq.s32.totalorder %s233, 0
    %s236 = sadd.s32 %s235, 1
    %s237 = scalar_select %p234, %s235, %s236
    %p240 = pneg %p234
    %p241 = scmp.eq.s32.totalorder %s16, 1
    %p242 = por %p240, %p241
    %p243 = scmp.ne.s32.totalorder %s235, %s238
    %p244 = scmp.eq.s32.totalorder %s16, 0
    %p245 = por %p243, %p244
    %p246 = scmp.ne.s32.totalorder %s235, %s238
    %p247 = scmp.eq.s32.totalorder %s21, 1
    %p248 = por %p246, %p247
    %p249 = scmp.ne.s32.totalorder %s238, %s239
    %p250 = scmp.eq.s32.totalorder %s21, 0
    %p251 = por %p249, %p250
    %p252 = scmp.ne.s32.totalorder %s238, %s239
    %p253 = scmp.eq.s32.totalorder %s22, 1
    %p254 = por %p252, %p253
    %p256 = scmp.ne.s32.totalorder %s239, %s255
    %p257 = scmp.eq.s32.totalorder %s22, 0
    %p258 = por %p256, %p257
    %p259 = scmp.le.s32.totalorder 1, %s16
    %p260 = scmp.lt.s32.totalorder %s16, 3
    %p261 = pnand %p259, %p260
    %p262 = pneg %p261
    // Predicated region
    $region9: #{fcn_forward.13} parent=5 // pred_check
      _
    $region10: #{fcn_forward.13} parent=5 // pred_check_branch
      %264 = sbr.rel (%p261) target = $region12
    $region11: #{fcn_forward.13} parent=5 // pred_region
      %s265 = ssub.s32 %s16, 1
      // Predicated region
      $region13: #{fcn_forward.13} parent=11 // pred_check
        %p266 = pneg %p63
      $region14: #{fcn_forward.13} parent=11 // pred_check_branch
        %268 = sbr.rel (%p266) target = $region16
      $region15: #{fcn_forward.13} parent=11 // pred_region
        _
      $region16: #{fcn_forward.13} parent=11 // pred_fallthru
        _
      // Predicated region
      $region17: #{fcn_forward.13} parent=11 // pred_check
        %p269 = pneg %p84
      $region18: #{fcn_forward.13} parent=11 // pred_check_branch
        %271 = sbr.rel (%p269) target = $region20
      $region19: #{fcn_forward.13} parent=11 // pred_region
        _
      $region20: #{fcn_forward.13} parent=11 // pred_fallthru
        _
      // Predicated region
      $region21: #{fcn_forward.13} parent=11 // pred_check
        %p272 = pneg %p105
      $region22: #{fcn_forward.13} parent=11 // pred_check_branch
        %274 = sbr.rel (%p272) target = $region24
      $region23: #{fcn_forward.13} parent=11 // pred_region
        _
      $region24: #{fcn_forward.13} parent=11 // pred_fallthru
        _
      // Predicated region
      $region25: #{fcn_forward.13} parent=11 // pred_check
        %p275 = pneg %p126
      $region26: #{fcn_forward.13} parent=11 // pred_check_branch
        %277 = sbr.rel (%p275) target = $region28
      $region27: #{fcn_forward.13} parent=11 // pred_region
        _
      $region28: #{fcn_forward.13} parent=11 // pred_fallthru
        _
      // Predicated region
      $region29: #{fcn_forward.13} parent=11 // pred_check
        %p278 = pneg %p147
      $region30: #{fcn_forward.13} parent=11 // pred_check_branch
        %280 = sbr.rel (%p278) target = $region32
      $region31: #{fcn_forward.13} parent=11 // pred_region
        _
      $region32: #{fcn_forward.13} parent=11 // pred_fallthru
        _
    $region12: #{fcn_forward.13} parent=5 // pred_fallthru
      _
    %p281 = scmp.lt.s32.totalorder %s16, 2
    // Predicated region
    $region33: #{fcn_forward.13} parent=5 // pred_check
      %p282 = pneg %p281
    $region34: #{fcn_forward.13} parent=5 // pred_check_branch
      %284 = sbr.rel (%p282) target = $region36
    $region35: #{fcn_forward.13} parent=5 // pred_region
      // Predicated region
      $region37: #{fcn_forward.13} parent=35 // pred_check
        %p285 = pneg %p36
      $region38: #{fcn_forward.13} parent=35 // pred_check_branch
        %287 = sbr.rel (%p285) target = $region40
      $region39: #{fcn_forward.13} parent=35 // pred_region
        %p288 = scmp.lt.s32.totalorder %s16, 1
        %s289 = scalar_select %p288, %s16, 1
        %s290 = smul.addr %s289, 4
        %s291 = smul.addr %s290, 4
        %s292 = scalar_lea.vmem %s0, %s291
      $region40: #{fcn_forward.13} parent=35 // pred_fallthru
        _
    $region36: #{fcn_forward.13} parent=5 // pred_fallthru
      _
    %p293 = scmp.le.s32.totalorder 1, %s16
    %p294 = scmp.lt.s32.totalorder %s16, 3
    %p295 = pnand %p293, %p294
    %p296 = pneg %p295
    // Predicated region
    $region41: #{fcn_forward.13} parent=5 // pred_check
      _
    $region42: #{fcn_forward.13} parent=5 // pred_check_branch
      %298 = sbr.rel (%p295) target = $region44
    $region43: #{fcn_forward.13} parent=5 // pred_region
      %s299 = ssub.s32 %s16, 1
      %p300 = scmp.lt.s32.totalorder %s21, 1
      %s301 = scalar_select %p300, %s21, 1
      %s302 = smul.addr %s301, 4
      %s303 = smul.addr %s302, 4
      %s304 = scalar_lea.vmem %s0, %s303
      %p305 = pneg %p42
      %p306 = pneg %p39
      %p307 = pneg %p63
      %p308 = pneg %p60
      %p309 = pneg %p84
      %p310 = pneg %p81
      %p311 = pneg %p105
      %p312 = pneg %p102
      %p313 = pneg %p126
      %p314 = pneg %p123
      %p315 = pneg %p147
      %p316 = pneg %p144
      %p317 = pneg %p173
      %p318 = pneg %p170
      %p319 = scmp.lt.s32.totalorder %s21, 1
      %s320 = scalar_select %p319, %s21, 1
      %s321 = smul.addr %s320, 3
      %s322 = smul.addr %s321, 4
      %s323 = scalar_lea.vmem %s6, %s322
      %p324 = pneg %p199
      %p325 = pneg %p196
      %p326 = scmp.lt.s32.totalorder %s21, 1
      %s327 = scalar_select %p326, %s21, 1
      %s328 = smul.addr %s327, 3
      %s329 = smul.addr %s328, 4
      %s330 = scalar_lea.vmem %s7, %s329
      %p331 = pneg %p225
      %p332 = pneg %p222
      %p333 = scmp.lt.s32.totalorder %s21, 1
      %s334 = scalar_select %p333, %s21, 1
      %s335 = smul.addr %s334, 3
      %s336 = smul.addr %s335, 4
      %s337 = scalar_lea.vmem %s8, %s336
      %p338 = pneg %p251
      %p339 = pneg %p248
      %p340 = scmp.lt.s32.totalorder %s21, 1
      %s341 = scalar_select %p340, %s21, 1
      %s342 = smul.addr %s341, 3
      %s343 = smul.addr %s342, 4
      %s344 = scalar_lea.vmem %s9, %s343
      %p345 = scmp.lt.s32.totalorder %s21, 1
      %s346 = scalar_select %p345, %s21, 1
      %s347 = smul.addr %s346, 4
      %s348 = smul.addr %s347, 4
      %s349 = scalar_lea.vmem %s0, %s348
      %p350 = scmp.lt.s32.totalorder %s21, 1
      %s351 = scalar_select %p350, %s21, 1
      %s352 = smul.addr %s351, 3
      %s353 = smul.addr %s352, 4
      %s354 = scalar_lea.vmem %s6, %s353
      %p355 = scmp.lt.s32.totalorder %s21, 1
      %s356 = scalar_select %p355, %s21, 1
      %s357 = smul.addr %s356, 3
      %s358 = smul.addr %s357, 4
      %s359 = scalar_lea.vmem %s7, %s358
      %p360 = scmp.lt.s32.totalorder %s21, 1
      %s361 = scalar_select %p360, %s21, 1
      %s362 = smul.addr %s361, 3
      %s363 = smul.addr %s362, 4
      %s364 = scalar_lea.vmem %s8, %s363
      %p365 = scmp.lt.s32.totalorder %s21, 1
      %s366 = scalar_select %p365, %s21, 1
      %s367 = smul.addr %s366, 3
      %s368 = smul.addr %s367, 4
      %s369 = scalar_lea.vmem %s9, %s368
      %v371 = vld [vmem:[%s349] sm:$0xf]
      %v372 = vld [vmem:[%s349 + $0x4] sm:$0xf]
      %v373 = vld [vmem:[%s349 + $0x8] sm:$0x3]
      %v374 = vld [vmem:[%s1] sm:$0xf]
      %v375 = vld [vmem:[%s1 + $0x4] sm:$0xf]
      %v376 = vld [vmem:[%s1 + $0x8] sm:$0xf]
      %v377 = vld [vmem:[%s1 + $0xc] sm:$0xf]
      %v378 = vld [vmem:[%s1 + $0x10] sm:$0xf]
      %v379 = vld [vmem:[%s1 + $0x14] sm:$0xf]
      %v380 = vld [vmem:[%s1 + $0x18] sm:$0xf]
      %v381 = vld [vmem:[%s1 + $0x1c] sm:$0xf]
      %v382 = vld [vmem:[%s1 + $0x20] sm:$0xf]
      %v383 = vld [vmem:[%s1 + $0x24] sm:$0xf]
      %v384 = vld [vmem:[%s5] sm:$0x1]
      %v386 = vperm.slane %v384, 0
      %v391 = vunpack.c.l.b16 %v371
      %v392 = vunpack.c.l.b16 %v372
      %v393 = vunpack.c.l.b16 %v373
      %v394 = vpack.c.b16 %v392, %v391
      %v395 = vpack.c.b16 %v393, %v393
      %v406 = vunpack.c.l.b16 %v374
      %v407 = vunpack.c.l.b16 %v375
      %v408 = vunpack.c.l.b16 %v376
      %v409 = vunpack.c.l.b16 %v377
      %v410 = vunpack.c.l.b16 %v378
      %v411 = vunpack.c.l.b16 %v379
      %v412 = vunpack.c.l.b16 %v380
      %v413 = vunpack.c.l.b16 %v381
      %v414 = vunpack.c.l.b16 %v382
      %v415 = vunpack.c.l.b16 %v383
      %v416 = vpack.c.b16 %v407, %v406
      %v417 = vpack.c.b16 %v409, %v408
      %v418 = vpack.c.b16 %v411, %v410
      %v419 = vpack.c.b16 %v413, %v412
      %v420 = vpack.c.b16 %v415, %v414
      %vm426 = vcmask 654336
      %v428 = vsel %vm426, %v394, 0
      %v431 = vsel %vm426, %v395, 0
      %433 = vmatpush.bf16.msra.mxu0 0
      %434 = vmatpush.bf16.msra.mxu0 0
      %435 = vmatpush.bf16.msra.mxu0 0
      %436 = vmatpush.bf16.msra.mxu0 %v420
      %437 = vmatpush.bf16.msra.mxu0 %v419
      %438 = vmatpush.bf16.msra.mxu0 %v418
      %439 = vmatpush.bf16.msra.mxu0 %v417
      %440 = vmatpush.bf16.msra.mxu0 %v416
      %441 = vmatmul.bf16.gmra.mxu0 %v428
      %v442 = vpop.f32.mrf.mxu0
      %v443 = vadd.f32 %v386, %v442
      %v444 = vpop.f32.mrf.mxu0
      %v445 = vadd.f32 %v386, %v444
      %446 = vmatmul.bf16.gmra.mxu0 %v431
      %v447 = vpop.f32.mrf.mxu0
      %v448 = vadd.f32 %v386, %v447
      %v449 = vpop.f32.mrf.mxu0
      %450 = vdwg.mxu0
      %v451 = vpack.c.bf16 %v443, %v443
      %v452 = vpack.c.bf16 %v445, %v445
      %v453 = vpack.c.bf16 %v448, %v448
      %vm454 = vcmask 322560
      %455 = vst.msk [vmem:[%s354] sm:$0xf] %vm454, %v451
      %456 = vst.msk [vmem:[%s354 + $0x4] sm:$0xf] %vm454, %v452
      %vm457 = vcmask 320512
      %458 = vst.msk [vmem:[%s354 + $0x8] sm:$0x3] %vm457, %v453
      %v459 = vld [vmem:[%s349] sm:$0xf]
      %v460 = vld [vmem:[%s349 + $0x4] sm:$0xf]
      %v461 = vld [vmem:[%s349 + $0x8] sm:$0x3]
      %v462 = vld [vmem:[%s349 + $0x8] sm:$0x7]
      %v466 = vunpack.c.l.b16 %v459
      %v467 = vunpack.c.l.b16 %v460
      %v468 = vunpack.c.l.b16 %v461
      %v469 = vpack.c.b16 %v467, %v466
      %v470 = vpack.c.b16 %v468, %v468
      %v472 = vunpack.c.l.b16 %v462
      %v473 = vpack.c.b16 %v472, %v472
      %vm474 = vsmask.f32 7424
      %v476 = vshrl.u32 %v469, 16
      %v478 = vshll.u32 %v469, 16
      %v480 = vrot.slane %v478, 1
      %v481 = vor.u32 %v476, %v480
      %v483 = vshll.u32 %v473, 16
      %v485 = vrot.slane %v483, 1
      %v486 = vsel %vm474, %v481, %v485
      %v487 = vshrl.u32 %v473, 16
      %v489 = vor.u32 %v487, %v485
      %490 = vrot.lane.b32.xlu0 %v486, 80
      %v491 = vpop.permute.xlu0 %490
      %492 = vrot.lane.b32.xlu0 %v489, 80
      %v493 = vpop.permute.xlu0 %492
      %v495 = vsel %vm426, %v469, %v491
      %v499 = vsel %vm426, %v470, %v493
      %v501 = vld [vmem:[%s2] sm:$0xf]
      %v502 = vld [vmem:[%s2 + $0x4] sm:$0xf]
      %v503 = vld [vmem:[%s2 + $0x8] sm:$0xf]
      %v504 = vld [vmem:[%s2 + $0xc] sm:$0xf]
      %v505 = vld [vmem:[%s2 + $0x10] sm:$0xf]
      %v506 = vld [vmem:[%s2 + $0x14] sm:$0xf]
      %v507 = vld [vmem:[%s2 + $0x18] sm:$0xf]
      %v508 = vld [vmem:[%s2 + $0x1c] sm:$0xf]
      %v509 = vld [vmem:[%s2 + $0x20] sm:$0xf]
      %v510 = vld [vmem:[%s2 + $0x24] sm:$0xf]
      %v511 = vld [vmem:[%s2 + $0x28] sm:$0xf]
      %v512 = vld [vmem:[%s2 + $0x2c] sm:$0xf]
      %v513 = vld [vmem:[%s2 + $0x30] sm:$0xf]
      %v514 = vld [vmem:[%s2 + $0x34] sm:$0xf]
      %v515 = vld [vmem:[%s2 + $0x38] sm:$0xf]
      %v516 = vld [vmem:[%s2 + $0x3c] sm:$0xf]
      %v517 = vld [vmem:[%s2 + $0x40] sm:$0xf]
      %v518 = vld [vmem:[%s2 + $0x44] sm:$0xf]
      %v519 = vld [vmem:[%s2 + $0x48] sm:$0xf]
      %v520 = vld [vmem:[%s2 + $0x4c] sm:$0xf]
      %v521 = vld [vmem:[%s5] sm:$0x1]
      %v523 = vperm.slane %v521, 0
      %v545 = vunpack.c.l.b16 %v501
      %v546 = vunpack.c.l.b16 %v502
      %v547 = vunpack.c.l.b16 %v503
      %v548 = vunpack.c.l.b16 %v504
      %v549 = vunpack.c.l.b16 %v505
      %v550 = vunpack.c.l.b16 %v506
      %v551 = vunpack.c.l.b16 %v507
      %v552 = vunpack.c.l.b16 %v508
      %v553 = vunpack.c.l.b16 %v509
      %v554 = vunpack.c.l.b16 %v510
      %v555 = vunpack.c.l.b16 %v511
      %v556 = vunpack.c.l.b16 %v512
      %v557 = vunpack.c.l.b16 %v513
      %v558 = vunpack.c.l.b16 %v514
      %v559 = vunpack.c.l.b16 %v515
      %v560 = vunpack.c.l.b16 %v516
      %v561 = vunpack.c.l.b16 %v517
      %v562 = vunpack.c.l.b16 %v518
      %v563 = vunpack.c.l.b16 %v519
      %v564 = vunpack.c.l.b16 %v520
      %v565 = vpack.c.b16 %v546, %v545
      %v566 = vpack.c.b16 %v548, %v547
      %v567 = vpack.c.b16 %v550, %v549
      %v568 = vpack.c.b16 %v552, %v551
      %v569 = vpack.c.b16 %v554, %v553
      %v570 = vpack.c.b16 %v556, %v555
      %v571 = vpack.c.b16 %v558, %v557
      %v572 = vpack.c.b16 %v560, %v559
      %v573 = vpack.c.b16 %v562, %v561
      %v574 = vpack.c.b16 %v564, %v563
      %vm585 = vcmask 261120
      %v586 = vsel %vm585, %v491, 0
      %v588 = vsel %vm585, %v493, 0
      %590 = vmatpush.bf16.msra.mxu0 %v572
      %591 = vmatpush.bf16.msra.mxu0 %v571
      %592 = vmatpush.bf16.msra.mxu0 %v570
      %593 = vmatpush.bf16.msra.mxu0 %v569
      %594 = vmatpush.bf16.msra.mxu0 %v568
      %595 = vmatpush.bf16.msra.mxu0 %v567
      %596 = vmatpush.bf16.msra.mxu0 %v566
      %597 = vmatpush.bf16.msra.mxu0 %v565
      %598 = vmatmul.bf16.gmra.mxu0 %v495
      %v599 = vpop.f32.mrf.mxu0
      %v600 = vadd.f32 %v523, %v599
      %v601 = vpop.f32.mrf.mxu0
      %v602 = vadd.f32 %v523, %v601
      %603 = vmatmul.bf16.gmra.mxu0 %v499
      %v604 = vpop.f32.mrf.mxu0
      %v605 = vadd.f32 %v523, %v604
      %v606 = vpop.f32.mrf.mxu0
      %607 = vdwg.mxu0
      %608 = vmatpush.bf16.msra.mxu0 0
      %609 = vmatpush.bf16.msra.mxu0 0
      %610 = vmatpush.bf16.msra.mxu0 0
      %611 = vmatpush.bf16.msra.mxu0 0
      %612 = vmatpush.bf16.msra.mxu0 0
      %613 = vmatpush.bf16.msra.mxu0 0
      %614 = vmatpush.bf16.msra.mxu0 %v574
      %615 = vmatpush.bf16.msra.mxu0 %v573
      %616 = vmatmul.bf16.gmra.mxu0 %v586
      %v617 = vpop.f32.mrf.mxu0
      %v618 = vadd.f32 %v600, %v617
      %v619 = vpop.f32.mrf.mxu0
      %v620 = vadd.f32 %v602, %v619
      %621 = vmatmul.bf16.gmra.mxu0 %v588
      %v622 = vpop.f32.mrf.mxu0
      %v623 = vadd.f32 %v605, %v622
      %v624 = vpop.f32.mrf.mxu0
      %625 = vdwg.mxu0
      %v626 = vpack.c.bf16 %v618, %v618
      %v627 = vpack.c.bf16 %v620, %v620
      %v628 = vpack.c.bf16 %v623, %v623
      %629 = vst.msk [vmem:[%s359] sm:$0xf] %vm454, %v626
      %630 = vst.msk [vmem:[%s359 + $0x4] sm:$0xf] %vm454, %v627
      %631 = vst.msk [vmem:[%s359 + $0x8] sm:$0x3] %vm457, %v628
      %v632 = vld [vmem:[%s349] sm:$0xf]
      %v633 = vld [vmem:[%s349 + $0x4] sm:$0xf]
      %v634 = vld [vmem:[%s349 + $0x8] sm:$0x3]
      %v635 = vld [vmem:[%s349] sm:$0xc]
      %v636 = vld [vmem:[%s349 + $0x8] sm:$0xf]
      %v637 = vld [vmem:[%s349 + $0xc] sm:$0x1]
      %v641 = vunpack.c.l.b16 %v632
      %v642 = vunpack.c.l.b16 %v633
      %v643 = vunpack.c.l.b16 %v634
      %v644 = vpack.c.b16 %v642, %v641
      %v645 = vpack.c.b16 %v643, %v643
      %v649 = vunpack.c.l.b16 %v635
      %v650 = vunpack.c.l.b16 %v636
      %v651 = vunpack.c.l.b16 %v637
      %v652 = vpack.c.b16 %v642, %v649
      %v653 = vpack.c.b16 %v651, %v650
      %vm654 = vsmask.f32 5376
      %v656 = vshrl.u32 %v652, 16
      %v658 = vrot.slane %v656, 2
      %v659 = vshll.u32 %v652, 16
      %v661 = vrot.slane %v659, 3
      %v662 = vor.u32 %v658, %v661
      %v664 = vshrl.u32 %v653, 16
      %v666 = vrot.slane %v664, 2
      %v667 = vshll.u32 %v653, 16
      %v669 = vrot.slane %v667, 3
      %v670 = vor.u32 %v666, %v669
      %v671 = vsel %vm654, %v662, %v670
      %672 = vrot.lane.b32.xlu0 %v671, 80
      %v673 = vpop.permute.xlu0 %672
      %674 = vrot.lane.b32.xlu0 %v670, 80
      %v675 = vpop.permute.xlu0 %674
      %v678 = vsel %vm426, %v644, %v673
      %v682 = vsel %vm426, %v645, %v675
      %v684 = vld [vmem:[%s3] sm:$0xf]
      %v685 = vld [vmem:[%s3 + $0x4] sm:$0xf]
      %v686 = vld [vmem:[%s3 + $0x8] sm:$0xf]
      %v687 = vld [vmem:[%s3 + $0xc] sm:$0xf]
      %v688 = vld [vmem:[%s3 + $0x10] sm:$0xf]
      %v689 = vld [vmem:[%s3 + $0x14] sm:$0xf]
      %v690 = vld [vmem:[%s3 + $0x18] sm:$0xf]
      %v691 = vld [vmem:[%s3 + $0x1c] sm:$0xf]
      %v692 = vld [vmem:[%s3 + $0x20] sm:$0xf]
      %v693 = vld [vmem:[%s3 + $0x24] sm:$0xf]
      %v694 = vld [vmem:[%s3 + $0x28] sm:$0xf]
      %v695 = vld [vmem:[%s3 + $0x2c] sm:$0xf]
      %v696 = vld [vmem:[%s3 + $0x30] sm:$0xf]
      %v697 = vld [vmem:[%s3 + $0x34] sm:$0xf]
      %v698 = vld [vmem:[%s3 + $0x38] sm:$0xf]
      %v699 = vld [vmem:[%s3 + $0x3c] sm:$0xf]
      %v700 = vld [vmem:[%s3 + $0x40] sm:$0xf]
      %v701 = vld [vmem:[%s3 + $0x44] sm:$0xf]
      %v702 = vld [vmem:[%s3 + $0x48] sm:$0xf]
      %v703 = vld [vmem:[%s3 + $0x4c] sm:$0xf]
      %v704 = vld [vmem:[%s5] sm:$0x1]
      %v706 = vperm.slane %v704, 0
      %v728 = vunpack.c.l.b16 %v684
      %v729 = vunpack.c.l.b16 %v685
      %v730 = vunpack.c.l.b16 %v686
      %v731 = vunpack.c.l.b16 %v687
      %v732 = vunpack.c.l.b16 %v688
      %v733 = vunpack.c.l.b16 %v689
      %v734 = vunpack.c.l.b16 %v690
      %v735 = vunpack.c.l.b16 %v691
      %v736 = vunpack.c.l.b16 %v692
      %v737 = vunpack.c.l.b16 %v693
      %v738 = vunpack.c.l.b16 %v694
      %v739 = vunpack.c.l.b16 %v695
      %v740 = vunpack.c.l.b16 %v696
      %v741 = vunpack.c.l.b16 %v697
      %v742 = vunpack.c.l.b16 %v698
      %v743 = vunpack.c.l.b16 %v699
      %v744 = vunpack.c.l.b16 %v700
      %v745 = vunpack.c.l.b16 %v701
      %v746 = vunpack.c.l.b16 %v702
      %v747 = vunpack.c.l.b16 %v703
      %v748 = vpack.c.b16 %v729, %v728
      %v749 = vpack.c.b16 %v731, %v730
      %v750 = vpack.c.b16 %v733, %v732
      %v751 = vpack.c.b16 %v735, %v734
      %v752 = vpack.c.b16 %v737, %v736
      %v753 = vpack.c.b16 %v739, %v738
      %v754 = vpack.c.b16 %v741, %v740
      %v755 = vpack.c.b16 %v743, %v742
      %v756 = vpack.c.b16 %v745, %v744
      %v757 = vpack.c.b16 %v747, %v746
      %v768 = vsel %vm585, %v673, 0
      %v770 = vsel %vm585, %v675, 0
      %772 = vmatpush.bf16.msra.mxu0 %v755
      %773 = vmatpush.bf16.msra.mxu0 %v754
      %774 = vmatpush.bf16.msra.mxu0 %v753
      %775 = vmatpush.bf16.msra.mxu0 %v752
      %776 = vmatpush.bf16.msra.mxu0 %v751
      %777 = vmatpush.bf16.msra.mxu0 %v750
      %778 = vmatpush.bf16.msra.mxu0 %v749
      %779 = vmatpush.bf16.msra.mxu0 %v748
      %780 = vmatmul.bf16.gmra.mxu0 %v678
      %v781 = vpop.f32.mrf.mxu0
      %v782 = vadd.f32 %v706, %v781
      %v783 = vpop.f32.mrf.mxu0
      %v784 = vadd.f32 %v706, %v783
      %785 = vmatmul.bf16.gmra.mxu0 %v682
      %v786 = vpop.f32.mrf.mxu0
      %v787 = vadd.f32 %v706, %v786
      %v788 = vpop.f32.mrf.mxu0
      %789 = vdwg.mxu0
      %790 = vmatpush.bf16.msra.mxu0 0
      %791 = vmatpush.bf16.msra.mxu0 0
      %792 = vmatpush.bf16.msra.mxu0 0
      %793 = vmatpush.bf16.msra.mxu0 0
      %794 = vmatpush.bf16.msra.mxu0 0
      %795 = vmatpush.bf16.msra.mxu0 0
      %796 = vmatpush.bf16.msra.mxu0 %v757
      %797 = vmatpush.bf16.msra.mxu0 %v756
      %798 = vmatmul.bf16.gmra.mxu0 %v768
      %v799 = vpop.f32.mrf.mxu0
      %v800 = vadd.f32 %v782, %v799
      %v801 = vpop.f32.mrf.mxu0
      %v802 = vadd.f32 %v784, %v801
      %803 = vmatmul.bf16.gmra.mxu0 %v770
      %v804 = vpop.f32.mrf.mxu0
      %v805 = vadd.f32 %v787, %v804
      %v806 = vpop.f32.mrf.mxu0
      %807 = vdwg.mxu0
      %v808 = vpack.c.bf16 %v800, %v800
      %v809 = vpack.c.bf16 %v802, %v802
      %v810 = vpack.c.bf16 %v805, %v805
      %811 = vst.msk [vmem:[%s364] sm:$0xf] %vm454, %v808
      %812 = vst.msk [vmem:[%s364 + $0x4] sm:$0xf] %vm454, %v809
      %813 = vst.msk [vmem:[%s364 + $0x8] sm:$0x3] %vm457, %v810
      %v814 = vld [vmem:[%s349] sm:$0xf]
      %v815 = vld [vmem:[%s349 + $0x4] sm:$0xf]
      %v816 = vld [vmem:[%s349 + $0x8] sm:$0x3]
      %v817 = vld [vmem:[%s349 + $0x8] sm:$0x7]
      %v818 = vld [vmem:[%s349] sm:$0xc]
      %v819 = vld [vmem:[%s349 + $0x8] sm:$0xf]
      %v820 = vld [vmem:[%s349 + $0xc] sm:$0x1]
      %v821 = vld [vmem:[%s349] sm:$0x8]
      %v825 = vunpack.c.l.b16 %v814
      %v826 = vunpack.c.l.b16 %v815
      %v827 = vunpack.c.l.b16 %v816
      %v828 = vpack.c.b16 %v826, %v825
      %v829 = vpack.c.b16 %v827, %v827
      %v831 = vunpack.c.l.b16 %v817
      %v832 = vpack.c.b16 %v831, %v831
      %v834 = vshrl.u32 %v828, 16
      %v836 = vshll.u32 %v828, 16
      %v838 = vrot.slane %v836, 1
      %v839 = vor.u32 %v834, %v838
      %v841 = vshll.u32 %v832, 16
      %v843 = vrot.slane %v841, 1
      %v844 = vsel %vm474, %v839, %v843
      %v845 = vshrl.u32 %v832, 16
      %v847 = vor.u32 %v845, %v843
      %848 = vrot.lane.b32.xlu0 %v844, 80
      %v849 = vpop.permute.xlu0 %848
      %850 = vrot.lane.b32.xlu0 %v847, 80
      %v851 = vpop.permute.xlu0 %850
      %v855 = vunpack.c.l.b16 %v818
      %v856 = vunpack.c.l.b16 %v819
      %v857 = vunpack.c.l.b16 %v820
      %v858 = vpack.c.b16 %v826, %v855
      %v859 = vpack.c.b16 %v857, %v856
      %v861 = vshrl.u32 %v858, 16
      %v863 = vrot.slane %v861, 2
      %v864 = vshll.u32 %v858, 16
      %v866 = vrot.slane %v864, 3
      %v867 = vor.u32 %v863, %v866
      %v869 = vshrl.u32 %v859, 16
      %v871 = vrot.slane %v869, 2
      %v872 = vshll.u32 %v859, 16
      %v874 = vrot.slane %v872, 3
      %v875 = vor.u32 %v871, %v874
      %v876 = vsel %vm654, %v867, %v875
      %877 = vrot.lane.b32.xlu0 %v876, 32
      %v878 = vpop.permute.xlu0 %877
      %879 = vrot.lane.b32.xlu0 %v875, 32
      %v880 = vpop.permute.xlu0 %879
      %v882 = vunpack.c.l.b16 %v821
      %v883 = vpack.c.b16 %v826, %v882
      %vm884 = vcmask 1044480
      %v885 = vrot.slane %v883, 3
      %v886 = vrot.slane %v859, 3
      %v887 = vsel %vm884, %v885, %v886
      %888 = vrot.lane.b32.xlu0 %v887, 112
      %v889 = vpop.permute.xlu0 %888
      %890 = vrot.lane.b32.xlu0 %v886, 112
      %v891 = vpop.permute.xlu0 %890
      %v893 = vsel %vm426, %v828, %v849
      %v897 = vsel %vm426, %v829, %v851
      %v900 = vsel %vm585, %v849, %v878
      %v902 = vsel %vm585, %v851, %v880
      %vm903 = vcmask 916480
      %v905 = vsel %vm903, %v900, %v889
      %v908 = vsel %vm903, %v902, %v891
      %v910 = vld [vmem:[%s4] sm:$0xf]
      %v911 = vld [vmem:[%s4 + $0x4] sm:$0xf]
      %v912 = vld [vmem:[%s4 + $0x8] sm:$0xf]
      %v913 = vld [vmem:[%s4 + $0xc] sm:$0xf]
      %v914 = vld [vmem:[%s4 + $0x10] sm:$0xf]
      %v915 = vld [vmem:[%s4 + $0x14] sm:$0xf]
      %v916 = vld [vmem:[%s4 + $0x18] sm:$0xf]
      %v917 = vld [vmem:[%s4 + $0x1c] sm:$0xf]
      %v918 = vld [vmem:[%s4 + $0x20] sm:$0xf]
      %v919 = vld [vmem:[%s4 + $0x24] sm:$0xf]
      %v920 = vld [vmem:[%s4 + $0x28] sm:$0xf]
      %v921 = vld [vmem:[%s4 + $0x2c] sm:$0xf]
      %v922 = vld [vmem:[%s4 + $0x30] sm:$0xf]
      %v923 = vld [vmem:[%s4 + $0x34] sm:$0xf]
      %v924 = vld [vmem:[%s4 + $0x38] sm:$0xf]
      %v925 = vld [vmem:[%s4 + $0x3c] sm:$0xf]
      %v926 = vld [vmem:[%s4 + $0x40] sm:$0xf]
      %v927 = vld [vmem:[%s4 + $0x44] sm:$0xf]
      %v928 = vld [vmem:[%s4 + $0x48] sm:$0xf]
      %v929 = vld [vmem:[%s4 + $0x4c] sm:$0xf]
      %v930 = vld [vmem:[%s4 + $0x50] sm:$0xf]
      %v931 = vld [vmem:[%s4 + $0x54] sm:$0xf]
      %v932 = vld [vmem:[%s4 + $0x58] sm:$0xf]
      %v933 = vld [vmem:[%s4 + $0x5c] sm:$0xf]
      %v934 = vld [vmem:[%s4 + $0x60] sm:$0xf]
      %v935 = vld [vmem:[%s4 + $0x64] sm:$0xf]
      %v936 = vld [vmem:[%s4 + $0x68] sm:$0xf]
      %v937 = vld [vmem:[%s4 + $0x6c] sm:$0xf]
      %v938 = vld [vmem:[%s4 + $0x70] sm:$0xf]
      %v939 = vld [vmem:[%s4 + $0x74] sm:$0xf]
      %v940 = vld [vmem:[%s4 + $0x78] sm:$0xf]
      %v941 = vld [vmem:[%s4 + $0x7c] sm:$0xf]
      %v942 = vld [vmem:[%s4 + $0x80] sm:$0xf]
      %v943 = vld [vmem:[%s4 + $0x84] sm:$0xf]
      %v944 = vld [vmem:[%s4 + $0x88] sm:$0xf]
      %v945 = vld [vmem:[%s4 + $0x8c] sm:$0xf]
      %v946 = vld [vmem:[%s4 + $0x90] sm:$0xf]
      %v947 = vld [vmem:[%s4 + $0x94] sm:$0xf]
      %v948 = vld [vmem:[%s4 + $0x98] sm:$0xf]
      %v949 = vld [vmem:[%s4 + $0x9c] sm:$0xf]
      %v950 = vld [vmem:[%s5] sm:$0x1]
      %v952 = vperm.slane %v950, 0
      %v994 = vunpack.c.l.b16 %v910
      %v995 = vunpack.c.l.b16 %v911
      %v996 = vunpack.c.l.b16 %v912
      %v997 = vunpack.c.l.b16 %v913
      %v998 = vunpack.c.l.b16 %v914
      %v999 = vunpack.c.l.b16 %v915
      %v1000 = vunpack.c.l.b16 %v916
      %v1001 = vunpack.c.l.b16 %v917
      %v1002 = vunpack.c.l.b16 %v918
      %v1003 = vunpack.c.l.b16 %v919
      %v1004 = vunpack.c.l.b16 %v920
      %v1005 = vunpack.c.l.b16 %v921
      %v1006 = vunpack.c.l.b16 %v922
      %v1007 = vunpack.c.l.b16 %v923
      %v1008 = vunpack.c.l.b16 %v924
      %v1009 = vunpack.c.l.b16 %v925
      %v1010 = vunpack.c.l.b16 %v926
      %v1011 = vunpack.c.l.b16 %v927
      %v1012 = vunpack.c.l.b16 %v928
      %v1013 = vunpack.c.l.b16 %v929
      %v1014 = vunpack.c.l.b16 %v930
      %v1015 = vunpack.c.l.b16 %v931
      %v1016 = vunpack.c.l.b16 %v932
      %v1017 = vunpack.c.l.b16 %v933
      %v1018 = vunpack.c.l.b16 %v934
      %v1019 = vunpack.c.l.b16 %v935
      %v1020 = vunpack.c.l.b16 %v936
      %v1021 = vunpack.c.l.b16 %v937
      %v1022 = vunpack.c.l.b16 %v938
      %v1023 = vunpack.c.l.b16 %v939
      %v1024 = vunpack.c.l.b16 %v940
      %v1025 = vunpack.c.l.b16 %v941
      %v1026 = vunpack.c.l.b16 %v942
      %v1027 = vunpack.c.l.b16 %v943
      %v1028 = vunpack.c.l.b16 %v944
      %v1029 = vunpack.c.l.b16 %v945
      %v1030 = vunpack.c.l.b16 %v946
      %v1031 = vunpack.c.l.b16 %v947
      %v1032 = vunpack.c.l.b16 %v948
      %v1033 = vunpack.c.l.b16 %v949
      %v1034 = vpack.c.b16 %v995, %v994
      %v1035 = vpack.c.b16 %v997, %v996
      %v1036 = vpack.c.b16 %v999, %v998
      %v1037 = vpack.c.b16 %v1001, %v1000
      %v1038 = vpack.c.b16 %v1003, %v1002
      %v1039 = vpack.c.b16 %v1005, %v1004
      %v1040 = vpack.c.b16 %v1007, %v1006
      %v1041 = vpack.c.b16 %v1009, %v1008
      %v1042 = vpack.c.b16 %v1011, %v1010
      %v1043 = vpack.c.b16 %v1013, %v1012
      %v1044 = vpack.c.b16 %v1015, %v1014
      %v1045 = vpack.c.b16 %v1017, %v1016
      %v1046 = vpack.c.b16 %v1019, %v1018
      %v1047 = vpack.c.b16 %v1021, %v1020
      %v1048 = vpack.c.b16 %v1023, %v1022
      %v1049 = vpack.c.b16 %v1025, %v1024
      %v1050 = vpack.c.b16 %v1027, %v1026
      %v1051 = vpack.c.b16 %v1029, %v1028
      %v1052 = vpack.c.b16 %v1031, %v1030
      %v1053 = vpack.c.b16 %v1033, %v1032
      %vm1074 = vcmask 523264
      %v1075 = vsel %vm1074, %v889, 0
      %v1077 = vsel %vm1074, %v891, 0
      %1079 = vmatpush.bf16.msra.mxu0 %v1041
      %1080 = vmatpush.bf16.msra.mxu0 %v1040
      %1081 = vmatpush.bf16.msra.mxu0 %v1039
      %1082 = vmatpush.bf16.msra.mxu0 %v1038
      %1083 = vmatpush.bf16.msra.mxu0 %v1037
      %1084 = vmatpush.bf16.msra.mxu0 %v1036
      %1085 = vmatpush.bf16.msra.mxu0 %v1035
      %1086 = vmatpush.bf16.msra.mxu0 %v1034
      %1087 = vmatmul.bf16.gmra.mxu0 %v893
      %v1088 = vpop.f32.mrf.mxu0
      %v1089 = vadd.f32 %v952, %v1088
      %v1090 = vpop.f32.mrf.mxu0
      %v1091 = vadd.f32 %v952, %v1090
      %1092 = vmatmul.bf16.gmra.mxu0 %v897
      %v1093 = vpop.f32.mrf.mxu0
      %v1094 = vadd.f32 %v952, %v1093
      %v1095 = vpop.f32.mrf.mxu0
      %1096 = vdwg.mxu0
      %1097 = vmatpush.bf16.msra.mxu0 %v1049
      %1098 = vmatpush.bf16.msra.mxu0 %v1048
      %1099 = vmatpush.bf16.msra.mxu0 %v1047
      %1100 = vmatpush.bf16.msra.mxu0 %v1046
      %1101 = vmatpush.bf16.msra.mxu0 %v1045
      %1102 = vmatpush.bf16.msra.mxu0 %v1044
      %1103 = vmatpush.bf16.msra.mxu0 %v1043
      %1104 = vmatpush.bf16.msra.mxu0 %v1042
      %1105 = vmatmul.bf16.gmra.mxu0 %v905
      %v1106 = vpop.f32.mrf.mxu0
      %v1107 = vadd.f32 %v1089, %v1106
      %v1108 = vpop.f32.mrf.mxu0
      %v1109 = vadd.f32 %v1091, %v1108
      %1110 = vmatmul.bf16.gmra.mxu0 %v908
      %v1111 = vpop.f32.mrf.mxu0
      %v1112 = vadd.f32 %v1094, %v1111
      %v1113 = vpop.f32.mrf.mxu0
      %1114 = vdwg.mxu0
      %1115 = vmatpush.bf16.msra.mxu0 0
      %1116 = vmatpush.bf16.msra.mxu0 0
      %1117 = vmatpush.bf16.msra.mxu0 0
      %1118 = vmatpush.bf16.msra.mxu0 0
      %1119 = vmatpush.bf16.msra.mxu0 %v1053
      %1120 = vmatpush.bf16.msra.mxu0 %v1052
      %1121 = vmatpush.bf16.msra.mxu0 %v1051
      %1122 = vmatpush.bf16.msra.mxu0 %v1050
      %1123 = vmatmul.bf16.gmra.mxu0 %v1075
      %v1124 = vpop.f32.mrf.mxu0
      %v1125 = vadd.f32 %v1107, %v1124
      %v1126 = vpop.f32.mrf.mxu0
      %v1127 = vadd.f32 %v1109, %v1126
      %1128 = vmatmul.bf16.gmra.mxu0 %v1077
      %v1129 = vpop.f32.mrf.mxu0
      %v1130 = vadd.f32 %v1112, %v1129
      %v1131 = vpop.f32.mrf.mxu0
      %1132 = vdwg.mxu0
      %v1133 = vpack.c.bf16 %v1125, %v1125
      %v1134 = vpack.c.bf16 %v1127, %v1127
      %v1135 = vpack.c.bf16 %v1130, %v1130
      %1136 = vst.msk [vmem:[%s369] sm:$0xf] %vm454, %v1133
      %1137 = vst.msk [vmem:[%s369 + $0x4] sm:$0xf] %vm454, %v1134
      %1138 = vst.msk [vmem:[%s369 + $0x8] sm:$0x3] %vm457, %v1135
      %p1139 = scmp.lt.s32.totalorder %s21, 1
      %s1140 = scalar_select %p1139, %s21, 1
      %s1141 = smul.addr %s1140, 3
      %s1142 = smul.addr %s1141, 4
      %s1143 = scalar_lea.vmem %s6, %s1142
      %p1144 = scmp.lt.s32.totalorder %s21, 1
      %s1145 = scalar_select %p1144, %s21, 1
      %s1146 = smul.addr %s1145, 3
      %s1147 = smul.addr %s1146, 4
      %s1148 = scalar_lea.vmem %s7, %s1147
      %p1149 = scmp.lt.s32.totalorder %s21, 1
      %s1150 = scalar_select %p1149, %s21, 1
      %s1151 = smul.addr %s1150, 3
      %s1152 = smul.addr %s1151, 4
      %s1153 = scalar_lea.vmem %s8, %s1152
      %p1154 = scmp.lt.s32.totalorder %s21, 1
      %s1155 = scalar_select %p1154, %s21, 1
      %s1156 = smul.addr %s1155, 3
      %s1157 = smul.addr %s1156, 4
      %s1158 = scalar_lea.vmem %s9, %s1157
      // Predicated region
      $region45: #{fcn_forward.13} parent=43 // pred_check
        %p1159 = pneg %p170
      $region46: #{fcn_forward.13} parent=43 // pred_check_branch
        %1161 = sbr.rel (%p1159) target = $region48
      $region47: #{fcn_forward.13} parent=43 // pred_region
        _
      $region48: #{fcn_forward.13} parent=43 // pred_fallthru
        _
      // Predicated region
      $region49: #{fcn_forward.13} parent=43 // pred_check
        %p1162 = pneg %p196
      $region50: #{fcn_forward.13} parent=43 // pred_check_branch
        %1164 = sbr.rel (%p1162) target = $region52
      $region51: #{fcn_forward.13} parent=43 // pred_region
        _
      $region52: #{fcn_forward.13} parent=43 // pred_fallthru
        _
      // Predicated region
      $region53: #{fcn_forward.13} parent=43 // pred_check
        %p1165 = pneg %p222
      $region54: #{fcn_forward.13} parent=43 // pred_check_branch
        %1167 = sbr.rel (%p1165) target = $region56
      $region55: #{fcn_forward.13} parent=43 // pred_region
        _
      $region56: #{fcn_forward.13} parent=43 // pred_fallthru
        _
      // Predicated region
      $region57: #{fcn_forward.13} parent=43 // pred_check
        %p1168 = pneg %p248
      $region58: #{fcn_forward.13} parent=43 // pred_check_branch
        %1170 = sbr.rel (%p1168) target = $region60
      $region59: #{fcn_forward.13} parent=43 // pred_region
        _
      $region60: #{fcn_forward.13} parent=43 // pred_fallthru
        _
    $region44: #{fcn_forward.13} parent=5 // pred_fallthru
      _
    %p1171 = scmp.le.s32.totalorder 2, %s16
    // Predicated region
    $region61: #{fcn_forward.13} parent=5 // pred_check
      %p1172 = pneg %p1171
    $region62: #{fcn_forward.13} parent=5 // pred_check_branch
      %1174 = sbr.rel (%p1172) target = $region64
    $region63: #{fcn_forward.13} parent=5 // pred_region
      %s1175 = ssub.s32 %s16, 2
      // Predicated region
      $region65: #{fcn_forward.13} parent=63 // pred_check
        %p1176 = pneg %p176
      $region66: #{fcn_forward.13} parent=63 // pred_check_branch
        %1178 = sbr.rel (%p1176) target = $region68
      $region67: #{fcn_forward.13} parent=63 // pred_region
        %p1179 = scmp.lt.s32.totalorder %s22, 1
        %s1180 = scalar_select %p1179, %s22, 1
        %s1181 = smul.addr %s1180, 3
        %s1182 = smul.addr %s1181, 4
        %s1183 = scalar_lea.vmem %s6, %s1182
      $region68: #{fcn_forward.13} parent=63 // pred_fallthru
        _
      // Predicated region
      $region69: #{fcn_forward.13} parent=63 // pred_check
        %p1184 = pneg %p202
      $region70: #{fcn_forward.13} parent=63 // pred_check_branch
        %1186 = sbr.rel (%p1184) target = $region72
      $region71: #{fcn_forward.13} parent=63 // pred_region
        %p1187 = scmp.lt.s32.totalorder %s22, 1
        %s1188 = scalar_select %p1187, %s22, 1
        %s1189 = smul.addr %s1188, 3
        %s1190 = smul.addr %s1189, 4
        %s1191 = scalar_lea.vmem %s7, %s1190
      $region72: #{fcn_forward.13} parent=63 // pred_fallthru
        _
      // Predicated region
      $region73: #{fcn_forward.13} parent=63 // pred_check
        %p1192 = pneg %p228
      $region74: #{fcn_forward.13} parent=63 // pred_check_branch
        %1194 = sbr.rel (%p1192) target = $region76
      $region75: #{fcn_forward.13} parent=63 // pred_region
        %p1195 = scmp.lt.s32.totalorder %s22, 1
        %s1196 = scalar_select %p1195, %s22, 1
        %s1197 = smul.addr %s1196, 3
        %s1198 = smul.addr %s1197, 4
        %s1199 = scalar_lea.vmem %s8, %s1198
      $region76: #{fcn_forward.13} parent=63 // pred_fallthru
        _
      // Predicated region
      $region77: #{fcn_forward.13} parent=63 // pred_check
        %p1200 = pneg %p254
      $region78: #{fcn_forward.13} parent=63 // pred_check_branch
        %1202 = sbr.rel (%p1200) target = $region80
      $region79: #{fcn_forward.13} parent=63 // pred_region
        %p1203 = scmp.lt.s32.totalorder %s22, 1
        %s1204 = scalar_select %p1203, %s22, 1
        %s1205 = smul.addr %s1204, 3
        %s1206 = smul.addr %s1205, 4
        %s1207 = scalar_lea.vmem %s9, %s1206
      $region80: #{fcn_forward.13} parent=63 // pred_fallthru
        _
    $region64: #{fcn_forward.13} parent=5 // pred_fallthru
      _
  $region6: #{fcn_forward.13} parent=0 // loop_footer
    %s20 = sadd.s32 1, %s16
  $region7: #{fcn_forward.13} parent=0 // loop_footer_branch
    %15 = sbr.rel target = $region3
  $region8: #{fcn_forward.13} parent=0 // loop_exit
    _

// kernel: fcn_forward.14
$region0: #{fcn_forward.14}
  #allocation0 [shape = 'u32[]', space=smem, size = 0x4, offset = 0x4, fixed_abs, tag = 'smem constant byte address 0x4 - core index']
  #allocation1 [shape = 'u32[72,128]{1,0:T(1,128)}', space=vmem, size = 0x9000, scoped, tag = 'internal scratch']
  %s0 = inlined_call_operand.vmem [shape: bf16[2,90,40], index: 0, kind: input, shape index: {}]
  %s1 = inlined_call_operand.vmem [shape: bf16[2,90,40], index: 1, kind: input, shape index: {}]
  %s2 = inlined_call_operand.vmem [shape: bf16[80,40], index: 2, kind: input, shape index: {}]
  %s3 = inlined_call_operand.vmem [shape: bf16[160,40], index: 3, kind: input, shape index: {}]
  %s4 = inlined_call_operand.vmem [shape: bf16[160,40], index: 4, kind: input, shape index: {}]
  %s5 = inlined_call_operand.vmem [shape: bf16[320,40], index: 5, kind: input, shape index: {}]
  %s6 = inlined_call_operand.vmem [shape: f32[1,40], index: 6, kind: input, shape index: {}]
  %s7 = inlined_call_operand.vmem [shape: bf16[2,72,40], index: 7, kind: output, shape index: {0}]
  %s8 = inlined_call_operand.vmem [shape: bf16[2,72,40], index: 8, kind: output, shape index: {1}]
  %s9 = inlined_call_operand.vmem [shape: bf16[2,72,40], index: 9, kind: output, shape index: {2}]
  %s10 = inlined_call_operand.vmem [shape: bf16[2,72,40], index: 10, kind: output, shape index: {3}]
  %11 = xla_tuple %s7, %s8, %s9, %s10
  %s12 = sld [smem:[#allocation0]]
  $region85: #{fcn_forward.14} parent=0
    _
  %s14 = ssub.s32 1, %s12
  %s15 = scalar_select 0, %s14, %s12
  loop: start=0, step=1, limit=4
  $region2: #{fcn_forward.14} parent=0 // loop_pre_header
    _
  $region3: #{fcn_forward.14} parent=0 // loop_header
    %s17 = sphi 0, %s21
    %p18 = scmp.ge.s32.totalorder %s17, 4
    %s27 = sphi 0, %s29
    %s30 = sphi 0, %s27
    %s31 = sphi 0, %s30
    %s47 = sphi 0, %s31
    %s53 = sphi 0, %s55
    %s56 = sphi 0, %s53
    %s57 = sphi 0, %s56
    %s73 = sphi 0, %s57
    %s77 = sphi 0, %s77
    %s79 = sphi 0, %s77
    %s80 = sphi 0, %s79
    %s94 = sphi 0, %s80
    %s98 = sphi 0, %s98
    %s100 = sphi 0, %s98
    %s101 = sphi 0, %s100
    %s115 = sphi 0, %s101
    %s119 = sphi 0, %s119
    %s121 = sphi 0, %s119
    %s122 = sphi 0, %s121
    %s136 = sphi 0, %s122
    %s140 = sphi 0, %s140
    %s142 = sphi 0, %s140
    %s143 = sphi 0, %s142
    %s157 = sphi 0, %s143
    %s161 = sphi 0, %s161
    %s163 = sphi 0, %s161
    %s164 = sphi 0, %s163
    %s178 = sphi 0, %s164
    %s184 = sphi 0, %s186
    %s187 = sphi 0, %s184
    %s188 = sphi 0, %s187
    %s204 = sphi 0, %s188
    %s210 = sphi 0, %s212
    %s213 = sphi 0, %s210
    %s214 = sphi 0, %s213
    %s230 = sphi 0, %s214
    %s236 = sphi 0, %s238
    %s239 = sphi 0, %s236
    %s240 = sphi 0, %s239
    %s256 = sphi 0, %s240
    %s262 = sphi 0, %s264
    %s265 = sphi 0, %s262
    %s266 = sphi 0, %s265
    %s282 = sphi 0, %s266
  $region4: #{fcn_forward.14} parent=0 // loop_header_branch
    %20 = sbr.rel (%p18) target = $region8
  $region5: #{fcn_forward.14} parent=0 // loop_body
    %s22 = ssub.s32 %s17, 1
    %s23 = ssub.s32 %s17, 2
    %s24 = sadd.s32 %s17, 1
    %s25 = ssub.s32 %s17, %s24
    %p26 = scmp.eq.s32.totalorder %s25, 0
    %s28 = sadd.s32 %s27, 1
    %s29 = scalar_select %p26, %s27, %s28
    %p32 = pneg %p26
    %p33 = scmp.eq.s32.totalorder %s17, 1
    %p34 = por %p32, %p33
    %p35 = scmp.ne.s32.totalorder %s27, %s30
    %p36 = scmp.eq.s32.totalorder %s17, 0
    %p37 = por %p35, %p36
    %p38 = scmp.ne.s32.totalorder %s27, %s30
    %p39 = scmp.eq.s32.totalorder %s22, 1
    %p40 = por %p38, %p39
    %p41 = scmp.ne.s32.totalorder %s30, %s31
    %p42 = scmp.eq.s32.totalorder %s22, 0
    %p43 = por %p41, %p42
    %p44 = scmp.ne.s32.totalorder %s30, %s31
    %p45 = scmp.eq.s32.totalorder %s23, 1
    %p46 = por %p44, %p45
    %p48 = scmp.ne.s32.totalorder %s31, %s47
    %p49 = scmp.eq.s32.totalorder %s23, 0
    %p50 = por %p48, %p49
    %s51 = ssub.s32 %s17, %s24
    %p52 = scmp.eq.s32.totalorder %s51, 0
    %s54 = sadd.s32 %s53, 1
    %s55 = scalar_select %p52, %s53, %s54
    %p58 = pneg %p52
    %p59 = scmp.eq.s32.totalorder %s17, 1
    %p60 = por %p58, %p59
    %p61 = scmp.ne.s32.totalorder %s53, %s56
    %p62 = scmp.eq.s32.totalorder %s17, 0
    %p63 = por %p61, %p62
    %p64 = scmp.ne.s32.totalorder %s53, %s56
    %p65 = scmp.eq.s32.totalorder %s22, 1
    %p66 = por %p64, %p65
    %p67 = scmp.ne.s32.totalorder %s56, %s57
    %p68 = scmp.eq.s32.totalorder %s22, 0
    %p69 = por %p67, %p68
    %p70 = scmp.ne.s32.totalorder %s56, %s57
    %p71 = scmp.eq.s32.totalorder %s23, 1
    %p72 = por %p70, %p71
    %p74 = scmp.ne.s32.totalorder %s57, %s73
    %p75 = scmp.eq.s32.totalorder %s23, 0
    %p76 = por %p74, %p75
    %s78 = sadd.s32 %s77, 1
    %p81 = scmp.eq.s32.totalorder %s17, 1
    %p82 = scmp.ne.s32.totalorder %s77, %s79
    %p83 = scmp.eq.s32.totalorder %s17, 0
    %p84 = por %p82, %p83
    %p85 = scmp.ne.s32.totalorder %s77, %s79
    %p86 = scmp.eq.s32.totalorder %s22, 1
    %p87 = por %p85, %p86
    %p88 = scmp.ne.s32.totalorder %s79, %s80
    %p89 = scmp.eq.s32.totalorder %s22, 0
    %p90 = por %p88, %p89
    %p91 = scmp.ne.s32.totalorder %s79, %s80
    %p92 = scmp.eq.s32.totalorder %s23, 1
    %p93 = por %p91, %p92
    %p95 = scmp.ne.s32.totalorder %s80, %s94
    %p96 = scmp.eq.s32.totalorder %s23, 0
    %p97 = por %p95, %p96
    %s99 = sadd.s32 %s98, 1
    %p102 = scmp.eq.s32.totalorder %s17, 1
    %p103 = scmp.ne.s32.totalorder %s98, %s100
    %p104 = scmp.eq.s32.totalorder %s17, 0
    %p105 = por %p103, %p104
    %p106 = scmp.ne.s32.totalorder %s98, %s100
    %p107 = scmp.eq.s32.totalorder %s22, 1
    %p108 = por %p106, %p107
    %p109 = scmp.ne.s32.totalorder %s100, %s101
    %p110 = scmp.eq.s32.totalorder %s22, 0
    %p111 = por %p109, %p110
    %p112 = scmp.ne.s32.totalorder %s100, %s101
    %p113 = scmp.eq.s32.totalorder %s23, 1
    %p114 = por %p112, %p113
    %p116 = scmp.ne.s32.totalorder %s101, %s115
    %p117 = scmp.eq.s32.totalorder %s23, 0
    %p118 = por %p116, %p117
    %s120 = sadd.s32 %s119, 1
    %p123 = scmp.eq.s32.totalorder %s17, 1
    %p124 = scmp.ne.s32.totalorder %s119, %s121
    %p125 = scmp.eq.s32.totalorder %s17, 0
    %p126 = por %p124, %p125
    %p127 = scmp.ne.s32.totalorder %s119, %s121
    %p128 = scmp.eq.s32.totalorder %s22, 1
    %p129 = por %p127, %p128
    %p130 = scmp.ne.s32.totalorder %s121, %s122
    %p131 = scmp.eq.s32.totalorder %s22, 0
    %p132 = por %p130, %p131
    %p133 = scmp.ne.s32.totalorder %s121, %s122
    %p134 = scmp.eq.s32.totalorder %s23, 1
    %p135 = por %p133, %p134
    %p137 = scmp.ne.s32.totalorder %s122, %s136
    %p138 = scmp.eq.s32.totalorder %s23, 0
    %p139 = por %p137, %p138
    %s141 = sadd.s32 %s140, 1
    %p144 = scmp.eq.s32.totalorder %s17, 1
    %p145 = scmp.ne.s32.totalorder %s140, %s142
    %p146 = scmp.eq.s32.totalorder %s17, 0
    %p147 = por %p145, %p146
    %p148 = scmp.ne.s32.totalorder %s140, %s142
    %p149 = scmp.eq.s32.totalorder %s22, 1
    %p150 = por %p148, %p149
    %p151 = scmp.ne.s32.totalorder %s142, %s143
    %p152 = scmp.eq.s32.totalorder %s22, 0
    %p153 = por %p151, %p152
    %p154 = scmp.ne.s32.totalorder %s142, %s143
    %p155 = scmp.eq.s32.totalorder %s23, 1
    %p156 = por %p154, %p155
    %p158 = scmp.ne.s32.totalorder %s143, %s157
    %p159 = scmp.eq.s32.totalorder %s23, 0
    %p160 = por %p158, %p159
    %s162 = sadd.s32 %s161, 1
    %p165 = scmp.eq.s32.totalorder %s17, 1
    %p166 = scmp.ne.s32.totalorder %s161, %s163
    %p167 = scmp.eq.s32.totalorder %s17, 0
    %p168 = por %p166, %p167
    %p169 = scmp.ne.s32.totalorder %s161, %s163
    %p170 = scmp.eq.s32.totalorder %s22, 1
    %p171 = por %p169, %p170
    %p172 = scmp.ne.s32.totalorder %s163, %s164
    %p173 = scmp.eq.s32.totalorder %s22, 0
    %p174 = por %p172, %p173
    %p175 = scmp.ne.s32.totalorder %s163, %s164
    %p176 = scmp.eq.s32.totalorder %s23, 1
    %p177 = por %p175, %p176
    %p179 = scmp.ne.s32.totalorder %s164, %s178
    %p180 = scmp.eq.s32.totalorder %s23, 0
    %p181 = por %p179, %p180
    %s182 = ssub.s32 %s17, %s24
    %p183 = scmp.eq.s32.totalorder %s182, 0
    %s185 = sadd.s32 %s184, 1
    %s186 = scalar_select %p183, %s184, %s185
    %p189 = pneg %p183
    %p190 = scmp.eq.s32.totalorder %s17, 1
    %p191 = por %p189, %p190
    %p192 = scmp.ne.s32.totalorder %s184, %s187
    %p193 = scmp.eq.s32.totalorder %s17, 0
    %p194 = por %p192, %p193
    %p195 = scmp.ne.s32.totalorder %s184, %s187
    %p196 = scmp.eq.s32.totalorder %s22, 1
    %p197 = por %p195, %p196
    %p198 = scmp.ne.s32.totalorder %s187, %s188
    %p199 = scmp.eq.s32.totalorder %s22, 0
    %p200 = por %p198, %p199
    %p201 = scmp.ne.s32.totalorder %s187, %s188
    %p202 = scmp.eq.s32.totalorder %s23, 1
    %p203 = por %p201, %p202
    %p205 = scmp.ne.s32.totalorder %s188, %s204
    %p206 = scmp.eq.s32.totalorder %s23, 0
    %p207 = por %p205, %p206
    %s208 = ssub.s32 %s17, %s24
    %p209 = scmp.eq.s32.totalorder %s208, 0
    %s211 = sadd.s32 %s210, 1
    %s212 = scalar_select %p209, %s210, %s211
    %p215 = pneg %p209
    %p216 = scmp.eq.s32.totalorder %s17, 1
    %p217 = por %p215, %p216
    %p218 = scmp.ne.s32.totalorder %s210, %s213
    %p219 = scmp.eq.s32.totalorder %s17, 0
    %p220 = por %p218, %p219
    %p221 = scmp.ne.s32.totalorder %s210, %s213
    %p222 = scmp.eq.s32.totalorder %s22, 1
    %p223 = por %p221, %p222
    %p224 = scmp.ne.s32.totalorder %s213, %s214
    %p225 = scmp.eq.s32.totalorder %s22, 0
    %p226 = por %p224, %p225
    %p227 = scmp.ne.s32.totalorder %s213, %s214
    %p228 = scmp.eq.s32.totalorder %s23, 1
    %p229 = por %p227, %p228
    %p231 = scmp.ne.s32.totalorder %s214, %s230
    %p232 = scmp.eq.s32.totalorder %s23, 0
    %p233 = por %p231, %p232
    %s234 = ssub.s32 %s17, %s24
    %p235 = scmp.eq.s32.totalorder %s234, 0
    %s237 = sadd.s32 %s236, 1
    %s238 = scalar_select %p235, %s236, %s237
    %p241 = pneg %p235
    %p242 = scmp.eq.s32.totalorder %s17, 1
    %p243 = por %p241, %p242
    %p244 = scmp.ne.s32.totalorder %s236, %s239
    %p245 = scmp.eq.s32.totalorder %s17, 0
    %p246 = por %p244, %p245
    %p247 = scmp.ne.s32.totalorder %s236, %s239
    %p248 = scmp.eq.s32.totalorder %s22, 1
    %p249 = por %p247, %p248
    %p250 = scmp.ne.s32.totalorder %s239, %s240
    %p251 = scmp.eq.s32.totalorder %s22, 0
    %p252 = por %p250, %p251
    %p253 = scmp.ne.s32.totalorder %s239, %s240
    %p254 = scmp.eq.s32.totalorder %s23, 1
    %p255 = por %p253, %p254
    %p257 = scmp.ne.s32.totalorder %s240, %s256
    %p258 = scmp.eq.s32.totalorder %s23, 0
    %p259 = por %p257, %p258
    %s260 = ssub.s32 %s17, %s24
    %p261 = scmp.eq.s32.totalorder %s260, 0
    %s263 = sadd.s32 %s262, 1
    %s264 = scalar_select %p261, %s262, %s263
    %p267 = pneg %p261
    %p268 = scmp.eq.s32.totalorder %s17, 1
    %p269 = por %p267, %p268
    %p270 = scmp.ne.s32.totalorder %s262, %s265
    %p271 = scmp.eq.s32.totalorder %s17, 0
    %p272 = por %p270, %p271
    %p273 = scmp.ne.s32.totalorder %s262, %s265
    %p274 = scmp.eq.s32.totalorder %s22, 1
    %p275 = por %p273, %p274
    %p276 = scmp.ne.s32.totalorder %s265, %s266
    %p277 = scmp.eq.s32.totalorder %s22, 0
    %p278 = por %p276, %p277
    %p279 = scmp.ne.s32.totalorder %s265, %s266
    %p280 = scmp.eq.s32.totalorder %s23, 1
    %p281 = por %p279, %p280
    %p283 = scmp.ne.s32.totalorder %s266, %s282
    %p284 = scmp.eq.s32.totalorder %s23, 0
    %p285 = por %p283, %p284
    %p286 = scmp.le.s32.totalorder 1, %s17
    %p287 = scmp.lt.s32.totalorder %s17, 3
    %p288 = pnand %p286, %p287
    %p289 = pneg %p288
    // Predicated region
    $region9: #{fcn_forward.14} parent=5 // pred_check
      _
    $region10: #{fcn_forward.14} parent=5 // pred_check_branch
      %291 = sbr.rel (%p288) target = $region12
    $region11: #{fcn_forward.14} parent=5 // pred_region
      %s292 = ssub.s32 %s17, 1
      // Predicated region
      $region13: #{fcn_forward.14} parent=11 // pred_check
        %p293 = pneg %p90
      $region14: #{fcn_forward.14} parent=11 // pred_check_branch
        %295 = sbr.rel (%p293) target = $region16
      $region15: #{fcn_forward.14} parent=11 // pred_region
        _
      $region16: #{fcn_forward.14} parent=11 // pred_fallthru
        _
      // Predicated region
      $region17: #{fcn_forward.14} parent=11 // pred_check
        %p296 = pneg %p111
      $region18: #{fcn_forward.14} parent=11 // pred_check_branch
        %298 = sbr.rel (%p296) target = $region20
      $region19: #{fcn_forward.14} parent=11 // pred_region
        _
      $region20: #{fcn_forward.14} parent=11 // pred_fallthru
        _
      // Predicated region
      $region21: #{fcn_forward.14} parent=11 // pred_check
        %p299 = pneg %p132
      $region22: #{fcn_forward.14} parent=11 // pred_check_branch
        %301 = sbr.rel (%p299) target = $region24
      $region23: #{fcn_forward.14} parent=11 // pred_region
        _
      $region24: #{fcn_forward.14} parent=11 // pred_fallthru
        _
      // Predicated region
      $region25: #{fcn_forward.14} parent=11 // pred_check
        %p302 = pneg %p153
      $region26: #{fcn_forward.14} parent=11 // pred_check_branch
        %304 = sbr.rel (%p302) target = $region28
      $region27: #{fcn_forward.14} parent=11 // pred_region
        _
      $region28: #{fcn_forward.14} parent=11 // pred_fallthru
        _
      // Predicated region
      $region29: #{fcn_forward.14} parent=11 // pred_check
        %p305 = pneg %p174
      $region30: #{fcn_forward.14} parent=11 // pred_check_branch
        %307 = sbr.rel (%p305) target = $region32
      $region31: #{fcn_forward.14} parent=11 // pred_region
        _
      $region32: #{fcn_forward.14} parent=11 // pred_fallthru
        _
    $region12: #{fcn_forward.14} parent=5 // pred_fallthru
      _
    %p308 = scmp.lt.s32.totalorder %s17, 2
    // Predicated region
    $region33: #{fcn_forward.14} parent=5 // pred_check
      %p309 = pneg %p308
    $region34: #{fcn_forward.14} parent=5 // pred_check_branch
      %311 = sbr.rel (%p309) target = $region36
    $region35: #{fcn_forward.14} parent=5 // pred_region
      // Predicated region
      $region37: #{fcn_forward.14} parent=35 // pred_check
        %p312 = pneg %p37
      $region38: #{fcn_forward.14} parent=35 // pred_check_branch
        %314 = sbr.rel (%p312) target = $region40
      $region39: #{fcn_forward.14} parent=35 // pred_region
        %p315 = scmp.lt.s32.totalorder %s17, 1
        %s316 = scalar_select %p315, %s17, 1
        %s317 = smul.addr %s316, 12
        %s318 = smul.addr %s317, 4
        %s319 = scalar_lea.vmem %s0, %s318
      $region40: #{fcn_forward.14} parent=35 // pred_fallthru
        _
      // Predicated region
      $region41: #{fcn_forward.14} parent=35 // pred_check
        %p320 = pneg %p63
      $region42: #{fcn_forward.14} parent=35 // pred_check_branch
        %322 = sbr.rel (%p320) target = $region44
      $region43: #{fcn_forward.14} parent=35 // pred_region
        %p323 = scmp.lt.s32.totalorder %s17, 1
        %s324 = scalar_select %p323, %s17, 1
        %s325 = smul.addr %s324, 12
        %s326 = smul.addr %s325, 4
        %s327 = scalar_lea.vmem %s1, %s326
      $region44: #{fcn_forward.14} parent=35 // pred_fallthru
        _
    $region36: #{fcn_forward.14} parent=5 // pred_fallthru
      _
    %p328 = scmp.le.s32.totalorder 1, %s17
    %p329 = scmp.lt.s32.totalorder %s17, 3
    %p330 = pnand %p328, %p329
    %p331 = pneg %p330
    // Predicated region
    $region45: #{fcn_forward.14} parent=5 // pred_check
      _
    $region46: #{fcn_forward.14} parent=5 // pred_check_branch
      %333 = sbr.rel (%p330) target = $region48
    $region47: #{fcn_forward.14} parent=5 // pred_region
      %s334 = ssub.s32 %s17, 1
      %p335 = scmp.lt.s32.totalorder %s22, 1
      %s336 = scalar_select %p335, %s22, 1
      %s337 = smul.addr %s336, 12
      %s338 = smul.addr %s337, 4
      %s339 = scalar_lea.vmem %s0, %s338
      %p340 = pneg %p43
      %p341 = pneg %p40
      %p342 = scmp.lt.s32.totalorder %s22, 1
      %s343 = scalar_select %p342, %s22, 1
      %s344 = smul.addr %s343, 12
      %s345 = smul.addr %s344, 4
      %s346 = scalar_lea.vmem %s1, %s345
      %p347 = pneg %p69
      %p348 = pneg %p66
      %p349 = pneg %p90
      %p350 = pneg %p87
      %p351 = pneg %p111
      %p352 = pneg %p108
      %p353 = pneg %p132
      %p354 = pneg %p129
      %p355 = pneg %p153
      %p356 = pneg %p150
      %p357 = pneg %p174
      %p358 = pneg %p171
      %p359 = pneg %p200
      %p360 = pneg %p197
      %p361 = scmp.lt.s32.totalorder %s22, 1
      %s362 = scalar_select %p361, %s22, 1
      %s363 = smul.addr %s362, 9
      %s364 = smul.addr %s363, 4
      %s365 = scalar_lea.vmem %s7, %s364
      %p366 = pneg %p226
      %p367 = pneg %p223
      %p368 = scmp.lt.s32.totalorder %s22, 1
      %s369 = scalar_select %p368, %s22, 1
      %s370 = smul.addr %s369, 9
      %s371 = smul.addr %s370, 4
      %s372 = scalar_lea.vmem %s8, %s371
      %p373 = pneg %p252
      %p374 = pneg %p249
      %p375 = scmp.lt.s32.totalorder %s22, 1
      %s376 = scalar_select %p375, %s22, 1
      %s377 = smul.addr %s376, 9
      %s378 = smul.addr %s377, 4
      %s379 = scalar_lea.vmem %s9, %s378
      %p380 = pneg %p278
      %p381 = pneg %p275
      %p382 = scmp.lt.s32.totalorder %s22, 1
      %s383 = scalar_select %p382, %s22, 1
      %s384 = smul.addr %s383, 9
      %s385 = smul.addr %s384, 4
      %s386 = scalar_lea.vmem %s10, %s385
      %p387 = scmp.lt.s32.totalorder %s22, 1
      %s388 = scalar_select %p387, %s22, 1
      %s389 = smul.addr %s388, 12
      %s390 = smul.addr %s389, 4
      %s391 = scalar_lea.vmem %s0, %s390
      %p392 = scmp.lt.s32.totalorder %s22, 1
      %s393 = scalar_select %p392, %s22, 1
      %s394 = smul.addr %s393, 12
      %s395 = smul.addr %s394, 4
      %s396 = scalar_lea.vmem %s1, %s395
      %p397 = scmp.lt.s32.totalorder %s22, 1
      %s398 = scalar_select %p397, %s22, 1
      %s399 = smul.addr %s398, 9
      %s400 = smul.addr %s399, 4
      %s401 = scalar_lea.vmem %s7, %s400
      %p402 = scmp.lt.s32.totalorder %s22, 1
      %s403 = scalar_select %p402, %s22, 1
      %s404 = smul.addr %s403, 9
      %s405 = smul.addr %s404, 4
      %s406 = scalar_lea.vmem %s8, %s405
      %p407 = scmp.lt.s32.totalorder %s22, 1
      %s408 = scalar_select %p407, %s22, 1
      %s409 = smul.addr %s408, 9
      %s410 = smul.addr %s409, 4
      %s411 = scalar_lea.vmem %s9, %s410
      %p412 = scmp.lt.s32.totalorder %s22, 1
      %s413 = scalar_select %p412, %s22, 1
      %s414 = smul.addr %s413, 9
      %s415 = smul.addr %s414, 4
      %s416 = scalar_lea.vmem %s10, %s415
      %v418 = vld [vmem:[%s391] sm:$0xf]
      %v419 = vld [vmem:[%s391 + $0x4] sm:$0xf]
      %v420 = vld [vmem:[%s391 + $0x8] sm:$0xf]
      %v421 = vld [vmem:[%s391 + $0xc] sm:$0xf]
      %v422 = vld [vmem:[%s391 + $0x10] sm:$0xf]
      %v423 = vld [vmem:[%s391 + $0x14] sm:$0xf]
      %v424 = vld [vmem:[%s391 + $0x18] sm:$0xf]
      %v425 = vld [vmem:[%s391 + $0x1c] sm:$0xf]
      %v426 = vld [vmem:[%s391 + $0x20] sm:$0xf]
      %v427 = vld [vmem:[%s396] sm:$0xf]
      %v428 = vld [vmem:[%s396 + $0x4] sm:$0xf]
      %v429 = vld [vmem:[%s396 + $0x8] sm:$0xf]
      %v430 = vld [vmem:[%s396 + $0xc] sm:$0xf]
      %v431 = vld [vmem:[%s396 + $0x10] sm:$0xf]
      %v432 = vld [vmem:[%s396 + $0x14] sm:$0xf]
      %v433 = vld [vmem:[%s396 + $0x18] sm:$0xf]
      %v434 = vld [vmem:[%s396 + $0x1c] sm:$0xf]
      %v435 = vld [vmem:[%s396 + $0x20] sm:$0xf]
      %v445 = vunpack.c.l.b16 %v418
      %v446 = vunpack.c.l.b16 %v419
      %v447 = vunpack.c.l.b16 %v420
      %v448 = vunpack.c.l.b16 %v421
      %v449 = vunpack.c.l.b16 %v422
      %v450 = vunpack.c.l.b16 %v423
      %v451 = vunpack.c.l.b16 %v424
      %v452 = vunpack.c.l.b16 %v425
      %v453 = vunpack.c.l.b16 %v426
      %v454 = vpack.c.b16 %v446, %v445
      %v455 = vpack.c.b16 %v448, %v447
      %v456 = vpack.c.b16 %v450, %v449
      %v457 = vpack.c.b16 %v452, %v451
      %v458 = vpack.c.b16 %v453, %v453
      %v468 = vunpack.c.l.b16 %v427
      %v469 = vunpack.c.l.b16 %v428
      %v470 = vunpack.c.l.b16 %v429
      %v471 = vunpack.c.l.b16 %v430
      %v472 = vunpack.c.l.b16 %v431
      %v473 = vunpack.c.l.b16 %v432
      %v474 = vunpack.c.l.b16 %v433
      %v475 = vunpack.c.l.b16 %v434
      %v476 = vunpack.c.l.b16 %v435
      %v477 = vpack.c.b16 %v469, %v468
      %v478 = vpack.c.b16 %v471, %v470
      %v479 = vpack.c.b16 %v473, %v472
      %v480 = vpack.c.b16 %v475, %v474
      %v481 = vpack.c.b16 %v476, %v476
      %482 = vrot.lane.b32.xlu0 %v477, 40
      %v483 = vpop.permute.xlu0 %482
      %484 = vrot.lane.b32.xlu0 %v478, 40
      %v485 = vpop.permute.xlu0 %484
      %486 = vrot.lane.b32.xlu0 %v479, 40
      %v487 = vpop.permute.xlu0 %486
      %488 = vrot.lane.b32.xlu0 %v480, 40
      %v489 = vpop.permute.xlu0 %488
      %490 = vrot.lane.b32.xlu0 %v481, 40
      %v491 = vpop.permute.xlu0 %490
      %vm492 = vcmask 326656
      %v495 = vsel %vm492, %v454, %v483
      %v498 = vsel %vm492, %v455, %v485
      %v501 = vsel %vm492, %v456, %v487
      %v504 = vsel %vm492, %v457, %v489
      %v507 = vsel %vm492, %v458, %v491
      %v508 = vld [vmem:[%s2] sm:$0xf]
      %v509 = vld [vmem:[%s2 + $0x4] sm:$0xf]
      %v510 = vld [vmem:[%s2 + $0x8] sm:$0xf]
      %v511 = vld [vmem:[%s2 + $0xc] sm:$0xf]
      %v512 = vld [vmem:[%s2 + $0x10] sm:$0xf]
      %v513 = vld [vmem:[%s2 + $0x14] sm:$0xf]
      %v514 = vld [vmem:[%s2 + $0x18] sm:$0xf]
      %v515 = vld [vmem:[%s2 + $0x1c] sm:$0xf]
      %v516 = vld [vmem:[%s2 + $0x20] sm:$0xf]
      %v517 = vld [vmem:[%s2 + $0x24] sm:$0xf]
      %v518 = vld [vmem:[%s6] sm:$0x1]
      %v520 = vperm.slane %v518, 0
      %v532 = vunpack.c.l.b16 %v508
      %v533 = vunpack.c.l.b16 %v509
      %v534 = vunpack.c.l.b16 %v510
      %v535 = vunpack.c.l.b16 %v511
      %v536 = vunpack.c.l.b16 %v512
      %v537 = vunpack.c.l.b16 %v513
      %v538 = vunpack.c.l.b16 %v514
      %v539 = vunpack.c.l.b16 %v515
      %v540 = vunpack.c.l.b16 %v516
      %v541 = vunpack.c.l.b16 %v517
      %v542 = vpack.c.b16 %v533, %v532
      %v543 = vpack.c.b16 %v535, %v534
      %v544 = vpack.c.b16 %v537, %v536
      %v545 = vpack.c.b16 %v539, %v538
      %v546 = vpack.c.b16 %v541, %v540
      %vm552 = vcmask 654336
      %v553 = vsel %vm552, %v495, 0
      %v555 = vsel %vm552, %v498, 0
      %v557 = vsel %vm552, %v501, 0
      %v559 = vsel %vm552, %v504, 0
      %v561 = vsel %vm552, %v507, 0
      %563 = vmatpush.bf16.msra.mxu0 0
      %564 = vmatpush.bf16.msra.mxu0 0
      %565 = vmatpush.bf16.msra.mxu0 0
      %566 = vmatpush.bf16.msra.mxu0 %v546
      %567 = vmatpush.bf16.msra.mxu0 %v545
      %568 = vmatpush.bf16.msra.mxu0 %v544
      %569 = vmatpush.bf16.msra.mxu0 %v543
      %570 = vmatpush.bf16.msra.mxu0 %v542
      %571 = vmatmul.bf16.gmra.mxu0 %v553
      %v572 = vpop.f32.mrf.mxu0
      %v573 = vadd.f32 %v520, %v572
      %v574 = vpop.f32.mrf.mxu0
      %v575 = vadd.f32 %v520, %v574
      %576 = vmatmul.bf16.gmra.mxu0 %v555
      %v577 = vpop.f32.mrf.mxu0
      %v578 = vadd.f32 %v520, %v577
      %v579 = vpop.f32.mrf.mxu0
      %v580 = vadd.f32 %v520, %v579
      %581 = vmatmul.bf16.gmra.mxu0 %v557
      %v582 = vpop.f32.mrf.mxu0
      %v583 = vadd.f32 %v520, %v582
      %v584 = vpop.f32.mrf.mxu0
      %v585 = vadd.f32 %v520, %v584
      %586 = vmatmul.bf16.gmra.mxu0 %v559
      %v587 = vpop.f32.mrf.mxu0
      %v588 = vadd.f32 %v520, %v587
      %v589 = vpop.f32.mrf.mxu0
      %v590 = vadd.f32 %v520, %v589
      %591 = vmatmul.bf16.gmra.mxu0 %v561
      %v592 = vpop.f32.mrf.mxu0
      %v593 = vadd.f32 %v520, %v592
      %v594 = vpop.f32.mrf.mxu0
      %595 = vdwg.mxu0
      %v596 = vpack.c.bf16 %v573, %v573
      %v597 = vpack.c.bf16 %v575, %v575
      %v598 = vpack.c.bf16 %v578, %v578
      %v599 = vpack.c.bf16 %v580, %v580
      %v600 = vpack.c.bf16 %v583, %v583
      %v601 = vpack.c.bf16 %v585, %v585
      %v602 = vpack.c.bf16 %v588, %v588
      %v603 = vpack.c.bf16 %v590, %v590
      %v604 = vpack.c.bf16 %v593, %v593
      %vm605 = vcmask 322560
      %606 = vst.msk [vmem:[%s401] sm:$0xf] %vm605, %v596
      %607 = vst.msk [vmem:[%s401 + $0x4] sm:$0xf] %vm605, %v597
      %608 = vst.msk [vmem:[%s401 + $0x8] sm:$0xf] %vm605, %v598
      %609 = vst.msk [vmem:[%s401 + $0xc] sm:$0xf] %vm605, %v599
      %610 = vst.msk [vmem:[%s401 + $0x10] sm:$0xf] %vm605, %v600
      %611 = vst.msk [vmem:[%s401 + $0x14] sm:$0xf] %vm605, %v601
      %612 = vst.msk [vmem:[%s401 + $0x18] sm:$0xf] %vm605, %v602
      %613 = vst.msk [vmem:[%s401 + $0x1c] sm:$0xf] %vm605, %v603
      %614 = vst.msk [vmem:[%s401 + $0x20] sm:$0xf] %vm605, %v604
      %v615 = vld [vmem:[%s391] sm:$0xf]
      %v616 = vld [vmem:[%s391 + $0x4] sm:$0xf]
      %v617 = vld [vmem:[%s391 + $0x8] sm:$0xf]
      %v618 = vld [vmem:[%s391 + $0xc] sm:$0xf]
      %v619 = vld [vmem:[%s391 + $0x10] sm:$0xf]
      %v620 = vld [vmem:[%s391 + $0x14] sm:$0xf]
      %v621 = vld [vmem:[%s391 + $0x18] sm:$0xf]
      %v622 = vld [vmem:[%s391 + $0x1c] sm:$0xf]
      %v623 = vld [vmem:[%s391 + $0x20] sm:$0xf]
      %v624 = vld [vmem:[%s396] sm:$0xf]
      %v625 = vld [vmem:[%s396 + $0x4] sm:$0xf]
      %v626 = vld [vmem:[%s396 + $0x8] sm:$0xf]
      %v627 = vld [vmem:[%s396 + $0xc] sm:$0xf]
      %v628 = vld [vmem:[%s396 + $0x10] sm:$0xf]
      %v629 = vld [vmem:[%s396 + $0x14] sm:$0xf]
      %v630 = vld [vmem:[%s396 + $0x18] sm:$0xf]
      %v631 = vld [vmem:[%s396 + $0x1c] sm:$0xf]
      %v632 = vld [vmem:[%s396 + $0x20] sm:$0xf]
      %v633 = vld [vmem:[%s391 + $0x24] sm:$0x1]
      %v634 = vld [vmem:[%s396 + $0x24] sm:$0x1]
      %v644 = vunpack.c.l.b16 %v615
      %v645 = vunpack.c.l.b16 %v616
      %v646 = vunpack.c.l.b16 %v617
      %v647 = vunpack.c.l.b16 %v618
      %v648 = vunpack.c.l.b16 %v619
      %v649 = vunpack.c.l.b16 %v620
      %v650 = vunpack.c.l.b16 %v621
      %v651 = vunpack.c.l.b16 %v622
      %v652 = vunpack.c.l.b16 %v623
      %v653 = vpack.c.b16 %v645, %v644
      %v654 = vpack.c.b16 %v647, %v646
      %v655 = vpack.c.b16 %v649, %v648
      %v656 = vpack.c.b16 %v651, %v650
      %v657 = vpack.c.b16 %v652, %v652
      %v667 = vunpack.c.l.b16 %v624
      %v668 = vunpack.c.l.b16 %v625
      %v669 = vunpack.c.l.b16 %v626
      %v670 = vunpack.c.l.b16 %v627
      %v671 = vunpack.c.l.b16 %v628
      %v672 = vunpack.c.l.b16 %v629
      %v673 = vunpack.c.l.b16 %v630
      %v674 = vunpack.c.l.b16 %v631
      %v675 = vunpack.c.l.b16 %v632
      %v676 = vpack.c.b16 %v668, %v667
      %v677 = vpack.c.b16 %v670, %v669
      %v678 = vpack.c.b16 %v672, %v671
      %v679 = vpack.c.b16 %v674, %v673
      %v680 = vpack.c.b16 %v675, %v675
      %681 = vrot.lane.b32.xlu0 %v676, 40
      %v682 = vpop.permute.xlu0 %681
      %683 = vrot.lane.b32.xlu0 %v677, 40
      %v684 = vpop.permute.xlu0 %683
      %685 = vrot.lane.b32.xlu0 %v678, 40
      %v686 = vpop.permute.xlu0 %685
      %687 = vrot.lane.b32.xlu0 %v679, 40
      %v688 = vpop.permute.xlu0 %687
      %689 = vrot.lane.b32.xlu0 %v680, 40
      %v690 = vpop.permute.xlu0 %689
      %v692 = vunpack.c.l.b16 %v633
      %v693 = vpack.c.b16 %v692, %v652
      %vm694 = vsmask.f32 7424
      %v696 = vshrl.u32 %v653, 16
      %v698 = vshll.u32 %v653, 16
      %v700 = vrot.slane %v698, 1
      %v701 = vor.u32 %v696, %v700
      %v703 = vshll.u32 %v654, 16
      %v705 = vrot.slane %v703, 1
      %v706 = vsel %vm694, %v701, %v705
      %v707 = vshrl.u32 %v654, 16
      %v709 = vor.u32 %v707, %v705
      %v711 = vshll.u32 %v655, 16
      %v713 = vrot.slane %v711, 1
      %v714 = vsel %vm694, %v709, %v713
      %v715 = vshrl.u32 %v655, 16
      %v717 = vor.u32 %v715, %v713
      %v719 = vshll.u32 %v656, 16
      %v721 = vrot.slane %v719, 1
      %v722 = vsel %vm694, %v717, %v721
      %v723 = vshrl.u32 %v656, 16
      %v725 = vor.u32 %v723, %v721
      %v727 = vshll.u32 %v693, 16
      %v729 = vrot.slane %v727, 1
      %v730 = vsel %vm694, %v725, %v729
      %v731 = vshrl.u32 %v693, 16
      %v733 = vor.u32 %v731, %v729
      %734 = vrot.lane.b32.xlu0 %v706, 80
      %v735 = vpop.permute.xlu0 %734
      %736 = vrot.lane.b32.xlu0 %v714, 80
      %v737 = vpop.permute.xlu0 %736
      %738 = vrot.lane.b32.xlu0 %v722, 80
      %v739 = vpop.permute.xlu0 %738
      %740 = vrot.lane.b32.xlu0 %v730, 80
      %v741 = vpop.permute.xlu0 %740
      %742 = vrot.lane.b32.xlu0 %v733, 80
      %v743 = vpop.permute.xlu0 %742
      %v745 = vunpack.c.l.b16 %v634
      %v746 = vpack.c.b16 %v745, %v675
      %v748 = vshrl.u32 %v676, 16
      %v750 = vshll.u32 %v676, 16
      %v752 = vrot.slane %v750, 1
      %v753 = vor.u32 %v748, %v752
      %v755 = vshll.u32 %v677, 16
      %v757 = vrot.slane %v755, 1
      %v758 = vsel %vm694, %v753, %v757
      %v759 = vshrl.u32 %v677, 16
      %v761 = vor.u32 %v759, %v757
      %v763 = vshll.u32 %v678, 16
      %v765 = vrot.slane %v763, 1
      %v766 = vsel %vm694, %v761, %v765
      %v767 = vshrl.u32 %v678, 16
      %v769 = vor.u32 %v767, %v765
      %v771 = vshll.u32 %v679, 16
      %v773 = vrot.slane %v771, 1
      %v774 = vsel %vm694, %v769, %v773
      %v775 = vshrl.u32 %v679, 16
      %v777 = vor.u32 %v775, %v773
      %v779 = vshll.u32 %v746, 16
      %v781 = vrot.slane %v779, 1
      %v782 = vsel %vm694, %v777, %v781
      %v783 = vshrl.u32 %v746, 16
      %v785 = vor.u32 %v783, %v781
      %786 = vrot.lane.b32.xlu0 %v758, 120
      %v787 = vpop.permute.xlu0 %786
      %788 = vrot.lane.b32.xlu0 %v766, 120
      %v789 = vpop.permute.xlu0 %788
      %790 = vrot.lane.b32.xlu0 %v774, 120
      %v791 = vpop.permute.xlu0 %790
      %792 = vrot.lane.b32.xlu0 %v782, 120
      %v793 = vpop.permute.xlu0 %792
      %794 = vrot.lane.b32.xlu0 %v785, 120
      %v795 = vpop.permute.xlu0 %794
      %v797 = vsel %vm492, %v653, %v682
      %v799 = vsel %vm492, %v654, %v684
      %v801 = vsel %vm492, %v655, %v686
      %v803 = vsel %vm492, %v656, %v688
      %v806 = vsel %vm492, %v657, %v690
      %v808 = vsel %vm552, %v797, %v735
      %v810 = vsel %vm552, %v799, %v737
      %v812 = vsel %vm552, %v801, %v739
      %v814 = vsel %vm552, %v803, %v741
      %v816 = vsel %vm552, %v806, %v743
      %vm817 = vcmask 982016
      %v819 = vsel %vm817, %v808, %v787
      %v822 = vsel %vm817, %v810, %v789
      %v825 = vsel %vm817, %v812, %v791
      %v828 = vsel %vm817, %v814, %v793
      %v831 = vsel %vm817, %v816, %v795
      %v833 = vld [vmem:[%s3] sm:$0xf]
      %v834 = vld [vmem:[%s3 + $0x4] sm:$0xf]
      %v835 = vld [vmem:[%s3 + $0x8] sm:$0xf]
      %v836 = vld [vmem:[%s3 + $0xc] sm:$0xf]
      %v837 = vld [vmem:[%s3 + $0x10] sm:$0xf]
      %v838 = vld [vmem:[%s3 + $0x14] sm:$0xf]
      %v839 = vld [vmem:[%s3 + $0x18] sm:$0xf]
      %v840 = vld [vmem:[%s3 + $0x1c] sm:$0xf]
      %v841 = vld [vmem:[%s3 + $0x20] sm:$0xf]
      %v842 = vld [vmem:[%s3 + $0x24] sm:$0xf]
      %v843 = vld [vmem:[%s3 + $0x28] sm:$0xf]
      %v844 = vld [vmem:[%s3 + $0x2c] sm:$0xf]
      %v845 = vld [vmem:[%s3 + $0x30] sm:$0xf]
      %v846 = vld [vmem:[%s3 + $0x34] sm:$0xf]
      %v847 = vld [vmem:[%s3 + $0x38] sm:$0xf]
      %v848 = vld [vmem:[%s3 + $0x3c] sm:$0xf]
      %v849 = vld [vmem:[%s3 + $0x40] sm:$0xf]
      %v850 = vld [vmem:[%s3 + $0x44] sm:$0xf]
      %v851 = vld [vmem:[%s3 + $0x48] sm:$0xf]
      %v852 = vld [vmem:[%s3 + $0x4c] sm:$0xf]
      %v853 = vld [vmem:[%s6] sm:$0x1]
      %v855 = vperm.slane %v853, 0
      %v877 = vunpack.c.l.b16 %v833
      %v878 = vunpack.c.l.b16 %v834
      %v879 = vunpack.c.l.b16 %v835
      %v880 = vunpack.c.l.b16 %v836
      %v881 = vunpack.c.l.b16 %v837
      %v882 = vunpack.c.l.b16 %v838
      %v883 = vunpack.c.l.b16 %v839
      %v884 = vunpack.c.l.b16 %v840
      %v885 = vunpack.c.l.b16 %v841
      %v886 = vunpack.c.l.b16 %v842
      %v887 = vunpack.c.l.b16 %v843
      %v888 = vunpack.c.l.b16 %v844
      %v889 = vunpack.c.l.b16 %v845
      %v890 = vunpack.c.l.b16 %v846
      %v891 = vunpack.c.l.b16 %v847
      %v892 = vunpack.c.l.b16 %v848
      %v893 = vunpack.c.l.b16 %v849
      %v894 = vunpack.c.l.b16 %v850
      %v895 = vunpack.c.l.b16 %v851
      %v896 = vunpack.c.l.b16 %v852
      %v897 = vpack.c.b16 %v878, %v877
      %v898 = vpack.c.b16 %v880, %v879
      %v899 = vpack.c.b16 %v882, %v881
      %v900 = vpack.c.b16 %v884, %v883
      %v901 = vpack.c.b16 %v886, %v885
      %v902 = vpack.c.b16 %v888, %v887
      %v903 = vpack.c.b16 %v890, %v889
      %v904 = vpack.c.b16 %v892, %v891
      %v905 = vpack.c.b16 %v894, %v893
      %v906 = vpack.c.b16 %v896, %v895
      %vm917 = vcmask 261120
      %v918 = vsel %vm917, %v787, 0
      %v920 = vsel %vm917, %v789, 0
      %v922 = vsel %vm917, %v791, 0
      %v924 = vsel %vm917, %v793, 0
      %v926 = vsel %vm917, %v795, 0
      %928 = vmatpush.bf16.msra.mxu0 %v904
      %929 = vmatpush.bf16.msra.mxu0 %v903
      %930 = vmatpush.bf16.msra.mxu0 %v902
      %931 = vmatpush.bf16.msra.mxu0 %v901
      %932 = vmatpush.bf16.msra.mxu0 %v900
      %933 = vmatpush.bf16.msra.mxu0 %v899
      %934 = vmatpush.bf16.msra.mxu0 %v898
      %935 = vmatpush.bf16.msra.mxu0 %v897
      %936 = vmatmul.bf16.gmra.mxu0 %v819
      %v937 = vpop.f32.mrf.mxu0
      %v938 = vadd.f32 %v855, %v937
      %v939 = vpop.f32.mrf.mxu0
      %v940 = vadd.f32 %v855, %v939
      %941 = vmatmul.bf16.gmra.mxu0 %v822
      %v942 = vpop.f32.mrf.mxu0
      %v943 = vadd.f32 %v855, %v942
      %v944 = vpop.f32.mrf.mxu0
      %v945 = vadd.f32 %v855, %v944
      %946 = vmatmul.bf16.gmra.mxu0 %v825
      %v947 = vpop.f32.mrf.mxu0
      %v948 = vadd.f32 %v855, %v947
      %v949 = vpop.f32.mrf.mxu0
      %v950 = vadd.f32 %v855, %v949
      %951 = vmatmul.bf16.gmra.mxu0 %v828
      %v952 = vpop.f32.mrf.mxu0
      %v953 = vadd.f32 %v855, %v952
      %v954 = vpop.f32.mrf.mxu0
      %v955 = vadd.f32 %v855, %v954
      %956 = vmatmul.bf16.gmra.mxu0 %v831
      %v957 = vpop.f32.mrf.mxu0
      %v958 = vadd.f32 %v855, %v957
      %v959 = vpop.f32.mrf.mxu0
      %960 = vdwg.mxu0
      %961 = vmatpush.bf16.msra.mxu0 0
      %962 = vmatpush.bf16.msra.mxu0 0
      %963 = vmatpush.bf16.msra.mxu0 0
      %964 = vmatpush.bf16.msra.mxu0 0
      %965 = vmatpush.bf16.msra.mxu0 0
      %966 = vmatpush.bf16.msra.mxu0 0
      %967 = vmatpush.bf16.msra.mxu0 %v906
      %968 = vmatpush.bf16.msra.mxu0 %v905
      %969 = vmatmul.bf16.gmra.mxu0 %v918
      %v970 = vpop.f32.mrf.mxu0
      %v971 = vadd.f32 %v938, %v970
      %v972 = vpop.f32.mrf.mxu0
      %v973 = vadd.f32 %v940, %v972
      %974 = vmatmul.bf16.gmra.mxu0 %v920
      %v975 = vpop.f32.mrf.mxu0
      %v976 = vadd.f32 %v943, %v975
      %v977 = vpop.f32.mrf.mxu0
      %v978 = vadd.f32 %v945, %v977
      %979 = vmatmul.bf16.gmra.mxu0 %v922
      %v980 = vpop.f32.mrf.mxu0
      %v981 = vadd.f32 %v948, %v980
      %v982 = vpop.f32.mrf.mxu0
      %v983 = vadd.f32 %v950, %v982
      %984 = vmatmul.bf16.gmra.mxu0 %v924
      %v985 = vpop.f32.mrf.mxu0
      %v986 = vadd.f32 %v953, %v985
      %v987 = vpop.f32.mrf.mxu0
      %v988 = vadd.f32 %v955, %v987
      %989 = vmatmul.bf16.gmra.mxu0 %v926
      %v990 = vpop.f32.mrf.mxu0
      %v991 = vadd.f32 %v958, %v990
      %v992 = vpop.f32.mrf.mxu0
      %993 = vdwg.mxu0
      %v994 = vpack.c.bf16 %v971, %v971
      %v995 = vpack.c.bf16 %v973, %v973
      %v996 = vpack.c.bf16 %v976, %v976
      %v997 = vpack.c.bf16 %v978, %v978
      %v998 = vpack.c.bf16 %v981, %v981
      %v999 = vpack.c.bf16 %v983, %v983
      %v1000 = vpack.c.bf16 %v986, %v986
      %v1001 = vpack.c.bf16 %v988, %v988
      %v1002 = vpack.c.bf16 %v991, %v991
      %1003 = vst.msk [vmem:[%s406] sm:$0xf] %vm605, %v994
      %1004 = vst.msk [vmem:[%s406 + $0x4] sm:$0xf] %vm605, %v995
      %1005 = vst.msk [vmem:[%s406 + $0x8] sm:$0xf] %vm605, %v996
      %1006 = vst.msk [vmem:[%s406 + $0xc] sm:$0xf] %vm605, %v997
      %1007 = vst.msk [vmem:[%s406 + $0x10] sm:$0xf] %vm605, %v998
      %1008 = vst.msk [vmem:[%s406 + $0x14] sm:$0xf] %vm605, %v999
      %1009 = vst.msk [vmem:[%s406 + $0x18] sm:$0xf] %vm605, %v1000
      %1010 = vst.msk [vmem:[%s406 + $0x1c] sm:$0xf] %vm605, %v1001
      %1011 = vst.msk [vmem:[%s406 + $0x20] sm:$0xf] %vm605, %v1002
      %v1012 = vld [vmem:[%s391] sm:$0xf]
      %v1013 = vld [vmem:[%s391 + $0x4] sm:$0xf]
      %v1014 = vld [vmem:[%s391 + $0x8] sm:$0xf]
      %v1015 = vld [vmem:[%s391 + $0xc] sm:$0xf]
      %v1016 = vld [vmem:[%s391 + $0x10] sm:$0xf]
      %v1017 = vld [vmem:[%s391 + $0x14] sm:$0xf]
      %v1018 = vld [vmem:[%s391 + $0x18] sm:$0xf]
      %v1019 = vld [vmem:[%s391 + $0x1c] sm:$0xf]
      %v1020 = vld [vmem:[%s391 + $0x20] sm:$0xf]
      %v1021 = vld [vmem:[%s396] sm:$0xf]
      %v1022 = vld [vmem:[%s396 + $0x4] sm:$0xf]
      %v1023 = vld [vmem:[%s396 + $0x8] sm:$0xf]
      %v1024 = vld [vmem:[%s396 + $0xc] sm:$0xf]
      %v1025 = vld [vmem:[%s396 + $0x10] sm:$0xf]
      %v1026 = vld [vmem:[%s396 + $0x14] sm:$0xf]
      %v1027 = vld [vmem:[%s396 + $0x18] sm:$0xf]
      %v1028 = vld [vmem:[%s396 + $0x1c] sm:$0xf]
      %v1029 = vld [vmem:[%s396 + $0x20] sm:$0xf]
      %v1030 = vld [vmem:[%s391 + $0x24] sm:$0xf]
      %v1031 = vld [vmem:[%s391 + $0x28] sm:$0x1]
      %v1032 = vld [vmem:[%s396 + $0x24] sm:$0xf]
      %v1033 = vld [vmem:[%s396 + $0x28] sm:$0x1]
      %v1043 = vunpack.c.l.b16 %v1012
      %v1044 = vunpack.c.l.b16 %v1013
      %v1045 = vunpack.c.l.b16 %v1014
      %v1046 = vunpack.c.l.b16 %v1015
      %v1047 = vunpack.c.l.b16 %v1016
      %v1048 = vunpack.c.l.b16 %v1017
      %v1049 = vunpack.c.l.b16 %v1018
      %v1050 = vunpack.c.l.b16 %v1019
      %v1051 = vunpack.c.l.b16 %v1020
      %v1052 = vpack.c.b16 %v1044, %v1043
      %v1053 = vpack.c.b16 %v1046, %v1045
      %v1054 = vpack.c.b16 %v1048, %v1047
      %v1055 = vpack.c.b16 %v1050, %v1049
      %v1056 = vpack.c.b16 %v1051, %v1051
      %v1066 = vunpack.c.l.b16 %v1021
      %v1067 = vunpack.c.l.b16 %v1022
      %v1068 = vunpack.c.l.b16 %v1023
      %v1069 = vunpack.c.l.b16 %v1024
      %v1070 = vunpack.c.l.b16 %v1025
      %v1071 = vunpack.c.l.b16 %v1026
      %v1072 = vunpack.c.l.b16 %v1027
      %v1073 = vunpack.c.l.b16 %v1028
      %v1074 = vunpack.c.l.b16 %v1029
      %v1075 = vpack.c.b16 %v1067, %v1066
      %v1076 = vpack.c.b16 %v1069, %v1068
      %v1077 = vpack.c.b16 %v1071, %v1070
      %v1078 = vpack.c.b16 %v1073, %v1072
      %v1079 = vpack.c.b16 %v1074, %v1074
      %1080 = vrot.lane.b32.xlu0 %v1075, 40
      %v1081 = vpop.permute.xlu0 %1080
      %1082 = vrot.lane.b32.xlu0 %v1076, 40
      %v1083 = vpop.permute.xlu0 %1082
      %1084 = vrot.lane.b32.xlu0 %v1077, 40
      %v1085 = vpop.permute.xlu0 %1084
      %1086 = vrot.lane.b32.xlu0 %v1078, 40
      %v1087 = vpop.permute.xlu0 %1086
      %1088 = vrot.lane.b32.xlu0 %v1079, 40
      %v1089 = vpop.permute.xlu0 %1088
      %v1092 = vunpack.c.l.b16 %v1030
      %v1093 = vunpack.c.l.b16 %v1031
      %v1094 = vpack.c.b16 %v1045, %v1044
      %v1095 = vpack.c.b16 %v1047, %v1046
      %v1096 = vpack.c.b16 %v1049, %v1048
      %v1097 = vpack.c.b16 %v1051, %v1050
      %v1098 = vpack.c.b16 %v1093, %v1092
      %v1100 = vshrl.u32 %v1094, 16
      %v1102 = vshll.u32 %v1094, 16
      %v1104 = vrot.slane %v1102, 1
      %v1105 = vor.u32 %v1100, %v1104
      %v1107 = vshll.u32 %v1095, 16
      %v1109 = vrot.slane %v1107, 1
      %v1110 = vsel %vm694, %v1105, %v1109
      %v1111 = vshrl.u32 %v1095, 16
      %v1113 = vor.u32 %v1111, %v1109
      %v1115 = vshll.u32 %v1096, 16
      %v1117 = vrot.slane %v1115, 1
      %v1118 = vsel %vm694, %v1113, %v1117
      %v1119 = vshrl.u32 %v1096, 16
      %v1121 = vor.u32 %v1119, %v1117
      %v1123 = vshll.u32 %v1097, 16
      %v1125 = vrot.slane %v1123, 1
      %v1126 = vsel %vm694, %v1121, %v1125
      %v1127 = vshrl.u32 %v1097, 16
      %v1129 = vor.u32 %v1127, %v1125
      %v1131 = vshll.u32 %v1098, 16
      %v1133 = vrot.slane %v1131, 1
      %v1134 = vsel %vm694, %v1129, %v1133
      %v1135 = vshrl.u32 %v1098, 16
      %v1137 = vor.u32 %v1135, %v1133
      %1138 = vrot.lane.b32.xlu0 %v1110, 80
      %v1139 = vpop.permute.xlu0 %1138
      %1140 = vrot.lane.b32.xlu0 %v1118, 80
      %v1141 = vpop.permute.xlu0 %1140
      %1142 = vrot.lane.b32.xlu0 %v1126, 80
      %v1143 = vpop.permute.xlu0 %1142
      %1144 = vrot.lane.b32.xlu0 %v1134, 80
      %v1145 = vpop.permute.xlu0 %1144
      %1146 = vrot.lane.b32.xlu0 %v1137, 80
      %v1147 = vpop.permute.xlu0 %1146
      %v1150 = vunpack.c.l.b16 %v1032
      %v1151 = vunpack.c.l.b16 %v1033
      %v1152 = vpack.c.b16 %v1068, %v1067
      %v1153 = vpack.c.b16 %v1070, %v1069
      %v1154 = vpack.c.b16 %v1072, %v1071
      %v1155 = vpack.c.b16 %v1074, %v1073
      %v1156 = vpack.c.b16 %v1151, %v1150
      %v1158 = vshrl.u32 %v1152, 16
      %v1160 = vshll.u32 %v1152, 16
      %v1162 = vrot.slane %v1160, 1
      %v1163 = vor.u32 %v1158, %v1162
      %v1165 = vshll.u32 %v1153, 16
      %v1167 = vrot.slane %v1165, 1
      %v1168 = vsel %vm694, %v1163, %v1167
      %v1169 = vshrl.u32 %v1153, 16
      %v1171 = vor.u32 %v1169, %v1167
      %v1173 = vshll.u32 %v1154, 16
      %v1175 = vrot.slane %v1173, 1
      %v1176 = vsel %vm694, %v1171, %v1175
      %v1177 = vshrl.u32 %v1154, 16
      %v1179 = vor.u32 %v1177, %v1175
      %v1181 = vshll.u32 %v1155, 16
      %v1183 = vrot.slane %v1181, 1
      %v1184 = vsel %vm694, %v1179, %v1183
      %v1185 = vshrl.u32 %v1155, 16
      %v1187 = vor.u32 %v1185, %v1183
      %v1189 = vshll.u32 %v1156, 16
      %v1191 = vrot.slane %v1189, 1
      %v1192 = vsel %vm694, %v1187, %v1191
      %v1193 = vshrl.u32 %v1156, 16
      %v1195 = vor.u32 %v1193, %v1191
      %1196 = vrot.lane.b32.xlu0 %v1168, 120
      %v1197 = vpop.permute.xlu0 %1196
      %1198 = vrot.lane.b32.xlu0 %v1176, 120
      %v1199 = vpop.permute.xlu0 %1198
      %1200 = vrot.lane.b32.xlu0 %v1184, 120
      %v1201 = vpop.permute.xlu0 %1200
      %1202 = vrot.lane.b32.xlu0 %v1192, 120
      %v1203 = vpop.permute.xlu0 %1202
      %1204 = vrot.lane.b32.xlu0 %v1195, 120
      %v1205 = vpop.permute.xlu0 %1204
      %v1208 = vsel %vm492, %v1052, %v1081
      %v1211 = vsel %vm492, %v1053, %v1083
      %v1214 = vsel %vm492, %v1054, %v1085
      %v1217 = vsel %vm492, %v1055, %v1087
      %v1220 = vsel %vm492, %v1056, %v1089
      %v1222 = vsel %vm552, %v1208, %v1139
      %v1224 = vsel %vm552, %v1211, %v1141
      %v1226 = vsel %vm552, %v1214, %v1143
      %v1228 = vsel %vm552, %v1217, %v1145
      %v1230 = vsel %vm552, %v1220, %v1147
      %v1232 = vsel %vm817, %v1222, %v1197
      %v1235 = vsel %vm817, %v1224, %v1199
      %v1238 = vsel %vm817, %v1226, %v1201
      %v1241 = vsel %vm817, %v1228, %v1203
      %v1244 = vsel %vm817, %v1230, %v1205
      %v1246 = vld [vmem:[%s4] sm:$0xf]
      %v1247 = vld [vmem:[%s4 + $0x4] sm:$0xf]
      %v1248 = vld [vmem:[%s4 + $0x8] sm:$0xf]
      %v1249 = vld [vmem:[%s4 + $0xc] sm:$0xf]
      %v1250 = vld [vmem:[%s4 + $0x10] sm:$0xf]
      %v1251 = vld [vmem:[%s4 + $0x14] sm:$0xf]
      %v1252 = vld [vmem:[%s4 + $0x18] sm:$0xf]
      %v1253 = vld [vmem:[%s4 + $0x1c] sm:$0xf]
      %v1254 = vld [vmem:[%s4 + $0x20] sm:$0xf]
      %v1255 = vld [vmem:[%s4 + $0x24] sm:$0xf]
      %v1256 = vld [vmem:[%s4 + $0x28] sm:$0xf]
      %v1257 = vld [vmem:[%s4 + $0x2c] sm:$0xf]
      %v1258 = vld [vmem:[%s4 + $0x30] sm:$0xf]
      %v1259 = vld [vmem:[%s4 + $0x34] sm:$0xf]
      %v1260 = vld [vmem:[%s4 + $0x38] sm:$0xf]
      %v1261 = vld [vmem:[%s4 + $0x3c] sm:$0xf]
      %v1262 = vld [vmem:[%s4 + $0x40] sm:$0xf]
      %v1263 = vld [vmem:[%s4 + $0x44] sm:$0xf]
      %v1264 = vld [vmem:[%s4 + $0x48] sm:$0xf]
      %v1265 = vld [vmem:[%s4 + $0x4c] sm:$0xf]
      %v1266 = vld [vmem:[%s6] sm:$0x1]
      %v1268 = vperm.slane %v1266, 0
      %v1290 = vunpack.c.l.b16 %v1246
      %v1291 = vunpack.c.l.b16 %v1247
      %v1292 = vunpack.c.l.b16 %v1248
      %v1293 = vunpack.c.l.b16 %v1249
      %v1294 = vunpack.c.l.b16 %v1250
      %v1295 = vunpack.c.l.b16 %v1251
      %v1296 = vunpack.c.l.b16 %v1252
      %v1297 = vunpack.c.l.b16 %v1253
      %v1298 = vunpack.c.l.b16 %v1254
      %v1299 = vunpack.c.l.b16 %v1255
      %v1300 = vunpack.c.l.b16 %v1256
      %v1301 = vunpack.c.l.b16 %v1257
      %v1302 = vunpack.c.l.b16 %v1258
      %v1303 = vunpack.c.l.b16 %v1259
      %v1304 = vunpack.c.l.b16 %v1260
      %v1305 = vunpack.c.l.b16 %v1261
      %v1306 = vunpack.c.l.b16 %v1262
      %v1307 = vunpack.c.l.b16 %v1263
      %v1308 = vunpack.c.l.b16 %v1264
      %v1309 = vunpack.c.l.b16 %v1265
      %v1310 = vpack.c.b16 %v1291, %v1290
      %v1311 = vpack.c.b16 %v1293, %v1292
      %v1312 = vpack.c.b16 %v1295, %v1294
      %v1313 = vpack.c.b16 %v1297, %v1296
      %v1314 = vpack.c.b16 %v1299, %v1298
      %v1315 = vpack.c.b16 %v1301, %v1300
      %v1316 = vpack.c.b16 %v1303, %v1302
      %v1317 = vpack.c.b16 %v1305, %v1304
      %v1318 = vpack.c.b16 %v1307, %v1306
      %v1319 = vpack.c.b16 %v1309, %v1308
      %v1330 = vsel %vm917, %v1197, 0
      %v1332 = vsel %vm917, %v1199, 0
      %v1334 = vsel %vm917, %v1201, 0
      %v1336 = vsel %vm917, %v1203, 0
      %v1338 = vsel %vm917, %v1205, 0
      %1340 = vmatpush.bf16.msra.mxu0 %v1317
      %1341 = vmatpush.bf16.msra.mxu0 %v1316
      %1342 = vmatpush.bf16.msra.mxu0 %v1315
      %1343 = vmatpush.bf16.msra.mxu0 %v1314
      %1344 = vmatpush.bf16.msra.mxu0 %v1313
      %1345 = vmatpush.bf16.msra.mxu0 %v1312
      %1346 = vmatpush.bf16.msra.mxu0 %v1311
      %1347 = vmatpush.bf16.msra.mxu0 %v1310
      %1348 = vmatmul.bf16.gmra.mxu0 %v1232
      %v1349 = vpop.f32.mrf.mxu0
      %v1350 = vadd.f32 %v1268, %v1349
      %v1351 = vpop.f32.mrf.mxu0
      %v1352 = vadd.f32 %v1268, %v1351
      %1353 = vmatmul.bf16.gmra.mxu0 %v1235
      %v1354 = vpop.f32.mrf.mxu0
      %v1355 = vadd.f32 %v1268, %v1354
      %v1356 = vpop.f32.mrf.mxu0
      %v1357 = vadd.f32 %v1268, %v1356
      %1358 = vmatmul.bf16.gmra.mxu0 %v1238
      %v1359 = vpop.f32.mrf.mxu0
      %v1360 = vadd.f32 %v1268, %v1359
      %v1361 = vpop.f32.mrf.mxu0
      %v1362 = vadd.f32 %v1268, %v1361
      %1363 = vmatmul.bf16.gmra.mxu0 %v1241
      %v1364 = vpop.f32.mrf.mxu0
      %v1365 = vadd.f32 %v1268, %v1364
      %v1366 = vpop.f32.mrf.mxu0
      %v1367 = vadd.f32 %v1268, %v1366
      %1368 = vmatmul.bf16.gmra.mxu0 %v1244
      %v1369 = vpop.f32.mrf.mxu0
      %v1370 = vadd.f32 %v1268, %v1369
      %v1371 = vpop.f32.mrf.mxu0
      %1372 = vdwg.mxu0
      %1373 = vmatpush.bf16.msra.mxu0 0
      %1374 = vmatpush.bf16.msra.mxu0 0
      %1375 = vmatpush.bf16.msra.mxu0 0
      %1376 = vmatpush.bf16.msra.mxu0 0
      %1377 = vmatpush.bf16.msra.mxu0 0
      %1378 = vmatpush.bf16.msra.mxu0 0
      %1379 = vmatpush.bf16.msra.mxu0 %v1319
      %1380 = vmatpush.bf16.msra.mxu0 %v1318
      %1381 = vmatmul.bf16.gmra.mxu0 %v1330
      %v1382 = vpop.f32.mrf.mxu0
      %v1383 = vadd.f32 %v1350, %v1382
      %v1384 = vpop.f32.mrf.mxu0
      %v1385 = vadd.f32 %v1352, %v1384
      %1386 = vmatmul.bf16.gmra.mxu0 %v1332
      %v1387 = vpop.f32.mrf.mxu0
      %v1388 = vadd.f32 %v1355, %v1387
      %v1389 = vpop.f32.mrf.mxu0
      %v1390 = vadd.f32 %v1357, %v1389
      %1391 = vmatmul.bf16.gmra.mxu0 %v1334
      %v1392 = vpop.f32.mrf.mxu0
      %v1393 = vadd.f32 %v1360, %v1392
      %v1394 = vpop.f32.mrf.mxu0
      %v1395 = vadd.f32 %v1362, %v1394
      %1396 = vmatmul.bf16.gmra.mxu0 %v1336
      %v1397 = vpop.f32.mrf.mxu0
      %v1398 = vadd.f32 %v1365, %v1397
      %v1399 = vpop.f32.mrf.mxu0
      %v1400 = vadd.f32 %v1367, %v1399
      %1401 = vmatmul.bf16.gmra.mxu0 %v1338
      %v1402 = vpop.f32.mrf.mxu0
      %v1403 = vadd.f32 %v1370, %v1402
      %v1404 = vpop.f32.mrf.mxu0
      %1405 = vdwg.mxu0
      %v1406 = vpack.c.bf16 %v1383, %v1383
      %v1407 = vpack.c.bf16 %v1385, %v1385
      %v1408 = vpack.c.bf16 %v1388, %v1388
      %v1409 = vpack.c.bf16 %v1390, %v1390
      %v1410 = vpack.c.bf16 %v1393, %v1393
      %v1411 = vpack.c.bf16 %v1395, %v1395
      %v1412 = vpack.c.bf16 %v1398, %v1398
      %v1413 = vpack.c.bf16 %v1400, %v1400
      %v1414 = vpack.c.bf16 %v1403, %v1403
      %1415 = vst.msk [vmem:[%s411] sm:$0xf] %vm605, %v1406
      %1416 = vst.msk [vmem:[%s411 + $0x4] sm:$0xf] %vm605, %v1407
      %1417 = vst.msk [vmem:[%s411 + $0x8] sm:$0xf] %vm605, %v1408
      %1418 = vst.msk [vmem:[%s411 + $0xc] sm:$0xf] %vm605, %v1409
      %1419 = vst.msk [vmem:[%s411 + $0x10] sm:$0xf] %vm605, %v1410
      %1420 = vst.msk [vmem:[%s411 + $0x14] sm:$0xf] %vm605, %v1411
      %1421 = vst.msk [vmem:[%s411 + $0x18] sm:$0xf] %vm605, %v1412
      %1422 = vst.msk [vmem:[%s411 + $0x1c] sm:$0xf] %vm605, %v1413
      %1423 = vst.msk [vmem:[%s411 + $0x20] sm:$0xf] %vm605, %v1414
      %v1424 = vld [vmem:[%s391] sm:$0xf]
      %v1425 = vld [vmem:[%s391 + $0x4] sm:$0xf]
      %v1426 = vld [vmem:[%s391 + $0x8] sm:$0xf]
      %v1427 = vld [vmem:[%s391 + $0xc] sm:$0xf]
      %v1428 = vld [vmem:[%s391 + $0x10] sm:$0xf]
      %v1429 = vld [vmem:[%s391 + $0x14] sm:$0xf]
      %v1430 = vld [vmem:[%s391 + $0x18] sm:$0xf]
      %v1431 = vld [vmem:[%s391 + $0x1c] sm:$0xf]
      %v1432 = vld [vmem:[%s391 + $0x20] sm:$0xf]
      %v1433 = vld [vmem:[%s396] sm:$0xf]
      %v1434 = vld [vmem:[%s396 + $0x4] sm:$0xf]
      %v1435 = vld [vmem:[%s396 + $0x8] sm:$0xf]
      %v1436 = vld [vmem:[%s396 + $0xc] sm:$0xf]
      %v1437 = vld [vmem:[%s396 + $0x10] sm:$0xf]
      %v1438 = vld [vmem:[%s396 + $0x14] sm:$0xf]
      %v1439 = vld [vmem:[%s396 + $0x18] sm:$0xf]
      %v1440 = vld [vmem:[%s396 + $0x1c] sm:$0xf]
      %v1441 = vld [vmem:[%s396 + $0x20] sm:$0xf]
      %v1442 = vld [vmem:[%s391 + $0x24] sm:$0x1]
      %v1443 = vld [vmem:[%s396 + $0x24] sm:$0x1]
      %v1444 = vld [vmem:[%s391 + $0x24] sm:$0xf]
      %v1445 = vld [vmem:[%s391 + $0x28] sm:$0x1]
      %v1446 = vld [vmem:[%s396 + $0x24] sm:$0xf]
      %v1447 = vld [vmem:[%s396 + $0x28] sm:$0x1]
      %v1448 = vld [vmem:[%s391 + $0x4] sm:$0xe]
      %v1449 = vld [vmem:[%s396 + $0x4] sm:$0xe]
      %v1459 = vunpack.c.l.b16 %v1424
      %v1460 = vunpack.c.l.b16 %v1425
      %v1461 = vunpack.c.l.b16 %v1426
      %v1462 = vunpack.c.l.b16 %v1427
      %v1463 = vunpack.c.l.b16 %v1428
      %v1464 = vunpack.c.l.b16 %v1429
      %v1465 = vunpack.c.l.b16 %v1430
      %v1466 = vunpack.c.l.b16 %v1431
      %v1467 = vunpack.c.l.b16 %v1432
      %v1468 = vpack.c.b16 %v1460, %v1459
      %v1469 = vpack.c.b16 %v1462, %v1461
      %v1470 = vpack.c.b16 %v1464, %v1463
      %v1471 = vpack.c.b16 %v1466, %v1465
      %v1472 = vpack.c.b16 %v1467, %v1467
      %v1482 = vunpack.c.l.b16 %v1433
      %v1483 = vunpack.c.l.b16 %v1434
      %v1484 = vunpack.c.l.b16 %v1435
      %v1485 = vunpack.c.l.b16 %v1436
      %v1486 = vunpack.c.l.b16 %v1437
      %v1487 = vunpack.c.l.b16 %v1438
      %v1488 = vunpack.c.l.b16 %v1439
      %v1489 = vunpack.c.l.b16 %v1440
      %v1490 = vunpack.c.l.b16 %v1441
      %v1491 = vpack.c.b16 %v1483, %v1482
      %v1492 = vpack.c.b16 %v1485, %v1484
      %v1493 = vpack.c.b16 %v1487, %v1486
      %v1494 = vpack.c.b16 %v1489, %v1488
      %v1495 = vpack.c.b16 %v1490, %v1490
      %1496 = vrot.lane.b32.xlu0 %v1491, 40
      %v1497 = vpop.permute.xlu0 %1496
      %1498 = vrot.lane.b32.xlu0 %v1492, 40
      %v1499 = vpop.permute.xlu0 %1498
      %1500 = vrot.lane.b32.xlu0 %v1493, 40
      %v1501 = vpop.permute.xlu0 %1500
      %1502 = vrot.lane.b32.xlu0 %v1494, 40
      %v1503 = vpop.permute.xlu0 %1502
      %1504 = vrot.lane.b32.xlu0 %v1495, 40
      %v1505 = vpop.permute.xlu0 %1504
      %v1507 = vunpack.c.l.b16 %v1442
      %v1508 = vpack.c.b16 %v1507, %v1467
      %v1510 = vshrl.u32 %v1468, 16
      %v1512 = vshll.u32 %v1468, 16
      %v1514 = vrot.slane %v1512, 1
      %v1515 = vor.u32 %v1510, %v1514
      %v1517 = vshll.u32 %v1469, 16
      %v1519 = vrot.slane %v1517, 1
      %v1520 = vsel %vm694, %v1515, %v1519
      %v1521 = vshrl.u32 %v1469, 16
      %v1523 = vor.u32 %v1521, %v1519
      %v1525 = vshll.u32 %v1470, 16
      %v1527 = vrot.slane %v1525, 1
      %v1528 = vsel %vm694, %v1523, %v1527
      %v1529 = vshrl.u32 %v1470, 16
      %v1531 = vor.u32 %v1529, %v1527
      %v1533 = vshll.u32 %v1471, 16
      %v1535 = vrot.slane %v1533, 1
      %v1536 = vsel %vm694, %v1531, %v1535
      %v1537 = vshrl.u32 %v1471, 16
      %v1539 = vor.u32 %v1537, %v1535
      %v1541 = vshll.u32 %v1508, 16
      %v1543 = vrot.slane %v1541, 1
      %v1544 = vsel %vm694, %v1539, %v1543
      %v1545 = vshrl.u32 %v1508, 16
      %v1547 = vor.u32 %v1545, %v1543
      %1548 = vrot.lane.b32.xlu0 %v1520, 80
      %v1549 = vpop.permute.xlu0 %1548
      %1550 = vrot.lane.b32.xlu0 %v1528, 80
      %v1551 = vpop.permute.xlu0 %1550
      %1552 = vrot.lane.b32.xlu0 %v1536, 80
      %v1553 = vpop.permute.xlu0 %1552
      %1554 = vrot.lane.b32.xlu0 %v1544, 80
      %v1555 = vpop.permute.xlu0 %1554
      %1556 = vrot.lane.b32.xlu0 %v1547, 80
      %v1557 = vpop.permute.xlu0 %1556
      %v1559 = vunpack.c.l.b16 %v1443
      %v1560 = vpack.c.b16 %v1559, %v1490
      %v1562 = vshrl.u32 %v1491, 16
      %v1564 = vshll.u32 %v1491, 16
      %v1566 = vrot.slane %v1564, 1
      %v1567 = vor.u32 %v1562, %v1566
      %v1569 = vshll.u32 %v1492, 16
      %v1571 = vrot.slane %v1569, 1
      %v1572 = vsel %vm694, %v1567, %v1571
      %v1573 = vshrl.u32 %v1492, 16
      %v1575 = vor.u32 %v1573, %v1571
      %v1577 = vshll.u32 %v1493, 16
      %v1579 = vrot.slane %v1577, 1
      %v1580 = vsel %vm694, %v1575, %v1579
      %v1581 = vshrl.u32 %v1493, 16
      %v1583 = vor.u32 %v1581, %v1579
      %v1585 = vshll.u32 %v1494, 16
      %v1587 = vrot.slane %v1585, 1
      %v1588 = vsel %vm694, %v1583, %v1587
      %v1589 = vshrl.u32 %v1494, 16
      %v1591 = vor.u32 %v1589, %v1587
      %v1593 = vshll.u32 %v1560, 16
      %v1595 = vrot.slane %v1593, 1
      %v1596 = vsel %vm694, %v1591, %v1595
      %v1597 = vshrl.u32 %v1560, 16
      %v1599 = vor.u32 %v1597, %v1595
      %1600 = vrot.lane.b32.xlu0 %v1572, 120
      %v1601 = vpop.permute.xlu0 %1600
      %1602 = vrot.lane.b32.xlu0 %v1580, 120
      %v1603 = vpop.permute.xlu0 %1602
      %1604 = vrot.lane.b32.xlu0 %v1588, 120
      %v1605 = vpop.permute.xlu0 %1604
      %1606 = vrot.lane.b32.xlu0 %v1596, 120
      %v1607 = vpop.permute.xlu0 %1606
      %1608 = vrot.lane.b32.xlu0 %v1599, 120
      %v1609 = vpop.permute.xlu0 %1608
      %v1612 = vunpack.c.l.b16 %v1444
      %v1613 = vunpack.c.l.b16 %v1445
      %v1614 = vpack.c.b16 %v1461, %v1460
      %v1615 = vpack.c.b16 %v1463, %v1462
      %v1616 = vpack.c.b16 %v1465, %v1464
      %v1617 = vpack.c.b16 %v1467, %v1466
      %v1618 = vpack.c.b16 %v1613, %v1612
      %v1620 = vshrl.u32 %v1614, 16
      %v1622 = vshll.u32 %v1614, 16
      %v1624 = vrot.slane %v1622, 1
      %v1625 = vor.u32 %v1620, %v1624
      %v1627 = vshll.u32 %v1615, 16
      %v1629 = vrot.slane %v1627, 1
      %v1630 = vsel %vm694, %v1625, %v1629
      %v1631 = vshrl.u32 %v1615, 16
      %v1633 = vor.u32 %v1631, %v1629
      %v1635 = vshll.u32 %v1616, 16
      %v1637 = vrot.slane %v1635, 1
      %v1638 = vsel %vm694, %v1633, %v1637
      %v1639 = vshrl.u32 %v1616, 16
      %v1641 = vor.u32 %v1639, %v1637
      %v1643 = vshll.u32 %v1617, 16
      %v1645 = vrot.slane %v1643, 1
      %v1646 = vsel %vm694, %v1641, %v1645
      %v1647 = vshrl.u32 %v1617, 16
      %v1649 = vor.u32 %v1647, %v1645
      %v1651 = vshll.u32 %v1618, 16
      %v1653 = vrot.slane %v1651, 1
      %v1654 = vsel %vm694, %v1649, %v1653
      %v1655 = vshrl.u32 %v1618, 16
      %v1657 = vor.u32 %v1655, %v1653
      %1658 = vrot.lane.b32.xlu0 %v1630, 32
      %v1659 = vpop.permute.xlu0 %1658
      %1660 = vrot.lane.b32.xlu0 %v1638, 32
      %v1661 = vpop.permute.xlu0 %1660
      %1662 = vrot.lane.b32.xlu0 %v1646, 32
      %v1663 = vpop.permute.xlu0 %1662
      %1664 = vrot.lane.b32.xlu0 %v1654, 32
      %v1665 = vpop.permute.xlu0 %1664
      %1666 = vrot.lane.b32.xlu0 %v1657, 32
      %v1667 = vpop.permute.xlu0 %1666
      %v1670 = vunpack.c.l.b16 %v1446
      %v1671 = vunpack.c.l.b16 %v1447
      %v1672 = vpack.c.b16 %v1484, %v1483
      %v1673 = vpack.c.b16 %v1486, %v1485
      %v1674 = vpack.c.b16 %v1488, %v1487
      %v1675 = vpack.c.b16 %v1490, %v1489
      %v1676 = vpack.c.b16 %v1671, %v1670
      %v1678 = vshrl.u32 %v1672, 16
      %v1680 = vshll.u32 %v1672, 16
      %v1682 = vrot.slane %v1680, 1
      %v1683 = vor.u32 %v1678, %v1682
      %v1685 = vshll.u32 %v1673, 16
      %v1687 = vrot.slane %v1685, 1
      %v1688 = vsel %vm694, %v1683, %v1687
      %v1689 = vshrl.u32 %v1673, 16
      %v1691 = vor.u32 %v1689, %v1687
      %v1693 = vshll.u32 %v1674, 16
      %v1695 = vrot.slane %v1693, 1
      %v1696 = vsel %vm694, %v1691, %v1695
      %v1697 = vshrl.u32 %v1674, 16
      %v1699 = vor.u32 %v1697, %v1695
      %v1701 = vshll.u32 %v1675, 16
      %v1703 = vrot.slane %v1701, 1
      %v1704 = vsel %vm694, %v1699, %v1703
      %v1705 = vshrl.u32 %v1675, 16
      %v1707 = vor.u32 %v1705, %v1703
      %v1709 = vshll.u32 %v1676, 16
      %v1711 = vrot.slane %v1709, 1
      %v1712 = vsel %vm694, %v1707, %v1711
      %v1713 = vshrl.u32 %v1676, 16
      %v1715 = vor.u32 %v1713, %v1711
      %1716 = vrot.lane.b32.xlu0 %v1688, 72
      %v1717 = vpop.permute.xlu0 %1716
      %1718 = vrot.lane.b32.xlu0 %v1696, 72
      %v1719 = vpop.permute.xlu0 %1718
      %1720 = vrot.lane.b32.xlu0 %v1704, 72
      %v1721 = vpop.permute.xlu0 %1720
      %1722 = vrot.lane.b32.xlu0 %v1712, 72
      %v1723 = vpop.permute.xlu0 %1722
      %1724 = vrot.lane.b32.xlu0 %v1715, 72
      %v1725 = vpop.permute.xlu0 %1724
      %v1727 = vunpack.c.l.b16 %v1448
      %v1728 = vpack.c.b16 %v1461, %v1727
      %vm1729 = vcmask 1046528
      %v1730 = vrot.slane %v1728, 1
      %v1731 = vrot.slane %v1615, 1
      %v1732 = vsel %vm1729, %v1730, %v1731
      %v1733 = vrot.slane %v1616, 1
      %v1734 = vsel %vm1729, %v1731, %v1733
      %v1735 = vrot.slane %v1617, 1
      %v1736 = vsel %vm1729, %v1733, %v1735
      %v1737 = vrot.slane %v1618, 1
      %v1738 = vsel %vm1729, %v1735, %v1737
      %1739 = vrot.lane.b32.xlu0 %v1732, 112
      %v1740 = vpop.permute.xlu0 %1739
      %1741 = vrot.lane.b32.xlu0 %v1734, 112
      %v1742 = vpop.permute.xlu0 %1741
      %1743 = vrot.lane.b32.xlu0 %v1736, 112
      %v1744 = vpop.permute.xlu0 %1743
      %1745 = vrot.lane.b32.xlu0 %v1738, 112
      %v1746 = vpop.permute.xlu0 %1745
      %1747 = vrot.lane.b32.xlu0 %v1737, 112
      %v1748 = vpop.permute.xlu0 %1747
      %v1750 = vunpack.c.l.b16 %v1449
      %v1751 = vpack.c.b16 %v1484, %v1750
      %v1752 = vrot.slane %v1751, 1
      %v1753 = vrot.slane %v1673, 1
      %v1754 = vsel %vm1729, %v1752, %v1753
      %v1755 = vrot.slane %v1674, 1
      %v1756 = vsel %vm1729, %v1753, %v1755
      %v1757 = vrot.slane %v1675, 1
      %v1758 = vsel %vm1729, %v1755, %v1757
      %v1759 = vrot.slane %v1676, 1
      %v1760 = vsel %vm1729, %v1757, %v1759
      %1761 = vrot.lane.b32.xlu0 %v1754, 24
      %v1762 = vpop.permute.xlu0 %1761
      %1763 = vrot.lane.b32.xlu0 %v1756, 24
      %v1764 = vpop.permute.xlu0 %1763
      %1765 = vrot.lane.b32.xlu0 %v1758, 24
      %v1766 = vpop.permute.xlu0 %1765
      %1767 = vrot.lane.b32.xlu0 %v1760, 24
      %v1768 = vpop.permute.xlu0 %1767
      %1769 = vrot.lane.b32.xlu0 %v1759, 24
      %v1770 = vpop.permute.xlu0 %1769
      %v1772 = vsel %vm492, %v1468, %v1497
      %v1774 = vsel %vm492, %v1469, %v1499
      %v1776 = vsel %vm492, %v1470, %v1501
      %v1778 = vsel %vm492, %v1471, %v1503
      %v1781 = vsel %vm492, %v1472, %v1505
      %v1783 = vsel %vm552, %v1772, %v1549
      %v1785 = vsel %vm552, %v1774, %v1551
      %v1787 = vsel %vm552, %v1776, %v1553
      %v1789 = vsel %vm552, %v1778, %v1555
      %v1791 = vsel %vm552, %v1781, %v1557
      %v1793 = vsel %vm817, %v1783, %v1601
      %v1796 = vsel %vm817, %v1785, %v1603
      %v1799 = vsel %vm817, %v1787, %v1605
      %v1802 = vsel %vm817, %v1789, %v1607
      %v1805 = vsel %vm817, %v1791, %v1609
      %v1808 = vsel %vm917, %v1601, %v1659
      %v1810 = vsel %vm917, %v1603, %v1661
      %v1812 = vsel %vm917, %v1605, %v1663
      %v1814 = vsel %vm917, %v1607, %v1665
      %v1816 = vsel %vm917, %v1609, %v1667
      %vm1817 = vcmask 588800
      %v1819 = vsel %vm1817, %v1808, %v1717
      %v1821 = vsel %vm1817, %v1810, %v1719
      %v1823 = vsel %vm1817, %v1812, %v1721
      %v1825 = vsel %vm1817, %v1814, %v1723
      %v1827 = vsel %vm1817, %v1816, %v1725
      %vm1828 = vcmask 916480
      %v1830 = vsel %vm1828, %v1819, %v1740
      %v1833 = vsel %vm1828, %v1821, %v1742
      %v1836 = vsel %vm1828, %v1823, %v1744
      %v1839 = vsel %vm1828, %v1825, %v1746
      %v1842 = vsel %vm1828, %v1827, %v1748
      %vm1844 = vcmask 195584
      %v1846 = vsel %vm1844, %v1740, %v1762
      %v1848 = vsel %vm1844, %v1742, %v1764
      %v1850 = vsel %vm1844, %v1744, %v1766
      %v1852 = vsel %vm1844, %v1746, %v1768
      %v1854 = vsel %vm1844, %v1748, %v1770
      %v1855 = vld [vmem:[%s5] sm:$0xf]
      %v1856 = vld [vmem:[%s5 + $0x4] sm:$0xf]
      %v1857 = vld [vmem:[%s5 + $0x8] sm:$0xf]
      %v1858 = vld [vmem:[%s5 + $0xc] sm:$0xf]
      %v1859 = vld [vmem:[%s5 + $0x10] sm:$0xf]
      %v1860 = vld [vmem:[%s5 + $0x14] sm:$0xf]
      %v1861 = vld [vmem:[%s5 + $0x18] sm:$0xf]
      %v1862 = vld [vmem:[%s5 + $0x1c] sm:$0xf]
      %v1863 = vld [vmem:[%s5 + $0x20] sm:$0xf]
      %v1864 = vld [vmem:[%s5 + $0x24] sm:$0xf]
      %v1865 = vld [vmem:[%s5 + $0x28] sm:$0xf]
      %v1866 = vld [vmem:[%s5 + $0x2c] sm:$0xf]
      %v1867 = vld [vmem:[%s5 + $0x30] sm:$0xf]
      %v1868 = vld [vmem:[%s5 + $0x34] sm:$0xf]
      %v1869 = vld [vmem:[%s5 + $0x38] sm:$0xf]
      %v1870 = vld [vmem:[%s5 + $0x3c] sm:$0xf]
      %v1871 = vld [vmem:[%s5 + $0x40] sm:$0xf]
      %v1872 = vld [vmem:[%s5 + $0x44] sm:$0xf]
      %v1873 = vld [vmem:[%s5 + $0x48] sm:$0xf]
      %v1874 = vld [vmem:[%s5 + $0x4c] sm:$0xf]
      %v1875 = vld [vmem:[%s5 + $0x50] sm:$0xf]
      %v1876 = vld [vmem:[%s5 + $0x54] sm:$0xf]
      %v1877 = vld [vmem:[%s5 + $0x58] sm:$0xf]
      %v1878 = vld [vmem:[%s5 + $0x5c] sm:$0xf]
      %v1879 = vld [vmem:[%s5 + $0x60] sm:$0xf]
      %v1880 = vld [vmem:[%s5 + $0x64] sm:$0xf]
      %v1881 = vld [vmem:[%s5 + $0x68] sm:$0xf]
      %v1882 = vld [vmem:[%s5 + $0x6c] sm:$0xf]
      %v1883 = vld [vmem:[%s5 + $0x70] sm:$0xf]
      %v1884 = vld [vmem:[%s5 + $0x74] sm:$0xf]
      %v1885 = vld [vmem:[%s5 + $0x78] sm:$0xf]
      %v1886 = vld [vmem:[%s5 + $0x7c] sm:$0xf]
      %v1887 = vld [vmem:[%s5 + $0x80] sm:$0xf]
      %v1888 = vld [vmem:[%s5 + $0x84] sm:$0xf]
      %v1889 = vld [vmem:[%s5 + $0x88] sm:$0xf]
      %v1890 = vld [vmem:[%s5 + $0x8c] sm:$0xf]
      %v1891 = vld [vmem:[%s5 + $0x90] sm:$0xf]
      %v1892 = vld [vmem:[%s5 + $0x94] sm:$0xf]
      %v1893 = vld [vmem:[%s5 + $0x98] sm:$0xf]
      %v1894 = vld [vmem:[%s5 + $0x9c] sm:$0xf]
      %v1895 = vld [vmem:[%s6] sm:$0x1]
      %v1897 = vperm.slane %v1895, 0
      %v1939 = vunpack.c.l.b16 %v1855
      %v1940 = vunpack.c.l.b16 %v1856
      %v1941 = vunpack.c.l.b16 %v1857
      %v1942 = vunpack.c.l.b16 %v1858
      %v1943 = vunpack.c.l.b16 %v1859
      %v1944 = vunpack.c.l.b16 %v1860
      %v1945 = vunpack.c.l.b16 %v1861
      %v1946 = vunpack.c.l.b16 %v1862
      %v1947 = vunpack.c.l.b16 %v1863
      %v1948 = vunpack.c.l.b16 %v1864
      %v1949 = vunpack.c.l.b16 %v1865
      %v1950 = vunpack.c.l.b16 %v1866
      %v1951 = vunpack.c.l.b16 %v1867
      %v1952 = vunpack.c.l.b16 %v1868
      %v1953 = vunpack.c.l.b16 %v1869
      %v1954 = vunpack.c.l.b16 %v1870
      %v1955 = vunpack.c.l.b16 %v1871
      %v1956 = vunpack.c.l.b16 %v1872
      %v1957 = vunpack.c.l.b16 %v1873
      %v1958 = vunpack.c.l.b16 %v1874
      %v1959 = vunpack.c.l.b16 %v1875
      %v1960 = vunpack.c.l.b16 %v1876
      %v1961 = vunpack.c.l.b16 %v1877
      %v1962 = vunpack.c.l.b16 %v1878
      %v1963 = vunpack.c.l.b16 %v1879
      %v1964 = vunpack.c.l.b16 %v1880
      %v1965 = vunpack.c.l.b16 %v1881
      %v1966 = vunpack.c.l.b16 %v1882
      %v1967 = vunpack.c.l.b16 %v1883
      %v1968 = vunpack.c.l.b16 %v1884
      %v1969 = vunpack.c.l.b16 %v1885
      %v1970 = vunpack.c.l.b16 %v1886
      %v1971 = vunpack.c.l.b16 %v1887
      %v1972 = vunpack.c.l.b16 %v1888
      %v1973 = vunpack.c.l.b16 %v1889
      %v1974 = vunpack.c.l.b16 %v1890
      %v1975 = vunpack.c.l.b16 %v1891
      %v1976 = vunpack.c.l.b16 %v1892
      %v1977 = vunpack.c.l.b16 %v1893
      %v1978 = vunpack.c.l.b16 %v1894
      %v1979 = vpack.c.b16 %v1940, %v1939
      %v1980 = vpack.c.b16 %v1942, %v1941
      %v1981 = vpack.c.b16 %v1944, %v1943
      %v1982 = vpack.c.b16 %v1946, %v1945
      %v1983 = vpack.c.b16 %v1948, %v1947
      %v1984 = vpack.c.b16 %v1950, %v1949
      %v1985 = vpack.c.b16 %v1952, %v1951
      %v1986 = vpack.c.b16 %v1954, %v1953
      %v1987 = vpack.c.b16 %v1956, %v1955
      %v1988 = vpack.c.b16 %v1958, %v1957
      %v1989 = vpack.c.b16 %v1960, %v1959
      %v1990 = vpack.c.b16 %v1962, %v1961
      %v1991 = vpack.c.b16 %v1964, %v1963
      %v1992 = vpack.c.b16 %v1966, %v1965
      %v1993 = vpack.c.b16 %v1968, %v1967
      %v1994 = vpack.c.b16 %v1970, %v1969
      %v1995 = vpack.c.b16 %v1972, %v1971
      %v1996 = vpack.c.b16 %v1974, %v1973
      %v1997 = vpack.c.b16 %v1976, %v1975
      %v1998 = vpack.c.b16 %v1978, %v1977
      %vm2019 = vcmask 523264
      %v2020 = vsel %vm2019, %v1846, 0
      %v2022 = vsel %vm2019, %v1848, 0
      %v2024 = vsel %vm2019, %v1850, 0
      %v2026 = vsel %vm2019, %v1852, 0
      %v2028 = vsel %vm2019, %v1854, 0
      %2030 = vmatpush.bf16.msra.mxu0 %v1986
      %2031 = vmatpush.bf16.msra.mxu0 %v1985
      %2032 = vmatpush.bf16.msra.mxu0 %v1984
      %2033 = vmatpush.bf16.msra.mxu0 %v1983
      %2034 = vmatpush.bf16.msra.mxu0 %v1982
      %2035 = vmatpush.bf16.msra.mxu0 %v1981
      %2036 = vmatpush.bf16.msra.mxu0 %v1980
      %2037 = vmatpush.bf16.msra.mxu0 %v1979
      %2038 = vmatmul.bf16.gmra.mxu0 %v1793
      %v2039 = vpop.f32.mrf.mxu0
      %v2040 = vadd.f32 %v1897, %v2039
      %v2041 = vpop.f32.mrf.mxu0
      %v2042 = vadd.f32 %v1897, %v2041
      %2043 = vmatmul.bf16.gmra.mxu0 %v1796
      %v2044 = vpop.f32.mrf.mxu0
      %v2045 = vadd.f32 %v1897, %v2044
      %v2046 = vpop.f32.mrf.mxu0
      %v2047 = vadd.f32 %v1897, %v2046
      %2048 = vmatmul.bf16.gmra.mxu0 %v1799
      %v2049 = vpop.f32.mrf.mxu0
      %v2050 = vadd.f32 %v1897, %v2049
      %v2051 = vpop.f32.mrf.mxu0
      %v2052 = vadd.f32 %v1897, %v2051
      %2053 = vmatmul.bf16.gmra.mxu0 %v1802
      %v2054 = vpop.f32.mrf.mxu0
      %v2055 = vadd.f32 %v1897, %v2054
      %v2056 = vpop.f32.mrf.mxu0
      %v2057 = vadd.f32 %v1897, %v2056
      %2058 = vmatmul.bf16.gmra.mxu0 %v1805
      %v2059 = vpop.f32.mrf.mxu0
      %v2060 = vadd.f32 %v1897, %v2059
      %v2061 = vpop.f32.mrf.mxu0
      %2062 = vdwg.mxu0
      %2063 = vmatpush.bf16.msra.mxu0 %v1994
      %2064 = vmatpush.bf16.msra.mxu0 %v1993
      %2065 = vmatpush.bf16.msra.mxu0 %v1992
      %2066 = vmatpush.bf16.msra.mxu0 %v1991
      %2067 = vmatpush.bf16.msra.mxu0 %v1990
      %2068 = vmatpush.bf16.msra.mxu0 %v1989
      %2069 = vmatpush.bf16.msra.mxu0 %v1988
      %2070 = vmatpush.bf16.msra.mxu0 %v1987
      %2071 = vmatmul.bf16.gmra.mxu0 %v1830
      %v2072 = vpop.f32.mrf.mxu0
      %v2073 = vadd.f32 %v2040, %v2072
      %v2074 = vpop.f32.mrf.mxu0
      %v2075 = vadd.f32 %v2042, %v2074
      %2076 = vmatmul.bf16.gmra.mxu0 %v1833
      %v2077 = vpop.f32.mrf.mxu0
      %v2078 = vadd.f32 %v2045, %v2077
      %v2079 = vpop.f32.mrf.mxu0
      %v2080 = vadd.f32 %v2047, %v2079
      %2081 = vmatmul.bf16.gmra.mxu0 %v1836
      %v2082 = vpop.f32.mrf.mxu0
      %v2083 = vadd.f32 %v2050, %v2082
      %v2084 = vpop.f32.mrf.mxu0
      %v2085 = vadd.f32 %v2052, %v2084
      %2086 = vmatmul.bf16.gmra.mxu0 %v1839
      %v2087 = vpop.f32.mrf.mxu0
      %v2088 = vadd.f32 %v2055, %v2087
      %v2089 = vpop.f32.mrf.mxu0
      %v2090 = vadd.f32 %v2057, %v2089
      %2091 = vmatmul.bf16.gmra.mxu0 %v1842
      %v2092 = vpop.f32.mrf.mxu0
      %v2093 = vadd.f32 %v2060, %v2092
      %v2094 = vpop.f32.mrf.mxu0
      %2095 = vdwg.mxu0
      %2096 = vmatpush.bf16.msra.mxu0 0
      %2097 = vmatpush.bf16.msra.mxu0 0
      %2098 = vmatpush.bf16.msra.mxu0 0
      %2099 = vmatpush.bf16.msra.mxu0 0
      %2100 = vmatpush.bf16.msra.mxu0 %v1998
      %2101 = vmatpush.bf16.msra.mxu0 %v1997
      %2102 = vmatpush.bf16.msra.mxu0 %v1996
      %2103 = vmatpush.bf16.msra.mxu0 %v1995
      %2104 = vmatmul.bf16.gmra.mxu0 %v2020
      %v2105 = vpop.f32.mrf.mxu0
      %v2106 = vadd.f32 %v2073, %v2105
      %v2107 = vpop.f32.mrf.mxu0
      %v2108 = vadd.f32 %v2075, %v2107
      %2109 = vmatmul.bf16.gmra.mxu0 %v2022
      %v2110 = vpop.f32.mrf.mxu0
      %v2111 = vadd.f32 %v2078, %v2110
      %v2112 = vpop.f32.mrf.mxu0
      %v2113 = vadd.f32 %v2080, %v2112
      %2114 = vmatmul.bf16.gmra.mxu0 %v2024
      %v2115 = vpop.f32.mrf.mxu0
      %v2116 = vadd.f32 %v2083, %v2115
      %v2117 = vpop.f32.mrf.mxu0
      %v2118 = vadd.f32 %v2085, %v2117
      %2119 = vmatmul.bf16.gmra.mxu0 %v2026
      %v2120 = vpop.f32.mrf.mxu0
      %v2121 = vadd.f32 %v2088, %v2120
      %v2122 = vpop.f32.mrf.mxu0
      %v2123 = vadd.f32 %v2090, %v2122
      %2124 = vmatmul.bf16.gmra.mxu0 %v2028
      %v2125 = vpop.f32.mrf.mxu0
      %v2126 = vadd.f32 %v2093, %v2125
      %v2127 = vpop.f32.mrf.mxu0
      %2128 = vdwg.mxu0
      %v2129 = vpack.c.bf16 %v2106, %v2106
      %v2130 = vpack.c.bf16 %v2108, %v2108
      %v2131 = vpack.c.bf16 %v2111, %v2111
      %v2132 = vpack.c.bf16 %v2113, %v2113
      %v2133 = vpack.c.bf16 %v2116, %v2116
      %v2134 = vpack.c.bf16 %v2118, %v2118
      %v2135 = vpack.c.bf16 %v2121, %v2121
      %v2136 = vpack.c.bf16 %v2123, %v2123
      %v2137 = vpack.c.bf16 %v2126, %v2126
      %2138 = vst.msk [vmem:[%s416] sm:$0xf] %vm605, %v2129
      %2139 = vst.msk [vmem:[%s416 + $0x4] sm:$0xf] %vm605, %v2130
      %2140 = vst.msk [vmem:[%s416 + $0x8] sm:$0xf] %vm605, %v2131
      %2141 = vst.msk [vmem:[%s416 + $0xc] sm:$0xf] %vm605, %v2132
      %2142 = vst.msk [vmem:[%s416 + $0x10] sm:$0xf] %vm605, %v2133
      %2143 = vst.msk [vmem:[%s416 + $0x14] sm:$0xf] %vm605, %v2134
      %2144 = vst.msk [vmem:[%s416 + $0x18] sm:$0xf] %vm605, %v2135
      %2145 = vst.msk [vmem:[%s416 + $0x1c] sm:$0xf] %vm605, %v2136
      %2146 = vst.msk [vmem:[%s416 + $0x20] sm:$0xf] %vm605, %v2137
      %p2147 = scmp.lt.s32.totalorder %s22, 1
      %s2148 = scalar_select %p2147, %s22, 1
      %s2149 = smul.addr %s2148, 9
      %s2150 = smul.addr %s2149, 4
      %s2151 = scalar_lea.vmem %s7, %s2150
      %p2152 = scmp.lt.s32.totalorder %s22, 1
      %s2153 = scalar_select %p2152, %s22, 1
      %s2154 = smul.addr %s2153, 9
      %s2155 = smul.addr %s2154, 4
      %s2156 = scalar_lea.vmem %s8, %s2155
      %p2157 = scmp.lt.s32.totalorder %s22, 1
      %s2158 = scalar_select %p2157, %s22, 1
      %s2159 = smul.addr %s2158, 9
      %s2160 = smul.addr %s2159, 4
      %s2161 = scalar_lea.vmem %s9, %s2160
      %p2162 = scmp.lt.s32.totalorder %s22, 1
      %s2163 = scalar_select %p2162, %s22, 1
      %s2164 = smul.addr %s2163, 9
      %s2165 = smul.addr %s2164, 4
      %s2166 = scalar_lea.vmem %s10, %s2165
      // Predicated region
      $region49: #{fcn_forward.14} parent=47 // pred_check
        %p2167 = pneg %p197
      $region50: #{fcn_forward.14} parent=47 // pred_check_branch
        %2169 = sbr.rel (%p2167) target = $region52
      $region51: #{fcn_forward.14} parent=47 // pred_region
        _
      $region52: #{fcn_forward.14} parent=47 // pred_fallthru
        _
      // Predicated region
      $region53: #{fcn_forward.14} parent=47 // pred_check
        %p2170 = pneg %p223
      $region54: #{fcn_forward.14} parent=47 // pred_check_branch
        %2172 = sbr.rel (%p2170) target = $region56
      $region55: #{fcn_forward.14} parent=47 // pred_region
        _
      $region56: #{fcn_forward.14} parent=47 // pred_fallthru
        _
      // Predicated region
      $region57: #{fcn_forward.14} parent=47 // pred_check
        %p2173 = pneg %p249
      $region58: #{fcn_forward.14} parent=47 // pred_check_branch
        %2175 = sbr.rel (%p2173) target = $region60
      $region59: #{fcn_forward.14} parent=47 // pred_region
        _
      $region60: #{fcn_forward.14} parent=47 // pred_fallthru
        _
      // Predicated region
      $region61: #{fcn_forward.14} parent=47 // pred_check
        %p2176 = pneg %p275
      $region62: #{fcn_forward.14} parent=47 // pred_check_branch
        %2178 = sbr.rel (%p2176) target = $region64
      $region63: #{fcn_forward.14} parent=47 // pred_region
        _
      $region64: #{fcn_forward.14} parent=47 // pred_fallthru
        _
    $region48: #{fcn_forward.14} parent=5 // pred_fallthru
      _
    %p2179 = scmp.le.s32.totalorder 2, %s17
    // Predicated region
    $region65: #{fcn_forward.14} parent=5 // pred_check
      %p2180 = pneg %p2179
    $region66: #{fcn_forward.14} parent=5 // pred_check_branch
      %2182 = sbr.rel (%p2180) target = $region68
    $region67: #{fcn_forward.14} parent=5 // pred_region
      %s2183 = ssub.s32 %s17, 2
      // Predicated region
      $region69: #{fcn_forward.14} parent=67 // pred_check
        %p2184 = pneg %p203
      $region70: #{fcn_forward.14} parent=67 // pred_check_branch
        %2186 = sbr.rel (%p2184) target = $region72
      $region71: #{fcn_forward.14} parent=67 // pred_region
        %p2187 = scmp.lt.s32.totalorder %s23, 1
        %s2188 = scalar_select %p2187, %s23, 1
        %s2189 = smul.addr %s2188, 9
        %s2190 = smul.addr %s2189, 4
        %s2191 = scalar_lea.vmem %s7, %s2190
      $region72: #{fcn_forward.14} parent=67 // pred_fallthru
        _
      // Predicated region
      $region73: #{fcn_forward.14} parent=67 // pred_check
        %p2192 = pneg %p229
      $region74: #{fcn_forward.14} parent=67 // pred_check_branch
        %2194 = sbr.rel (%p2192) target = $region76
      $region75: #{fcn_forward.14} parent=67 // pred_region
        %p2195 = scmp.lt.s32.totalorder %s23, 1
        %s2196 = scalar_select %p2195, %s23, 1
        %s2197 = smul.addr %s2196, 9
        %s2198 = smul.addr %s2197, 4
        %s2199 = scalar_lea.vmem %s8, %s2198
      $region76: #{fcn_forward.14} parent=67 // pred_fallthru
        _
      // Predicated region
      $region77: #{fcn_forward.14} parent=67 // pred_check
        %p2200 = pneg %p255
      $region78: #{fcn_forward.14} parent=67 // pred_check_branch
        %2202 = sbr.rel (%p2200) target = $region80
      $region79: #{fcn_forward.14} parent=67 // pred_region
        %p2203 = scmp.lt.s32.totalorder %s23, 1
        %s2204 = scalar_select %p2203, %s23, 1
        %s2205 = smul.addr %s2204, 9
        %s2206 = smul.addr %s2205, 4
        %s2207 = scalar_lea.vmem %s9, %s2206
      $region80: #{fcn_forward.14} parent=67 // pred_fallthru
        _
      // Predicated region
      $region81: #{fcn_forward.14} parent=67 // pred_check
        %p2208 = pneg %p281
      $region82: #{fcn_forward.14} parent=67 // pred_check_branch
        %2210 = sbr.rel (%p2208) target = $region84
      $region83: #{fcn_forward.14} parent=67 // pred_region
        %p2211 = scmp.lt.s32.totalorder %s23, 1
        %s2212 = scalar_select %p2211, %s23, 1
        %s2213 = smul.addr %s2212, 9
        %s2214 = smul.addr %s2213, 4
        %s2215 = scalar_lea.vmem %s10, %s2214
      $region84: #{fcn_forward.14} parent=67 // pred_fallthru
        _
    $region68: #{fcn_forward.14} parent=5 // pred_fallthru
      _
  $region6: #{fcn_forward.14} parent=0 // loop_footer
    %s21 = sadd.s32 1, %s17
  $region7: #{fcn_forward.14} parent=0 // loop_footer_branch
    %16 = sbr.rel target = $region3
  $region8: #{fcn_forward.14} parent=0 // loop_exit
    _

// kernel: fcn_forward.15
$region0: #{fcn_forward.15}
  #allocation0 [shape = 'u32[]', space=smem, size = 0x4, offset = 0x4, fixed_abs, tag = 'smem constant byte address 0x4 - core index']
  #allocation1 [shape = 'u32[72,128]{1,0:T(1,128)}', space=vmem, size = 0x9000, scoped, tag = 'internal scratch']
  %s0 = inlined_call_operand.vmem [shape: bf16[2,256,40], index: 0, kind: input, shape index: {}]
  %s1 = inlined_call_operand.vmem [shape: bf16[2,256,20], index: 1, kind: input, shape index: {}]
  %s2 = inlined_call_operand.vmem [shape: bf16[5,60], index: 2, kind: input, shape index: {}]
  %s3 = inlined_call_operand.vmem [shape: f32[5,1], index: 3, kind: input, shape index: {}]
  %s4 = inlined_call_operand.vmem [shape: f32[2,5,256], index: 4, kind: output, shape index: {}]
  %s5 = sld [smem:[#allocation0]]
  $region49: #{fcn_forward.15} parent=0
    _
  %s7 = ssub.s32 1, %s5
  %s8 = scalar_select 0, %s7, %s5
  loop: start=0, step=1, limit=4
  $region2: #{fcn_forward.15} parent=0 // loop_pre_header
    _
  $region3: #{fcn_forward.15} parent=0 // loop_header
    %s10 = sphi 0, %s14
    %p11 = scmp.ge.s32.totalorder %s10, 4
    %s17 = sphi 0, %s29
    %s18 = sphi 0, %s25
    %s19 = sphi 0, %s17
    %s20 = sphi 0, %s18
    %s21 = sphi 0, %s19
    %s22 = sphi 0, %s20
    %s34 = sphi 0, %s36
    %s37 = sphi 0, %s34
    %s38 = sphi 0, %s37
    %s54 = sphi 0, %s38
    %s62 = sphi 0, %s64
    %s65 = sphi 0, %s62
    %s66 = sphi 0, %s65
    %s82 = sphi 0, %s66
    %s86 = sphi 0, %s86
    %s88 = sphi 0, %s86
    %s89 = sphi 0, %s88
    %s103 = sphi 0, %s89
    %s107 = sphi 0, %s107
    %s109 = sphi 0, %s107
    %s110 = sphi 0, %s109
    %s124 = sphi 0, %s110
    %s132 = sphi 0, %s134
    %s135 = sphi 0, %s132
    %s136 = sphi 0, %s135
    %s152 = sphi 0, %s136
  $region4: #{fcn_forward.15} parent=0 // loop_header_branch
    %13 = sbr.rel (%p11) target = $region8
  $region5: #{fcn_forward.15} parent=0 // loop_body
    %s15 = ssub.s32 %s10, 1
    %s16 = ssub.s32 %s10, 2
    %s23 = sadd.s32 1, %s18
    %p24 = scmp.ge.s32.totalorder %s23, 1
    %s25 = scalar_select %p24, 0, %s23
    %s26 = sadd.s32 1, %s17
    %s27 = scalar_select %p24, %s26, %s17
    %p28 = scmp.ge.s32.totalorder %s27, 2
    %s29 = scalar_select %p28, 0, %s27
    %s30 = ssub.s32 %s17, %s29
    %s31 = ssub.s32 %s18, %s25
    %s32 = sor.u32 %s30, %s31
    %p33 = scmp.eq.s32.totalorder %s32, 0
    %s35 = sadd.s32 %s34, 1
    %s36 = scalar_select %p33, %s34, %s35
    %p39 = pneg %p33
    %p40 = scmp.eq.s32.totalorder %s10, 1
    %p41 = por %p39, %p40
    %p42 = scmp.ne.s32.totalorder %s34, %s37
    %p43 = scmp.eq.s32.totalorder %s10, 0
    %p44 = por %p42, %p43
    %p45 = scmp.ne.s32.totalorder %s34, %s37
    %p46 = scmp.eq.s32.totalorder %s15, 1
    %p47 = por %p45, %p46
    %p48 = scmp.ne.s32.totalorder %s37, %s38
    %p49 = scmp.eq.s32.totalorder %s15, 0
    %p50 = por %p48, %p49
    %p51 = scmp.ne.s32.totalorder %s37, %s38
    %p52 = scmp.eq.s32.totalorder %s16, 1
    %p53 = por %p51, %p52
    %p55 = scmp.ne.s32.totalorder %s38, %s54
    %p56 = scmp.eq.s32.totalorder %s16, 0
    %p57 = por %p55, %p56
    %s58 = ssub.s32 %s17, %s29
    %s59 = ssub.s32 %s18, %s25
    %s60 = sor.u32 %s58, %s59
    %p61 = scmp.eq.s32.totalorder %s60, 0
    %s63 = sadd.s32 %s62, 1
    %s64 = scalar_select %p61, %s62, %s63
    %p67 = pneg %p61
    %p68 = scmp.eq.s32.totalorder %s10, 1
    %p69 = por %p67, %p68
    %p70 = scmp.ne.s32.totalorder %s62, %s65
    %p71 = scmp.eq.s32.totalorder %s10, 0
    %p72 = por %p70, %p71
    %p73 = scmp.ne.s32.totalorder %s62, %s65
    %p74 = scmp.eq.s32.totalorder %s15, 1
    %p75 = por %p73, %p74
    %p76 = scmp.ne.s32.totalorder %s65, %s66
    %p77 = scmp.eq.s32.totalorder %s15, 0
    %p78 = por %p76, %p77
    %p79 = scmp.ne.s32.totalorder %s65, %s66
    %p80 = scmp.eq.s32.totalorder %s16, 1
    %p81 = por %p79, %p80
    %p83 = scmp.ne.s32.totalorder %s66, %s82
    %p84 = scmp.eq.s32.totalorder %s16, 0
    %p85 = por %p83, %p84
    %s87 = sadd.s32 %s86, 1
    %p90 = scmp.eq.s32.totalorder %s10, 1
    %p91 = scmp.ne.s32.totalorder %s86, %s88
    %p92 = scmp.eq.s32.totalorder %s10, 0
    %p93 = por %p91, %p92
    %p94 = scmp.ne.s32.totalorder %s86, %s88
    %p95 = scmp.eq.s32.totalorder %s15, 1
    %p96 = por %p94, %p95
    %p97 = scmp.ne.s32.totalorder %s88, %s89
    %p98 = scmp.eq.s32.totalorder %s15, 0
    %p99 = por %p97, %p98
    %p100 = scmp.ne.s32.totalorder %s88, %s89
    %p101 = scmp.eq.s32.totalorder %s16, 1
    %p102 = por %p100, %p101
    %p104 = scmp.ne.s32.totalorder %s89, %s103
    %p105 = scmp.eq.s32.totalorder %s16, 0
    %p106 = por %p104, %p105
    %s108 = sadd.s32 %s107, 1
    %p111 = scmp.eq.s32.totalorder %s10, 1
    %p112 = scmp.ne.s32.totalorder %s107, %s109
    %p113 = scmp.eq.s32.totalorder %s10, 0
    %p114 = por %p112, %p113
    %p115 = scmp.ne.s32.totalorder %s107, %s109
    %p116 = scmp.eq.s32.totalorder %s15, 1
    %p117 = por %p115, %p116
    %p118 = scmp.ne.s32.totalorder %s109, %s110
    %p119 = scmp.eq.s32.totalorder %s15, 0
    %p120 = por %p118, %p119
    %p121 = scmp.ne.s32.totalorder %s109, %s110
    %p122 = scmp.eq.s32.totalorder %s16, 1
    %p123 = por %p121, %p122
    %p125 = scmp.ne.s32.totalorder %s110, %s124
    %p126 = scmp.eq.s32.totalorder %s16, 0
    %p127 = por %p125, %p126
    %s128 = ssub.s32 %s17, %s29
    %s129 = ssub.s32 %s18, %s25
    %s130 = sor.u32 %s128, %s129
    %p131 = scmp.eq.s32.totalorder %s130, 0
    %s133 = sadd.s32 %s132, 1
    %s134 = scalar_select %p131, %s132, %s133
    %p137 = pneg %p131
    %p138 = scmp.eq.s32.totalorder %s10, 1
    %p139 = por %p137, %p138
    %p140 = scmp.ne.s32.totalorder %s132, %s135
    %p141 = scmp.eq.s32.totalorder %s10, 0
    %p142 = por %p140, %p141
    %p143 = scmp.ne.s32.totalorder %s132, %s135
    %p144 = scmp.eq.s32.totalorder %s15, 1
    %p145 = por %p143, %p144
    %p146 = scmp.ne.s32.totalorder %s135, %s136
    %p147 = scmp.eq.s32.totalorder %s15, 0
    %p148 = por %p146, %p147
    %p149 = scmp.ne.s32.totalorder %s135, %s136
    %p150 = scmp.eq.s32.totalorder %s16, 1
    %p151 = por %p149, %p150
    %p153 = scmp.ne.s32.totalorder %s136, %s152
    %p154 = scmp.eq.s32.totalorder %s16, 0
    %p155 = por %p153, %p154
    %p156 = scmp.le.s32.totalorder 1, %s10
    %p157 = scmp.lt.s32.totalorder %s10, 3
    %p158 = pnand %p156, %p157
    %p159 = pneg %p158
    // Predicated region
    $region9: #{fcn_forward.15} parent=5 // pred_check
      _
    $region10: #{fcn_forward.15} parent=5 // pred_check_branch
      %161 = sbr.rel (%p158) target = $region12
    $region11: #{fcn_forward.15} parent=5 // pred_region
      %s162 = ssub.s32 %s10, 1
      // Predicated region
      $region13: #{fcn_forward.15} parent=11 // pred_check
        %p163 = pneg %p99
      $region14: #{fcn_forward.15} parent=11 // pred_check_branch
        %165 = sbr.rel (%p163) target = $region16
      $region15: #{fcn_forward.15} parent=11 // pred_region
        _
      $region16: #{fcn_forward.15} parent=11 // pred_fallthru
        _
      // Predicated region
      $region17: #{fcn_forward.15} parent=11 // pred_check
        %p166 = pneg %p120
      $region18: #{fcn_forward.15} parent=11 // pred_check_branch
        %168 = sbr.rel (%p166) target = $region20
      $region19: #{fcn_forward.15} parent=11 // pred_region
        _
      $region20: #{fcn_forward.15} parent=11 // pred_fallthru
        _
    $region12: #{fcn_forward.15} parent=5 // pred_fallthru
      _
    %p169 = scmp.lt.s32.totalorder %s10, 2
    // Predicated region
    $region21: #{fcn_forward.15} parent=5 // pred_check
      %p170 = pneg %p169
    $region22: #{fcn_forward.15} parent=5 // pred_check_branch
      %172 = sbr.rel (%p170) target = $region24
    $region23: #{fcn_forward.15} parent=5 // pred_region
      // Predicated region
      $region25: #{fcn_forward.15} parent=23 // pred_check
        %p173 = pneg %p44
      $region26: #{fcn_forward.15} parent=23 // pred_check_branch
        %175 = sbr.rel (%p173) target = $region28
      $region27: #{fcn_forward.15} parent=23 // pred_region
        %s176 = smul.u32 32, %s18
        %p177 = scmp.lt.s32.totalorder %s17, 1
        %s178 = scalar_select %p177, %s17, 1
        %p179 = scmp.lt.s32.totalorder %s176, 31
        %s180 = scalar_select %p179, %s176, 31
        %s181 = smul.addr %s178, 32
        %s182 = sadd.s32 %s180, %s181
        %s183 = smul.addr %s182, 4
        %s184 = scalar_lea.vmem %s0, %s183
        %s185 = smul.u32 32, %s18
      $region28: #{fcn_forward.15} parent=23 // pred_fallthru
        _
      // Predicated region
      $region29: #{fcn_forward.15} parent=23 // pred_check
        %p186 = pneg %p72
      $region30: #{fcn_forward.15} parent=23 // pred_check_branch
        %188 = sbr.rel (%p186) target = $region32
      $region31: #{fcn_forward.15} parent=23 // pred_region
        %s189 = smul.u32 32, %s18
        %p190 = scmp.lt.s32.totalorder %s17, 1
        %s191 = scalar_select %p190, %s17, 1
        %p192 = scmp.lt.s32.totalorder %s189, 31
        %s193 = scalar_select %p192, %s189, 31
        %s194 = smul.addr %s191, 32
        %s195 = sadd.s32 %s193, %s194
        %s196 = smul.addr %s195, 4
        %s197 = scalar_lea.vmem %s1, %s196
        %s198 = smul.u32 32, %s18
      $region32: #{fcn_forward.15} parent=23 // pred_fallthru
        _
    $region24: #{fcn_forward.15} parent=5 // pred_fallthru
      _
    %p199 = scmp.le.s32.totalorder 1, %s10
    %p200 = scmp.lt.s32.totalorder %s10, 3
    %p201 = pnand %p199, %p200
    %p202 = pneg %p201
    // Predicated region
    $region33: #{fcn_forward.15} parent=5 // pred_check
      _
    $region34: #{fcn_forward.15} parent=5 // pred_check_branch
      %204 = sbr.rel (%p201) target = $region36
    $region35: #{fcn_forward.15} parent=5 // pred_region
      %s205 = ssub.s32 %s10, 1
      %s206 = smul.u32 32, %s20
      %p207 = scmp.lt.s32.totalorder %s19, 1
      %s208 = scalar_select %p207, %s19, 1
      %p209 = scmp.lt.s32.totalorder %s206, 31
      %s210 = scalar_select %p209, %s206, 31
      %s211 = smul.addr %s208, 32
      %s212 = sadd.s32 %s210, %s211
      %s213 = smul.addr %s212, 4
      %s214 = scalar_lea.vmem %s0, %s213
      %p215 = pneg %p50
      %p216 = pneg %p47
      %s217 = smul.u32 32, %s20
      %p218 = scmp.lt.s32.totalorder %s19, 1
      %s219 = scalar_select %p218, %s19, 1
      %p220 = scmp.lt.s32.totalorder %s217, 31
      %s221 = scalar_select %p220, %s217, 31
      %s222 = smul.addr %s219, 32
      %s223 = sadd.s32 %s221, %s222
      %s224 = smul.addr %s223, 4
      %s225 = scalar_lea.vmem %s1, %s224
      %p226 = pneg %p78
      %p227 = pneg %p75
      %p228 = pneg %p99
      %p229 = pneg %p96
      %p230 = pneg %p120
      %p231 = pneg %p117
      %p232 = pneg %p148
      %p233 = pneg %p145
      %s234 = smul.u32 2, %s20
      %p235 = scmp.lt.s32.totalorder %s19, 1
      %s236 = scalar_select %p235, %s19, 1
      %p237 = scmp.lt.s32.totalorder %s234, 1
      %s238 = scalar_select %p237, %s234, 1
      %s239 = smul.addr %s236, 2
      %s240 = sadd.s32 %s238, %s239
      %s241 = smul.addr %s240, 8
      %s242 = scalar_lea.vmem %s4, %s241
      %s243 = smul.u32 32, %s20
      %p244 = scmp.lt.s32.totalorder %s19, 1
      %s245 = scalar_select %p244, %s19, 1
      %p246 = scmp.lt.s32.totalorder %s243, 31
      %s247 = scalar_select %p246, %s243, 31
      %s248 = smul.addr %s245, 32
      %s249 = sadd.s32 %s247, %s248
      %s250 = smul.addr %s249, 4
      %s251 = scalar_lea.vmem %s0, %s250
      %s252 = smul.u32 32, %s20
      %s253 = smul.u32 32, %s20
      %p254 = scmp.lt.s32.totalorder %s19, 1
      %s255 = scalar_select %p254, %s19, 1
      %p256 = scmp.lt.s32.totalorder %s253, 31
      %s257 = scalar_select %p256, %s253, 31
      %s258 = smul.addr %s255, 32
      %s259 = sadd.s32 %s257, %s258
      %s260 = smul.addr %s259, 4
      %s261 = scalar_lea.vmem %s1, %s260
      %s262 = smul.u32 32, %s20
      %s263 = smul.u32 2, %s20
      %p264 = scmp.lt.s32.totalorder %s19, 1
      %s265 = scalar_select %p264, %s19, 1
      %p266 = scmp.lt.s32.totalorder %s263, 1
      %s267 = scalar_select %p266, %s263, 1
      %s268 = smul.addr %s265, 2
      %s269 = sadd.s32 %s267, %s268
      %s270 = smul.addr %s269, 8
      %s271 = scalar_lea.vmem %s4, %s270
      %s272 = smul.u32 2, %s20
      %v273 = vld [vmem:[%s251] sm:$0xf]
      %v274 = vld [vmem:[%s251 + $0x4] sm:$0xf]
      %v275 = vld [vmem:[%s251 + $0x8] sm:$0xf]
      %v276 = vld [vmem:[%s251 + $0xc] sm:$0xf]
      %v277 = vld [vmem:[%s251 + $0x10] sm:$0xf]
      %v278 = vld [vmem:[%s251 + $0x14] sm:$0xf]
      %v279 = vld [vmem:[%s251 + $0x18] sm:$0xf]
      %v280 = vld [vmem:[%s251 + $0x1c] sm:$0xf]
      %v281 = vld [vmem:[%s251 + $0x20] sm:$0xf]
      %v282 = vld [vmem:[%s251 + $0x24] sm:$0xf]
      %v283 = vld [vmem:[%s251 + $0x28] sm:$0xf]
      %v284 = vld [vmem:[%s251 + $0x2c] sm:$0xf]
      %v285 = vld [vmem:[%s251 + $0x30] sm:$0xf]
      %v286 = vld [vmem:[%s251 + $0x34] sm:$0xf]
      %v287 = vld [vmem:[%s251 + $0x38] sm:$0xf]
      %v288 = vld [vmem:[%s251 + $0x3c] sm:$0xf]
      %v289 = vld [vmem:[%s251 + $0x40] sm:$0xf]
      %v290 = vld [vmem:[%s251 + $0x44] sm:$0xf]
      %v291 = vld [vmem:[%s251 + $0x48] sm:$0xf]
      %v292 = vld [vmem:[%s251 + $0x4c] sm:$0xf]
      %v293 = vld [vmem:[%s251 + $0x50] sm:$0xf]
      %v294 = vld [vmem:[%s251 + $0x54] sm:$0xf]
      %v295 = vld [vmem:[%s251 + $0x58] sm:$0xf]
      %v296 = vld [vmem:[%s251 + $0x5c] sm:$0xf]
      %v297 = vld [vmem:[%s251 + $0x60] sm:$0xf]
      %v298 = vld [vmem:[%s251 + $0x64] sm:$0xf]
      %v299 = vld [vmem:[%s251 + $0x68] sm:$0xf]
      %v300 = vld [vmem:[%s251 + $0x6c] sm:$0xf]
      %v301 = vld [vmem:[%s251 + $0x70] sm:$0xf]
      %v302 = vld [vmem:[%s251 + $0x74] sm:$0xf]
      %v303 = vld [vmem:[%s251 + $0x78] sm:$0xf]
      %v304 = vld [vmem:[%s251 + $0x7c] sm:$0xf]
      %v305 = vld [vmem:[%s261] sm:$0xf]
      %v306 = vld [vmem:[%s261 + $0x4] sm:$0xf]
      %v307 = vld [vmem:[%s261 + $0x8] sm:$0xf]
      %v308 = vld [vmem:[%s261 + $0xc] sm:$0xf]
      %v309 = vld [vmem:[%s261 + $0x10] sm:$0xf]
      %v310 = vld [vmem:[%s261 + $0x14] sm:$0xf]
      %v311 = vld [vmem:[%s261 + $0x18] sm:$0xf]
      %v312 = vld [vmem:[%s261 + $0x1c] sm:$0xf]
      %v313 = vld [vmem:[%s261 + $0x20] sm:$0xf]
      %v314 = vld [vmem:[%s261 + $0x24] sm:$0xf]
      %v315 = vld [vmem:[%s261 + $0x28] sm:$0xf]
      %v316 = vld [vmem:[%s261 + $0x2c] sm:$0xf]
      %v317 = vld [vmem:[%s261 + $0x30] sm:$0xf]
      %v318 = vld [vmem:[%s261 + $0x34] sm:$0xf]
      %v319 = vld [vmem:[%s261 + $0x38] sm:$0xf]
      %v320 = vld [vmem:[%s261 + $0x3c] sm:$0xf]
      %v321 = vld [vmem:[%s261 + $0x40] sm:$0xf]
      %v322 = vld [vmem:[%s261 + $0x44] sm:$0xf]
      %v323 = vld [vmem:[%s261 + $0x48] sm:$0xf]
      %v324 = vld [vmem:[%s261 + $0x4c] sm:$0xf]
      %v325 = vld [vmem:[%s261 + $0x50] sm:$0xf]
      %v326 = vld [vmem:[%s261 + $0x54] sm:$0xf]
      %v327 = vld [vmem:[%s261 + $0x58] sm:$0xf]
      %v328 = vld [vmem:[%s261 + $0x5c] sm:$0xf]
      %v329 = vld [vmem:[%s261 + $0x60] sm:$0xf]
      %v330 = vld [vmem:[%s261 + $0x64] sm:$0xf]
      %v331 = vld [vmem:[%s261 + $0x68] sm:$0xf]
      %v332 = vld [vmem:[%s261 + $0x6c] sm:$0xf]
      %v333 = vld [vmem:[%s261 + $0x70] sm:$0xf]
      %v334 = vld [vmem:[%s261 + $0x74] sm:$0xf]
      %v335 = vld [vmem:[%s261 + $0x78] sm:$0xf]
      %v336 = vld [vmem:[%s261 + $0x7c] sm:$0xf]
      %v369 = vunpack.c.l.b16 %v273
      %v370 = vunpack.c.l.b16 %v274
      %v371 = vunpack.c.l.b16 %v275
      %v372 = vunpack.c.l.b16 %v276
      %v373 = vunpack.c.l.b16 %v277
      %v374 = vunpack.c.l.b16 %v278
      %v375 = vunpack.c.l.b16 %v279
      %v376 = vunpack.c.l.b16 %v280
      %v377 = vunpack.c.l.b16 %v281
      %v378 = vunpack.c.l.b16 %v282
      %v379 = vunpack.c.l.b16 %v283
      %v380 = vunpack.c.l.b16 %v284
      %v381 = vunpack.c.l.b16 %v285
      %v382 = vunpack.c.l.b16 %v286
      %v383 = vunpack.c.l.b16 %v287
      %v384 = vunpack.c.l.b16 %v288
      %v385 = vunpack.c.l.b16 %v289
      %v386 = vunpack.c.l.b16 %v290
      %v387 = vunpack.c.l.b16 %v291
      %v388 = vunpack.c.l.b16 %v292
      %v389 = vunpack.c.l.b16 %v293
      %v390 = vunpack.c.l.b16 %v294
      %v391 = vunpack.c.l.b16 %v295
      %v392 = vunpack.c.l.b16 %v296
      %v393 = vunpack.c.l.b16 %v297
      %v394 = vunpack.c.l.b16 %v298
      %v395 = vunpack.c.l.b16 %v299
      %v396 = vunpack.c.l.b16 %v300
      %v397 = vunpack.c.l.b16 %v301
      %v398 = vunpack.c.l.b16 %v302
      %v399 = vunpack.c.l.b16 %v303
      %v400 = vunpack.c.l.b16 %v304
      %v401 = vpack.c.b16 %v370, %v369
      %v402 = vpack.c.b16 %v372, %v371
      %v403 = vpack.c.b16 %v374, %v373
      %v404 = vpack.c.b16 %v376, %v375
      %v405 = vpack.c.b16 %v378, %v377
      %v406 = vpack.c.b16 %v380, %v379
      %v407 = vpack.c.b16 %v382, %v381
      %v408 = vpack.c.b16 %v384, %v383
      %v409 = vpack.c.b16 %v386, %v385
      %v410 = vpack.c.b16 %v388, %v387
      %v411 = vpack.c.b16 %v390, %v389
      %v412 = vpack.c.b16 %v392, %v391
      %v413 = vpack.c.b16 %v394, %v393
      %v414 = vpack.c.b16 %v396, %v395
      %v415 = vpack.c.b16 %v398, %v397
      %v416 = vpack.c.b16 %v400, %v399
      %v449 = vunpack.c.l.b16 %v305
      %v450 = vunpack.c.l.b16 %v306
      %v451 = vunpack.c.l.b16 %v307
      %v452 = vunpack.c.l.b16 %v308
      %v453 = vunpack.c.l.b16 %v309
      %v454 = vunpack.c.l.b16 %v310
      %v455 = vunpack.c.l.b16 %v311
      %v456 = vunpack.c.l.b16 %v312
      %v457 = vunpack.c.l.b16 %v313
      %v458 = vunpack.c.l.b16 %v314
      %v459 = vunpack.c.l.b16 %v315
      %v460 = vunpack.c.l.b16 %v316
      %v461 = vunpack.c.l.b16 %v317
      %v462 = vunpack.c.l.b16 %v318
      %v463 = vunpack.c.l.b16 %v319
      %v464 = vunpack.c.l.b16 %v320
      %v465 = vunpack.c.l.b16 %v321
      %v466 = vunpack.c.l.b16 %v322
      %v467 = vunpack.c.l.b16 %v323
      %v468 = vunpack.c.l.b16 %v324
      %v469 = vunpack.c.l.b16 %v325
      %v470 = vunpack.c.l.b16 %v326
      %v471 = vunpack.c.l.b16 %v327
      %v472 = vunpack.c.l.b16 %v328
      %v473 = vunpack.c.l.b16 %v329
      %v474 = vunpack.c.l.b16 %v330
      %v475 = vunpack.c.l.b16 %v331
      %v476 = vunpack.c.l.b16 %v332
      %v477 = vunpack.c.l.b16 %v333
      %v478 = vunpack.c.l.b16 %v334
      %v479 = vunpack.c.l.b16 %v335
      %v480 = vunpack.c.l.b16 %v336
      %v481 = vpack.c.b16 %v450, %v449
      %v482 = vpack.c.b16 %v452, %v451
      %v483 = vpack.c.b16 %v454, %v453
      %v484 = vpack.c.b16 %v456, %v455
      %v485 = vpack.c.b16 %v458, %v457
      %v486 = vpack.c.b16 %v460, %v459
      %v487 = vpack.c.b16 %v462, %v461
      %v488 = vpack.c.b16 %v464, %v463
      %v489 = vpack.c.b16 %v466, %v465
      %v490 = vpack.c.b16 %v468, %v467
      %v491 = vpack.c.b16 %v470, %v469
      %v492 = vpack.c.b16 %v472, %v471
      %v493 = vpack.c.b16 %v474, %v473
      %v494 = vpack.c.b16 %v476, %v475
      %v495 = vpack.c.b16 %v478, %v477
      %v496 = vpack.c.b16 %v480, %v479
      %497 = vrot.lane.b32.xlu0 %v481, 40
      %v498 = vpop.permute.xlu0 %497
      %499 = vrot.lane.b32.xlu0 %v482, 40
      %v500 = vpop.permute.xlu0 %499
      %501 = vrot.lane.b32.xlu0 %v483, 40
      %v502 = vpop.permute.xlu0 %501
      %503 = vrot.lane.b32.xlu0 %v484, 40
      %v504 = vpop.permute.xlu0 %503
      %505 = vrot.lane.b32.xlu0 %v485, 40
      %v506 = vpop.permute.xlu0 %505
      %507 = vrot.lane.b32.xlu0 %v486, 40
      %v508 = vpop.permute.xlu0 %507
      %509 = vrot.lane.b32.xlu0 %v487, 40
      %v510 = vpop.permute.xlu0 %509
      %511 = vrot.lane.b32.xlu0 %v488, 40
      %v512 = vpop.permute.xlu0 %511
      %513 = vrot.lane.b32.xlu0 %v489, 40
      %v514 = vpop.permute.xlu0 %513
      %515 = vrot.lane.b32.xlu0 %v490, 40
      %v516 = vpop.permute.xlu0 %515
      %517 = vrot.lane.b32.xlu0 %v491, 40
      %v518 = vpop.permute.xlu0 %517
      %519 = vrot.lane.b32.xlu0 %v492, 40
      %v520 = vpop.permute.xlu0 %519
      %521 = vrot.lane.b32.xlu0 %v493, 40
      %v522 = vpop.permute.xlu0 %521
      %523 = vrot.lane.b32.xlu0 %v494, 40
      %v524 = vpop.permute.xlu0 %523
      %525 = vrot.lane.b32.xlu0 %v495, 40
      %v526 = vpop.permute.xlu0 %525
      %527 = vrot.lane.b32.xlu0 %v496, 40
      %v528 = vpop.permute.xlu0 %527
      %vm529 = vcmask 326656
      %v532 = vsel %vm529, %v401, %v498
      %v535 = vsel %vm529, %v402, %v500
      %v538 = vsel %vm529, %v403, %v502
      %v541 = vsel %vm529, %v404, %v504
      %v544 = vsel %vm529, %v405, %v506
      %v547 = vsel %vm529, %v406, %v508
      %v550 = vsel %vm529, %v407, %v510
      %v553 = vsel %vm529, %v408, %v512
      %v556 = vsel %vm529, %v409, %v514
      %v559 = vsel %vm529, %v410, %v516
      %v562 = vsel %vm529, %v411, %v518
      %v565 = vsel %vm529, %v412, %v520
      %v568 = vsel %vm529, %v413, %v522
      %v571 = vsel %vm529, %v414, %v524
      %v574 = vsel %vm529, %v415, %v526
      %v577 = vsel %vm529, %v416, %v528
      %v578 = vld [vmem:[%s2] sm:$0x7]
      %v579 = vld [vmem:[%s3] sm:$0x1f]
      %581 = vset.pattern.permute.xlu0 0
      %582 = vperm.xlu0 %581, %v579
      %v583 = vpop.permute.xlu0 %582
      %vm585 = vcmask 490496
      %v587 = vsel %vm585, %v578, 0
      %v589 = vsel %vm585, %v532, 0
      %v591 = vsel %vm585, %v535, 0
      %v593 = vsel %vm585, %v538, 0
      %v595 = vsel %vm585, %v541, 0
      %v597 = vsel %vm585, %v544, 0
      %v599 = vsel %vm585, %v547, 0
      %v601 = vsel %vm585, %v550, 0
      %v603 = vsel %vm585, %v553, 0
      %v605 = vsel %vm585, %v556, 0
      %v607 = vsel %vm585, %v559, 0
      %v609 = vsel %vm585, %v562, 0
      %v611 = vsel %vm585, %v565, 0
      %v613 = vsel %vm585, %v568, 0
      %v615 = vsel %vm585, %v571, 0
      %v617 = vsel %vm585, %v574, 0
      %v619 = vsel %vm585, %v577, 0
      %621 = vmatpush.bf16.xpose.msra.mxu0 %v603
      %622 = vmatpush.bf16.xpose.msra.mxu0 %v601
      %623 = vmatpush.bf16.xpose.msra.mxu0 %v599
      %624 = vmatpush.bf16.xpose.msra.mxu0 %v597
      %625 = vmatpush.bf16.xpose.msra.mxu0 %v595
      %626 = vmatpush.bf16.xpose.msra.mxu0 %v593
      %627 = vmatpush.bf16.xpose.msra.mxu0 %v591
      %628 = vmatpush.bf16.xpose.msra.mxu0 %v589
      %629 = vmatmul.bf16.gmra.mxu0 %v587
      %v630 = vpop.f32.mrf.mxu0
      %v631 = vadd.f32 %v583, %v630
      %v632 = vpop.f32.mrf.mxu0
      %633 = vdwg.mxu0
      %634 = vmatpush.bf16.xpose.msra.mxu0 %v619
      %635 = vmatpush.bf16.xpose.msra.mxu0 %v617
      %636 = vmatpush.bf16.xpose.msra.mxu0 %v615
      %637 = vmatpush.bf16.xpose.msra.mxu0 %v613
      %638 = vmatpush.bf16.xpose.msra.mxu0 %v611
      %639 = vmatpush.bf16.xpose.msra.mxu0 %v609
      %640 = vmatpush.bf16.xpose.msra.mxu0 %v607
      %641 = vmatpush.bf16.xpose.msra.mxu0 %v605
      %642 = vmatmul.bf16.gmra.mxu0 %v587
      %v643 = vpop.f32.mrf.mxu0
      %v644 = vadd.f32 %v583, %v643
      %v645 = vpop.f32.mrf.mxu0
      %646 = vdwg.mxu0
      %647 = vst [vmem:[%s271] sm:$0x1f] %v631
      %648 = vst [vmem:[%s271 + $0x8] sm:$0x1f] %v644
      %s649 = smul.u32 2, %s20
      %p650 = scmp.lt.s32.totalorder %s19, 1
      %s651 = scalar_select %p650, %s19, 1
      %p652 = scmp.lt.s32.totalorder %s649, 1
      %s653 = scalar_select %p652, %s649, 1
      %s654 = smul.addr %s651, 2
      %s655 = sadd.s32 %s653, %s654
      %s656 = smul.addr %s655, 8
      %s657 = scalar_lea.vmem %s4, %s656
      // Predicated region
      $region37: #{fcn_forward.15} parent=35 // pred_check
        %p658 = pneg %p145
      $region38: #{fcn_forward.15} parent=35 // pred_check_branch
        %660 = sbr.rel (%p658) target = $region40
      $region39: #{fcn_forward.15} parent=35 // pred_region
        %s661 = smul.u32 2, %s20
      $region40: #{fcn_forward.15} parent=35 // pred_fallthru
        _
    $region36: #{fcn_forward.15} parent=5 // pred_fallthru
      _
    %p662 = scmp.le.s32.totalorder 2, %s10
    // Predicated region
    $region41: #{fcn_forward.15} parent=5 // pred_check
      %p663 = pneg %p662
    $region42: #{fcn_forward.15} parent=5 // pred_check_branch
      %665 = sbr.rel (%p663) target = $region44
    $region43: #{fcn_forward.15} parent=5 // pred_region
      %s666 = ssub.s32 %s10, 2
      // Predicated region
      $region45: #{fcn_forward.15} parent=43 // pred_check
        %p667 = pneg %p151
      $region46: #{fcn_forward.15} parent=43 // pred_check_branch
        %669 = sbr.rel (%p667) target = $region48
      $region47: #{fcn_forward.15} parent=43 // pred_region
        %s670 = smul.u32 2, %s22
        %p671 = scmp.lt.s32.totalorder %s21, 1
        %s672 = scalar_select %p671, %s21, 1
        %p673 = scmp.lt.s32.totalorder %s670, 1
        %s674 = scalar_select %p673, %s670, 1
        %s675 = smul.addr %s672, 2
        %s676 = sadd.s32 %s674, %s675
        %s677 = smul.addr %s676, 8
        %s678 = scalar_lea.vmem %s4, %s677
      $region48: #{fcn_forward.15} parent=43 // pred_fallthru
        _
    $region44: #{fcn_forward.15} parent=5 // pred_fallthru
      _
  $region6: #{fcn_forward.15} parent=0 // loop_footer
    %s14 = sadd.s32 1, %s10
  $region7: #{fcn_forward.15} parent=0 // loop_footer_branch
    %9 = sbr.rel target = $region3
  $region8: #{fcn_forward.15} parent=0 // loop_exit
    _

</llo_original>
